<compile_context>
chip_gen: v7x
topology: tpu7x:2x2x1
jax: 0.10.0
libtpu: 0.0.40
codegen_flags: <defaults>
</compile_context>

<pallas_src>
import math

import jax
import jax.numpy as jnp
from jax.experimental import pallas as pl
from jax.experimental.pallas import tpu as pltpu

N_HEAD = 4     # heads of the TransformerEncoderLayer used in both blocks
LN_EPS = 1e-5  # PyTorch LayerNorm / TransformerEncoderLayer default


# ----------------------------------------------------------------------------
# Fused kernel factory (all shape constants are static closures)
# ----------------------------------------------------------------------------
def _make_fused_kernel(N, D, H, L):
    hd = D // H
    scale = 1.0 / math.sqrt(hd)
    half = D // 2

    def _gelu(h):
        # TODO(synk): PyTorch nn.GELU() default is erf-exact; tanh approximation used here
        #             (erf lowering availability in Mosaic is not guaranteed).
        return 0.5 * h * (1.0 + jnp.tanh(0.7978845608028654 * (h + 0.044715 * h * h * h)))

    def _layernorm(x, w, b):
        mu = jnp.mean(x, axis=-1, keepdims=True)
        xc = x - mu
        var = jnp.mean(xc * xc, axis=-1, keepdims=True)
        return xc * jax.lax.rsqrt(var + LN_EPS) * w + b

    def _encoder_layer(x, W, V, add_mask):
        """One PyTorch TransformerEncoderLayer (post-norm, relu FFN, d_ff = D, eval mode).

        x:        (T, D) activation (all samples / tokens stacked)
        W:        (D, 6D) = [Wq | Wk | Wv | Wo | W1 | W2]
        V:        (10, D) = [bq, bk, bv, bo, b1, b2, ln1w, ln1b, ln2w, ln2b]
        add_mask: (T, T) additive attention mask (0 / -1e30) or None
        """
        wq = W[:, 0 * D:1 * D]
        wk = W[:, 1 * D:2 * D]
        wv = W[:, 2 * D:3 * D]
        wo = W[:, 3 * D:4 * D]
        w1 = W[:, 4 * D:5 * D]
        w2 = W[:, 5 * D:6 * D]

        q = jnp.dot(x, wq, preferred_element_type=jnp.float32) + V[0:1]
        k = jnp.dot(x, wk, preferred_element_type=jnp.float32) + V[1:2]
        v = jnp.dot(x, wv, preferred_element_type=jnp.float32) + V[2:3]

        # Per-head attention; no lane concat: each head's output is folded directly into the
        # output projection through the matching Wo row slab and accumulated.
        acc = jnp.zeros((x.shape[0], D), jnp.float32)
        for h in range(H):
            lo = h * hd
            qh = q[:, lo:lo + hd] * scale
            kh = k[:, lo:lo + hd]
            vh = v[:, lo:lo + hd]
            s = jax.lax.dot_general(qh, kh, (((1,), (1,)), ((), ())),
                                    preferred_element_type=jnp.float32)     # (T, T)
            if add_mask is not None:
                s = s + add_mask
            s = s - jnp.max(s, axis=-1, keepdims=True)
            e = jnp.exp(s)
            p = e * pl.reciprocal(jnp.sum(e, axis=-1, keepdims=True), approx=True)
            oh = jnp.dot(p, vh, preferred_element_type=jnp.float32)         # (T, hd)
            acc = acc + jnp.dot(oh, wo[lo:lo + hd, :],
                                preferred_element_type=jnp.float32)         # (T, D)
        attn = acc + V[3:4]

        src = _layernorm(x + attn, V[6:7], V[7:8])
        ff = jnp.maximum(jnp.dot(src, w1, preferred_element_type=jnp.float32) + V[4:5], 0.0)
        ff = jnp.dot(ff, w2, preferred_element_type=jnp.float32) + V[5:6]
        return _layernorm(src + ff, V[8:9], V[9:10])

    def _mlp(x, w1, b1, w2, b2):
        h = _gelu(jnp.dot(x, w1, preferred_element_type=jnp.float32) + b1)
        return jnp.dot(h, w2, preferred_element_type=jnp.float32) + b2

    def kernel(x_ref, mask_ref, wcm_ref, vcm_ref, wba_ref, vba_ref, postln_ref,
               pw_ref, pb_ref, hw_ref, hb_ref, w2f_ref, b2f_ref, o_ref):
        x = x_ref[...]                      # (T, D), token-major (row = s*N + b)
        mask = mask_ref[...]                # (T, T) additive block mask
        postln = postln_ref[...]            # (4, D): [ca_w, ca_b, ba_w, ba_b]

        # ----- crossmodal block ('fuse-self-attn') + ca_post_ln -----
        for l in range(L):
            x = _encoder_layer(x, wcm_ref[l], vcm_ref[l], mask)
        x = _layernorm(x, postln[0:1], postln[1:2])

        # reg-token embeddings: token-major layout puts them in the first N rows
        tok = x[0:N, :]                      # (N, D)

        # ----- batch attention block ('single-emb') + ba_post_ln -----
        y = tok
        for l in range(L):
            y = _encoder_layer(y, wba_ref[l], vba_ref[l], None)
        y = _layernorm(y, postln[2:3], postln[3:4])

        # ----- paired-embedding branch -----
        # Weights are zero-padded to (D, D); padded columns stay exactly 0 through both MLPs,
        # so the mean over the true D/2 features is sum(over D cols) / (D/2).
        pw = pw_ref[...]
        pb = pb_ref[...]
        xx = _mlp(tok, pw[0], pb[0:1], pw[1], pb[1:2])       # paired_branch_mlp1
        xx = _mlp(xx, pw[2], pb[2:3], pw[3], pb[3:4])        # paired_branch_mlp2

        inv_half = 1.0 / float(half)
        # mean_d(xx_i - xx_j) == rowmean(xx)_i - rowmean(xx)_j
        m_col = jnp.sum(xx, axis=-1, keepdims=True) * inv_half            # (N, 1)
        ones_row = jnp.full((1, D), inv_half, jnp.float32)
        m_row = jax.lax.dot_general(ones_row, xx, (((1,), (1,)), ((), ())),
                                    preferred_element_type=jnp.float32)   # (1, N)
        # lane-widen (1, N) -> (1, 128) via an iota "selector" matmul (avoids lane concat)
        sel = jnp.where(jax.lax.broadcasted_iota(jnp.int32, (N, 128), 0) ==
                        jax.lax.broadcasted_iota(jnp.int32, (N, 128), 1),
                        jnp.float32(1.0), jnp.float32(0.0))               # (N, 128)
        m_row_wide = jnp.dot(m_row, sel, preferred_element_type=jnp.float32)  # (1, 128)
        pair = m_col - m_row_wide                                         # (N, 128); lanes >= N unused

        # ----- scoring head: mlp2(mlp1(y)) -----
        hw = hw_ref[...]
        hb = hb_ref[...]
        y = _mlp(y, hw[0], hb[0:1], hw[1], hb[1:2])                       # mlp1: (N, D)
        h2 = _gelu(jnp.dot(y, hw[2], preferred_element_type=jnp.float32) + hb[2:3])
        # final weight is lane-tiled (D, 128) -> every lane of each row holds the sample's score
        score = jnp.dot(h2, w2f_ref[...], preferred_element_type=jnp.float32) + b2f_ref[...]

        # single lane-dense (2N, 128) store: rows [0, N) = pairwise, rows [N, 2N) = scores
        o_ref[...] = jnp.concatenate([pair, score], axis=0)

    return kernel


# ----------------------------------------------------------------------------
# Parameter initialization (deterministic, synthetic, pre-packed for the kernel)
# ----------------------------------------------------------------------------
def init_rank_adapter_params(key, num_layers, d_model, num_learnable_text_tokens,
                             max_batch_size=64):
    D = d_model
    half = D // 2
    keys = jax.random.split(key, 8)
    std = 0.02

    def _xavier(k, shape):
        fan_in, fan_out = shape
        return jax.random.normal(k, shape, jnp.float32) * math.sqrt(2.0 / (fan_in + fan_out))

    def _pad_to(w, rows, cols):
        return jnp.zeros((rows, cols), jnp.float32).at[:w.shape[0], :w.shape[1]].set(w)

    def _enc_stack(k):
        """Stacked TransformerEncoder params: W (L, D, 6D), V (L, 10, D)."""
        ws, vs = [], []
        for lk in jax.random.split(k, num_layers):
            lks = jax.random.split(lk, 6)
            w = jnp.concatenate(
                [jax.random.normal(lks[i], (D, D), jnp.float32) * std for i in range(6)],
                axis=1)                                                   # [Wq|Wk|Wv|Wo|W1|W2]
            v = jnp.concatenate(
                [jnp.zeros((6, D), jnp.float32),                          # bq bk bv bo b1 b2
                 jnp.ones((1, D), jnp.float32), jnp.zeros((1, D), jnp.float32),   # ln1 w, b
                 jnp.ones((1, D), jnp.float32), jnp.zeros((1, D), jnp.float32)],  # ln2 w, b
                axis=0)                                                   # (10, D)
            ws.append(w)
            vs.append(v)
        return jnp.stack(ws), jnp.stack(vs)

    wcm, vcm = _enc_stack(keys[0])     # crossmodal block
    wba, vba = _enc_stack(keys[1])     # batch-attention block

    # paired branch (MLPLayer x2), zero-padded to uniform (D, D) slabs
    kp = jax.random.split(keys[2], 4)
    pw = jnp.stack([_xavier(kp[0], (D, D)),
                    _pad_to(_xavier(kp[1], (D, half)), D, D),
                    _pad_to(_xavier(kp[2], (half, half)), D, D),
                    _pad_to(_xavier(kp[3], (half, half)), D, D)])         # (4, D, D)
    pb = jnp.zeros((4, D), jnp.float32)                                   # zero (and zero-padded) biases

    # scoring head: mlp1 (D->D->D), mlp2 (D->D->1)
    kh = jax.random.split(keys[3], 4)
    hw = jnp.stack([_xavier(kh[0], (D, D)),
                    _xavier(kh[1], (D, D)),
                    _xavier(kh[2], (D, D))])                              # (3, D, D)
    hb = jnp.zeros((3, D), jnp.float32)
    w2f = jnp.tile(_xavier(kh[3], (D, 1)), (1, 128))                      # (D, 128) lane-tiled final weight
    b2f = jnp.zeros((1, 128), jnp.float32)

    postln = jnp.concatenate([jnp.ones((1, D)), jnp.zeros((1, D)),
                              jnp.ones((1, D)), jnp.zeros((1, D))],
                             axis=0).astype(jnp.float32)                  # [ca_w, ca_b, ba_w, ba_b]

    return {
        'learnable_text_tokens':
            jax.random.normal(keys[4], (1, num_learnable_text_tokens), jnp.float32) * std,
        'batch_reg_token':
            jax.random.normal(keys[5], (1, 1, D), jnp.float32) * std,
        'batch_index_encoding':
            jax.random.normal(keys[6], (max_batch_size, 1, D), jnp.float32) * std,
        'wcm': wcm, 'vcm': vcm, 'wba': wba, 'vba': vba,
        'postln': postln, 'pw': pw, 'pb': pb, 'hw': hw, 'hb': hb,
        'w2f': w2f, 'b2f': b2f,
    }


# ----------------------------------------------------------------------------
# Forward pass: cheap layout glue in JAX, all compute in ONE pallas_call
# ----------------------------------------------------------------------------
def rank_adapter_v2_forward(params, image_embeddings, text_embeddings):
    """
    image_embeddings: [N, v_ctx, d_model]
    text_embeddings : [N, t_ctx, d_model]
    returns (x: [N, 1], xx: [N*N, 1])
    """
    N, _, D = image_embeddings.shape
    L_tok = params['learnable_text_tokens'].shape[1]
    num_layers = params['wcm'].shape[0]

    # learnable text tokens: per-token scalar broadcast across the feature dim (as in the ref)
    ltt = params['learnable_text_tokens'].reshape(1, L_tok, 1)
    ltt_exp = jnp.broadcast_to(ltt, (N, L_tok, D))
    text = jnp.concatenate([ltt_exp, text_embeddings], axis=1)

    # batch register token + per-sample batch index encoding, prepended to image tokens
    brt = (jnp.broadcast_to(params['batch_reg_token'], (N, 1, D))
           + params['batch_index_encoding'][:N])
    image = jnp.concatenate([brt, image_embeddings], axis=1)

    # cross_attn_method == 'fuse-self-attn': fused token sequence (N, S, D)
    x = jnp.concatenate([image, text], axis=1)
    S = x.shape[1]
    T = N * S

    # Token-major interleave: row = s*N + b  ->  the N batch-reg tokens are rows 0..N-1.
    x2d = jnp.transpose(x, (1, 0, 2)).reshape(T, D)

    # Additive block mask: 0 for same-sample token pairs, -1e30 otherwise.
    sample_id = jnp.arange(T, dtype=jnp.int32) % N
    mask = jnp.where(sample_id[:, None] == sample_id[None, :],
                     0.0, -1e30).astype(jnp.float32)

    kernel = _make_fused_kernel(N=N, D=D, H=N_HEAD, L=num_layers)
    out = pl.pallas_call(
        kernel,
        out_shape=jax.ShapeDtypeStruct((2 * N, 128), jnp.float32),
        compiler_params=pltpu.CompilerParams(vmem_limit_bytes=8 * 1024 * 1024),
    )(x2d, mask,
      params['wcm'], params['vcm'], params['wba'], params['vba'],
      params['postln'], params['pw'], params['pb'], params['hw'], params['hb'],
      params['w2f'], params['b2f'])

    x_scores = out[N:2 * N, :1]              # (N, 1)
    xx = out[:N, :N].reshape(-1, 1)          # (N*N, 1)
    return x_scores, xx


# ----------------------------------------------------------------------------
if __name__ == "__main__":
    key = jax.random.PRNGKey(0)
    k_img, k_txt, k_par = jax.random.split(key, 3)

    N, V_CTX, T_CTX = 4, 7, 4
    D_MODEL = 32
    NUM_LAYERS = 2
    NUM_LEARNABLE_TEXT_TOKENS = 4

    image_embeddings = jax.random.normal(k_img, (N, V_CTX, D_MODEL), jnp.float32)
    text_embeddings = jax.random.normal(k_txt, (N, T_CTX, D_MODEL), jnp.float32)

    params = init_rank_adapter_params(k_par, NUM_LAYERS, D_MODEL,
                                      NUM_LEARNABLE_TEXT_TOKENS)

    fwd = jax.jit(rank_adapter_v2_forward)
    x_out, xx_out = fwd(params, image_embeddings, text_embeddings)
    jax.block_until_ready((x_out, xx_out))

    assert x_out.shape == (N, 1)
    assert xx_out.shape == (N * N, 1)
    assert bool(jnp.all(jnp.isfinite(x_out)))
    assert bool(jnp.all(jnp.isfinite(xx_out)))
    print("KERNEL_OK")
</pallas_src>

<mosaic_0001>
module attributes {stable_mosaic.version = 11 : i64} {
  func.func @kernel(%arg0: memref<64x32xf32, #tpu.memory_space<vmem>>, %arg1: memref<64x64xf32, #tpu.memory_space<vmem>>, %arg2: memref<2x32x192xf32, #tpu.memory_space<vmem>>, %arg3: memref<2x10x32xf32, #tpu.memory_space<vmem>>, %arg4: memref<2x32x192xf32, #tpu.memory_space<vmem>>, %arg5: memref<2x10x32xf32, #tpu.memory_space<vmem>>, %arg6: memref<4x32xf32, #tpu.memory_space<vmem>>, %arg7: memref<4x32x32xf32, #tpu.memory_space<vmem>>, %arg8: memref<4x32xf32, #tpu.memory_space<vmem>>, %arg9: memref<3x32x32xf32, #tpu.memory_space<vmem>>, %arg10: memref<3x32xf32, #tpu.memory_space<vmem>>, %arg11: memref<32x128xf32, #tpu.memory_space<vmem>>, %arg12: memref<1x128xf32, #tpu.memory_space<vmem>>, %arg13: memref<8x128xf32, #tpu.memory_space<vmem>>) attributes {dimension_semantics = [], scalar_prefetch = 0 : i64, scratch_operands = 0 : i64, tpu.core_type = #tpu.core_type<tc>} {
    %c0 = arith.constant 0 : index
    %c0_0 = arith.constant 0 : index
    %0 = vector.load %arg0[%c0, %c0_0] : memref<64x32xf32, #tpu.memory_space<vmem>>, vector<64x32xf32>
    %c0_1 = arith.constant 0 : index
    %c0_2 = arith.constant 0 : index
    %1 = vector.load %arg1[%c0_1, %c0_2] : memref<64x64xf32, #tpu.memory_space<vmem>>, vector<64x64xf32>
    %c0_3 = arith.constant 0 : index
    %c0_4 = arith.constant 0 : index
    %2 = vector.load %arg6[%c0_3, %c0_4] : memref<4x32xf32, #tpu.memory_space<vmem>>, vector<4x32xf32>
    %c0_5 = arith.constant 0 : index
    %c0_6 = arith.constant 0 : index
    %c0_7 = arith.constant 0 : index
    %3 = vector.load %arg2[%c0_5, %c0_6, %c0_7] : memref<2x32x192xf32, #tpu.memory_space<vmem>>, vector<1x32x192xf32>
    %4 = vector.shape_cast %3 : vector<1x32x192xf32> to vector<32x192xf32>
    %c0_8 = arith.constant 0 : index
    %c0_9 = arith.constant 0 : index
    %c0_10 = arith.constant 0 : index
    %5 = vector.load %arg3[%c0_8, %c0_9, %c0_10] : memref<2x10x32xf32, #tpu.memory_space<vmem>>, vector<1x10x32xf32>
    %6 = vector.shape_cast %5 : vector<1x10x32xf32> to vector<10x32xf32>
    %7 = vector.extract_strided_slice %4 {offsets = [0, 0], sizes = [32, 32], strides = [1, 1]} : vector<32x192xf32> to vector<32x32xf32>
    %8 = vector.extract_strided_slice %4 {offsets = [0, 32], sizes = [32, 32], strides = [1, 1]} : vector<32x192xf32> to vector<32x32xf32>
    %9 = vector.extract_strided_slice %4 {offsets = [0, 64], sizes = [32, 32], strides = [1, 1]} : vector<32x192xf32> to vector<32x32xf32>
    %10 = vector.extract_strided_slice %4 {offsets = [0, 96], sizes = [32, 32], strides = [1, 1]} : vector<32x192xf32> to vector<32x32xf32>
    %11 = vector.extract_strided_slice %4 {offsets = [0, 128], sizes = [32, 32], strides = [1, 1]} : vector<32x192xf32> to vector<32x32xf32>
    %12 = vector.extract_strided_slice %4 {offsets = [0, 160], sizes = [32, 32], strides = [1, 1]} : vector<32x192xf32> to vector<32x32xf32>
    %cst = arith.constant dense<0.000000e+00> : vector<64x32xf32>
    %13 = tpu.matmul %0, %7, %cst {dimension_numbers = #tpu.dot_dimension_numbers<[1], [0], [0], [1], [0, 0, 1, 1], [], []>} : vector<64x32xf32>, vector<32x32xf32>, vector<64x32xf32> -> vector<64x32xf32>
    %14 = vector.extract_strided_slice %6 {offsets = [0, 0], sizes = [1, 32], strides = [1, 1]} : vector<10x32xf32> to vector<1x32xf32>
    %15 = vector.broadcast %14 : vector<1x32xf32> to vector<64x32xf32>
    %16 = arith.addf %13, %15 : vector<64x32xf32>
    %cst_11 = arith.constant dense<0.000000e+00> : vector<64x32xf32>
    %17 = tpu.matmul %0, %8, %cst_11 {dimension_numbers = #tpu.dot_dimension_numbers<[1], [0], [0], [1], [0, 0, 1, 1], [], []>} : vector<64x32xf32>, vector<32x32xf32>, vector<64x32xf32> -> vector<64x32xf32>
    %18 = vector.extract_strided_slice %6 {offsets = [1, 0], sizes = [1, 32], strides = [1, 1]} : vector<10x32xf32> to vector<1x32xf32>
    %19 = vector.broadcast %18 : vector<1x32xf32> to vector<64x32xf32>
    %20 = arith.addf %17, %19 : vector<64x32xf32>
    %cst_12 = arith.constant dense<0.000000e+00> : vector<64x32xf32>
    %21 = tpu.matmul %0, %9, %cst_12 {dimension_numbers = #tpu.dot_dimension_numbers<[1], [0], [0], [1], [0, 0, 1, 1], [], []>} : vector<64x32xf32>, vector<32x32xf32>, vector<64x32xf32> -> vector<64x32xf32>
    %22 = vector.extract_strided_slice %6 {offsets = [2, 0], sizes = [1, 32], strides = [1, 1]} : vector<10x32xf32> to vector<1x32xf32>
    %23 = vector.broadcast %22 : vector<1x32xf32> to vector<64x32xf32>
    %24 = arith.addf %21, %23 : vector<64x32xf32>
    %cst_13 = arith.constant 0.000000e+00 : f32
    %25 = vector.broadcast %cst_13 : f32 to vector<64x32xf32>
    %26 = vector.extract_strided_slice %16 {offsets = [0, 0], sizes = [64, 8], strides = [1, 1]} : vector<64x32xf32> to vector<64x8xf32>
    %cst_14 = arith.constant 0.353553385 : f32
    %27 = vector.broadcast %cst_14 : f32 to vector<64x8xf32>
    %28 = arith.mulf %26, %27 : vector<64x8xf32>
    %29 = vector.extract_strided_slice %20 {offsets = [0, 0], sizes = [64, 8], strides = [1, 1]} : vector<64x32xf32> to vector<64x8xf32>
    %30 = vector.extract_strided_slice %24 {offsets = [0, 0], sizes = [64, 8], strides = [1, 1]} : vector<64x32xf32> to vector<64x8xf32>
    %cst_15 = arith.constant dense<0.000000e+00> : vector<64x64xf32>
    %31 = tpu.matmul %28, %29, %cst_15 {dimension_numbers = #tpu.dot_dimension_numbers<[1], [1], [0], [0], [0, 0, 1, 0], [], []>} : vector<64x8xf32>, vector<64x8xf32>, vector<64x64xf32> -> vector<64x64xf32>
    %32 = arith.addf %31, %1 : vector<64x64xf32>
    %cst_16 = arith.constant dense<0xFF800000> : vector<64xf32>
    %33 = vector.multi_reduction <maximumf>, %32, %cst_16 [1] : vector<64x64xf32> to vector<64xf32>
    %34 = vector.shape_cast %33 : vector<64xf32> to vector<64x1xf32>
    %35 = vector.broadcast %34 : vector<64x1xf32> to vector<64x64xf32>
    %36 = arith.subf %32, %35 : vector<64x64xf32>
    %37 = math.exp %36 : vector<64x64xf32>
    %cst_17 = arith.constant dense<0.000000e+00> : vector<64xf32>
    %38 = vector.multi_reduction <add>, %37, %cst_17 [1] : vector<64x64xf32> to vector<64xf32>
    %39 = vector.shape_cast %38 : vector<64xf32> to vector<64x1xf32>
    %40 = tpu.reciprocal %39 {approx = true} : vector<64x1xf32> -> vector<64x1xf32>
    %41 = vector.broadcast %40 : vector<64x1xf32> to vector<64x64xf32>
    %42 = arith.mulf %37, %41 : vector<64x64xf32>
    %cst_18 = arith.constant dense<0.000000e+00> : vector<64x8xf32>
    %43 = tpu.matmul %42, %30, %cst_18 {dimension_numbers = #tpu.dot_dimension_numbers<[1], [0], [0], [1], [0, 0, 1, 1], [], []>} : vector<64x64xf32>, vector<64x8xf32>, vector<64x8xf32> -> vector<64x8xf32>
    %44 = vector.extract_strided_slice %10 {offsets = [0, 0], sizes = [8, 32], strides = [1, 1]} : vector<32x32xf32> to vector<8x32xf32>
    %cst_19 = arith.constant dense<0.000000e+00> : vector<64x32xf32>
    %45 = tpu.matmul %43, %44, %cst_19 {dimension_numbers = #tpu.dot_dimension_numbers<[1], [0], [0], [1], [0, 0, 1, 1], [], []>} : vector<64x8xf32>, vector<8x32xf32>, vector<64x32xf32> -> vector<64x32xf32>
    %46 = arith.addf %25, %45 : vector<64x32xf32>
    %47 = vector.extract_strided_slice %16 {offsets = [0, 8], sizes = [64, 8], strides = [1, 1]} : vector<64x32xf32> to vector<64x8xf32>
    %cst_20 = arith.constant 0.353553385 : f32
    %48 = vector.broadcast %cst_20 : f32 to vector<64x8xf32>
    %49 = arith.mulf %47, %48 : vector<64x8xf32>
    %50 = vector.extract_strided_slice %20 {offsets = [0, 8], sizes = [64, 8], strides = [1, 1]} : vector<64x32xf32> to vector<64x8xf32>
    %51 = vector.extract_strided_slice %24 {offsets = [0, 8], sizes = [64, 8], strides = [1, 1]} : vector<64x32xf32> to vector<64x8xf32>
    %cst_21 = arith.constant dense<0.000000e+00> : vector<64x64xf32>
    %52 = tpu.matmul %49, %50, %cst_21 {dimension_numbers = #tpu.dot_dimension_numbers<[1], [1], [0], [0], [0, 0, 1, 0], [], []>} : vector<64x8xf32>, vector<64x8xf32>, vector<64x64xf32> -> vector<64x64xf32>
    %53 = arith.addf %52, %1 : vector<64x64xf32>
    %cst_22 = arith.constant dense<0xFF800000> : vector<64xf32>
    %54 = vector.multi_reduction <maximumf>, %53, %cst_22 [1] : vector<64x64xf32> to vector<64xf32>
    %55 = vector.shape_cast %54 : vector<64xf32> to vector<64x1xf32>
    %56 = vector.broadcast %55 : vector<64x1xf32> to vector<64x64xf32>
    %57 = arith.subf %53, %56 : vector<64x64xf32>
    %58 = math.exp %57 : vector<64x64xf32>
    %cst_23 = arith.constant dense<0.000000e+00> : vector<64xf32>
    %59 = vector.multi_reduction <add>, %58, %cst_23 [1] : vector<64x64xf32> to vector<64xf32>
    %60 = vector.shape_cast %59 : vector<64xf32> to vector<64x1xf32>
    %61 = tpu.reciprocal %60 {approx = true} : vector<64x1xf32> -> vector<64x1xf32>
    %62 = vector.broadcast %61 : vector<64x1xf32> to vector<64x64xf32>
    %63 = arith.mulf %58, %62 : vector<64x64xf32>
    %cst_24 = arith.constant dense<0.000000e+00> : vector<64x8xf32>
    %64 = tpu.matmul %63, %51, %cst_24 {dimension_numbers = #tpu.dot_dimension_numbers<[1], [0], [0], [1], [0, 0, 1, 1], [], []>} : vector<64x64xf32>, vector<64x8xf32>, vector<64x8xf32> -> vector<64x8xf32>
    %65 = vector.extract_strided_slice %10 {offsets = [8, 0], sizes = [8, 32], strides = [1, 1]} : vector<32x32xf32> to vector<8x32xf32>
    %cst_25 = arith.constant dense<0.000000e+00> : vector<64x32xf32>
    %66 = tpu.matmul %64, %65, %cst_25 {dimension_numbers = #tpu.dot_dimension_numbers<[1], [0], [0], [1], [0, 0, 1, 1], [], []>} : vector<64x8xf32>, vector<8x32xf32>, vector<64x32xf32> -> vector<64x32xf32>
    %67 = arith.addf %46, %66 : vector<64x32xf32>
    %68 = vector.extract_strided_slice %16 {offsets = [0, 16], sizes = [64, 8], strides = [1, 1]} : vector<64x32xf32> to vector<64x8xf32>
    %cst_26 = arith.constant 0.353553385 : f32
    %69 = vector.broadcast %cst_26 : f32 to vector<64x8xf32>
    %70 = arith.mulf %68, %69 : vector<64x8xf32>
    %71 = vector.extract_strided_slice %20 {offsets = [0, 16], sizes = [64, 8], strides = [1, 1]} : vector<64x32xf32> to vector<64x8xf32>
    %72 = vector.extract_strided_slice %24 {offsets = [0, 16], sizes = [64, 8], strides = [1, 1]} : vector<64x32xf32> to vector<64x8xf32>
    %cst_27 = arith.constant dense<0.000000e+00> : vector<64x64xf32>
    %73 = tpu.matmul %70, %71, %cst_27 {dimension_numbers = #tpu.dot_dimension_numbers<[1], [1], [0], [0], [0, 0, 1, 0], [], []>} : vector<64x8xf32>, vector<64x8xf32>, vector<64x64xf32> -> vector<64x64xf32>
    %74 = arith.addf %73, %1 : vector<64x64xf32>
    %cst_28 = arith.constant dense<0xFF800000> : vector<64xf32>
    %75 = vector.multi_reduction <maximumf>, %74, %cst_28 [1] : vector<64x64xf32> to vector<64xf32>
    %76 = vector.shape_cast %75 : vector<64xf32> to vector<64x1xf32>
    %77 = vector.broadcast %76 : vector<64x1xf32> to vector<64x64xf32>
    %78 = arith.subf %74, %77 : vector<64x64xf32>
    %79 = math.exp %78 : vector<64x64xf32>
    %cst_29 = arith.constant dense<0.000000e+00> : vector<64xf32>
    %80 = vector.multi_reduction <add>, %79, %cst_29 [1] : vector<64x64xf32> to vector<64xf32>
    %81 = vector.shape_cast %80 : vector<64xf32> to vector<64x1xf32>
    %82 = tpu.reciprocal %81 {approx = true} : vector<64x1xf32> -> vector<64x1xf32>
    %83 = vector.broadcast %82 : vector<64x1xf32> to vector<64x64xf32>
    %84 = arith.mulf %79, %83 : vector<64x64xf32>
    %cst_30 = arith.constant dense<0.000000e+00> : vector<64x8xf32>
    %85 = tpu.matmul %84, %72, %cst_30 {dimension_numbers = #tpu.dot_dimension_numbers<[1], [0], [0], [1], [0, 0, 1, 1], [], []>} : vector<64x64xf32>, vector<64x8xf32>, vector<64x8xf32> -> vector<64x8xf32>
    %86 = vector.extract_strided_slice %10 {offsets = [16, 0], sizes = [8, 32], strides = [1, 1]} : vector<32x32xf32> to vector<8x32xf32>
    %cst_31 = arith.constant dense<0.000000e+00> : vector<64x32xf32>
    %87 = tpu.matmul %85, %86, %cst_31 {dimension_numbers = #tpu.dot_dimension_numbers<[1], [0], [0], [1], [0, 0, 1, 1], [], []>} : vector<64x8xf32>, vector<8x32xf32>, vector<64x32xf32> -> vector<64x32xf32>
    %88 = arith.addf %67, %87 : vector<64x32xf32>
    %89 = vector.extract_strided_slice %16 {offsets = [0, 24], sizes = [64, 8], strides = [1, 1]} : vector<64x32xf32> to vector<64x8xf32>
    %cst_32 = arith.constant 0.353553385 : f32
    %90 = vector.broadcast %cst_32 : f32 to vector<64x8xf32>
    %91 = arith.mulf %89, %90 : vector<64x8xf32>
    %92 = vector.extract_strided_slice %20 {offsets = [0, 24], sizes = [64, 8], strides = [1, 1]} : vector<64x32xf32> to vector<64x8xf32>
    %93 = vector.extract_strided_slice %24 {offsets = [0, 24], sizes = [64, 8], strides = [1, 1]} : vector<64x32xf32> to vector<64x8xf32>
    %cst_33 = arith.constant dense<0.000000e+00> : vector<64x64xf32>
    %94 = tpu.matmul %91, %92, %cst_33 {dimension_numbers = #tpu.dot_dimension_numbers<[1], [1], [0], [0], [0, 0, 1, 0], [], []>} : vector<64x8xf32>, vector<64x8xf32>, vector<64x64xf32> -> vector<64x64xf32>
    %95 = arith.addf %94, %1 : vector<64x64xf32>
    %cst_34 = arith.constant dense<0xFF800000> : vector<64xf32>
    %96 = vector.multi_reduction <maximumf>, %95, %cst_34 [1] : vector<64x64xf32> to vector<64xf32>
    %97 = vector.shape_cast %96 : vector<64xf32> to vector<64x1xf32>
    %98 = vector.broadcast %97 : vector<64x1xf32> to vector<64x64xf32>
    %99 = arith.subf %95, %98 : vector<64x64xf32>
    %100 = math.exp %99 : vector<64x64xf32>
    %cst_35 = arith.constant dense<0.000000e+00> : vector<64xf32>
    %101 = vector.multi_reduction <add>, %100, %cst_35 [1] : vector<64x64xf32> to vector<64xf32>
    %102 = vector.shape_cast %101 : vector<64xf32> to vector<64x1xf32>
    %103 = tpu.reciprocal %102 {approx = true} : vector<64x1xf32> -> vector<64x1xf32>
    %104 = vector.broadcast %103 : vector<64x1xf32> to vector<64x64xf32>
    %105 = arith.mulf %100, %104 : vector<64x64xf32>
    %cst_36 = arith.constant dense<0.000000e+00> : vector<64x8xf32>
    %106 = tpu.matmul %105, %93, %cst_36 {dimension_numbers = #tpu.dot_dimension_numbers<[1], [0], [0], [1], [0, 0, 1, 1], [], []>} : vector<64x64xf32>, vector<64x8xf32>, vector<64x8xf32> -> vector<64x8xf32>
    %107 = vector.extract_strided_slice %10 {offsets = [24, 0], sizes = [8, 32], strides = [1, 1]} : vector<32x32xf32> to vector<8x32xf32>
    %cst_37 = arith.constant dense<0.000000e+00> : vector<64x32xf32>
    %108 = tpu.matmul %106, %107, %cst_37 {dimension_numbers = #tpu.dot_dimension_numbers<[1], [0], [0], [1], [0, 0, 1, 1], [], []>} : vector<64x8xf32>, vector<8x32xf32>, vector<64x32xf32> -> vector<64x32xf32>
    %109 = arith.addf %88, %108 : vector<64x32xf32>
    %110 = vector.extract_strided_slice %6 {offsets = [3, 0], sizes = [1, 32], strides = [1, 1]} : vector<10x32xf32> to vector<1x32xf32>
    %111 = vector.broadcast %110 : vector<1x32xf32> to vector<64x32xf32>
    %112 = arith.addf %109, %111 : vector<64x32xf32>
    %113 = arith.addf %0, %112 : vector<64x32xf32>
    %114 = vector.extract_strided_slice %6 {offsets = [6, 0], sizes = [1, 32], strides = [1, 1]} : vector<10x32xf32> to vector<1x32xf32>
    %115 = vector.extract_strided_slice %6 {offsets = [7, 0], sizes = [1, 32], strides = [1, 1]} : vector<10x32xf32> to vector<1x32xf32>
    %cst_38 = arith.constant dense<0.000000e+00> : vector<64xf32>
    %116 = vector.multi_reduction <add>, %113, %cst_38 [1] : vector<64x32xf32> to vector<64xf32>
    %117 = vector.shape_cast %116 : vector<64xf32> to vector<64x1xf32>
    %cst_39 = arith.constant 3.200000e+01 : f32
    %118 = vector.broadcast %cst_39 : f32 to vector<64x1xf32>
    %119 = arith.divf %117, %118 : vector<64x1xf32>
    %120 = vector.broadcast %119 : vector<64x1xf32> to vector<64x32xf32>
    %121 = arith.subf %113, %120 : vector<64x32xf32>
    %122 = arith.mulf %121, %121 : vector<64x32xf32>
    %cst_40 = arith.constant dense<0.000000e+00> : vector<64xf32>
    %123 = vector.multi_reduction <add>, %122, %cst_40 [1] : vector<64x32xf32> to vector<64xf32>
    %124 = vector.shape_cast %123 : vector<64xf32> to vector<64x1xf32>
    %cst_41 = arith.constant 3.200000e+01 : f32
    %125 = vector.broadcast %cst_41 : f32 to vector<64x1xf32>
    %126 = arith.divf %124, %125 : vector<64x1xf32>
    %cst_42 = arith.constant 9.99999974E-6 : f32
    %127 = vector.broadcast %cst_42 : f32 to vector<64x1xf32>
    %128 = arith.addf %126, %127 : vector<64x1xf32>
    %129 = math.rsqrt %128 : vector<64x1xf32>
    %130 = vector.broadcast %129 : vector<64x1xf32> to vector<64x32xf32>
    %131 = arith.mulf %121, %130 : vector<64x32xf32>
    %132 = vector.broadcast %114 : vector<1x32xf32> to vector<64x32xf32>
    %133 = arith.mulf %131, %132 : vector<64x32xf32>
    %134 = vector.broadcast %115 : vector<1x32xf32> to vector<64x32xf32>
    %135 = arith.addf %133, %134 : vector<64x32xf32>
    %cst_43 = arith.constant dense<0.000000e+00> : vector<64x32xf32>
    %136 = tpu.matmul %135, %11, %cst_43 {dimension_numbers = #tpu.dot_dimension_numbers<[1], [0], [0], [1], [0, 0, 1, 1], [], []>} : vector<64x32xf32>, vector<32x32xf32>, vector<64x32xf32> -> vector<64x32xf32>
    %137 = vector.extract_strided_slice %6 {offsets = [4, 0], sizes = [1, 32], strides = [1, 1]} : vector<10x32xf32> to vector<1x32xf32>
    %138 = vector.broadcast %137 : vector<1x32xf32> to vector<64x32xf32>
    %139 = arith.addf %136, %138 : vector<64x32xf32>
    %cst_44 = arith.constant 0.000000e+00 : f32
    %140 = vector.broadcast %cst_44 : f32 to vector<64x32xf32>
    %141 = arith.maximumf %139, %140 : vector<64x32xf32>
    %cst_45 = arith.constant dense<0.000000e+00> : vector<64x32xf32>
    %142 = tpu.matmul %141, %12, %cst_45 {dimension_numbers = #tpu.dot_dimension_numbers<[1], [0], [0], [1], [0, 0, 1, 1], [], []>} : vector<64x32xf32>, vector<32x32xf32>, vector<64x32xf32> -> vector<64x32xf32>
    %143 = vector.extract_strided_slice %6 {offsets = [5, 0], sizes = [1, 32], strides = [1, 1]} : vector<10x32xf32> to vector<1x32xf32>
    %144 = vector.broadcast %143 : vector<1x32xf32> to vector<64x32xf32>
    %145 = arith.addf %142, %144 : vector<64x32xf32>
    %146 = arith.addf %135, %145 : vector<64x32xf32>
    %147 = vector.extract_strided_slice %6 {offsets = [8, 0], sizes = [1, 32], strides = [1, 1]} : vector<10x32xf32> to vector<1x32xf32>
    %148 = vector.extract_strided_slice %6 {offsets = [9, 0], sizes = [1, 32], strides = [1, 1]} : vector<10x32xf32> to vector<1x32xf32>
    %cst_46 = arith.constant dense<0.000000e+00> : vector<64xf32>
    %149 = vector.multi_reduction <add>, %146, %cst_46 [1] : vector<64x32xf32> to vector<64xf32>
    %150 = vector.shape_cast %149 : vector<64xf32> to vector<64x1xf32>
    %cst_47 = arith.constant 3.200000e+01 : f32
    %151 = vector.broadcast %cst_47 : f32 to vector<64x1xf32>
    %152 = arith.divf %150, %151 : vector<64x1xf32>
    %153 = vector.broadcast %152 : vector<64x1xf32> to vector<64x32xf32>
    %154 = arith.subf %146, %153 : vector<64x32xf32>
    %155 = arith.mulf %154, %154 : vector<64x32xf32>
    %cst_48 = arith.constant dense<0.000000e+00> : vector<64xf32>
    %156 = vector.multi_reduction <add>, %155, %cst_48 [1] : vector<64x32xf32> to vector<64xf32>
    %157 = vector.shape_cast %156 : vector<64xf32> to vector<64x1xf32>
    %cst_49 = arith.constant 3.200000e+01 : f32
    %158 = vector.broadcast %cst_49 : f32 to vector<64x1xf32>
    %159 = arith.divf %157, %158 : vector<64x1xf32>
    %cst_50 = arith.constant 9.99999974E-6 : f32
    %160 = vector.broadcast %cst_50 : f32 to vector<64x1xf32>
    %161 = arith.addf %159, %160 : vector<64x1xf32>
    %162 = math.rsqrt %161 : vector<64x1xf32>
    %163 = vector.broadcast %162 : vector<64x1xf32> to vector<64x32xf32>
    %164 = arith.mulf %154, %163 : vector<64x32xf32>
    %165 = vector.broadcast %147 : vector<1x32xf32> to vector<64x32xf32>
    %166 = arith.mulf %164, %165 : vector<64x32xf32>
    %167 = vector.broadcast %148 : vector<1x32xf32> to vector<64x32xf32>
    %168 = arith.addf %166, %167 : vector<64x32xf32>
    %c1 = arith.constant 1 : index
    %c0_51 = arith.constant 0 : index
    %c0_52 = arith.constant 0 : index
    %169 = vector.load %arg2[%c1, %c0_51, %c0_52] : memref<2x32x192xf32, #tpu.memory_space<vmem>>, vector<1x32x192xf32>
    %170 = vector.shape_cast %169 : vector<1x32x192xf32> to vector<32x192xf32>
    %c1_53 = arith.constant 1 : index
    %c0_54 = arith.constant 0 : index
    %c0_55 = arith.constant 0 : index
    %171 = vector.load %arg3[%c1_53, %c0_54, %c0_55] : memref<2x10x32xf32, #tpu.memory_space<vmem>>, vector<1x10x32xf32>
    %172 = vector.shape_cast %171 : vector<1x10x32xf32> to vector<10x32xf32>
    %173 = vector.extract_strided_slice %170 {offsets = [0, 0], sizes = [32, 32], strides = [1, 1]} : vector<32x192xf32> to vector<32x32xf32>
    %174 = vector.extract_strided_slice %170 {offsets = [0, 32], sizes = [32, 32], strides = [1, 1]} : vector<32x192xf32> to vector<32x32xf32>
    %175 = vector.extract_strided_slice %170 {offsets = [0, 64], sizes = [32, 32], strides = [1, 1]} : vector<32x192xf32> to vector<32x32xf32>
    %176 = vector.extract_strided_slice %170 {offsets = [0, 96], sizes = [32, 32], strides = [1, 1]} : vector<32x192xf32> to vector<32x32xf32>
    %177 = vector.extract_strided_slice %170 {offsets = [0, 128], sizes = [32, 32], strides = [1, 1]} : vector<32x192xf32> to vector<32x32xf32>
    %178 = vector.extract_strided_slice %170 {offsets = [0, 160], sizes = [32, 32], strides = [1, 1]} : vector<32x192xf32> to vector<32x32xf32>
    %cst_56 = arith.constant dense<0.000000e+00> : vector<64x32xf32>
    %179 = tpu.matmul %168, %173, %cst_56 {dimension_numbers = #tpu.dot_dimension_numbers<[1], [0], [0], [1], [0, 0, 1, 1], [], []>} : vector<64x32xf32>, vector<32x32xf32>, vector<64x32xf32> -> vector<64x32xf32>
    %180 = vector.extract_strided_slice %172 {offsets = [0, 0], sizes = [1, 32], strides = [1, 1]} : vector<10x32xf32> to vector<1x32xf32>
    %181 = vector.broadcast %180 : vector<1x32xf32> to vector<64x32xf32>
    %182 = arith.addf %179, %181 : vector<64x32xf32>
    %cst_57 = arith.constant dense<0.000000e+00> : vector<64x32xf32>
    %183 = tpu.matmul %168, %174, %cst_57 {dimension_numbers = #tpu.dot_dimension_numbers<[1], [0], [0], [1], [0, 0, 1, 1], [], []>} : vector<64x32xf32>, vector<32x32xf32>, vector<64x32xf32> -> vector<64x32xf32>
    %184 = vector.extract_strided_slice %172 {offsets = [1, 0], sizes = [1, 32], strides = [1, 1]} : vector<10x32xf32> to vector<1x32xf32>
    %185 = vector.broadcast %184 : vector<1x32xf32> to vector<64x32xf32>
    %186 = arith.addf %183, %185 : vector<64x32xf32>
    %cst_58 = arith.constant dense<0.000000e+00> : vector<64x32xf32>
    %187 = tpu.matmul %168, %175, %cst_58 {dimension_numbers = #tpu.dot_dimension_numbers<[1], [0], [0], [1], [0, 0, 1, 1], [], []>} : vector<64x32xf32>, vector<32x32xf32>, vector<64x32xf32> -> vector<64x32xf32>
    %188 = vector.extract_strided_slice %172 {offsets = [2, 0], sizes = [1, 32], strides = [1, 1]} : vector<10x32xf32> to vector<1x32xf32>
    %189 = vector.broadcast %188 : vector<1x32xf32> to vector<64x32xf32>
    %190 = arith.addf %187, %189 : vector<64x32xf32>
    %cst_59 = arith.constant 0.000000e+00 : f32
    %191 = vector.broadcast %cst_59 : f32 to vector<64x32xf32>
    %192 = vector.extract_strided_slice %182 {offsets = [0, 0], sizes = [64, 8], strides = [1, 1]} : vector<64x32xf32> to vector<64x8xf32>
    %cst_60 = arith.constant 0.353553385 : f32
    %193 = vector.broadcast %cst_60 : f32 to vector<64x8xf32>
    %194 = arith.mulf %192, %193 : vector<64x8xf32>
    %195 = vector.extract_strided_slice %186 {offsets = [0, 0], sizes = [64, 8], strides = [1, 1]} : vector<64x32xf32> to vector<64x8xf32>
    %196 = vector.extract_strided_slice %190 {offsets = [0, 0], sizes = [64, 8], strides = [1, 1]} : vector<64x32xf32> to vector<64x8xf32>
    %cst_61 = arith.constant dense<0.000000e+00> : vector<64x64xf32>
    %197 = tpu.matmul %194, %195, %cst_61 {dimension_numbers = #tpu.dot_dimension_numbers<[1], [1], [0], [0], [0, 0, 1, 0], [], []>} : vector<64x8xf32>, vector<64x8xf32>, vector<64x64xf32> -> vector<64x64xf32>
    %198 = arith.addf %197, %1 : vector<64x64xf32>
    %cst_62 = arith.constant dense<0xFF800000> : vector<64xf32>
    %199 = vector.multi_reduction <maximumf>, %198, %cst_62 [1] : vector<64x64xf32> to vector<64xf32>
    %200 = vector.shape_cast %199 : vector<64xf32> to vector<64x1xf32>
    %201 = vector.broadcast %200 : vector<64x1xf32> to vector<64x64xf32>
    %202 = arith.subf %198, %201 : vector<64x64xf32>
    %203 = math.exp %202 : vector<64x64xf32>
    %cst_63 = arith.constant dense<0.000000e+00> : vector<64xf32>
    %204 = vector.multi_reduction <add>, %203, %cst_63 [1] : vector<64x64xf32> to vector<64xf32>
    %205 = vector.shape_cast %204 : vector<64xf32> to vector<64x1xf32>
    %206 = tpu.reciprocal %205 {approx = true} : vector<64x1xf32> -> vector<64x1xf32>
    %207 = vector.broadcast %206 : vector<64x1xf32> to vector<64x64xf32>
    %208 = arith.mulf %203, %207 : vector<64x64xf32>
    %cst_64 = arith.constant dense<0.000000e+00> : vector<64x8xf32>
    %209 = tpu.matmul %208, %196, %cst_64 {dimension_numbers = #tpu.dot_dimension_numbers<[1], [0], [0], [1], [0, 0, 1, 1], [], []>} : vector<64x64xf32>, vector<64x8xf32>, vector<64x8xf32> -> vector<64x8xf32>
    %210 = vector.extract_strided_slice %176 {offsets = [0, 0], sizes = [8, 32], strides = [1, 1]} : vector<32x32xf32> to vector<8x32xf32>
    %cst_65 = arith.constant dense<0.000000e+00> : vector<64x32xf32>
    %211 = tpu.matmul %209, %210, %cst_65 {dimension_numbers = #tpu.dot_dimension_numbers<[1], [0], [0], [1], [0, 0, 1, 1], [], []>} : vector<64x8xf32>, vector<8x32xf32>, vector<64x32xf32> -> vector<64x32xf32>
    %212 = arith.addf %191, %211 : vector<64x32xf32>
    %213 = vector.extract_strided_slice %182 {offsets = [0, 8], sizes = [64, 8], strides = [1, 1]} : vector<64x32xf32> to vector<64x8xf32>
    %cst_66 = arith.constant 0.353553385 : f32
    %214 = vector.broadcast %cst_66 : f32 to vector<64x8xf32>
    %215 = arith.mulf %213, %214 : vector<64x8xf32>
    %216 = vector.extract_strided_slice %186 {offsets = [0, 8], sizes = [64, 8], strides = [1, 1]} : vector<64x32xf32> to vector<64x8xf32>
    %217 = vector.extract_strided_slice %190 {offsets = [0, 8], sizes = [64, 8], strides = [1, 1]} : vector<64x32xf32> to vector<64x8xf32>
    %cst_67 = arith.constant dense<0.000000e+00> : vector<64x64xf32>
    %218 = tpu.matmul %215, %216, %cst_67 {dimension_numbers = #tpu.dot_dimension_numbers<[1], [1], [0], [0], [0, 0, 1, 0], [], []>} : vector<64x8xf32>, vector<64x8xf32>, vector<64x64xf32> -> vector<64x64xf32>
    %219 = arith.addf %218, %1 : vector<64x64xf32>
    %cst_68 = arith.constant dense<0xFF800000> : vector<64xf32>
    %220 = vector.multi_reduction <maximumf>, %219, %cst_68 [1] : vector<64x64xf32> to vector<64xf32>
    %221 = vector.shape_cast %220 : vector<64xf32> to vector<64x1xf32>
    %222 = vector.broadcast %221 : vector<64x1xf32> to vector<64x64xf32>
    %223 = arith.subf %219, %222 : vector<64x64xf32>
    %224 = math.exp %223 : vector<64x64xf32>
    %cst_69 = arith.constant dense<0.000000e+00> : vector<64xf32>
    %225 = vector.multi_reduction <add>, %224, %cst_69 [1] : vector<64x64xf32> to vector<64xf32>
    %226 = vector.shape_cast %225 : vector<64xf32> to vector<64x1xf32>
    %227 = tpu.reciprocal %226 {approx = true} : vector<64x1xf32> -> vector<64x1xf32>
    %228 = vector.broadcast %227 : vector<64x1xf32> to vector<64x64xf32>
    %229 = arith.mulf %224, %228 : vector<64x64xf32>
    %cst_70 = arith.constant dense<0.000000e+00> : vector<64x8xf32>
    %230 = tpu.matmul %229, %217, %cst_70 {dimension_numbers = #tpu.dot_dimension_numbers<[1], [0], [0], [1], [0, 0, 1, 1], [], []>} : vector<64x64xf32>, vector<64x8xf32>, vector<64x8xf32> -> vector<64x8xf32>
    %231 = vector.extract_strided_slice %176 {offsets = [8, 0], sizes = [8, 32], strides = [1, 1]} : vector<32x32xf32> to vector<8x32xf32>
    %cst_71 = arith.constant dense<0.000000e+00> : vector<64x32xf32>
    %232 = tpu.matmul %230, %231, %cst_71 {dimension_numbers = #tpu.dot_dimension_numbers<[1], [0], [0], [1], [0, 0, 1, 1], [], []>} : vector<64x8xf32>, vector<8x32xf32>, vector<64x32xf32> -> vector<64x32xf32>
    %233 = arith.addf %212, %232 : vector<64x32xf32>
    %234 = vector.extract_strided_slice %182 {offsets = [0, 16], sizes = [64, 8], strides = [1, 1]} : vector<64x32xf32> to vector<64x8xf32>
    %cst_72 = arith.constant 0.353553385 : f32
    %235 = vector.broadcast %cst_72 : f32 to vector<64x8xf32>
    %236 = arith.mulf %234, %235 : vector<64x8xf32>
    %237 = vector.extract_strided_slice %186 {offsets = [0, 16], sizes = [64, 8], strides = [1, 1]} : vector<64x32xf32> to vector<64x8xf32>
    %238 = vector.extract_strided_slice %190 {offsets = [0, 16], sizes = [64, 8], strides = [1, 1]} : vector<64x32xf32> to vector<64x8xf32>
    %cst_73 = arith.constant dense<0.000000e+00> : vector<64x64xf32>
    %239 = tpu.matmul %236, %237, %cst_73 {dimension_numbers = #tpu.dot_dimension_numbers<[1], [1], [0], [0], [0, 0, 1, 0], [], []>} : vector<64x8xf32>, vector<64x8xf32>, vector<64x64xf32> -> vector<64x64xf32>
    %240 = arith.addf %239, %1 : vector<64x64xf32>
    %cst_74 = arith.constant dense<0xFF800000> : vector<64xf32>
    %241 = vector.multi_reduction <maximumf>, %240, %cst_74 [1] : vector<64x64xf32> to vector<64xf32>
    %242 = vector.shape_cast %241 : vector<64xf32> to vector<64x1xf32>
    %243 = vector.broadcast %242 : vector<64x1xf32> to vector<64x64xf32>
    %244 = arith.subf %240, %243 : vector<64x64xf32>
    %245 = math.exp %244 : vector<64x64xf32>
    %cst_75 = arith.constant dense<0.000000e+00> : vector<64xf32>
    %246 = vector.multi_reduction <add>, %245, %cst_75 [1] : vector<64x64xf32> to vector<64xf32>
    %247 = vector.shape_cast %246 : vector<64xf32> to vector<64x1xf32>
    %248 = tpu.reciprocal %247 {approx = true} : vector<64x1xf32> -> vector<64x1xf32>
    %249 = vector.broadcast %248 : vector<64x1xf32> to vector<64x64xf32>
    %250 = arith.mulf %245, %249 : vector<64x64xf32>
    %cst_76 = arith.constant dense<0.000000e+00> : vector<64x8xf32>
    %251 = tpu.matmul %250, %238, %cst_76 {dimension_numbers = #tpu.dot_dimension_numbers<[1], [0], [0], [1], [0, 0, 1, 1], [], []>} : vector<64x64xf32>, vector<64x8xf32>, vector<64x8xf32> -> vector<64x8xf32>
    %252 = vector.extract_strided_slice %176 {offsets = [16, 0], sizes = [8, 32], strides = [1, 1]} : vector<32x32xf32> to vector<8x32xf32>
    %cst_77 = arith.constant dense<0.000000e+00> : vector<64x32xf32>
    %253 = tpu.matmul %251, %252, %cst_77 {dimension_numbers = #tpu.dot_dimension_numbers<[1], [0], [0], [1], [0, 0, 1, 1], [], []>} : vector<64x8xf32>, vector<8x32xf32>, vector<64x32xf32> -> vector<64x32xf32>
    %254 = arith.addf %233, %253 : vector<64x32xf32>
    %255 = vector.extract_strided_slice %182 {offsets = [0, 24], sizes = [64, 8], strides = [1, 1]} : vector<64x32xf32> to vector<64x8xf32>
    %cst_78 = arith.constant 0.353553385 : f32
    %256 = vector.broadcast %cst_78 : f32 to vector<64x8xf32>
    %257 = arith.mulf %255, %256 : vector<64x8xf32>
    %258 = vector.extract_strided_slice %186 {offsets = [0, 24], sizes = [64, 8], strides = [1, 1]} : vector<64x32xf32> to vector<64x8xf32>
    %259 = vector.extract_strided_slice %190 {offsets = [0, 24], sizes = [64, 8], strides = [1, 1]} : vector<64x32xf32> to vector<64x8xf32>
    %cst_79 = arith.constant dense<0.000000e+00> : vector<64x64xf32>
    %260 = tpu.matmul %257, %258, %cst_79 {dimension_numbers = #tpu.dot_dimension_numbers<[1], [1], [0], [0], [0, 0, 1, 0], [], []>} : vector<64x8xf32>, vector<64x8xf32>, vector<64x64xf32> -> vector<64x64xf32>
    %261 = arith.addf %260, %1 : vector<64x64xf32>
    %cst_80 = arith.constant dense<0xFF800000> : vector<64xf32>
    %262 = vector.multi_reduction <maximumf>, %261, %cst_80 [1] : vector<64x64xf32> to vector<64xf32>
    %263 = vector.shape_cast %262 : vector<64xf32> to vector<64x1xf32>
    %264 = vector.broadcast %263 : vector<64x1xf32> to vector<64x64xf32>
    %265 = arith.subf %261, %264 : vector<64x64xf32>
    %266 = math.exp %265 : vector<64x64xf32>
    %cst_81 = arith.constant dense<0.000000e+00> : vector<64xf32>
    %267 = vector.multi_reduction <add>, %266, %cst_81 [1] : vector<64x64xf32> to vector<64xf32>
    %268 = vector.shape_cast %267 : vector<64xf32> to vector<64x1xf32>
    %269 = tpu.reciprocal %268 {approx = true} : vector<64x1xf32> -> vector<64x1xf32>
    %270 = vector.broadcast %269 : vector<64x1xf32> to vector<64x64xf32>
    %271 = arith.mulf %266, %270 : vector<64x64xf32>
    %cst_82 = arith.constant dense<0.000000e+00> : vector<64x8xf32>
    %272 = tpu.matmul %271, %259, %cst_82 {dimension_numbers = #tpu.dot_dimension_numbers<[1], [0], [0], [1], [0, 0, 1, 1], [], []>} : vector<64x64xf32>, vector<64x8xf32>, vector<64x8xf32> -> vector<64x8xf32>
    %273 = vector.extract_strided_slice %176 {offsets = [24, 0], sizes = [8, 32], strides = [1, 1]} : vector<32x32xf32> to vector<8x32xf32>
    %cst_83 = arith.constant dense<0.000000e+00> : vector<64x32xf32>
    %274 = tpu.matmul %272, %273, %cst_83 {dimension_numbers = #tpu.dot_dimension_numbers<[1], [0], [0], [1], [0, 0, 1, 1], [], []>} : vector<64x8xf32>, vector<8x32xf32>, vector<64x32xf32> -> vector<64x32xf32>
    %275 = arith.addf %254, %274 : vector<64x32xf32>
    %276 = vector.extract_strided_slice %172 {offsets = [3, 0], sizes = [1, 32], strides = [1, 1]} : vector<10x32xf32> to vector<1x32xf32>
    %277 = vector.broadcast %276 : vector<1x32xf32> to vector<64x32xf32>
    %278 = arith.addf %275, %277 : vector<64x32xf32>
    %279 = arith.addf %168, %278 : vector<64x32xf32>
    %280 = vector.extract_strided_slice %172 {offsets = [6, 0], sizes = [1, 32], strides = [1, 1]} : vector<10x32xf32> to vector<1x32xf32>
    %281 = vector.extract_strided_slice %172 {offsets = [7, 0], sizes = [1, 32], strides = [1, 1]} : vector<10x32xf32> to vector<1x32xf32>
    %cst_84 = arith.constant dense<0.000000e+00> : vector<64xf32>
    %282 = vector.multi_reduction <add>, %279, %cst_84 [1] : vector<64x32xf32> to vector<64xf32>
    %283 = vector.shape_cast %282 : vector<64xf32> to vector<64x1xf32>
    %cst_85 = arith.constant 3.200000e+01 : f32
    %284 = vector.broadcast %cst_85 : f32 to vector<64x1xf32>
    %285 = arith.divf %283, %284 : vector<64x1xf32>
    %286 = vector.broadcast %285 : vector<64x1xf32> to vector<64x32xf32>
    %287 = arith.subf %279, %286 : vector<64x32xf32>
    %288 = arith.mulf %287, %287 : vector<64x32xf32>
    %cst_86 = arith.constant dense<0.000000e+00> : vector<64xf32>
    %289 = vector.multi_reduction <add>, %288, %cst_86 [1] : vector<64x32xf32> to vector<64xf32>
    %290 = vector.shape_cast %289 : vector<64xf32> to vector<64x1xf32>
    %cst_87 = arith.constant 3.200000e+01 : f32
    %291 = vector.broadcast %cst_87 : f32 to vector<64x1xf32>
    %292 = arith.divf %290, %291 : vector<64x1xf32>
    %cst_88 = arith.constant 9.99999974E-6 : f32
    %293 = vector.broadcast %cst_88 : f32 to vector<64x1xf32>
    %294 = arith.addf %292, %293 : vector<64x1xf32>
    %295 = math.rsqrt %294 : vector<64x1xf32>
    %296 = vector.broadcast %295 : vector<64x1xf32> to vector<64x32xf32>
    %297 = arith.mulf %287, %296 : vector<64x32xf32>
    %298 = vector.broadcast %280 : vector<1x32xf32> to vector<64x32xf32>
    %299 = arith.mulf %297, %298 : vector<64x32xf32>
    %300 = vector.broadcast %281 : vector<1x32xf32> to vector<64x32xf32>
    %301 = arith.addf %299, %300 : vector<64x32xf32>
    %cst_89 = arith.constant dense<0.000000e+00> : vector<64x32xf32>
    %302 = tpu.matmul %301, %177, %cst_89 {dimension_numbers = #tpu.dot_dimension_numbers<[1], [0], [0], [1], [0, 0, 1, 1], [], []>} : vector<64x32xf32>, vector<32x32xf32>, vector<64x32xf32> -> vector<64x32xf32>
    %303 = vector.extract_strided_slice %172 {offsets = [4, 0], sizes = [1, 32], strides = [1, 1]} : vector<10x32xf32> to vector<1x32xf32>
    %304 = vector.broadcast %303 : vector<1x32xf32> to vector<64x32xf32>
    %305 = arith.addf %302, %304 : vector<64x32xf32>
    %cst_90 = arith.constant 0.000000e+00 : f32
    %306 = vector.broadcast %cst_90 : f32 to vector<64x32xf32>
    %307 = arith.maximumf %305, %306 : vector<64x32xf32>
    %cst_91 = arith.constant dense<0.000000e+00> : vector<64x32xf32>
    %308 = tpu.matmul %307, %178, %cst_91 {dimension_numbers = #tpu.dot_dimension_numbers<[1], [0], [0], [1], [0, 0, 1, 1], [], []>} : vector<64x32xf32>, vector<32x32xf32>, vector<64x32xf32> -> vector<64x32xf32>
    %309 = vector.extract_strided_slice %172 {offsets = [5, 0], sizes = [1, 32], strides = [1, 1]} : vector<10x32xf32> to vector<1x32xf32>
    %310 = vector.broadcast %309 : vector<1x32xf32> to vector<64x32xf32>
    %311 = arith.addf %308, %310 : vector<64x32xf32>
    %312 = arith.addf %301, %311 : vector<64x32xf32>
    %313 = vector.extract_strided_slice %172 {offsets = [8, 0], sizes = [1, 32], strides = [1, 1]} : vector<10x32xf32> to vector<1x32xf32>
    %314 = vector.extract_strided_slice %172 {offsets = [9, 0], sizes = [1, 32], strides = [1, 1]} : vector<10x32xf32> to vector<1x32xf32>
    %cst_92 = arith.constant dense<0.000000e+00> : vector<64xf32>
    %315 = vector.multi_reduction <add>, %312, %cst_92 [1] : vector<64x32xf32> to vector<64xf32>
    %316 = vector.shape_cast %315 : vector<64xf32> to vector<64x1xf32>
    %cst_93 = arith.constant 3.200000e+01 : f32
    %317 = vector.broadcast %cst_93 : f32 to vector<64x1xf32>
    %318 = arith.divf %316, %317 : vector<64x1xf32>
    %319 = vector.broadcast %318 : vector<64x1xf32> to vector<64x32xf32>
    %320 = arith.subf %312, %319 : vector<64x32xf32>
    %321 = arith.mulf %320, %320 : vector<64x32xf32>
    %cst_94 = arith.constant dense<0.000000e+00> : vector<64xf32>
    %322 = vector.multi_reduction <add>, %321, %cst_94 [1] : vector<64x32xf32> to vector<64xf32>
    %323 = vector.shape_cast %322 : vector<64xf32> to vector<64x1xf32>
    %cst_95 = arith.constant 3.200000e+01 : f32
    %324 = vector.broadcast %cst_95 : f32 to vector<64x1xf32>
    %325 = arith.divf %323, %324 : vector<64x1xf32>
    %cst_96 = arith.constant 9.99999974E-6 : f32
    %326 = vector.broadcast %cst_96 : f32 to vector<64x1xf32>
    %327 = arith.addf %325, %326 : vector<64x1xf32>
    %328 = math.rsqrt %327 : vector<64x1xf32>
    %329 = vector.broadcast %328 : vector<64x1xf32> to vector<64x32xf32>
    %330 = arith.mulf %320, %329 : vector<64x32xf32>
    %331 = vector.broadcast %313 : vector<1x32xf32> to vector<64x32xf32>
    %332 = arith.mulf %330, %331 : vector<64x32xf32>
    %333 = vector.broadcast %314 : vector<1x32xf32> to vector<64x32xf32>
    %334 = arith.addf %332, %333 : vector<64x32xf32>
    %335 = vector.extract_strided_slice %2 {offsets = [0, 0], sizes = [1, 32], strides = [1, 1]} : vector<4x32xf32> to vector<1x32xf32>
    %336 = vector.extract_strided_slice %2 {offsets = [1, 0], sizes = [1, 32], strides = [1, 1]} : vector<4x32xf32> to vector<1x32xf32>
    %cst_97 = arith.constant dense<0.000000e+00> : vector<64xf32>
    %337 = vector.multi_reduction <add>, %334, %cst_97 [1] : vector<64x32xf32> to vector<64xf32>
    %338 = vector.shape_cast %337 : vector<64xf32> to vector<64x1xf32>
    %cst_98 = arith.constant 3.200000e+01 : f32
    %339 = vector.broadcast %cst_98 : f32 to vector<64x1xf32>
    %340 = arith.divf %338, %339 : vector<64x1xf32>
    %341 = vector.broadcast %340 : vector<64x1xf32> to vector<64x32xf32>
    %342 = arith.subf %334, %341 : vector<64x32xf32>
    %343 = arith.mulf %342, %342 : vector<64x32xf32>
    %cst_99 = arith.constant dense<0.000000e+00> : vector<64xf32>
    %344 = vector.multi_reduction <add>, %343, %cst_99 [1] : vector<64x32xf32> to vector<64xf32>
    %345 = vector.shape_cast %344 : vector<64xf32> to vector<64x1xf32>
    %cst_100 = arith.constant 3.200000e+01 : f32
    %346 = vector.broadcast %cst_100 : f32 to vector<64x1xf32>
    %347 = arith.divf %345, %346 : vector<64x1xf32>
    %cst_101 = arith.constant 9.99999974E-6 : f32
    %348 = vector.broadcast %cst_101 : f32 to vector<64x1xf32>
    %349 = arith.addf %347, %348 : vector<64x1xf32>
    %350 = math.rsqrt %349 : vector<64x1xf32>
    %351 = vector.broadcast %350 : vector<64x1xf32> to vector<64x32xf32>
    %352 = arith.mulf %342, %351 : vector<64x32xf32>
    %353 = vector.broadcast %335 : vector<1x32xf32> to vector<64x32xf32>
    %354 = arith.mulf %352, %353 : vector<64x32xf32>
    %355 = vector.broadcast %336 : vector<1x32xf32> to vector<64x32xf32>
    %356 = arith.addf %354, %355 : vector<64x32xf32>
    %357 = vector.extract_strided_slice %356 {offsets = [0, 0], sizes = [4, 32], strides = [1, 1]} : vector<64x32xf32> to vector<4x32xf32>
    %c0_102 = arith.constant 0 : index
    %c0_103 = arith.constant 0 : index
    %c0_104 = arith.constant 0 : index
    %358 = vector.load %arg4[%c0_102, %c0_103, %c0_104] : memref<2x32x192xf32, #tpu.memory_space<vmem>>, vector<1x32x192xf32>
    %359 = vector.shape_cast %358 : vector<1x32x192xf32> to vector<32x192xf32>
    %c0_105 = arith.constant 0 : index
    %c0_106 = arith.constant 0 : index
    %c0_107 = arith.constant 0 : index
    %360 = vector.load %arg5[%c0_105, %c0_106, %c0_107] : memref<2x10x32xf32, #tpu.memory_space<vmem>>, vector<1x10x32xf32>
    %361 = vector.shape_cast %360 : vector<1x10x32xf32> to vector<10x32xf32>
    %362 = vector.extract_strided_slice %359 {offsets = [0, 0], sizes = [32, 32], strides = [1, 1]} : vector<32x192xf32> to vector<32x32xf32>
    %363 = vector.extract_strided_slice %359 {offsets = [0, 32], sizes = [32, 32], strides = [1, 1]} : vector<32x192xf32> to vector<32x32xf32>
    %364 = vector.extract_strided_slice %359 {offsets = [0, 64], sizes = [32, 32], strides = [1, 1]} : vector<32x192xf32> to vector<32x32xf32>
    %365 = vector.extract_strided_slice %359 {offsets = [0, 96], sizes = [32, 32], strides = [1, 1]} : vector<32x192xf32> to vector<32x32xf32>
    %366 = vector.extract_strided_slice %359 {offsets = [0, 128], sizes = [32, 32], strides = [1, 1]} : vector<32x192xf32> to vector<32x32xf32>
    %367 = vector.extract_strided_slice %359 {offsets = [0, 160], sizes = [32, 32], strides = [1, 1]} : vector<32x192xf32> to vector<32x32xf32>
    %cst_108 = arith.constant dense<0.000000e+00> : vector<4x32xf32>
    %368 = tpu.matmul %357, %362, %cst_108 {dimension_numbers = #tpu.dot_dimension_numbers<[1], [0], [0], [1], [0, 0, 1, 1], [], []>} : vector<4x32xf32>, vector<32x32xf32>, vector<4x32xf32> -> vector<4x32xf32>
    %369 = vector.extract_strided_slice %361 {offsets = [0, 0], sizes = [1, 32], strides = [1, 1]} : vector<10x32xf32> to vector<1x32xf32>
    %370 = vector.broadcast %369 : vector<1x32xf32> to vector<4x32xf32>
    %371 = arith.addf %368, %370 : vector<4x32xf32>
    %cst_109 = arith.constant dense<0.000000e+00> : vector<4x32xf32>
    %372 = tpu.matmul %357, %363, %cst_109 {dimension_numbers = #tpu.dot_dimension_numbers<[1], [0], [0], [1], [0, 0, 1, 1], [], []>} : vector<4x32xf32>, vector<32x32xf32>, vector<4x32xf32> -> vector<4x32xf32>
    %373 = vector.extract_strided_slice %361 {offsets = [1, 0], sizes = [1, 32], strides = [1, 1]} : vector<10x32xf32> to vector<1x32xf32>
    %374 = vector.broadcast %373 : vector<1x32xf32> to vector<4x32xf32>
    %375 = arith.addf %372, %374 : vector<4x32xf32>
    %cst_110 = arith.constant dense<0.000000e+00> : vector<4x32xf32>
    %376 = tpu.matmul %357, %364, %cst_110 {dimension_numbers = #tpu.dot_dimension_numbers<[1], [0], [0], [1], [0, 0, 1, 1], [], []>} : vector<4x32xf32>, vector<32x32xf32>, vector<4x32xf32> -> vector<4x32xf32>
    %377 = vector.extract_strided_slice %361 {offsets = [2, 0], sizes = [1, 32], strides = [1, 1]} : vector<10x32xf32> to vector<1x32xf32>
    %378 = vector.broadcast %377 : vector<1x32xf32> to vector<4x32xf32>
    %379 = arith.addf %376, %378 : vector<4x32xf32>
    %cst_111 = arith.constant 0.000000e+00 : f32
    %380 = vector.broadcast %cst_111 : f32 to vector<4x32xf32>
    %381 = vector.extract_strided_slice %371 {offsets = [0, 0], sizes = [4, 8], strides = [1, 1]} : vector<4x32xf32> to vector<4x8xf32>
    %cst_112 = arith.constant 0.353553385 : f32
    %382 = vector.broadcast %cst_112 : f32 to vector<4x8xf32>
    %383 = arith.mulf %381, %382 : vector<4x8xf32>
    %384 = vector.extract_strided_slice %375 {offsets = [0, 0], sizes = [4, 8], strides = [1, 1]} : vector<4x32xf32> to vector<4x8xf32>
    %385 = vector.extract_strided_slice %379 {offsets = [0, 0], sizes = [4, 8], strides = [1, 1]} : vector<4x32xf32> to vector<4x8xf32>
    %cst_113 = arith.constant dense<0.000000e+00> : vector<4x4xf32>
    %386 = tpu.matmul %383, %384, %cst_113 {dimension_numbers = #tpu.dot_dimension_numbers<[1], [1], [0], [0], [0, 0, 1, 0], [], []>} : vector<4x8xf32>, vector<4x8xf32>, vector<4x4xf32> -> vector<4x4xf32>
    %cst_114 = arith.constant dense<0xFF800000> : vector<4xf32>
    %387 = vector.multi_reduction <maximumf>, %386, %cst_114 [1] : vector<4x4xf32> to vector<4xf32>
    %388 = vector.shape_cast %387 : vector<4xf32> to vector<4x1xf32>
    %389 = vector.broadcast %388 : vector<4x1xf32> to vector<4x4xf32>
    %390 = arith.subf %386, %389 : vector<4x4xf32>
    %391 = math.exp %390 : vector<4x4xf32>
    %cst_115 = arith.constant dense<0.000000e+00> : vector<4xf32>
    %392 = vector.multi_reduction <add>, %391, %cst_115 [1] : vector<4x4xf32> to vector<4xf32>
    %393 = vector.shape_cast %392 : vector<4xf32> to vector<4x1xf32>
    %394 = tpu.reciprocal %393 {approx = true} : vector<4x1xf32> -> vector<4x1xf32>
    %395 = vector.broadcast %394 : vector<4x1xf32> to vector<4x4xf32>
    %396 = arith.mulf %391, %395 : vector<4x4xf32>
    %cst_116 = arith.constant dense<0.000000e+00> : vector<4x8xf32>
    %397 = tpu.matmul %396, %385, %cst_116 {dimension_numbers = #tpu.dot_dimension_numbers<[1], [0], [0], [1], [0, 0, 1, 1], [], []>} : vector<4x4xf32>, vector<4x8xf32>, vector<4x8xf32> -> vector<4x8xf32>
    %398 = vector.extract_strided_slice %365 {offsets = [0, 0], sizes = [8, 32], strides = [1, 1]} : vector<32x32xf32> to vector<8x32xf32>
    %cst_117 = arith.constant dense<0.000000e+00> : vector<4x32xf32>
    %399 = tpu.matmul %397, %398, %cst_117 {dimension_numbers = #tpu.dot_dimension_numbers<[1], [0], [0], [1], [0, 0, 1, 1], [], []>} : vector<4x8xf32>, vector<8x32xf32>, vector<4x32xf32> -> vector<4x32xf32>
    %400 = arith.addf %380, %399 : vector<4x32xf32>
    %401 = vector.extract_strided_slice %371 {offsets = [0, 8], sizes = [4, 8], strides = [1, 1]} : vector<4x32xf32> to vector<4x8xf32>
    %cst_118 = arith.constant 0.353553385 : f32
    %402 = vector.broadcast %cst_118 : f32 to vector<4x8xf32>
    %403 = arith.mulf %401, %402 : vector<4x8xf32>
    %404 = vector.extract_strided_slice %375 {offsets = [0, 8], sizes = [4, 8], strides = [1, 1]} : vector<4x32xf32> to vector<4x8xf32>
    %405 = vector.extract_strided_slice %379 {offsets = [0, 8], sizes = [4, 8], strides = [1, 1]} : vector<4x32xf32> to vector<4x8xf32>
    %cst_119 = arith.constant dense<0.000000e+00> : vector<4x4xf32>
    %406 = tpu.matmul %403, %404, %cst_119 {dimension_numbers = #tpu.dot_dimension_numbers<[1], [1], [0], [0], [0, 0, 1, 0], [], []>} : vector<4x8xf32>, vector<4x8xf32>, vector<4x4xf32> -> vector<4x4xf32>
    %cst_120 = arith.constant dense<0xFF800000> : vector<4xf32>
    %407 = vector.multi_reduction <maximumf>, %406, %cst_120 [1] : vector<4x4xf32> to vector<4xf32>
    %408 = vector.shape_cast %407 : vector<4xf32> to vector<4x1xf32>
    %409 = vector.broadcast %408 : vector<4x1xf32> to vector<4x4xf32>
    %410 = arith.subf %406, %409 : vector<4x4xf32>
    %411 = math.exp %410 : vector<4x4xf32>
    %cst_121 = arith.constant dense<0.000000e+00> : vector<4xf32>
    %412 = vector.multi_reduction <add>, %411, %cst_121 [1] : vector<4x4xf32> to vector<4xf32>
    %413 = vector.shape_cast %412 : vector<4xf32> to vector<4x1xf32>
    %414 = tpu.reciprocal %413 {approx = true} : vector<4x1xf32> -> vector<4x1xf32>
    %415 = vector.broadcast %414 : vector<4x1xf32> to vector<4x4xf32>
    %416 = arith.mulf %411, %415 : vector<4x4xf32>
    %cst_122 = arith.constant dense<0.000000e+00> : vector<4x8xf32>
    %417 = tpu.matmul %416, %405, %cst_122 {dimension_numbers = #tpu.dot_dimension_numbers<[1], [0], [0], [1], [0, 0, 1, 1], [], []>} : vector<4x4xf32>, vector<4x8xf32>, vector<4x8xf32> -> vector<4x8xf32>
    %418 = vector.extract_strided_slice %365 {offsets = [8, 0], sizes = [8, 32], strides = [1, 1]} : vector<32x32xf32> to vector<8x32xf32>
    %cst_123 = arith.constant dense<0.000000e+00> : vector<4x32xf32>
    %419 = tpu.matmul %417, %418, %cst_123 {dimension_numbers = #tpu.dot_dimension_numbers<[1], [0], [0], [1], [0, 0, 1, 1], [], []>} : vector<4x8xf32>, vector<8x32xf32>, vector<4x32xf32> -> vector<4x32xf32>
    %420 = arith.addf %400, %419 : vector<4x32xf32>
    %421 = vector.extract_strided_slice %371 {offsets = [0, 16], sizes = [4, 8], strides = [1, 1]} : vector<4x32xf32> to vector<4x8xf32>
    %cst_124 = arith.constant 0.353553385 : f32
    %422 = vector.broadcast %cst_124 : f32 to vector<4x8xf32>
    %423 = arith.mulf %421, %422 : vector<4x8xf32>
    %424 = vector.extract_strided_slice %375 {offsets = [0, 16], sizes = [4, 8], strides = [1, 1]} : vector<4x32xf32> to vector<4x8xf32>
    %425 = vector.extract_strided_slice %379 {offsets = [0, 16], sizes = [4, 8], strides = [1, 1]} : vector<4x32xf32> to vector<4x8xf32>
    %cst_125 = arith.constant dense<0.000000e+00> : vector<4x4xf32>
    %426 = tpu.matmul %423, %424, %cst_125 {dimension_numbers = #tpu.dot_dimension_numbers<[1], [1], [0], [0], [0, 0, 1, 0], [], []>} : vector<4x8xf32>, vector<4x8xf32>, vector<4x4xf32> -> vector<4x4xf32>
    %cst_126 = arith.constant dense<0xFF800000> : vector<4xf32>
    %427 = vector.multi_reduction <maximumf>, %426, %cst_126 [1] : vector<4x4xf32> to vector<4xf32>
    %428 = vector.shape_cast %427 : vector<4xf32> to vector<4x1xf32>
    %429 = vector.broadcast %428 : vector<4x1xf32> to vector<4x4xf32>
    %430 = arith.subf %426, %429 : vector<4x4xf32>
    %431 = math.exp %430 : vector<4x4xf32>
    %cst_127 = arith.constant dense<0.000000e+00> : vector<4xf32>
    %432 = vector.multi_reduction <add>, %431, %cst_127 [1] : vector<4x4xf32> to vector<4xf32>
    %433 = vector.shape_cast %432 : vector<4xf32> to vector<4x1xf32>
    %434 = tpu.reciprocal %433 {approx = true} : vector<4x1xf32> -> vector<4x1xf32>
    %435 = vector.broadcast %434 : vector<4x1xf32> to vector<4x4xf32>
    %436 = arith.mulf %431, %435 : vector<4x4xf32>
    %cst_128 = arith.constant dense<0.000000e+00> : vector<4x8xf32>
    %437 = tpu.matmul %436, %425, %cst_128 {dimension_numbers = #tpu.dot_dimension_numbers<[1], [0], [0], [1], [0, 0, 1, 1], [], []>} : vector<4x4xf32>, vector<4x8xf32>, vector<4x8xf32> -> vector<4x8xf32>
    %438 = vector.extract_strided_slice %365 {offsets = [16, 0], sizes = [8, 32], strides = [1, 1]} : vector<32x32xf32> to vector<8x32xf32>
    %cst_129 = arith.constant dense<0.000000e+00> : vector<4x32xf32>
    %439 = tpu.matmul %437, %438, %cst_129 {dimension_numbers = #tpu.dot_dimension_numbers<[1], [0], [0], [1], [0, 0, 1, 1], [], []>} : vector<4x8xf32>, vector<8x32xf32>, vector<4x32xf32> -> vector<4x32xf32>
    %440 = arith.addf %420, %439 : vector<4x32xf32>
    %441 = vector.extract_strided_slice %371 {offsets = [0, 24], sizes = [4, 8], strides = [1, 1]} : vector<4x32xf32> to vector<4x8xf32>
    %cst_130 = arith.constant 0.353553385 : f32
    %442 = vector.broadcast %cst_130 : f32 to vector<4x8xf32>
    %443 = arith.mulf %441, %442 : vector<4x8xf32>
    %444 = vector.extract_strided_slice %375 {offsets = [0, 24], sizes = [4, 8], strides = [1, 1]} : vector<4x32xf32> to vector<4x8xf32>
    %445 = vector.extract_strided_slice %379 {offsets = [0, 24], sizes = [4, 8], strides = [1, 1]} : vector<4x32xf32> to vector<4x8xf32>
    %cst_131 = arith.constant dense<0.000000e+00> : vector<4x4xf32>
    %446 = tpu.matmul %443, %444, %cst_131 {dimension_numbers = #tpu.dot_dimension_numbers<[1], [1], [0], [0], [0, 0, 1, 0], [], []>} : vector<4x8xf32>, vector<4x8xf32>, vector<4x4xf32> -> vector<4x4xf32>
    %cst_132 = arith.constant dense<0xFF800000> : vector<4xf32>
    %447 = vector.multi_reduction <maximumf>, %446, %cst_132 [1] : vector<4x4xf32> to vector<4xf32>
    %448 = vector.shape_cast %447 : vector<4xf32> to vector<4x1xf32>
    %449 = vector.broadcast %448 : vector<4x1xf32> to vector<4x4xf32>
    %450 = arith.subf %446, %449 : vector<4x4xf32>
    %451 = math.exp %450 : vector<4x4xf32>
    %cst_133 = arith.constant dense<0.000000e+00> : vector<4xf32>
    %452 = vector.multi_reduction <add>, %451, %cst_133 [1] : vector<4x4xf32> to vector<4xf32>
    %453 = vector.shape_cast %452 : vector<4xf32> to vector<4x1xf32>
    %454 = tpu.reciprocal %453 {approx = true} : vector<4x1xf32> -> vector<4x1xf32>
    %455 = vector.broadcast %454 : vector<4x1xf32> to vector<4x4xf32>
    %456 = arith.mulf %451, %455 : vector<4x4xf32>
    %cst_134 = arith.constant dense<0.000000e+00> : vector<4x8xf32>
    %457 = tpu.matmul %456, %445, %cst_134 {dimension_numbers = #tpu.dot_dimension_numbers<[1], [0], [0], [1], [0, 0, 1, 1], [], []>} : vector<4x4xf32>, vector<4x8xf32>, vector<4x8xf32> -> vector<4x8xf32>
    %458 = vector.extract_strided_slice %365 {offsets = [24, 0], sizes = [8, 32], strides = [1, 1]} : vector<32x32xf32> to vector<8x32xf32>
    %cst_135 = arith.constant dense<0.000000e+00> : vector<4x32xf32>
    %459 = tpu.matmul %457, %458, %cst_135 {dimension_numbers = #tpu.dot_dimension_numbers<[1], [0], [0], [1], [0, 0, 1, 1], [], []>} : vector<4x8xf32>, vector<8x32xf32>, vector<4x32xf32> -> vector<4x32xf32>
    %460 = arith.addf %440, %459 : vector<4x32xf32>
    %461 = vector.extract_strided_slice %361 {offsets = [3, 0], sizes = [1, 32], strides = [1, 1]} : vector<10x32xf32> to vector<1x32xf32>
    %462 = vector.broadcast %461 : vector<1x32xf32> to vector<4x32xf32>
    %463 = arith.addf %460, %462 : vector<4x32xf32>
    %464 = arith.addf %357, %463 : vector<4x32xf32>
    %465 = vector.extract_strided_slice %361 {offsets = [6, 0], sizes = [1, 32], strides = [1, 1]} : vector<10x32xf32> to vector<1x32xf32>
    %466 = vector.extract_strided_slice %361 {offsets = [7, 0], sizes = [1, 32], strides = [1, 1]} : vector<10x32xf32> to vector<1x32xf32>
    %cst_136 = arith.constant dense<0.000000e+00> : vector<4xf32>
    %467 = vector.multi_reduction <add>, %464, %cst_136 [1] : vector<4x32xf32> to vector<4xf32>
    %468 = vector.shape_cast %467 : vector<4xf32> to vector<4x1xf32>
    %cst_137 = arith.constant 3.200000e+01 : f32
    %469 = vector.broadcast %cst_137 : f32 to vector<4x1xf32>
    %470 = arith.divf %468, %469 : vector<4x1xf32>
    %471 = vector.broadcast %470 : vector<4x1xf32> to vector<4x32xf32>
    %472 = arith.subf %464, %471 : vector<4x32xf32>
    %473 = arith.mulf %472, %472 : vector<4x32xf32>
    %cst_138 = arith.constant dense<0.000000e+00> : vector<4xf32>
    %474 = vector.multi_reduction <add>, %473, %cst_138 [1] : vector<4x32xf32> to vector<4xf32>
    %475 = vector.shape_cast %474 : vector<4xf32> to vector<4x1xf32>
    %cst_139 = arith.constant 3.200000e+01 : f32
    %476 = vector.broadcast %cst_139 : f32 to vector<4x1xf32>
    %477 = arith.divf %475, %476 : vector<4x1xf32>
    %cst_140 = arith.constant 9.99999974E-6 : f32
    %478 = vector.broadcast %cst_140 : f32 to vector<4x1xf32>
    %479 = arith.addf %477, %478 : vector<4x1xf32>
    %480 = math.rsqrt %479 : vector<4x1xf32>
    %481 = vector.broadcast %480 : vector<4x1xf32> to vector<4x32xf32>
    %482 = arith.mulf %472, %481 : vector<4x32xf32>
    %483 = vector.broadcast %465 : vector<1x32xf32> to vector<4x32xf32>
    %484 = arith.mulf %482, %483 : vector<4x32xf32>
    %485 = vector.broadcast %466 : vector<1x32xf32> to vector<4x32xf32>
    %486 = arith.addf %484, %485 : vector<4x32xf32>
    %cst_141 = arith.constant dense<0.000000e+00> : vector<4x32xf32>
    %487 = tpu.matmul %486, %366, %cst_141 {dimension_numbers = #tpu.dot_dimension_numbers<[1], [0], [0], [1], [0, 0, 1, 1], [], []>} : vector<4x32xf32>, vector<32x32xf32>, vector<4x32xf32> -> vector<4x32xf32>
    %488 = vector.extract_strided_slice %361 {offsets = [4, 0], sizes = [1, 32], strides = [1, 1]} : vector<10x32xf32> to vector<1x32xf32>
    %489 = vector.broadcast %488 : vector<1x32xf32> to vector<4x32xf32>
    %490 = arith.addf %487, %489 : vector<4x32xf32>
    %cst_142 = arith.constant 0.000000e+00 : f32
    %491 = vector.broadcast %cst_142 : f32 to vector<4x32xf32>
    %492 = arith.maximumf %490, %491 : vector<4x32xf32>
    %cst_143 = arith.constant dense<0.000000e+00> : vector<4x32xf32>
    %493 = tpu.matmul %492, %367, %cst_143 {dimension_numbers = #tpu.dot_dimension_numbers<[1], [0], [0], [1], [0, 0, 1, 1], [], []>} : vector<4x32xf32>, vector<32x32xf32>, vector<4x32xf32> -> vector<4x32xf32>
    %494 = vector.extract_strided_slice %361 {offsets = [5, 0], sizes = [1, 32], strides = [1, 1]} : vector<10x32xf32> to vector<1x32xf32>
    %495 = vector.broadcast %494 : vector<1x32xf32> to vector<4x32xf32>
    %496 = arith.addf %493, %495 : vector<4x32xf32>
    %497 = arith.addf %486, %496 : vector<4x32xf32>
    %498 = vector.extract_strided_slice %361 {offsets = [8, 0], sizes = [1, 32], strides = [1, 1]} : vector<10x32xf32> to vector<1x32xf32>
    %499 = vector.extract_strided_slice %361 {offsets = [9, 0], sizes = [1, 32], strides = [1, 1]} : vector<10x32xf32> to vector<1x32xf32>
    %cst_144 = arith.constant dense<0.000000e+00> : vector<4xf32>
    %500 = vector.multi_reduction <add>, %497, %cst_144 [1] : vector<4x32xf32> to vector<4xf32>
    %501 = vector.shape_cast %500 : vector<4xf32> to vector<4x1xf32>
    %cst_145 = arith.constant 3.200000e+01 : f32
    %502 = vector.broadcast %cst_145 : f32 to vector<4x1xf32>
    %503 = arith.divf %501, %502 : vector<4x1xf32>
    %504 = vector.broadcast %503 : vector<4x1xf32> to vector<4x32xf32>
    %505 = arith.subf %497, %504 : vector<4x32xf32>
    %506 = arith.mulf %505, %505 : vector<4x32xf32>
    %cst_146 = arith.constant dense<0.000000e+00> : vector<4xf32>
    %507 = vector.multi_reduction <add>, %506, %cst_146 [1] : vector<4x32xf32> to vector<4xf32>
    %508 = vector.shape_cast %507 : vector<4xf32> to vector<4x1xf32>
    %cst_147 = arith.constant 3.200000e+01 : f32
    %509 = vector.broadcast %cst_147 : f32 to vector<4x1xf32>
    %510 = arith.divf %508, %509 : vector<4x1xf32>
    %cst_148 = arith.constant 9.99999974E-6 : f32
    %511 = vector.broadcast %cst_148 : f32 to vector<4x1xf32>
    %512 = arith.addf %510, %511 : vector<4x1xf32>
    %513 = math.rsqrt %512 : vector<4x1xf32>
    %514 = vector.broadcast %513 : vector<4x1xf32> to vector<4x32xf32>
    %515 = arith.mulf %505, %514 : vector<4x32xf32>
    %516 = vector.broadcast %498 : vector<1x32xf32> to vector<4x32xf32>
    %517 = arith.mulf %515, %516 : vector<4x32xf32>
    %518 = vector.broadcast %499 : vector<1x32xf32> to vector<4x32xf32>
    %519 = arith.addf %517, %518 : vector<4x32xf32>
    %c1_149 = arith.constant 1 : index
    %c0_150 = arith.constant 0 : index
    %c0_151 = arith.constant 0 : index
    %520 = vector.load %arg4[%c1_149, %c0_150, %c0_151] : memref<2x32x192xf32, #tpu.memory_space<vmem>>, vector<1x32x192xf32>
    %521 = vector.shape_cast %520 : vector<1x32x192xf32> to vector<32x192xf32>
    %c1_152 = arith.constant 1 : index
    %c0_153 = arith.constant 0 : index
    %c0_154 = arith.constant 0 : index
    %522 = vector.load %arg5[%c1_152, %c0_153, %c0_154] : memref<2x10x32xf32, #tpu.memory_space<vmem>>, vector<1x10x32xf32>
    %523 = vector.shape_cast %522 : vector<1x10x32xf32> to vector<10x32xf32>
    %524 = vector.extract_strided_slice %521 {offsets = [0, 0], sizes = [32, 32], strides = [1, 1]} : vector<32x192xf32> to vector<32x32xf32>
    %525 = vector.extract_strided_slice %521 {offsets = [0, 32], sizes = [32, 32], strides = [1, 1]} : vector<32x192xf32> to vector<32x32xf32>
    %526 = vector.extract_strided_slice %521 {offsets = [0, 64], sizes = [32, 32], strides = [1, 1]} : vector<32x192xf32> to vector<32x32xf32>
    %527 = vector.extract_strided_slice %521 {offsets = [0, 96], sizes = [32, 32], strides = [1, 1]} : vector<32x192xf32> to vector<32x32xf32>
    %528 = vector.extract_strided_slice %521 {offsets = [0, 128], sizes = [32, 32], strides = [1, 1]} : vector<32x192xf32> to vector<32x32xf32>
    %529 = vector.extract_strided_slice %521 {offsets = [0, 160], sizes = [32, 32], strides = [1, 1]} : vector<32x192xf32> to vector<32x32xf32>
    %cst_155 = arith.constant dense<0.000000e+00> : vector<4x32xf32>
    %530 = tpu.matmul %519, %524, %cst_155 {dimension_numbers = #tpu.dot_dimension_numbers<[1], [0], [0], [1], [0, 0, 1, 1], [], []>} : vector<4x32xf32>, vector<32x32xf32>, vector<4x32xf32> -> vector<4x32xf32>
    %531 = vector.extract_strided_slice %523 {offsets = [0, 0], sizes = [1, 32], strides = [1, 1]} : vector<10x32xf32> to vector<1x32xf32>
    %532 = vector.broadcast %531 : vector<1x32xf32> to vector<4x32xf32>
    %533 = arith.addf %530, %532 : vector<4x32xf32>
    %cst_156 = arith.constant dense<0.000000e+00> : vector<4x32xf32>
    %534 = tpu.matmul %519, %525, %cst_156 {dimension_numbers = #tpu.dot_dimension_numbers<[1], [0], [0], [1], [0, 0, 1, 1], [], []>} : vector<4x32xf32>, vector<32x32xf32>, vector<4x32xf32> -> vector<4x32xf32>
    %535 = vector.extract_strided_slice %523 {offsets = [1, 0], sizes = [1, 32], strides = [1, 1]} : vector<10x32xf32> to vector<1x32xf32>
    %536 = vector.broadcast %535 : vector<1x32xf32> to vector<4x32xf32>
    %537 = arith.addf %534, %536 : vector<4x32xf32>
    %cst_157 = arith.constant dense<0.000000e+00> : vector<4x32xf32>
    %538 = tpu.matmul %519, %526, %cst_157 {dimension_numbers = #tpu.dot_dimension_numbers<[1], [0], [0], [1], [0, 0, 1, 1], [], []>} : vector<4x32xf32>, vector<32x32xf32>, vector<4x32xf32> -> vector<4x32xf32>
    %539 = vector.extract_strided_slice %523 {offsets = [2, 0], sizes = [1, 32], strides = [1, 1]} : vector<10x32xf32> to vector<1x32xf32>
    %540 = vector.broadcast %539 : vector<1x32xf32> to vector<4x32xf32>
    %541 = arith.addf %538, %540 : vector<4x32xf32>
    %cst_158 = arith.constant 0.000000e+00 : f32
    %542 = vector.broadcast %cst_158 : f32 to vector<4x32xf32>
    %543 = vector.extract_strided_slice %533 {offsets = [0, 0], sizes = [4, 8], strides = [1, 1]} : vector<4x32xf32> to vector<4x8xf32>
    %cst_159 = arith.constant 0.353553385 : f32
    %544 = vector.broadcast %cst_159 : f32 to vector<4x8xf32>
    %545 = arith.mulf %543, %544 : vector<4x8xf32>
    %546 = vector.extract_strided_slice %537 {offsets = [0, 0], sizes = [4, 8], strides = [1, 1]} : vector<4x32xf32> to vector<4x8xf32>
    %547 = vector.extract_strided_slice %541 {offsets = [0, 0], sizes = [4, 8], strides = [1, 1]} : vector<4x32xf32> to vector<4x8xf32>
    %cst_160 = arith.constant dense<0.000000e+00> : vector<4x4xf32>
    %548 = tpu.matmul %545, %546, %cst_160 {dimension_numbers = #tpu.dot_dimension_numbers<[1], [1], [0], [0], [0, 0, 1, 0], [], []>} : vector<4x8xf32>, vector<4x8xf32>, vector<4x4xf32> -> vector<4x4xf32>
    %cst_161 = arith.constant dense<0xFF800000> : vector<4xf32>
    %549 = vector.multi_reduction <maximumf>, %548, %cst_161 [1] : vector<4x4xf32> to vector<4xf32>
    %550 = vector.shape_cast %549 : vector<4xf32> to vector<4x1xf32>
    %551 = vector.broadcast %550 : vector<4x1xf32> to vector<4x4xf32>
    %552 = arith.subf %548, %551 : vector<4x4xf32>
    %553 = math.exp %552 : vector<4x4xf32>
    %cst_162 = arith.constant dense<0.000000e+00> : vector<4xf32>
    %554 = vector.multi_reduction <add>, %553, %cst_162 [1] : vector<4x4xf32> to vector<4xf32>
    %555 = vector.shape_cast %554 : vector<4xf32> to vector<4x1xf32>
    %556 = tpu.reciprocal %555 {approx = true} : vector<4x1xf32> -> vector<4x1xf32>
    %557 = vector.broadcast %556 : vector<4x1xf32> to vector<4x4xf32>
    %558 = arith.mulf %553, %557 : vector<4x4xf32>
    %cst_163 = arith.constant dense<0.000000e+00> : vector<4x8xf32>
    %559 = tpu.matmul %558, %547, %cst_163 {dimension_numbers = #tpu.dot_dimension_numbers<[1], [0], [0], [1], [0, 0, 1, 1], [], []>} : vector<4x4xf32>, vector<4x8xf32>, vector<4x8xf32> -> vector<4x8xf32>
    %560 = vector.extract_strided_slice %527 {offsets = [0, 0], sizes = [8, 32], strides = [1, 1]} : vector<32x32xf32> to vector<8x32xf32>
    %cst_164 = arith.constant dense<0.000000e+00> : vector<4x32xf32>
    %561 = tpu.matmul %559, %560, %cst_164 {dimension_numbers = #tpu.dot_dimension_numbers<[1], [0], [0], [1], [0, 0, 1, 1], [], []>} : vector<4x8xf32>, vector<8x32xf32>, vector<4x32xf32> -> vector<4x32xf32>
    %562 = arith.addf %542, %561 : vector<4x32xf32>
    %563 = vector.extract_strided_slice %533 {offsets = [0, 8], sizes = [4, 8], strides = [1, 1]} : vector<4x32xf32> to vector<4x8xf32>
    %cst_165 = arith.constant 0.353553385 : f32
    %564 = vector.broadcast %cst_165 : f32 to vector<4x8xf32>
    %565 = arith.mulf %563, %564 : vector<4x8xf32>
    %566 = vector.extract_strided_slice %537 {offsets = [0, 8], sizes = [4, 8], strides = [1, 1]} : vector<4x32xf32> to vector<4x8xf32>
    %567 = vector.extract_strided_slice %541 {offsets = [0, 8], sizes = [4, 8], strides = [1, 1]} : vector<4x32xf32> to vector<4x8xf32>
    %cst_166 = arith.constant dense<0.000000e+00> : vector<4x4xf32>
    %568 = tpu.matmul %565, %566, %cst_166 {dimension_numbers = #tpu.dot_dimension_numbers<[1], [1], [0], [0], [0, 0, 1, 0], [], []>} : vector<4x8xf32>, vector<4x8xf32>, vector<4x4xf32> -> vector<4x4xf32>
    %cst_167 = arith.constant dense<0xFF800000> : vector<4xf32>
    %569 = vector.multi_reduction <maximumf>, %568, %cst_167 [1] : vector<4x4xf32> to vector<4xf32>
    %570 = vector.shape_cast %569 : vector<4xf32> to vector<4x1xf32>
    %571 = vector.broadcast %570 : vector<4x1xf32> to vector<4x4xf32>
    %572 = arith.subf %568, %571 : vector<4x4xf32>
    %573 = math.exp %572 : vector<4x4xf32>
    %cst_168 = arith.constant dense<0.000000e+00> : vector<4xf32>
    %574 = vector.multi_reduction <add>, %573, %cst_168 [1] : vector<4x4xf32> to vector<4xf32>
    %575 = vector.shape_cast %574 : vector<4xf32> to vector<4x1xf32>
    %576 = tpu.reciprocal %575 {approx = true} : vector<4x1xf32> -> vector<4x1xf32>
    %577 = vector.broadcast %576 : vector<4x1xf32> to vector<4x4xf32>
    %578 = arith.mulf %573, %577 : vector<4x4xf32>
    %cst_169 = arith.constant dense<0.000000e+00> : vector<4x8xf32>
    %579 = tpu.matmul %578, %567, %cst_169 {dimension_numbers = #tpu.dot_dimension_numbers<[1], [0], [0], [1], [0, 0, 1, 1], [], []>} : vector<4x4xf32>, vector<4x8xf32>, vector<4x8xf32> -> vector<4x8xf32>
    %580 = vector.extract_strided_slice %527 {offsets = [8, 0], sizes = [8, 32], strides = [1, 1]} : vector<32x32xf32> to vector<8x32xf32>
    %cst_170 = arith.constant dense<0.000000e+00> : vector<4x32xf32>
    %581 = tpu.matmul %579, %580, %cst_170 {dimension_numbers = #tpu.dot_dimension_numbers<[1], [0], [0], [1], [0, 0, 1, 1], [], []>} : vector<4x8xf32>, vector<8x32xf32>, vector<4x32xf32> -> vector<4x32xf32>
    %582 = arith.addf %562, %581 : vector<4x32xf32>
    %583 = vector.extract_strided_slice %533 {offsets = [0, 16], sizes = [4, 8], strides = [1, 1]} : vector<4x32xf32> to vector<4x8xf32>
    %cst_171 = arith.constant 0.353553385 : f32
    %584 = vector.broadcast %cst_171 : f32 to vector<4x8xf32>
    %585 = arith.mulf %583, %584 : vector<4x8xf32>
    %586 = vector.extract_strided_slice %537 {offsets = [0, 16], sizes = [4, 8], strides = [1, 1]} : vector<4x32xf32> to vector<4x8xf32>
    %587 = vector.extract_strided_slice %541 {offsets = [0, 16], sizes = [4, 8], strides = [1, 1]} : vector<4x32xf32> to vector<4x8xf32>
    %cst_172 = arith.constant dense<0.000000e+00> : vector<4x4xf32>
    %588 = tpu.matmul %585, %586, %cst_172 {dimension_numbers = #tpu.dot_dimension_numbers<[1], [1], [0], [0], [0, 0, 1, 0], [], []>} : vector<4x8xf32>, vector<4x8xf32>, vector<4x4xf32> -> vector<4x4xf32>
    %cst_173 = arith.constant dense<0xFF800000> : vector<4xf32>
    %589 = vector.multi_reduction <maximumf>, %588, %cst_173 [1] : vector<4x4xf32> to vector<4xf32>
    %590 = vector.shape_cast %589 : vector<4xf32> to vector<4x1xf32>
    %591 = vector.broadcast %590 : vector<4x1xf32> to vector<4x4xf32>
    %592 = arith.subf %588, %591 : vector<4x4xf32>
    %593 = math.exp %592 : vector<4x4xf32>
    %cst_174 = arith.constant dense<0.000000e+00> : vector<4xf32>
    %594 = vector.multi_reduction <add>, %593, %cst_174 [1] : vector<4x4xf32> to vector<4xf32>
    %595 = vector.shape_cast %594 : vector<4xf32> to vector<4x1xf32>
    %596 = tpu.reciprocal %595 {approx = true} : vector<4x1xf32> -> vector<4x1xf32>
    %597 = vector.broadcast %596 : vector<4x1xf32> to vector<4x4xf32>
    %598 = arith.mulf %593, %597 : vector<4x4xf32>
    %cst_175 = arith.constant dense<0.000000e+00> : vector<4x8xf32>
    %599 = tpu.matmul %598, %587, %cst_175 {dimension_numbers = #tpu.dot_dimension_numbers<[1], [0], [0], [1], [0, 0, 1, 1], [], []>} : vector<4x4xf32>, vector<4x8xf32>, vector<4x8xf32> -> vector<4x8xf32>
    %600 = vector.extract_strided_slice %527 {offsets = [16, 0], sizes = [8, 32], strides = [1, 1]} : vector<32x32xf32> to vector<8x32xf32>
    %cst_176 = arith.constant dense<0.000000e+00> : vector<4x32xf32>
    %601 = tpu.matmul %599, %600, %cst_176 {dimension_numbers = #tpu.dot_dimension_numbers<[1], [0], [0], [1], [0, 0, 1, 1], [], []>} : vector<4x8xf32>, vector<8x32xf32>, vector<4x32xf32> -> vector<4x32xf32>
    %602 = arith.addf %582, %601 : vector<4x32xf32>
    %603 = vector.extract_strided_slice %533 {offsets = [0, 24], sizes = [4, 8], strides = [1, 1]} : vector<4x32xf32> to vector<4x8xf32>
    %cst_177 = arith.constant 0.353553385 : f32
    %604 = vector.broadcast %cst_177 : f32 to vector<4x8xf32>
    %605 = arith.mulf %603, %604 : vector<4x8xf32>
    %606 = vector.extract_strided_slice %537 {offsets = [0, 24], sizes = [4, 8], strides = [1, 1]} : vector<4x32xf32> to vector<4x8xf32>
    %607 = vector.extract_strided_slice %541 {offsets = [0, 24], sizes = [4, 8], strides = [1, 1]} : vector<4x32xf32> to vector<4x8xf32>
    %cst_178 = arith.constant dense<0.000000e+00> : vector<4x4xf32>
    %608 = tpu.matmul %605, %606, %cst_178 {dimension_numbers = #tpu.dot_dimension_numbers<[1], [1], [0], [0], [0, 0, 1, 0], [], []>} : vector<4x8xf32>, vector<4x8xf32>, vector<4x4xf32> -> vector<4x4xf32>
    %cst_179 = arith.constant dense<0xFF800000> : vector<4xf32>
    %609 = vector.multi_reduction <maximumf>, %608, %cst_179 [1] : vector<4x4xf32> to vector<4xf32>
    %610 = vector.shape_cast %609 : vector<4xf32> to vector<4x1xf32>
    %611 = vector.broadcast %610 : vector<4x1xf32> to vector<4x4xf32>
    %612 = arith.subf %608, %611 : vector<4x4xf32>
    %613 = math.exp %612 : vector<4x4xf32>
    %cst_180 = arith.constant dense<0.000000e+00> : vector<4xf32>
    %614 = vector.multi_reduction <add>, %613, %cst_180 [1] : vector<4x4xf32> to vector<4xf32>
    %615 = vector.shape_cast %614 : vector<4xf32> to vector<4x1xf32>
    %616 = tpu.reciprocal %615 {approx = true} : vector<4x1xf32> -> vector<4x1xf32>
    %617 = vector.broadcast %616 : vector<4x1xf32> to vector<4x4xf32>
    %618 = arith.mulf %613, %617 : vector<4x4xf32>
    %cst_181 = arith.constant dense<0.000000e+00> : vector<4x8xf32>
    %619 = tpu.matmul %618, %607, %cst_181 {dimension_numbers = #tpu.dot_dimension_numbers<[1], [0], [0], [1], [0, 0, 1, 1], [], []>} : vector<4x4xf32>, vector<4x8xf32>, vector<4x8xf32> -> vector<4x8xf32>
    %620 = vector.extract_strided_slice %527 {offsets = [24, 0], sizes = [8, 32], strides = [1, 1]} : vector<32x32xf32> to vector<8x32xf32>
    %cst_182 = arith.constant dense<0.000000e+00> : vector<4x32xf32>
    %621 = tpu.matmul %619, %620, %cst_182 {dimension_numbers = #tpu.dot_dimension_numbers<[1], [0], [0], [1], [0, 0, 1, 1], [], []>} : vector<4x8xf32>, vector<8x32xf32>, vector<4x32xf32> -> vector<4x32xf32>
    %622 = arith.addf %602, %621 : vector<4x32xf32>
    %623 = vector.extract_strided_slice %523 {offsets = [3, 0], sizes = [1, 32], strides = [1, 1]} : vector<10x32xf32> to vector<1x32xf32>
    %624 = vector.broadcast %623 : vector<1x32xf32> to vector<4x32xf32>
    %625 = arith.addf %622, %624 : vector<4x32xf32>
    %626 = arith.addf %519, %625 : vector<4x32xf32>
    %627 = vector.extract_strided_slice %523 {offsets = [6, 0], sizes = [1, 32], strides = [1, 1]} : vector<10x32xf32> to vector<1x32xf32>
    %628 = vector.extract_strided_slice %523 {offsets = [7, 0], sizes = [1, 32], strides = [1, 1]} : vector<10x32xf32> to vector<1x32xf32>
    %cst_183 = arith.constant dense<0.000000e+00> : vector<4xf32>
    %629 = vector.multi_reduction <add>, %626, %cst_183 [1] : vector<4x32xf32> to vector<4xf32>
    %630 = vector.shape_cast %629 : vector<4xf32> to vector<4x1xf32>
    %cst_184 = arith.constant 3.200000e+01 : f32
    %631 = vector.broadcast %cst_184 : f32 to vector<4x1xf32>
    %632 = arith.divf %630, %631 : vector<4x1xf32>
    %633 = vector.broadcast %632 : vector<4x1xf32> to vector<4x32xf32>
    %634 = arith.subf %626, %633 : vector<4x32xf32>
    %635 = arith.mulf %634, %634 : vector<4x32xf32>
    %cst_185 = arith.constant dense<0.000000e+00> : vector<4xf32>
    %636 = vector.multi_reduction <add>, %635, %cst_185 [1] : vector<4x32xf32> to vector<4xf32>
    %637 = vector.shape_cast %636 : vector<4xf32> to vector<4x1xf32>
    %cst_186 = arith.constant 3.200000e+01 : f32
    %638 = vector.broadcast %cst_186 : f32 to vector<4x1xf32>
    %639 = arith.divf %637, %638 : vector<4x1xf32>
    %cst_187 = arith.constant 9.99999974E-6 : f32
    %640 = vector.broadcast %cst_187 : f32 to vector<4x1xf32>
    %641 = arith.addf %639, %640 : vector<4x1xf32>
    %642 = math.rsqrt %641 : vector<4x1xf32>
    %643 = vector.broadcast %642 : vector<4x1xf32> to vector<4x32xf32>
    %644 = arith.mulf %634, %643 : vector<4x32xf32>
    %645 = vector.broadcast %627 : vector<1x32xf32> to vector<4x32xf32>
    %646 = arith.mulf %644, %645 : vector<4x32xf32>
    %647 = vector.broadcast %628 : vector<1x32xf32> to vector<4x32xf32>
    %648 = arith.addf %646, %647 : vector<4x32xf32>
    %cst_188 = arith.constant dense<0.000000e+00> : vector<4x32xf32>
    %649 = tpu.matmul %648, %528, %cst_188 {dimension_numbers = #tpu.dot_dimension_numbers<[1], [0], [0], [1], [0, 0, 1, 1], [], []>} : vector<4x32xf32>, vector<32x32xf32>, vector<4x32xf32> -> vector<4x32xf32>
    %650 = vector.extract_strided_slice %523 {offsets = [4, 0], sizes = [1, 32], strides = [1, 1]} : vector<10x32xf32> to vector<1x32xf32>
    %651 = vector.broadcast %650 : vector<1x32xf32> to vector<4x32xf32>
    %652 = arith.addf %649, %651 : vector<4x32xf32>
    %cst_189 = arith.constant 0.000000e+00 : f32
    %653 = vector.broadcast %cst_189 : f32 to vector<4x32xf32>
    %654 = arith.maximumf %652, %653 : vector<4x32xf32>
    %cst_190 = arith.constant dense<0.000000e+00> : vector<4x32xf32>
    %655 = tpu.matmul %654, %529, %cst_190 {dimension_numbers = #tpu.dot_dimension_numbers<[1], [0], [0], [1], [0, 0, 1, 1], [], []>} : vector<4x32xf32>, vector<32x32xf32>, vector<4x32xf32> -> vector<4x32xf32>
    %656 = vector.extract_strided_slice %523 {offsets = [5, 0], sizes = [1, 32], strides = [1, 1]} : vector<10x32xf32> to vector<1x32xf32>
    %657 = vector.broadcast %656 : vector<1x32xf32> to vector<4x32xf32>
    %658 = arith.addf %655, %657 : vector<4x32xf32>
    %659 = arith.addf %648, %658 : vector<4x32xf32>
    %660 = vector.extract_strided_slice %523 {offsets = [8, 0], sizes = [1, 32], strides = [1, 1]} : vector<10x32xf32> to vector<1x32xf32>
    %661 = vector.extract_strided_slice %523 {offsets = [9, 0], sizes = [1, 32], strides = [1, 1]} : vector<10x32xf32> to vector<1x32xf32>
    %cst_191 = arith.constant dense<0.000000e+00> : vector<4xf32>
    %662 = vector.multi_reduction <add>, %659, %cst_191 [1] : vector<4x32xf32> to vector<4xf32>
    %663 = vector.shape_cast %662 : vector<4xf32> to vector<4x1xf32>
    %cst_192 = arith.constant 3.200000e+01 : f32
    %664 = vector.broadcast %cst_192 : f32 to vector<4x1xf32>
    %665 = arith.divf %663, %664 : vector<4x1xf32>
    %666 = vector.broadcast %665 : vector<4x1xf32> to vector<4x32xf32>
    %667 = arith.subf %659, %666 : vector<4x32xf32>
    %668 = arith.mulf %667, %667 : vector<4x32xf32>
    %cst_193 = arith.constant dense<0.000000e+00> : vector<4xf32>
    %669 = vector.multi_reduction <add>, %668, %cst_193 [1] : vector<4x32xf32> to vector<4xf32>
    %670 = vector.shape_cast %669 : vector<4xf32> to vector<4x1xf32>
    %cst_194 = arith.constant 3.200000e+01 : f32
    %671 = vector.broadcast %cst_194 : f32 to vector<4x1xf32>
    %672 = arith.divf %670, %671 : vector<4x1xf32>
    %cst_195 = arith.constant 9.99999974E-6 : f32
    %673 = vector.broadcast %cst_195 : f32 to vector<4x1xf32>
    %674 = arith.addf %672, %673 : vector<4x1xf32>
    %675 = math.rsqrt %674 : vector<4x1xf32>
    %676 = vector.broadcast %675 : vector<4x1xf32> to vector<4x32xf32>
    %677 = arith.mulf %667, %676 : vector<4x32xf32>
    %678 = vector.broadcast %660 : vector<1x32xf32> to vector<4x32xf32>
    %679 = arith.mulf %677, %678 : vector<4x32xf32>
    %680 = vector.broadcast %661 : vector<1x32xf32> to vector<4x32xf32>
    %681 = arith.addf %679, %680 : vector<4x32xf32>
    %682 = vector.extract_strided_slice %2 {offsets = [2, 0], sizes = [1, 32], strides = [1, 1]} : vector<4x32xf32> to vector<1x32xf32>
    %683 = vector.extract_strided_slice %2 {offsets = [3, 0], sizes = [1, 32], strides = [1, 1]} : vector<4x32xf32> to vector<1x32xf32>
    %cst_196 = arith.constant dense<0.000000e+00> : vector<4xf32>
    %684 = vector.multi_reduction <add>, %681, %cst_196 [1] : vector<4x32xf32> to vector<4xf32>
    %685 = vector.shape_cast %684 : vector<4xf32> to vector<4x1xf32>
    %cst_197 = arith.constant 3.200000e+01 : f32
    %686 = vector.broadcast %cst_197 : f32 to vector<4x1xf32>
    %687 = arith.divf %685, %686 : vector<4x1xf32>
    %688 = vector.broadcast %687 : vector<4x1xf32> to vector<4x32xf32>
    %689 = arith.subf %681, %688 : vector<4x32xf32>
    %690 = arith.mulf %689, %689 : vector<4x32xf32>
    %cst_198 = arith.constant dense<0.000000e+00> : vector<4xf32>
    %691 = vector.multi_reduction <add>, %690, %cst_198 [1] : vector<4x32xf32> to vector<4xf32>
    %692 = vector.shape_cast %691 : vector<4xf32> to vector<4x1xf32>
    %cst_199 = arith.constant 3.200000e+01 : f32
    %693 = vector.broadcast %cst_199 : f32 to vector<4x1xf32>
    %694 = arith.divf %692, %693 : vector<4x1xf32>
    %cst_200 = arith.constant 9.99999974E-6 : f32
    %695 = vector.broadcast %cst_200 : f32 to vector<4x1xf32>
    %696 = arith.addf %694, %695 : vector<4x1xf32>
    %697 = math.rsqrt %696 : vector<4x1xf32>
    %698 = vector.broadcast %697 : vector<4x1xf32> to vector<4x32xf32>
    %699 = arith.mulf %689, %698 : vector<4x32xf32>
    %700 = vector.broadcast %682 : vector<1x32xf32> to vector<4x32xf32>
    %701 = arith.mulf %699, %700 : vector<4x32xf32>
    %702 = vector.broadcast %683 : vector<1x32xf32> to vector<4x32xf32>
    %703 = arith.addf %701, %702 : vector<4x32xf32>
    %c0_201 = arith.constant 0 : index
    %c0_202 = arith.constant 0 : index
    %c0_203 = arith.constant 0 : index
    %704 = vector.load %arg7[%c0_201, %c0_202, %c0_203] : memref<4x32x32xf32, #tpu.memory_space<vmem>>, vector<4x32x32xf32>
    %c0_204 = arith.constant 0 : index
    %c0_205 = arith.constant 0 : index
    %705 = vector.load %arg8[%c0_204, %c0_205] : memref<4x32xf32, #tpu.memory_space<vmem>>, vector<4x32xf32>
    %706 = vector.extract_strided_slice %704 {offsets = [0, 0, 0], sizes = [1, 32, 32], strides = [1, 1, 1]} : vector<4x32x32xf32> to vector<1x32x32xf32>
    %707 = vector.shape_cast %706 : vector<1x32x32xf32> to vector<32x32xf32>
    %708 = vector.extract_strided_slice %705 {offsets = [0, 0], sizes = [1, 32], strides = [1, 1]} : vector<4x32xf32> to vector<1x32xf32>
    %709 = vector.extract_strided_slice %704 {offsets = [1, 0, 0], sizes = [1, 32, 32], strides = [1, 1, 1]} : vector<4x32x32xf32> to vector<1x32x32xf32>
    %710 = vector.shape_cast %709 : vector<1x32x32xf32> to vector<32x32xf32>
    %711 = vector.extract_strided_slice %705 {offsets = [1, 0], sizes = [1, 32], strides = [1, 1]} : vector<4x32xf32> to vector<1x32xf32>
    %cst_206 = arith.constant dense<0.000000e+00> : vector<4x32xf32>
    %712 = tpu.matmul %357, %707, %cst_206 {dimension_numbers = #tpu.dot_dimension_numbers<[1], [0], [0], [1], [0, 0, 1, 1], [], []>} : vector<4x32xf32>, vector<32x32xf32>, vector<4x32xf32> -> vector<4x32xf32>
    %713 = vector.broadcast %708 : vector<1x32xf32> to vector<4x32xf32>
    %714 = arith.addf %712, %713 : vector<4x32xf32>
    %cst_207 = arith.constant 5.000000e-01 : f32
    %715 = vector.broadcast %cst_207 : f32 to vector<4x32xf32>
    %716 = arith.mulf %715, %714 : vector<4x32xf32>
    %cst_208 = arith.constant 4.471500e-02 : f32
    %717 = vector.broadcast %cst_208 : f32 to vector<4x32xf32>
    %718 = arith.mulf %717, %714 : vector<4x32xf32>
    %719 = arith.mulf %718, %714 : vector<4x32xf32>
    %720 = arith.mulf %719, %714 : vector<4x32xf32>
    %721 = arith.addf %714, %720 : vector<4x32xf32>
    %cst_209 = arith.constant 0.797884583 : f32
    %722 = vector.broadcast %cst_209 : f32 to vector<4x32xf32>
    %723 = arith.mulf %722, %721 : vector<4x32xf32>
    %724 = math.tanh %723 : vector<4x32xf32>
    %cst_210 = arith.constant 1.000000e+00 : f32
    %725 = vector.broadcast %cst_210 : f32 to vector<4x32xf32>
    %726 = arith.addf %725, %724 : vector<4x32xf32>
    %727 = arith.mulf %716, %726 : vector<4x32xf32>
    %cst_211 = arith.constant dense<0.000000e+00> : vector<4x32xf32>
    %728 = tpu.matmul %727, %710, %cst_211 {dimension_numbers = #tpu.dot_dimension_numbers<[1], [0], [0], [1], [0, 0, 1, 1], [], []>} : vector<4x32xf32>, vector<32x32xf32>, vector<4x32xf32> -> vector<4x32xf32>
    %729 = vector.broadcast %711 : vector<1x32xf32> to vector<4x32xf32>
    %730 = arith.addf %728, %729 : vector<4x32xf32>
    %731 = vector.extract_strided_slice %704 {offsets = [2, 0, 0], sizes = [1, 32, 32], strides = [1, 1, 1]} : vector<4x32x32xf32> to vector<1x32x32xf32>
    %732 = vector.shape_cast %731 : vector<1x32x32xf32> to vector<32x32xf32>
    %733 = vector.extract_strided_slice %705 {offsets = [2, 0], sizes = [1, 32], strides = [1, 1]} : vector<4x32xf32> to vector<1x32xf32>
    %734 = vector.extract_strided_slice %704 {offsets = [3, 0, 0], sizes = [1, 32, 32], strides = [1, 1, 1]} : vector<4x32x32xf32> to vector<1x32x32xf32>
    %735 = vector.shape_cast %734 : vector<1x32x32xf32> to vector<32x32xf32>
    %736 = vector.extract_strided_slice %705 {offsets = [3, 0], sizes = [1, 32], strides = [1, 1]} : vector<4x32xf32> to vector<1x32xf32>
    %cst_212 = arith.constant dense<0.000000e+00> : vector<4x32xf32>
    %737 = tpu.matmul %730, %732, %cst_212 {dimension_numbers = #tpu.dot_dimension_numbers<[1], [0], [0], [1], [0, 0, 1, 1], [], []>} : vector<4x32xf32>, vector<32x32xf32>, vector<4x32xf32> -> vector<4x32xf32>
    %738 = vector.broadcast %733 : vector<1x32xf32> to vector<4x32xf32>
    %739 = arith.addf %737, %738 : vector<4x32xf32>
    %cst_213 = arith.constant 5.000000e-01 : f32
    %740 = vector.broadcast %cst_213 : f32 to vector<4x32xf32>
    %741 = arith.mulf %740, %739 : vector<4x32xf32>
    %cst_214 = arith.constant 4.471500e-02 : f32
    %742 = vector.broadcast %cst_214 : f32 to vector<4x32xf32>
    %743 = arith.mulf %742, %739 : vector<4x32xf32>
    %744 = arith.mulf %743, %739 : vector<4x32xf32>
    %745 = arith.mulf %744, %739 : vector<4x32xf32>
    %746 = arith.addf %739, %745 : vector<4x32xf32>
    %cst_215 = arith.constant 0.797884583 : f32
    %747 = vector.broadcast %cst_215 : f32 to vector<4x32xf32>
    %748 = arith.mulf %747, %746 : vector<4x32xf32>
    %749 = math.tanh %748 : vector<4x32xf32>
    %cst_216 = arith.constant 1.000000e+00 : f32
    %750 = vector.broadcast %cst_216 : f32 to vector<4x32xf32>
    %751 = arith.addf %750, %749 : vector<4x32xf32>
    %752 = arith.mulf %741, %751 : vector<4x32xf32>
    %cst_217 = arith.constant dense<0.000000e+00> : vector<4x32xf32>
    %753 = tpu.matmul %752, %735, %cst_217 {dimension_numbers = #tpu.dot_dimension_numbers<[1], [0], [0], [1], [0, 0, 1, 1], [], []>} : vector<4x32xf32>, vector<32x32xf32>, vector<4x32xf32> -> vector<4x32xf32>
    %754 = vector.broadcast %736 : vector<1x32xf32> to vector<4x32xf32>
    %755 = arith.addf %753, %754 : vector<4x32xf32>
    %cst_218 = arith.constant dense<0.000000e+00> : vector<4xf32>
    %756 = vector.multi_reduction <add>, %755, %cst_218 [1] : vector<4x32xf32> to vector<4xf32>
    %757 = vector.shape_cast %756 : vector<4xf32> to vector<4x1xf32>
    %cst_219 = arith.constant 6.250000e-02 : f32
    %758 = vector.broadcast %cst_219 : f32 to vector<4x1xf32>
    %759 = arith.mulf %757, %758 : vector<4x1xf32>
    %cst_220 = arith.constant 6.250000e-02 : f32
    %760 = vector.broadcast %cst_220 : f32 to vector<1x32xf32>
    %cst_221 = arith.constant dense<0.000000e+00> : vector<1x4xf32>
    %761 = tpu.matmul %760, %755, %cst_221 {dimension_numbers = #tpu.dot_dimension_numbers<[1], [1], [0], [0], [0, 0, 1, 0], [], []>} : vector<1x32xf32>, vector<4x32xf32>, vector<1x4xf32> -> vector<1x4xf32>
    %762 = tpu.iota {dimensions = array<i32: 0>} : vector<4x128xi32>
    %763 = tpu.iota {dimensions = array<i32: 1>} : vector<4x128xi32>
    %764 = arith.cmpi eq, %762, %763 : vector<4x128xi32>
    %cst_222 = arith.constant 1.000000e+00 : f32
    %cst_223 = arith.constant 0.000000e+00 : f32
    %765 = vector.broadcast %cst_222 : f32 to vector<4x128xf32>
    %766 = vector.broadcast %cst_223 : f32 to vector<4x128xf32>
    %767 = arith.select %764, %765, %766 : vector<4x128xi1>, vector<4x128xf32>
    %cst_224 = arith.constant dense<0.000000e+00> : vector<1x128xf32>
    %768 = tpu.matmul %761, %767, %cst_224 {dimension_numbers = #tpu.dot_dimension_numbers<[1], [0], [0], [1], [0, 0, 1, 1], [], []>} : vector<1x4xf32>, vector<4x128xf32>, vector<1x128xf32> -> vector<1x128xf32>
    %769 = vector.broadcast %759 : vector<4x1xf32> to vector<4x128xf32>
    %770 = vector.broadcast %768 : vector<1x128xf32> to vector<4x128xf32>
    %771 = arith.subf %769, %770 : vector<4x128xf32>
    %c0_225 = arith.constant 0 : index
    %c0_226 = arith.constant 0 : index
    %c0_227 = arith.constant 0 : index
    %772 = vector.load %arg9[%c0_225, %c0_226, %c0_227] : memref<3x32x32xf32, #tpu.memory_space<vmem>>, vector<3x32x32xf32>
    %c0_228 = arith.constant 0 : index
    %c0_229 = arith.constant 0 : index
    %773 = vector.load %arg10[%c0_228, %c0_229] : memref<3x32xf32, #tpu.memory_space<vmem>>, vector<3x32xf32>
    %774 = vector.extract_strided_slice %772 {offsets = [0, 0, 0], sizes = [1, 32, 32], strides = [1, 1, 1]} : vector<3x32x32xf32> to vector<1x32x32xf32>
    %775 = vector.shape_cast %774 : vector<1x32x32xf32> to vector<32x32xf32>
    %776 = vector.extract_strided_slice %773 {offsets = [0, 0], sizes = [1, 32], strides = [1, 1]} : vector<3x32xf32> to vector<1x32xf32>
    %777 = vector.extract_strided_slice %772 {offsets = [1, 0, 0], sizes = [1, 32, 32], strides = [1, 1, 1]} : vector<3x32x32xf32> to vector<1x32x32xf32>
    %778 = vector.shape_cast %777 : vector<1x32x32xf32> to vector<32x32xf32>
    %779 = vector.extract_strided_slice %773 {offsets = [1, 0], sizes = [1, 32], strides = [1, 1]} : vector<3x32xf32> to vector<1x32xf32>
    %cst_230 = arith.constant dense<0.000000e+00> : vector<4x32xf32>
    %780 = tpu.matmul %703, %775, %cst_230 {dimension_numbers = #tpu.dot_dimension_numbers<[1], [0], [0], [1], [0, 0, 1, 1], [], []>} : vector<4x32xf32>, vector<32x32xf32>, vector<4x32xf32> -> vector<4x32xf32>
    %781 = vector.broadcast %776 : vector<1x32xf32> to vector<4x32xf32>
    %782 = arith.addf %780, %781 : vector<4x32xf32>
    %cst_231 = arith.constant 5.000000e-01 : f32
    %783 = vector.broadcast %cst_231 : f32 to vector<4x32xf32>
    %784 = arith.mulf %783, %782 : vector<4x32xf32>
    %cst_232 = arith.constant 4.471500e-02 : f32
    %785 = vector.broadcast %cst_232 : f32 to vector<4x32xf32>
    %786 = arith.mulf %785, %782 : vector<4x32xf32>
    %787 = arith.mulf %786, %782 : vector<4x32xf32>
    %788 = arith.mulf %787, %782 : vector<4x32xf32>
    %789 = arith.addf %782, %788 : vector<4x32xf32>
    %cst_233 = arith.constant 0.797884583 : f32
    %790 = vector.broadcast %cst_233 : f32 to vector<4x32xf32>
    %791 = arith.mulf %790, %789 : vector<4x32xf32>
    %792 = math.tanh %791 : vector<4x32xf32>
    %cst_234 = arith.constant 1.000000e+00 : f32
    %793 = vector.broadcast %cst_234 : f32 to vector<4x32xf32>
    %794 = arith.addf %793, %792 : vector<4x32xf32>
    %795 = arith.mulf %784, %794 : vector<4x32xf32>
    %cst_235 = arith.constant dense<0.000000e+00> : vector<4x32xf32>
    %796 = tpu.matmul %795, %778, %cst_235 {dimension_numbers = #tpu.dot_dimension_numbers<[1], [0], [0], [1], [0, 0, 1, 1], [], []>} : vector<4x32xf32>, vector<32x32xf32>, vector<4x32xf32> -> vector<4x32xf32>
    %797 = vector.broadcast %779 : vector<1x32xf32> to vector<4x32xf32>
    %798 = arith.addf %796, %797 : vector<4x32xf32>
    %799 = vector.extract_strided_slice %772 {offsets = [2, 0, 0], sizes = [1, 32, 32], strides = [1, 1, 1]} : vector<3x32x32xf32> to vector<1x32x32xf32>
    %800 = vector.shape_cast %799 : vector<1x32x32xf32> to vector<32x32xf32>
    %cst_236 = arith.constant dense<0.000000e+00> : vector<4x32xf32>
    %801 = tpu.matmul %798, %800, %cst_236 {dimension_numbers = #tpu.dot_dimension_numbers<[1], [0], [0], [1], [0, 0, 1, 1], [], []>} : vector<4x32xf32>, vector<32x32xf32>, vector<4x32xf32> -> vector<4x32xf32>
    %802 = vector.extract_strided_slice %773 {offsets = [2, 0], sizes = [1, 32], strides = [1, 1]} : vector<3x32xf32> to vector<1x32xf32>
    %803 = vector.broadcast %802 : vector<1x32xf32> to vector<4x32xf32>
    %804 = arith.addf %801, %803 : vector<4x32xf32>
    %cst_237 = arith.constant 5.000000e-01 : f32
    %805 = vector.broadcast %cst_237 : f32 to vector<4x32xf32>
    %806 = arith.mulf %805, %804 : vector<4x32xf32>
    %cst_238 = arith.constant 4.471500e-02 : f32
    %807 = vector.broadcast %cst_238 : f32 to vector<4x32xf32>
    %808 = arith.mulf %807, %804 : vector<4x32xf32>
    %809 = arith.mulf %808, %804 : vector<4x32xf32>
    %810 = arith.mulf %809, %804 : vector<4x32xf32>
    %811 = arith.addf %804, %810 : vector<4x32xf32>
    %cst_239 = arith.constant 0.797884583 : f32
    %812 = vector.broadcast %cst_239 : f32 to vector<4x32xf32>
    %813 = arith.mulf %812, %811 : vector<4x32xf32>
    %814 = math.tanh %813 : vector<4x32xf32>
    %cst_240 = arith.constant 1.000000e+00 : f32
    %815 = vector.broadcast %cst_240 : f32 to vector<4x32xf32>
    %816 = arith.addf %815, %814 : vector<4x32xf32>
    %817 = arith.mulf %806, %816 : vector<4x32xf32>
    %c0_241 = arith.constant 0 : index
    %c0_242 = arith.constant 0 : index
    %818 = vector.load %arg11[%c0_241, %c0_242] : memref<32x128xf32, #tpu.memory_space<vmem>>, vector<32x128xf32>
    %cst_243 = arith.constant dense<0.000000e+00> : vector<4x128xf32>
    %819 = tpu.matmul %817, %818, %cst_243 {dimension_numbers = #tpu.dot_dimension_numbers<[1], [0], [0], [1], [0, 0, 1, 1], [], []>} : vector<4x32xf32>, vector<32x128xf32>, vector<4x128xf32> -> vector<4x128xf32>
    %c0_244 = arith.constant 0 : index
    %c0_245 = arith.constant 0 : index
    %820 = vector.load %arg12[%c0_244, %c0_245] : memref<1x128xf32, #tpu.memory_space<vmem>>, vector<1x128xf32>
    %821 = vector.broadcast %820 : vector<1x128xf32> to vector<4x128xf32>
    %822 = arith.addf %819, %821 : vector<4x128xf32>
    %823 = tpu.concatenate %771, %822 in 0 : vector<4x128xf32>, vector<4x128xf32> -> vector<8x128xf32>
    %c0_246 = arith.constant 0 : index
    %c0_247 = arith.constant 0 : index
    %824 = vector.load %arg13[%c0_246, %c0_247] : memref<8x128xf32, #tpu.memory_space<vmem>>, vector<8x128xf32>
    tpu.vector_store %arg13[%c0_246, %c0_247], %823 {strides = array<i32>} : memref<8x128xf32, #tpu.memory_space<vmem>>, vector<8x128xf32>,
    return
  }
}

</mosaic_0001>

<llo_original>
// kernel: rank_adapter_v2_forward.1
$region0: #{rank_adapter_v2_forward.1}
  #allocation0 [shape = 'u32[]', space=smem, size = 0x4, offset = 0x4, fixed_abs, tag = 'smem constant byte address 0x4 - core index']
  #allocation1 [shape = 'u32[144,128]{1,0:T(1,128)}', space=vmem, size = 0x12000, scoped, tag = 'internal scratch']
  %s0 = inlined_call_operand.vmem [shape: f32[64,32], index: 0, kind: input, shape index: {}]
  %s1 = inlined_call_operand.vmem [shape: f32[64,64], index: 1, kind: input, shape index: {}]
  %s2 = inlined_call_operand.vmem [shape: f32[2,32,192], index: 2, kind: input, shape index: {}]
  %s3 = inlined_call_operand.vmem [shape: f32[2,10,32], index: 3, kind: input, shape index: {}]
  %s4 = inlined_call_operand.vmem [shape: f32[2,32,192], index: 4, kind: input, shape index: {}]
  %s5 = inlined_call_operand.vmem [shape: f32[2,10,32], index: 5, kind: input, shape index: {}]
  %s6 = inlined_call_operand.hbm [shape: f32[4,32], index: 6, kind: input, shape index: {}]
  %s7 = inlined_call_operand.vmem [shape: f32[4,32,32], index: 7, kind: input, shape index: {}]
  %s8 = inlined_call_operand.hbm [shape: f32[4,32], index: 8, kind: input, shape index: {}]
  %s9 = inlined_call_operand.hbm [shape: f32[3,32,32], index: 9, kind: input, shape index: {}]
  %s10 = inlined_call_operand.hbm [shape: f32[3,32], index: 10, kind: input, shape index: {}]
  %s11 = inlined_call_operand.vmem [shape: f32[32,128], index: 11, kind: input, shape index: {}]
  %s12 = inlined_call_operand.hbm [shape: f32[1,128], index: 12, kind: input, shape index: {}]
  %s13 = inlined_call_operand.vmem [shape: f32[8,128], index: 13, kind: output, shape index: {}]
  %s14 = sld [smem:[#allocation0]]
  $region82: #{rank_adapter_v2_forward.1} parent=0
    _
  %s16 = ssub.s32 1, %s14
  %s17 = scalar_select 0, %s16, %s14
  $region1: #{rank_adapter_v2_forward.1} parent=0
    #allocation2 [shape = 'u8[2048]{0}', space=vmem, size = 0x800, scoped, tag = 'input window, operand 6, single buffered']
    #allocation3 [shape = 's32[1]{0}', space=sflag, size = 0x4, scoped, tag = 'scoped memory for rank_adapter_v2_forward.1']
    #allocation4 [shape = 'u8[2048]{0}', space=vmem, size = 0x800, scoped, tag = 'input window, operand 8, single buffered']
    #allocation5 [shape = 's32[1]{0}', space=sflag, size = 0x4, scoped, tag = 'scoped memory for rank_adapter_v2_forward.1']
    #allocation6 [shape = 'u8[49152]{0}', space=vmem, size = 0xc000, scoped, tag = 'input window, operand 9, single buffered']
    #allocation7 [shape = 'u8[2048]{0}', space=vmem, size = 0x800, scoped, tag = 'input window, operand 10, single buffered']
    #allocation8 [shape = 's32[1]{0}', space=sflag, size = 0x4, scoped, tag = 'scoped memory for rank_adapter_v2_forward.1']
    #allocation9 [shape = 'u8[512]{0}', space=vmem, size = 0x400, scoped, tag = 'input window, operand 12, single buffered']
    %18 = vsyncpa [#allocation3], 0
    %19 = vsyncpa [#allocation5], 0
    %20 = vsyncpa [#allocation8], 0
    // Predicated region
    $region2: #{rank_adapter_v2_forward.1} parent=1 // pred_check
      _
    $region3: #{rank_adapter_v2_forward.1} parent=1 // pred_check_branch
      %22 = sbr.rel (0) target = $region5
    $region4: #{rank_adapter_v2_forward.1} parent=1 // pred_region
      _
    $region5: #{rank_adapter_v2_forward.1} parent=1 // pred_fallthru
      _
    // Predicated region
    $region6: #{rank_adapter_v2_forward.1} parent=1 // pred_check
      _
    $region7: #{rank_adapter_v2_forward.1} parent=1 // pred_check_branch
      %24 = sbr.rel (0) target = $region9
    $region8: #{rank_adapter_v2_forward.1} parent=1 // pred_region
      _
    $region9: #{rank_adapter_v2_forward.1} parent=1 // pred_fallthru
      _
    // Predicated region
    $region10: #{rank_adapter_v2_forward.1} parent=1 // pred_check
      _
    $region11: #{rank_adapter_v2_forward.1} parent=1 // pred_check_branch
      %26 = sbr.rel (0) target = $region13
    $region12: #{rank_adapter_v2_forward.1} parent=1 // pred_region
      _
    $region13: #{rank_adapter_v2_forward.1} parent=1 // pred_fallthru
      _
    // Predicated region
    $region14: #{rank_adapter_v2_forward.1} parent=1 // pred_check
      _
    $region15: #{rank_adapter_v2_forward.1} parent=1 // pred_check_branch
      %28 = sbr.rel (0) target = $region17
    $region16: #{rank_adapter_v2_forward.1} parent=1 // pred_region
      _
    $region17: #{rank_adapter_v2_forward.1} parent=1 // pred_fallthru
      _
    // Predicated region
    $region18: #{rank_adapter_v2_forward.1} parent=1 // pred_check
      _
    $region19: #{rank_adapter_v2_forward.1} parent=1 // pred_check_branch
      %30 = sbr.rel (0) target = $region21
    $region20: #{rank_adapter_v2_forward.1} parent=1 // pred_region
      _
    $region21: #{rank_adapter_v2_forward.1} parent=1 // pred_fallthru
      _
    // Predicated region
    $region22: #{rank_adapter_v2_forward.1} parent=1 // pred_check
      _
    $region23: #{rank_adapter_v2_forward.1} parent=1 // pred_check_branch
      %32 = sbr.rel (0) target = $region25
    $region24: #{rank_adapter_v2_forward.1} parent=1 // pred_region
      _
    $region25: #{rank_adapter_v2_forward.1} parent=1 // pred_fallthru
      _
    // Predicated region
    $region26: #{rank_adapter_v2_forward.1} parent=1 // pred_check
      _
    $region27: #{rank_adapter_v2_forward.1} parent=1 // pred_check_branch
      %34 = sbr.rel (0) target = $region29
    $region28: #{rank_adapter_v2_forward.1} parent=1 // pred_region
      %s36 = ssub.s32 64, 64
      %37 = vsyncadd [#allocation3], %s36
      %s39 = sshll.u32 [#allocation2], 4
      %s40 = int_to_ptr.vmem [resolvable:$true] %s39
      %42 = dma.hbm_to_vmem [thread:$0]  %s6, 64, %s40, [#allocation3]
    $region29: #{rank_adapter_v2_forward.1} parent=1 // pred_fallthru
      _
    // Predicated region
    $region30: #{rank_adapter_v2_forward.1} parent=1 // pred_check
      _
    $region31: #{rank_adapter_v2_forward.1} parent=1 // pred_check_branch
      %44 = sbr.rel (0) target = $region33
    $region32: #{rank_adapter_v2_forward.1} parent=1 // pred_region
      _
    $region33: #{rank_adapter_v2_forward.1} parent=1 // pred_fallthru
      _
    // Predicated region
    $region34: #{rank_adapter_v2_forward.1} parent=1 // pred_check
      _
    $region35: #{rank_adapter_v2_forward.1} parent=1 // pred_check_branch
      %46 = sbr.rel (0) target = $region37
    $region36: #{rank_adapter_v2_forward.1} parent=1 // pred_region
      %s48 = ssub.s32 64, 64
      %49 = vsyncadd [#allocation5], %s48
      %s51 = sshll.u32 [#allocation4], 4
      %s52 = int_to_ptr.vmem [resolvable:$true] %s51
      %54 = dma.hbm_to_vmem [thread:$0]  %s8, 64, %s52, [#allocation5]
    $region37: #{rank_adapter_v2_forward.1} parent=1 // pred_fallthru
      _
    // Predicated region
    $region38: #{rank_adapter_v2_forward.1} parent=1 // pred_check
      _
    $region39: #{rank_adapter_v2_forward.1} parent=1 // pred_check_branch
      %56 = sbr.rel (0) target = $region41
    $region40: #{rank_adapter_v2_forward.1} parent=1 // pred_region
      %s58 = ssub.s32 1536, 1536
      %59 = vsyncadd [#allocation5], %s58
      %s60 = sshll.u32 [#allocation6], 4
      %s61 = int_to_ptr.vmem [resolvable:$true] %s60
      %66 = dma.hbm_to_vmem [thread:$0]  %s9, 1536, %s61, [#allocation5], 128, 128, 8
    $region41: #{rank_adapter_v2_forward.1} parent=1 // pred_fallthru
      _
    // Predicated region
    $region42: #{rank_adapter_v2_forward.1} parent=1 // pred_check
      _
    $region43: #{rank_adapter_v2_forward.1} parent=1 // pred_check_branch
      %68 = sbr.rel (0) target = $region45
    $region44: #{rank_adapter_v2_forward.1} parent=1 // pred_region
      %s70 = ssub.s32 64, 64
      %71 = vsyncadd [#allocation8], %s70
      %s73 = sshll.u32 [#allocation7], 4
      %s74 = int_to_ptr.vmem [resolvable:$true] %s73
      %76 = dma.hbm_to_vmem [thread:$0]  %s10, 64, %s74, [#allocation8]
    $region45: #{rank_adapter_v2_forward.1} parent=1 // pred_fallthru
      _
    // Predicated region
    $region46: #{rank_adapter_v2_forward.1} parent=1 // pred_check
      _
    $region47: #{rank_adapter_v2_forward.1} parent=1 // pred_check_branch
      %78 = sbr.rel (0) target = $region49
    $region48: #{rank_adapter_v2_forward.1} parent=1 // pred_region
      _
    $region49: #{rank_adapter_v2_forward.1} parent=1 // pred_fallthru
      _
    // Predicated region
    $region50: #{rank_adapter_v2_forward.1} parent=1 // pred_check
      _
    $region51: #{rank_adapter_v2_forward.1} parent=1 // pred_check_branch
      %80 = sbr.rel (0) target = $region53
    $region52: #{rank_adapter_v2_forward.1} parent=1 // pred_region
      %s82 = ssub.s32 16, 16
      %83 = vsyncadd [#allocation8], %s82
      %s85 = sshll.u32 [#allocation9], 4
      %s86 = int_to_ptr.vmem [resolvable:$true] %s85
      %88 = dma.hbm_to_vmem [thread:$0]  %s12, 16, %s86, [#allocation8]
    $region53: #{rank_adapter_v2_forward.1} parent=1 // pred_fallthru
      _
    // Predicated region
    $region54: #{rank_adapter_v2_forward.1} parent=1 // pred_check
      _
    $region55: #{rank_adapter_v2_forward.1} parent=1 // pred_check_branch
      %90 = sbr.rel (0) target = $region57
    $region56: #{rank_adapter_v2_forward.1} parent=1 // pred_region
      %91 = dma.done [#allocation3], 64
    $region57: #{rank_adapter_v2_forward.1} parent=1 // pred_fallthru
      _
    // Predicated region
    $region58: #{rank_adapter_v2_forward.1} parent=1 // pred_check
      _
    $region59: #{rank_adapter_v2_forward.1} parent=1 // pred_check_branch
      %93 = sbr.rel (0) target = $region61
    $region60: #{rank_adapter_v2_forward.1} parent=1 // pred_region
      %94 = dma.done [#allocation5], 64
    $region61: #{rank_adapter_v2_forward.1} parent=1 // pred_fallthru
      _
    // Predicated region
    $region62: #{rank_adapter_v2_forward.1} parent=1 // pred_check
      _
    $region63: #{rank_adapter_v2_forward.1} parent=1 // pred_check_branch
      %96 = sbr.rel (0) target = $region65
    $region64: #{rank_adapter_v2_forward.1} parent=1 // pred_region
      %97 = dma.done [#allocation5], 1536
    $region65: #{rank_adapter_v2_forward.1} parent=1 // pred_fallthru
      _
    // Predicated region
    $region66: #{rank_adapter_v2_forward.1} parent=1 // pred_check
      _
    $region67: #{rank_adapter_v2_forward.1} parent=1 // pred_check_branch
      %99 = sbr.rel (0) target = $region69
    $region68: #{rank_adapter_v2_forward.1} parent=1 // pred_region
      %100 = dma.done [#allocation8], 64
    $region69: #{rank_adapter_v2_forward.1} parent=1 // pred_fallthru
      _
    // Predicated region
    $region70: #{rank_adapter_v2_forward.1} parent=1 // pred_check
      _
    $region71: #{rank_adapter_v2_forward.1} parent=1 // pred_check_branch
      %102 = sbr.rel (0) target = $region73
    $region72: #{rank_adapter_v2_forward.1} parent=1 // pred_region
      %103 = dma.done [#allocation8], 16
    $region73: #{rank_adapter_v2_forward.1} parent=1 // pred_fallthru
      _
    %v104 = vld [vmem:[%s0] sm:$0xff]
    %v105 = vld [vmem:[%s0 + $0x8] sm:$0xff]
    %v106 = vld [vmem:[%s0 + $0x10] sm:$0xff]
    %v107 = vld [vmem:[%s0 + $0x18] sm:$0xff]
    %v108 = vld [vmem:[%s0 + $0x20] sm:$0xff]
    %v109 = vld [vmem:[%s0 + $0x28] sm:$0xff]
    %v110 = vld [vmem:[%s0 + $0x30] sm:$0xff]
    %v111 = vld [vmem:[%s0 + $0x38] sm:$0xff]
    %v112 = vld [vmem:[%s1] sm:$0xff]
    %v113 = vld [vmem:[%s1 + $0x8] sm:$0xff]
    %v114 = vld [vmem:[%s1 + $0x10] sm:$0xff]
    %v115 = vld [vmem:[%s1 + $0x18] sm:$0xff]
    %v116 = vld [vmem:[%s1 + $0x20] sm:$0xff]
    %v117 = vld [vmem:[%s1 + $0x28] sm:$0xff]
    %v118 = vld [vmem:[%s1 + $0x30] sm:$0xff]
    %v119 = vld [vmem:[%s1 + $0x38] sm:$0xff]
    %v120 = vld [vmem:[#allocation2] sm:$0xf]
    %v121 = vld [vmem:[%s2] sm:$0xff]
    %v122 = vld [vmem:[%s2 + $0x8] sm:$0xff]
    %v123 = vld [vmem:[%s2 + $0x10] sm:$0xff]
    %v124 = vld [vmem:[%s2 + $0x18] sm:$0xff]
    %v125 = vld [vmem:[%s2 + $0x20] sm:$0xff]
    %v126 = vld [vmem:[%s2 + $0x28] sm:$0xff]
    %v127 = vld [vmem:[%s2 + $0x30] sm:$0xff]
    %v128 = vld [vmem:[%s2 + $0x38] sm:$0xff]
    %v129 = vld [vmem:[%s3] sm:$0xff]
    %v130 = vld [vmem:[%s3 + $0x8] sm:$0x3]
    %v131 = vlaneseq
    %v132 = vshrl.u32 %v131, 7
    %v133 = vsub.s32 0, %v132
    %v134 = vrot.slane %v129, %v133
    %vm135 = vcmask 261120
    %v137 = vsel %vm135, %v104, 0
    %v140 = vsel %vm135, %v105, 0
    %v143 = vsel %vm135, %v106, 0
    %v146 = vsel %vm135, %v107, 0
    %v149 = vsel %vm135, %v108, 0
    %v152 = vsel %vm135, %v109, 0
    %v155 = vsel %vm135, %v110, 0
    %v158 = vsel %vm135, %v111, 0
    %160 = vmatprep.subr.mxu0 0.0
    %161 = vmatpush1.msra.mxu0 %v121
    %162 = vmatprep.subr.mxu0 0.0
    %163 = vmatpush1.msra.mxu0 %v123
    %164 = vmatprep.subr.mxu0 0.0
    %165 = vmatpush1.msra.mxu0 %v125
    %166 = vmatprep.subr.mxu0 0.0
    %167 = vmatpush1.msra.mxu0 %v127
    %168 = vmatprep.subr.mxu0 0.0
    %169 = vmatpush1.msra.mxu0 0.0
    %170 = vmatprep.subr.mxu0 0.0
    %171 = vmatpush1.msra.mxu0 0.0
    %172 = vmatprep.subr.mxu0 0.0
    %173 = vmatpush1.msra.mxu0 0.0
    %174 = vmatprep.subr.mxu0 0.0
    %175 = vmatpush1.msra.mxu0 0.0
    %176 = vmatprep.subr.mxu0 0.0
    %177 = vmatpush1.msra.mxu0 0.0
    %178 = vmatprep.subr.mxu0 0.0
    %179 = vmatpush1.msra.mxu0 0.0
    %180 = vmatprep.subr.mxu0 0.0
    %181 = vmatpush1.msra.mxu0 0.0
    %182 = vmatprep.subr.mxu0 0.0
    %183 = vmatpush1.msra.mxu0 0.0
    %184 = vmatprep.subr.mxu0 0.0
    %185 = vmatpush1.msra.mxu0 0.0
    %186 = vmatprep.subr.mxu0 0.0
    %187 = vmatpush1.msra.mxu0 0.0
    %188 = vmatprep.subr.mxu0 0.0
    %189 = vmatpush1.msra.mxu0 0.0
    %190 = vmatprep.subr.mxu0 0.0
    %191 = vmatpush1.msra.mxu0 0.0
    %192 = vmatprep.subr.mxu0 0.0
    %193 = vmatpush1.msra.mxu0 0.0
    %194 = vmatprep.subr.mxu0 0.0
    %195 = vmatpush1.msra.mxu0 0.0
    %196 = vmatprep.subr.mxu0 0.0
    %197 = vmatpush1.msra.mxu0 0.0
    %198 = vmatprep.subr.mxu0 0.0
    %199 = vmatpush1.msra.mxu0 0.0
    %200 = vmatprep.subr.mxu0 0.0
    %201 = vmatpush1.msra.mxu0 0.0
    %202 = vmatprep.subr.mxu0 0.0
    %203 = vmatpush1.msra.mxu0 0.0
    %204 = vmatprep.subr.mxu0 0.0
    %205 = vmatpush1.msra.mxu0 0.0
    %206 = vmatprep.subr.mxu0 0.0
    %207 = vmatpush1.msra.mxu0 0.0
    %208 = vmatprep.subr.mxu0 0.0
    %209 = vmatpush1.msra.mxu0 0.0
    %210 = vmatprep.subr.mxu0 0.0
    %211 = vmatpush1.msra.mxu0 0.0
    %212 = vmatprep.subr.mxu0 0.0
    %213 = vmatpush1.msra.mxu0 0.0
    %214 = vmatprep.subr.mxu0 0.0
    %215 = vmatpush1.msra.mxu0 0.0
    %216 = vmatprep.subr.mxu0 0.0
    %217 = vmatpush1.msra.mxu0 0.0
    %218 = vmatprep.subr.mxu0 0.0
    %219 = vmatpush1.msra.mxu0 0.0
    %220 = vmatprep.subr.mxu0 0.0
    %221 = vmatpush1.msra.mxu0 0.0
    %222 = vmatprep.subr.mxu0 0.0
    %223 = vmatpush1.msra.mxu0 0.0
    %224 = vmatprep.mubr.f32.mxu0 0.0
    %225 = vmatmul.mubr.f32.gmra.mrb[0].mxu0 %v137
    %v226 = vpop.f32.mrb[0].mxu0
    %v227 = vadd.f32 %v134, %v226
    %v228 = vpop.f32.mrb[0].mxu0
    %229 = vmatprep.mubr.f32.mxu0 0.0
    %230 = vmatmul.mubr.f32.gmra.mrb[0].mxu0 %v140
    %v231 = vpop.f32.mrb[0].mxu0
    %v232 = vadd.f32 %v134, %v231
    %v233 = vpop.f32.mrb[0].mxu0
    %234 = vmatprep.mubr.f32.mxu0 0.0
    %235 = vmatmul.mubr.f32.gmra.mrb[0].mxu0 %v143
    %v236 = vpop.f32.mrb[0].mxu0
    %v237 = vadd.f32 %v134, %v236
    %v238 = vpop.f32.mrb[0].mxu0
    %239 = vmatprep.mubr.f32.mxu0 0.0
    %240 = vmatmul.mubr.f32.gmra.mrb[0].mxu0 %v146
    %v241 = vpop.f32.mrb[0].mxu0
    %v242 = vadd.f32 %v134, %v241
    %v243 = vpop.f32.mrb[0].mxu0
    %244 = vmatprep.mubr.f32.mxu0 0.0
    %245 = vmatmul.mubr.f32.gmra.mrb[0].mxu0 %v149
    %v246 = vpop.f32.mrb[0].mxu0
    %v247 = vadd.f32 %v134, %v246
    %v248 = vpop.f32.mrb[0].mxu0
    %249 = vmatprep.mubr.f32.mxu0 0.0
    %250 = vmatmul.mubr.f32.gmra.mrb[0].mxu0 %v152
    %v251 = vpop.f32.mrb[0].mxu0
    %v252 = vadd.f32 %v134, %v251
    %v253 = vpop.f32.mrb[0].mxu0
    %254 = vmatprep.mubr.f32.mxu0 0.0
    %255 = vmatmul.mubr.f32.gmra.mrb[0].mxu0 %v155
    %v256 = vpop.f32.mrb[0].mxu0
    %v257 = vadd.f32 %v134, %v256
    %v258 = vpop.f32.mrb[0].mxu0
    %259 = vmatprep.mubr.f32.mxu0 0.0
    %260 = vmatmul.mubr.f32.gmra.mrb[0].mxu0 %v158
    %v261 = vpop.f32.mrb[0].mxu0
    %v262 = vadd.f32 %v134, %v261
    %v263 = vpop.f32.mrb[0].mxu0
    %264 = vdwg.mxu0
    %v265 = vlaneseq
    %v266 = vshrl.u32 %v265, 7
    %v267 = vsub.s32 1, %v266
    %v268 = vrot.slane %v129, %v267
    %273 = vrot.lane.b32.xlu0 %v121, 96
    %v274 = vpop.permute.xlu0 %273
    %275 = vrot.lane.b32.xlu0 %v123, 96
    %v276 = vpop.permute.xlu0 %275
    %277 = vrot.lane.b32.xlu0 %v125, 96
    %v278 = vpop.permute.xlu0 %277
    %279 = vrot.lane.b32.xlu0 %v127, 96
    %v280 = vpop.permute.xlu0 %279
    %285 = vmatprep.subr.mxu0 0.0
    %286 = vmatpush1.msra.mxu0 %v274
    %287 = vmatprep.subr.mxu0 0.0
    %288 = vmatpush1.msra.mxu0 %v276
    %289 = vmatprep.subr.mxu0 0.0
    %290 = vmatpush1.msra.mxu0 %v278
    %291 = vmatprep.subr.mxu0 0.0
    %292 = vmatpush1.msra.mxu0 %v280
    %293 = vmatprep.subr.mxu0 0.0
    %294 = vmatpush1.msra.mxu0 0.0
    %295 = vmatprep.subr.mxu0 0.0
    %296 = vmatpush1.msra.mxu0 0.0
    %297 = vmatprep.subr.mxu0 0.0
    %298 = vmatpush1.msra.mxu0 0.0
    %299 = vmatprep.subr.mxu0 0.0
    %300 = vmatpush1.msra.mxu0 0.0
    %301 = vmatprep.subr.mxu0 0.0
    %302 = vmatpush1.msra.mxu0 0.0
    %303 = vmatprep.subr.mxu0 0.0
    %304 = vmatpush1.msra.mxu0 0.0
    %305 = vmatprep.subr.mxu0 0.0
    %306 = vmatpush1.msra.mxu0 0.0
    %307 = vmatprep.subr.mxu0 0.0
    %308 = vmatpush1.msra.mxu0 0.0
    %309 = vmatprep.subr.mxu0 0.0
    %310 = vmatpush1.msra.mxu0 0.0
    %311 = vmatprep.subr.mxu0 0.0
    %312 = vmatpush1.msra.mxu0 0.0
    %313 = vmatprep.subr.mxu0 0.0
    %314 = vmatpush1.msra.mxu0 0.0
    %315 = vmatprep.subr.mxu0 0.0
    %316 = vmatpush1.msra.mxu0 0.0
    %317 = vmatprep.subr.mxu0 0.0
    %318 = vmatpush1.msra.mxu0 0.0
    %319 = vmatprep.subr.mxu0 0.0
    %320 = vmatpush1.msra.mxu0 0.0
    %321 = vmatprep.subr.mxu0 0.0
    %322 = vmatpush1.msra.mxu0 0.0
    %323 = vmatprep.subr.mxu0 0.0
    %324 = vmatpush1.msra.mxu0 0.0
    %325 = vmatprep.subr.mxu0 0.0
    %326 = vmatpush1.msra.mxu0 0.0
    %327 = vmatprep.subr.mxu0 0.0
    %328 = vmatpush1.msra.mxu0 0.0
    %329 = vmatprep.subr.mxu0 0.0
    %330 = vmatpush1.msra.mxu0 0.0
    %331 = vmatprep.subr.mxu0 0.0
    %332 = vmatpush1.msra.mxu0 0.0
    %333 = vmatprep.subr.mxu0 0.0
    %334 = vmatpush1.msra.mxu0 0.0
    %335 = vmatprep.subr.mxu0 0.0
    %336 = vmatpush1.msra.mxu0 0.0
    %337 = vmatprep.subr.mxu0 0.0
    %338 = vmatpush1.msra.mxu0 0.0
    %339 = vmatprep.subr.mxu0 0.0
    %340 = vmatpush1.msra.mxu0 0.0
    %341 = vmatprep.subr.mxu0 0.0
    %342 = vmatpush1.msra.mxu0 0.0
    %343 = vmatprep.subr.mxu0 0.0
    %344 = vmatpush1.msra.mxu0 0.0
    %345 = vmatprep.subr.mxu0 0.0
    %346 = vmatpush1.msra.mxu0 0.0
    %347 = vmatprep.subr.mxu0 0.0
    %348 = vmatpush1.msra.mxu0 0.0
    %349 = vmatprep.mubr.f32.mxu0 0.0
    %350 = vmatmul.mubr.f32.gmra.mrb[0].mxu0 %v137
    %v351 = vpop.f32.mrb[0].mxu0
    %v352 = vadd.f32 %v268, %v351
    %v353 = vpop.f32.mrb[0].mxu0
    %354 = vmatprep.mubr.f32.mxu0 0.0
    %355 = vmatmul.mubr.f32.gmra.mrb[0].mxu0 %v140
    %v356 = vpop.f32.mrb[0].mxu0
    %v357 = vadd.f32 %v268, %v356
    %v358 = vpop.f32.mrb[0].mxu0
    %359 = vmatprep.mubr.f32.mxu0 0.0
    %360 = vmatmul.mubr.f32.gmra.mrb[0].mxu0 %v143
    %v361 = vpop.f32.mrb[0].mxu0
    %v362 = vadd.f32 %v268, %v361
    %v363 = vpop.f32.mrb[0].mxu0
    %364 = vmatprep.mubr.f32.mxu0 0.0
    %365 = vmatmul.mubr.f32.gmra.mrb[0].mxu0 %v146
    %v366 = vpop.f32.mrb[0].mxu0
    %v367 = vadd.f32 %v268, %v366
    %v368 = vpop.f32.mrb[0].mxu0
    %369 = vmatprep.mubr.f32.mxu0 0.0
    %370 = vmatmul.mubr.f32.gmra.mrb[0].mxu0 %v149
    %v371 = vpop.f32.mrb[0].mxu0
    %v372 = vadd.f32 %v268, %v371
    %v373 = vpop.f32.mrb[0].mxu0
    %374 = vmatprep.mubr.f32.mxu0 0.0
    %375 = vmatmul.mubr.f32.gmra.mrb[0].mxu0 %v152
    %v376 = vpop.f32.mrb[0].mxu0
    %v377 = vadd.f32 %v268, %v376
    %v378 = vpop.f32.mrb[0].mxu0
    %379 = vmatprep.mubr.f32.mxu0 0.0
    %380 = vmatmul.mubr.f32.gmra.mrb[0].mxu0 %v155
    %v381 = vpop.f32.mrb[0].mxu0
    %v382 = vadd.f32 %v268, %v381
    %v383 = vpop.f32.mrb[0].mxu0
    %384 = vmatprep.mubr.f32.mxu0 0.0
    %385 = vmatmul.mubr.f32.gmra.mrb[0].mxu0 %v158
    %v386 = vpop.f32.mrb[0].mxu0
    %v387 = vadd.f32 %v268, %v386
    %v388 = vpop.f32.mrb[0].mxu0
    %389 = vdwg.mxu0
    %v390 = vlaneseq
    %v391 = vshrl.u32 %v390, 7
    %v392 = vsub.s32 2, %v391
    %v393 = vrot.slane %v129, %v392
    %394 = vrot.lane.b32.xlu0 %v121, 64
    %v395 = vpop.permute.xlu0 %394
    %396 = vrot.lane.b32.xlu0 %v123, 64
    %v397 = vpop.permute.xlu0 %396
    %398 = vrot.lane.b32.xlu0 %v125, 64
    %v399 = vpop.permute.xlu0 %398
    %400 = vrot.lane.b32.xlu0 %v127, 64
    %v401 = vpop.permute.xlu0 %400
    %406 = vmatprep.subr.mxu0 0.0
    %407 = vmatpush1.msra.mxu0 %v395
    %408 = vmatprep.subr.mxu0 0.0
    %409 = vmatpush1.msra.mxu0 %v397
    %410 = vmatprep.subr.mxu0 0.0
    %411 = vmatpush1.msra.mxu0 %v399
    %412 = vmatprep.subr.mxu0 0.0
    %413 = vmatpush1.msra.mxu0 %v401
    %414 = vmatprep.subr.mxu0 0.0
    %415 = vmatpush1.msra.mxu0 0.0
    %416 = vmatprep.subr.mxu0 0.0
    %417 = vmatpush1.msra.mxu0 0.0
    %418 = vmatprep.subr.mxu0 0.0
    %419 = vmatpush1.msra.mxu0 0.0
    %420 = vmatprep.subr.mxu0 0.0
    %421 = vmatpush1.msra.mxu0 0.0
    %422 = vmatprep.subr.mxu0 0.0
    %423 = vmatpush1.msra.mxu0 0.0
    %424 = vmatprep.subr.mxu0 0.0
    %425 = vmatpush1.msra.mxu0 0.0
    %426 = vmatprep.subr.mxu0 0.0
    %427 = vmatpush1.msra.mxu0 0.0
    %428 = vmatprep.subr.mxu0 0.0
    %429 = vmatpush1.msra.mxu0 0.0
    %430 = vmatprep.subr.mxu0 0.0
    %431 = vmatpush1.msra.mxu0 0.0
    %432 = vmatprep.subr.mxu0 0.0
    %433 = vmatpush1.msra.mxu0 0.0
    %434 = vmatprep.subr.mxu0 0.0
    %435 = vmatpush1.msra.mxu0 0.0
    %436 = vmatprep.subr.mxu0 0.0
    %437 = vmatpush1.msra.mxu0 0.0
    %438 = vmatprep.subr.mxu0 0.0
    %439 = vmatpush1.msra.mxu0 0.0
    %440 = vmatprep.subr.mxu0 0.0
    %441 = vmatpush1.msra.mxu0 0.0
    %442 = vmatprep.subr.mxu0 0.0
    %443 = vmatpush1.msra.mxu0 0.0
    %444 = vmatprep.subr.mxu0 0.0
    %445 = vmatpush1.msra.mxu0 0.0
    %446 = vmatprep.subr.mxu0 0.0
    %447 = vmatpush1.msra.mxu0 0.0
    %448 = vmatprep.subr.mxu0 0.0
    %449 = vmatpush1.msra.mxu0 0.0
    %450 = vmatprep.subr.mxu0 0.0
    %451 = vmatpush1.msra.mxu0 0.0
    %452 = vmatprep.subr.mxu0 0.0
    %453 = vmatpush1.msra.mxu0 0.0
    %454 = vmatprep.subr.mxu0 0.0
    %455 = vmatpush1.msra.mxu0 0.0
    %456 = vmatprep.subr.mxu0 0.0
    %457 = vmatpush1.msra.mxu0 0.0
    %458 = vmatprep.subr.mxu0 0.0
    %459 = vmatpush1.msra.mxu0 0.0
    %460 = vmatprep.subr.mxu0 0.0
    %461 = vmatpush1.msra.mxu0 0.0
    %462 = vmatprep.subr.mxu0 0.0
    %463 = vmatpush1.msra.mxu0 0.0
    %464 = vmatprep.subr.mxu0 0.0
    %465 = vmatpush1.msra.mxu0 0.0
    %466 = vmatprep.subr.mxu0 0.0
    %467 = vmatpush1.msra.mxu0 0.0
    %468 = vmatprep.subr.mxu0 0.0
    %469 = vmatpush1.msra.mxu0 0.0
    %470 = vmatprep.mubr.f32.mxu0 0.0
    %471 = vmatmul.mubr.f32.gmra.mrb[0].mxu0 %v137
    %v472 = vpop.f32.mrb[0].mxu0
    %v473 = vadd.f32 %v393, %v472
    %v474 = vpop.f32.mrb[0].mxu0
    %475 = vmatprep.mubr.f32.mxu0 0.0
    %476 = vmatmul.mubr.f32.gmra.mrb[0].mxu0 %v140
    %v477 = vpop.f32.mrb[0].mxu0
    %v478 = vadd.f32 %v393, %v477
    %v479 = vpop.f32.mrb[0].mxu0
    %480 = vmatprep.mubr.f32.mxu0 0.0
    %481 = vmatmul.mubr.f32.gmra.mrb[0].mxu0 %v143
    %v482 = vpop.f32.mrb[0].mxu0
    %v483 = vadd.f32 %v393, %v482
    %v484 = vpop.f32.mrb[0].mxu0
    %485 = vmatprep.mubr.f32.mxu0 0.0
    %486 = vmatmul.mubr.f32.gmra.mrb[0].mxu0 %v146
    %v487 = vpop.f32.mrb[0].mxu0
    %v488 = vadd.f32 %v393, %v487
    %v489 = vpop.f32.mrb[0].mxu0
    %490 = vmatprep.mubr.f32.mxu0 0.0
    %491 = vmatmul.mubr.f32.gmra.mrb[0].mxu0 %v149
    %v492 = vpop.f32.mrb[0].mxu0
    %v493 = vadd.f32 %v393, %v492
    %v494 = vpop.f32.mrb[0].mxu0
    %495 = vmatprep.mubr.f32.mxu0 0.0
    %496 = vmatmul.mubr.f32.gmra.mrb[0].mxu0 %v152
    %v497 = vpop.f32.mrb[0].mxu0
    %v498 = vadd.f32 %v393, %v497
    %v499 = vpop.f32.mrb[0].mxu0
    %500 = vmatprep.mubr.f32.mxu0 0.0
    %501 = vmatmul.mubr.f32.gmra.mrb[0].mxu0 %v155
    %v502 = vpop.f32.mrb[0].mxu0
    %v503 = vadd.f32 %v393, %v502
    %v504 = vpop.f32.mrb[0].mxu0
    %505 = vmatprep.mubr.f32.mxu0 0.0
    %506 = vmatmul.mubr.f32.gmra.mrb[0].mxu0 %v158
    %v507 = vpop.f32.mrb[0].mxu0
    %v508 = vadd.f32 %v393, %v507
    %v509 = vpop.f32.mrb[0].mxu0
    %510 = vdwg.mxu0
    %v511 = vmul.f32 %v227, 0.35355338
    %v512 = vmul.f32 %v232, 0.35355338
    %v513 = vmul.f32 %v237, 0.35355338
    %v514 = vmul.f32 %v242, 0.35355338
    %v515 = vmul.f32 %v247, 0.35355338
    %v516 = vmul.f32 %v252, 0.35355338
    %v517 = vmul.f32 %v257, 0.35355338
    %v518 = vmul.f32 %v262, 0.35355338
    %vm519 = vcmask 64512
    %v521 = vsel %vm519, %v511, 0
    %v524 = vsel %vm519, %v512, 0
    %v527 = vsel %vm519, %v513, 0
    %v530 = vsel %vm519, %v514, 0
    %v533 = vsel %vm519, %v515, 0
    %v536 = vsel %vm519, %v516, 0
    %v539 = vsel %vm519, %v517, 0
    %v542 = vsel %vm519, %v518, 0
    %v545 = vsel %vm519, %v352, 0
    %v548 = vsel %vm519, %v357, 0
    %v551 = vsel %vm519, %v362, 0
    %v554 = vsel %vm519, %v367, 0
    %v557 = vsel %vm519, %v372, 0
    %v560 = vsel %vm519, %v377, 0
    %v563 = vsel %vm519, %v382, 0
    %v566 = vsel %vm519, %v387, 0
    %568 = vmatprep.subr.mxu0 0.0
    %569 = vmatpush1.xpose.msra.mxu0 %v545
    %570 = vmatprep.subr.mxu0 0.0
    %571 = vmatpush1.xpose.msra.mxu0 %v548
    %572 = vmatprep.subr.mxu0 0.0
    %573 = vmatpush1.xpose.msra.mxu0 %v551
    %574 = vmatprep.subr.mxu0 0.0
    %575 = vmatpush1.xpose.msra.mxu0 %v554
    %576 = vmatprep.subr.mxu0 0.0
    %577 = vmatpush1.xpose.msra.mxu0 %v557
    %578 = vmatprep.subr.mxu0 0.0
    %579 = vmatpush1.xpose.msra.mxu0 %v560
    %580 = vmatprep.subr.mxu0 0.0
    %581 = vmatpush1.xpose.msra.mxu0 %v563
    %582 = vmatprep.subr.mxu0 0.0
    %583 = vmatpush1.xpose.msra.mxu0 %v566
    %584 = vmatprep.subr.mxu0 0.0
    %585 = vmatpush1.xpose.msra.mxu0 0.0
    %586 = vmatprep.subr.mxu0 0.0
    %587 = vmatpush1.xpose.msra.mxu0 0.0
    %588 = vmatprep.subr.mxu0 0.0
    %589 = vmatpush1.xpose.msra.mxu0 0.0
    %590 = vmatprep.subr.mxu0 0.0
    %591 = vmatpush1.xpose.msra.mxu0 0.0
    %592 = vmatprep.subr.mxu0 0.0
    %593 = vmatpush1.xpose.msra.mxu0 0.0
    %594 = vmatprep.subr.mxu0 0.0
    %595 = vmatpush1.xpose.msra.mxu0 0.0
    %596 = vmatprep.subr.mxu0 0.0
    %597 = vmatpush1.xpose.msra.mxu0 0.0
    %598 = vmatprep.subr.mxu0 0.0
    %599 = vmatpush1.xpose.msra.mxu0 0.0
    %600 = vmatprep.subr.mxu0 0.0
    %601 = vmatpush1.xpose.msra.mxu0 0.0
    %602 = vmatprep.subr.mxu0 0.0
    %603 = vmatpush1.xpose.msra.mxu0 0.0
    %604 = vmatprep.subr.mxu0 0.0
    %605 = vmatpush1.xpose.msra.mxu0 0.0
    %606 = vmatprep.subr.mxu0 0.0
    %607 = vmatpush1.xpose.msra.mxu0 0.0
    %608 = vmatprep.subr.mxu0 0.0
    %609 = vmatpush1.xpose.msra.mxu0 0.0
    %610 = vmatprep.subr.mxu0 0.0
    %611 = vmatpush1.xpose.msra.mxu0 0.0
    %612 = vmatprep.subr.mxu0 0.0
    %613 = vmatpush1.xpose.msra.mxu0 0.0
    %614 = vmatprep.subr.mxu0 0.0
    %615 = vmatpush1.xpose.msra.mxu0 0.0
    %616 = vmatprep.subr.mxu0 0.0
    %617 = vmatpush1.xpose.msra.mxu0 0.0
    %618 = vmatprep.subr.mxu0 0.0
    %619 = vmatpush1.xpose.msra.mxu0 0.0
    %620 = vmatprep.subr.mxu0 0.0
    %621 = vmatpush1.xpose.msra.mxu0 0.0
    %622 = vmatprep.subr.mxu0 0.0
    %623 = vmatpush1.xpose.msra.mxu0 0.0
    %624 = vmatprep.subr.mxu0 0.0
    %625 = vmatpush1.xpose.msra.mxu0 0.0
    %626 = vmatprep.subr.mxu0 0.0
    %627 = vmatpush1.xpose.msra.mxu0 0.0
    %628 = vmatprep.subr.mxu0 0.0
    %629 = vmatpush1.xpose.msra.mxu0 0.0
    %630 = vmatprep.subr.mxu0 0.0
    %631 = vmatpush1.xpose.msra.mxu0 0.0
    %632 = vmatprep.mubr.f32.mxu0 0.0
    %633 = vmatmul.mubr.f32.gmra.mrb[0].mxu0 %v521
    %v634 = vpop.f32.mrb[0].mxu0
    %v635 = vadd.f32 %v112, %v634
    %v636 = vpop.f32.mrb[0].mxu0
    %637 = vmatprep.mubr.f32.mxu0 0.0
    %638 = vmatmul.mubr.f32.gmra.mrb[0].mxu0 %v524
    %v639 = vpop.f32.mrb[0].mxu0
    %v640 = vadd.f32 %v113, %v639
    %v641 = vpop.f32.mrb[0].mxu0
    %642 = vmatprep.mubr.f32.mxu0 0.0
    %643 = vmatmul.mubr.f32.gmra.mrb[0].mxu0 %v527
    %v644 = vpop.f32.mrb[0].mxu0
    %v645 = vadd.f32 %v114, %v644
    %v646 = vpop.f32.mrb[0].mxu0
    %647 = vmatprep.mubr.f32.mxu0 0.0
    %648 = vmatmul.mubr.f32.gmra.mrb[0].mxu0 %v530
    %v649 = vpop.f32.mrb[0].mxu0
    %v650 = vadd.f32 %v115, %v649
    %v651 = vpop.f32.mrb[0].mxu0
    %652 = vmatprep.mubr.f32.mxu0 0.0
    %653 = vmatmul.mubr.f32.gmra.mrb[0].mxu0 %v533
    %v654 = vpop.f32.mrb[0].mxu0
    %v655 = vadd.f32 %v116, %v654
    %v656 = vpop.f32.mrb[0].mxu0
    %657 = vmatprep.mubr.f32.mxu0 0.0
    %658 = vmatmul.mubr.f32.gmra.mrb[0].mxu0 %v536
    %v659 = vpop.f32.mrb[0].mxu0
    %v660 = vadd.f32 %v117, %v659
    %v661 = vpop.f32.mrb[0].mxu0
    %662 = vmatprep.mubr.f32.mxu0 0.0
    %663 = vmatmul.mubr.f32.gmra.mrb[0].mxu0 %v539
    %v664 = vpop.f32.mrb[0].mxu0
    %v665 = vadd.f32 %v118, %v664
    %v666 = vpop.f32.mrb[0].mxu0
    %667 = vmatprep.mubr.f32.mxu0 0.0
    %668 = vmatmul.mubr.f32.gmra.mrb[0].mxu0 %v542
    %v669 = vpop.f32.mrb[0].mxu0
    %v670 = vadd.f32 %v119, %v669
    %v671 = vpop.f32.mrb[0].mxu0
    %672 = vdwg.mxu0
    %vm673 = vcmask 523264
    %v674 = vsel %vm673, %v635, -inf
    %675 = vmax.xlane.f32.xlu0 %v674
    %v676 = vpop.xlane.xlu0 %675
    %v677 = vsel %vm673, %v640, -inf
    %678 = vmax.xlane.f32.xlu0 %v677
    %v679 = vpop.xlane.xlu0 %678
    %v680 = vsel %vm673, %v645, -inf
    %681 = vmax.xlane.f32.xlu0 %v680
    %v682 = vpop.xlane.xlu0 %681
    %v683 = vsel %vm673, %v650, -inf
    %684 = vmax.xlane.f32.xlu0 %v683
    %v685 = vpop.xlane.xlu0 %684
    %v686 = vsel %vm673, %v655, -inf
    %687 = vmax.xlane.f32.xlu0 %v686
    %v688 = vpop.xlane.xlu0 %687
    %v689 = vsel %vm673, %v660, -inf
    %690 = vmax.xlane.f32.xlu0 %v689
    %v691 = vpop.xlane.xlu0 %690
    %v692 = vsel %vm673, %v665, -inf
    %693 = vmax.xlane.f32.xlu0 %v692
    %v694 = vpop.xlane.xlu0 %693
    %v695 = vsel %vm673, %v670, -inf
    %696 = vmax.xlane.f32.xlu0 %v695
    %v697 = vpop.xlane.xlu0 %696
    %v698 = vsub.f32 %v635, %v676
    %v699 = vsub.f32 %v640, %v679
    %v700 = vsub.f32 %v645, %v682
    %v701 = vsub.f32 %v650, %v685
    %v702 = vsub.f32 %v655, %v688
    %v703 = vsub.f32 %v660, %v691
    %v704 = vsub.f32 %v665, %v694
    %v705 = vsub.f32 %v670, %v697
    %v706 = vmul.f32 %v698, 1.442695
    %v707 = vpow.pop %v706
    %v708 = vmul.f32 %v699, 1.442695
    %v709 = vpow.pop %v708
    %v710 = vmul.f32 %v700, 1.442695
    %v711 = vpow.pop %v710
    %v712 = vmul.f32 %v701, 1.442695
    %v713 = vpow.pop %v712
    %v714 = vmul.f32 %v702, 1.442695
    %v715 = vpow.pop %v714
    %v716 = vmul.f32 %v703, 1.442695
    %v717 = vpow.pop %v716
    %v718 = vmul.f32 %v704, 1.442695
    %v719 = vpow.pop %v718
    %v720 = vmul.f32 %v705, 1.442695
    %v721 = vpow.pop %v720
    %v722 = vsel %vm673, %v707, 0.0
    %723 = vadd.xlane.f32.xlu0 %v722
    %v724 = vpop.xlane.xlu0 %723
    %v725 = vsel %vm673, %v709, 0.0
    %726 = vadd.xlane.f32.xlu0 %v725
    %v727 = vpop.xlane.xlu0 %726
    %v728 = vsel %vm673, %v711, 0.0
    %729 = vadd.xlane.f32.xlu0 %v728
    %v730 = vpop.xlane.xlu0 %729
    %v731 = vsel %vm673, %v713, 0.0
    %732 = vadd.xlane.f32.xlu0 %v731
    %v733 = vpop.xlane.xlu0 %732
    %v734 = vsel %vm673, %v715, 0.0
    %735 = vadd.xlane.f32.xlu0 %v734
    %v736 = vpop.xlane.xlu0 %735
    %v737 = vsel %vm673, %v717, 0.0
    %738 = vadd.xlane.f32.xlu0 %v737
    %v739 = vpop.xlane.xlu0 %738
    %v740 = vsel %vm673, %v719, 0.0
    %741 = vadd.xlane.f32.xlu0 %v740
    %v742 = vpop.xlane.xlu0 %741
    %v743 = vsel %vm673, %v721, 0.0
    %744 = vadd.xlane.f32.xlu0 %v743
    %v745 = vpop.xlane.xlu0 %744
    %v746 = vrcp.pop %v724
    %v747 = vrcp.pop %v727
    %v748 = vrcp.pop %v730
    %v749 = vrcp.pop %v733
    %v750 = vrcp.pop %v736
    %v751 = vrcp.pop %v739
    %v752 = vrcp.pop %v742
    %v753 = vrcp.pop %v745
    %v754 = vmul.f32 %v707, %v746
    %v755 = vmul.f32 %v709, %v747
    %v756 = vmul.f32 %v711, %v748
    %v757 = vmul.f32 %v713, %v749
    %v758 = vmul.f32 %v715, %v750
    %v759 = vmul.f32 %v717, %v751
    %v760 = vmul.f32 %v719, %v752
    %v761 = vmul.f32 %v721, %v753
    %v763 = vsel %vm673, %v754, 0
    %v766 = vsel %vm673, %v755, 0
    %v769 = vsel %vm673, %v756, 0
    %v772 = vsel %vm673, %v757, 0
    %v775 = vsel %vm673, %v758, 0
    %v778 = vsel %vm673, %v759, 0
    %v781 = vsel %vm673, %v760, 0
    %v784 = vsel %vm673, %v761, 0
    %786 = vmatprep.subr.mxu0 0.0
    %787 = vmatpush1.msra.mxu0 %v473
    %788 = vmatprep.subr.mxu0 0.0
    %789 = vmatpush1.msra.mxu0 %v478
    %790 = vmatprep.subr.mxu0 0.0
    %791 = vmatpush1.msra.mxu0 %v483
    %792 = vmatprep.subr.mxu0 0.0
    %793 = vmatpush1.msra.mxu0 %v488
    %794 = vmatprep.subr.mxu0 0.0
    %795 = vmatpush1.msra.mxu0 %v493
    %796 = vmatprep.subr.mxu0 0.0
    %797 = vmatpush1.msra.mxu0 %v498
    %798 = vmatprep.subr.mxu0 0.0
    %799 = vmatpush1.msra.mxu0 %v503
    %800 = vmatprep.subr.mxu0 0.0
    %801 = vmatpush1.msra.mxu0 %v508
    %802 = vmatprep.subr.mxu0 0.0
    %803 = vmatpush1.msra.mxu0 0.0
    %804 = vmatprep.subr.mxu0 0.0
    %805 = vmatpush1.msra.mxu0 0.0
    %806 = vmatprep.subr.mxu0 0.0
    %807 = vmatpush1.msra.mxu0 0.0
    %808 = vmatprep.subr.mxu0 0.0
    %809 = vmatpush1.msra.mxu0 0.0
    %810 = vmatprep.subr.mxu0 0.0
    %811 = vmatpush1.msra.mxu0 0.0
    %812 = vmatprep.subr.mxu0 0.0
    %813 = vmatpush1.msra.mxu0 0.0
    %814 = vmatprep.subr.mxu0 0.0
    %815 = vmatpush1.msra.mxu0 0.0
    %816 = vmatprep.subr.mxu0 0.0
    %817 = vmatpush1.msra.mxu0 0.0
    %818 = vmatprep.subr.mxu0 0.0
    %819 = vmatpush1.msra.mxu0 0.0
    %820 = vmatprep.subr.mxu0 0.0
    %821 = vmatpush1.msra.mxu0 0.0
    %822 = vmatprep.subr.mxu0 0.0
    %823 = vmatpush1.msra.mxu0 0.0
    %824 = vmatprep.subr.mxu0 0.0
    %825 = vmatpush1.msra.mxu0 0.0
    %826 = vmatprep.subr.mxu0 0.0
    %827 = vmatpush1.msra.mxu0 0.0
    %828 = vmatprep.subr.mxu0 0.0
    %829 = vmatpush1.msra.mxu0 0.0
    %830 = vmatprep.subr.mxu0 0.0
    %831 = vmatpush1.msra.mxu0 0.0
    %832 = vmatprep.subr.mxu0 0.0
    %833 = vmatpush1.msra.mxu0 0.0
    %834 = vmatprep.subr.mxu0 0.0
    %835 = vmatpush1.msra.mxu0 0.0
    %836 = vmatprep.subr.mxu0 0.0
    %837 = vmatpush1.msra.mxu0 0.0
    %838 = vmatprep.subr.mxu0 0.0
    %839 = vmatpush1.msra.mxu0 0.0
    %840 = vmatprep.subr.mxu0 0.0
    %841 = vmatpush1.msra.mxu0 0.0
    %842 = vmatprep.subr.mxu0 0.0
    %843 = vmatpush1.msra.mxu0 0.0
    %844 = vmatprep.subr.mxu0 0.0
    %845 = vmatpush1.msra.mxu0 0.0
    %846 = vmatprep.subr.mxu0 0.0
    %847 = vmatpush1.msra.mxu0 0.0
    %848 = vmatprep.subr.mxu0 0.0
    %849 = vmatpush1.msra.mxu0 0.0
    %850 = vmatprep.mubr.f32.mxu0 0.0
    %851 = vmatmul.mubr.f32.gmra.mrb[0].mxu0 %v763
    %v852 = vpop.f32.mrb[0].mxu0
    %v853 = vadd.f32 0.0, %v852
    %v854 = vpop.f32.mrb[0].mxu0
    %855 = vmatprep.mubr.f32.mxu0 0.0
    %856 = vmatmul.mubr.f32.gmra.mrb[0].mxu0 %v766
    %v857 = vpop.f32.mrb[0].mxu0
    %v858 = vadd.f32 0.0, %v857
    %v859 = vpop.f32.mrb[0].mxu0
    %860 = vmatprep.mubr.f32.mxu0 0.0
    %861 = vmatmul.mubr.f32.gmra.mrb[0].mxu0 %v769
    %v862 = vpop.f32.mrb[0].mxu0
    %v863 = vadd.f32 0.0, %v862
    %v864 = vpop.f32.mrb[0].mxu0
    %865 = vmatprep.mubr.f32.mxu0 0.0
    %866 = vmatmul.mubr.f32.gmra.mrb[0].mxu0 %v772
    %v867 = vpop.f32.mrb[0].mxu0
    %v868 = vadd.f32 0.0, %v867
    %v869 = vpop.f32.mrb[0].mxu0
    %870 = vmatprep.mubr.f32.mxu0 0.0
    %871 = vmatmul.mubr.f32.gmra.mrb[0].mxu0 %v775
    %v872 = vpop.f32.mrb[0].mxu0
    %v873 = vadd.f32 0.0, %v872
    %v874 = vpop.f32.mrb[0].mxu0
    %875 = vmatprep.mubr.f32.mxu0 0.0
    %876 = vmatmul.mubr.f32.gmra.mrb[0].mxu0 %v778
    %v877 = vpop.f32.mrb[0].mxu0
    %v878 = vadd.f32 0.0, %v877
    %v879 = vpop.f32.mrb[0].mxu0
    %880 = vmatprep.mubr.f32.mxu0 0.0
    %881 = vmatmul.mubr.f32.gmra.mrb[0].mxu0 %v781
    %v882 = vpop.f32.mrb[0].mxu0
    %v883 = vadd.f32 0.0, %v882
    %v884 = vpop.f32.mrb[0].mxu0
    %885 = vmatprep.mubr.f32.mxu0 0.0
    %886 = vmatmul.mubr.f32.gmra.mrb[0].mxu0 %v784
    %v887 = vpop.f32.mrb[0].mxu0
    %v888 = vadd.f32 0.0, %v887
    %v889 = vpop.f32.mrb[0].mxu0
    %890 = vdwg.mxu0
    %891 = vrot.lane.b32.xlu0 %v511, 120
    %v892 = vpop.permute.xlu0 %891
    %893 = vrot.lane.b32.xlu0 %v512, 120
    %v894 = vpop.permute.xlu0 %893
    %895 = vrot.lane.b32.xlu0 %v513, 120
    %v896 = vpop.permute.xlu0 %895
    %897 = vrot.lane.b32.xlu0 %v514, 120
    %v898 = vpop.permute.xlu0 %897
    %899 = vrot.lane.b32.xlu0 %v515, 120
    %v900 = vpop.permute.xlu0 %899
    %901 = vrot.lane.b32.xlu0 %v516, 120
    %v902 = vpop.permute.xlu0 %901
    %903 = vrot.lane.b32.xlu0 %v517, 120
    %v904 = vpop.permute.xlu0 %903
    %905 = vrot.lane.b32.xlu0 %v518, 120
    %v906 = vpop.permute.xlu0 %905
    %907 = vrot.lane.b32.xlu0 %v352, 120
    %v908 = vpop.permute.xlu0 %907
    %909 = vrot.lane.b32.xlu0 %v357, 120
    %v910 = vpop.permute.xlu0 %909
    %911 = vrot.lane.b32.xlu0 %v362, 120
    %v912 = vpop.permute.xlu0 %911
    %913 = vrot.lane.b32.xlu0 %v367, 120
    %v914 = vpop.permute.xlu0 %913
    %915 = vrot.lane.b32.xlu0 %v372, 120
    %v916 = vpop.permute.xlu0 %915
    %917 = vrot.lane.b32.xlu0 %v377, 120
    %v918 = vpop.permute.xlu0 %917
    %919 = vrot.lane.b32.xlu0 %v382, 120
    %v920 = vpop.permute.xlu0 %919
    %921 = vrot.lane.b32.xlu0 %v387, 120
    %v922 = vpop.permute.xlu0 %921
    %v923 = vsel %vm519, %v892, 0
    %v925 = vsel %vm519, %v894, 0
    %v927 = vsel %vm519, %v896, 0
    %v929 = vsel %vm519, %v898, 0
    %v931 = vsel %vm519, %v900, 0
    %v933 = vsel %vm519, %v902, 0
    %v935 = vsel %vm519, %v904, 0
    %v937 = vsel %vm519, %v906, 0
    %v939 = vsel %vm519, %v908, 0
    %v941 = vsel %vm519, %v910, 0
    %v943 = vsel %vm519, %v912, 0
    %v945 = vsel %vm519, %v914, 0
    %v947 = vsel %vm519, %v916, 0
    %v949 = vsel %vm519, %v918, 0
    %v951 = vsel %vm519, %v920, 0
    %v953 = vsel %vm519, %v922, 0
    %955 = vmatprep.subr.mxu0 0.0
    %956 = vmatpush1.xpose.msra.mxu0 %v939
    %957 = vmatprep.subr.mxu0 0.0
    %958 = vmatpush1.xpose.msra.mxu0 %v941
    %959 = vmatprep.subr.mxu0 0.0
    %960 = vmatpush1.xpose.msra.mxu0 %v943
    %961 = vmatprep.subr.mxu0 0.0
    %962 = vmatpush1.xpose.msra.mxu0 %v945
    %963 = vmatprep.subr.mxu0 0.0
    %964 = vmatpush1.xpose.msra.mxu0 %v947
    %965 = vmatprep.subr.mxu0 0.0
    %966 = vmatpush1.xpose.msra.mxu0 %v949
    %967 = vmatprep.subr.mxu0 0.0
    %968 = vmatpush1.xpose.msra.mxu0 %v951
    %969 = vmatprep.subr.mxu0 0.0
    %970 = vmatpush1.xpose.msra.mxu0 %v953
    %971 = vmatprep.subr.mxu0 0.0
    %972 = vmatpush1.xpose.msra.mxu0 0.0
    %973 = vmatprep.subr.mxu0 0.0
    %974 = vmatpush1.xpose.msra.mxu0 0.0
    %975 = vmatprep.subr.mxu0 0.0
    %976 = vmatpush1.xpose.msra.mxu0 0.0
    %977 = vmatprep.subr.mxu0 0.0
    %978 = vmatpush1.xpose.msra.mxu0 0.0
    %979 = vmatprep.subr.mxu0 0.0
    %980 = vmatpush1.xpose.msra.mxu0 0.0
    %981 = vmatprep.subr.mxu0 0.0
    %982 = vmatpush1.xpose.msra.mxu0 0.0
    %983 = vmatprep.subr.mxu0 0.0
    %984 = vmatpush1.xpose.msra.mxu0 0.0
    %985 = vmatprep.subr.mxu0 0.0
    %986 = vmatpush1.xpose.msra.mxu0 0.0
    %987 = vmatprep.subr.mxu0 0.0
    %988 = vmatpush1.xpose.msra.mxu0 0.0
    %989 = vmatprep.subr.mxu0 0.0
    %990 = vmatpush1.xpose.msra.mxu0 0.0
    %991 = vmatprep.subr.mxu0 0.0
    %992 = vmatpush1.xpose.msra.mxu0 0.0
    %993 = vmatprep.subr.mxu0 0.0
    %994 = vmatpush1.xpose.msra.mxu0 0.0
    %995 = vmatprep.subr.mxu0 0.0
    %996 = vmatpush1.xpose.msra.mxu0 0.0
    %997 = vmatprep.subr.mxu0 0.0
    %998 = vmatpush1.xpose.msra.mxu0 0.0
    %999 = vmatprep.subr.mxu0 0.0
    %1000 = vmatpush1.xpose.msra.mxu0 0.0
    %1001 = vmatprep.subr.mxu0 0.0
    %1002 = vmatpush1.xpose.msra.mxu0 0.0
    %1003 = vmatprep.subr.mxu0 0.0
    %1004 = vmatpush1.xpose.msra.mxu0 0.0
    %1005 = vmatprep.subr.mxu0 0.0
    %1006 = vmatpush1.xpose.msra.mxu0 0.0
    %1007 = vmatprep.subr.mxu0 0.0
    %1008 = vmatpush1.xpose.msra.mxu0 0.0
    %1009 = vmatprep.subr.mxu0 0.0
    %1010 = vmatpush1.xpose.msra.mxu0 0.0
    %1011 = vmatprep.subr.mxu0 0.0
    %1012 = vmatpush1.xpose.msra.mxu0 0.0
    %1013 = vmatprep.subr.mxu0 0.0
    %1014 = vmatpush1.xpose.msra.mxu0 0.0
    %1015 = vmatprep.subr.mxu0 0.0
    %1016 = vmatpush1.xpose.msra.mxu0 0.0
    %1017 = vmatprep.subr.mxu0 0.0
    %1018 = vmatpush1.xpose.msra.mxu0 0.0
    %1019 = vmatprep.mubr.f32.mxu0 0.0
    %1020 = vmatmul.mubr.f32.gmra.mrb[0].mxu0 %v923
    %v1021 = vpop.f32.mrb[0].mxu0
    %v1022 = vadd.f32 %v112, %v1021
    %v1023 = vpop.f32.mrb[0].mxu0
    %1024 = vmatprep.mubr.f32.mxu0 0.0
    %1025 = vmatmul.mubr.f32.gmra.mrb[0].mxu0 %v925
    %v1026 = vpop.f32.mrb[0].mxu0
    %v1027 = vadd.f32 %v113, %v1026
    %v1028 = vpop.f32.mrb[0].mxu0
    %1029 = vmatprep.mubr.f32.mxu0 0.0
    %1030 = vmatmul.mubr.f32.gmra.mrb[0].mxu0 %v927
    %v1031 = vpop.f32.mrb[0].mxu0
    %v1032 = vadd.f32 %v114, %v1031
    %v1033 = vpop.f32.mrb[0].mxu0
    %1034 = vmatprep.mubr.f32.mxu0 0.0
    %1035 = vmatmul.mubr.f32.gmra.mrb[0].mxu0 %v929
    %v1036 = vpop.f32.mrb[0].mxu0
    %v1037 = vadd.f32 %v115, %v1036
    %v1038 = vpop.f32.mrb[0].mxu0
    %1039 = vmatprep.mubr.f32.mxu0 0.0
    %1040 = vmatmul.mubr.f32.gmra.mrb[0].mxu0 %v931
    %v1041 = vpop.f32.mrb[0].mxu0
    %v1042 = vadd.f32 %v116, %v1041
    %v1043 = vpop.f32.mrb[0].mxu0
    %1044 = vmatprep.mubr.f32.mxu0 0.0
    %1045 = vmatmul.mubr.f32.gmra.mrb[0].mxu0 %v933
    %v1046 = vpop.f32.mrb[0].mxu0
    %v1047 = vadd.f32 %v117, %v1046
    %v1048 = vpop.f32.mrb[0].mxu0
    %1049 = vmatprep.mubr.f32.mxu0 0.0
    %1050 = vmatmul.mubr.f32.gmra.mrb[0].mxu0 %v935
    %v1051 = vpop.f32.mrb[0].mxu0
    %v1052 = vadd.f32 %v118, %v1051
    %v1053 = vpop.f32.mrb[0].mxu0
    %1054 = vmatprep.mubr.f32.mxu0 0.0
    %1055 = vmatmul.mubr.f32.gmra.mrb[0].mxu0 %v937
    %v1056 = vpop.f32.mrb[0].mxu0
    %v1057 = vadd.f32 %v119, %v1056
    %v1058 = vpop.f32.mrb[0].mxu0
    %1059 = vdwg.mxu0
    %v1060 = vsel %vm673, %v1022, -inf
    %1061 = vmax.xlane.f32.xlu0 %v1060
    %v1062 = vpop.xlane.xlu0 %1061
    %v1063 = vsel %vm673, %v1027, -inf
    %1064 = vmax.xlane.f32.xlu0 %v1063
    %v1065 = vpop.xlane.xlu0 %1064
    %v1066 = vsel %vm673, %v1032, -inf
    %1067 = vmax.xlane.f32.xlu0 %v1066
    %v1068 = vpop.xlane.xlu0 %1067
    %v1069 = vsel %vm673, %v1037, -inf
    %1070 = vmax.xlane.f32.xlu0 %v1069
    %v1071 = vpop.xlane.xlu0 %1070
    %v1072 = vsel %vm673, %v1042, -inf
    %1073 = vmax.xlane.f32.xlu0 %v1072
    %v1074 = vpop.xlane.xlu0 %1073
    %v1075 = vsel %vm673, %v1047, -inf
    %1076 = vmax.xlane.f32.xlu0 %v1075
    %v1077 = vpop.xlane.xlu0 %1076
    %v1078 = vsel %vm673, %v1052, -inf
    %1079 = vmax.xlane.f32.xlu0 %v1078
    %v1080 = vpop.xlane.xlu0 %1079
    %v1081 = vsel %vm673, %v1057, -inf
    %1082 = vmax.xlane.f32.xlu0 %v1081
    %v1083 = vpop.xlane.xlu0 %1082
    %v1084 = vsub.f32 %v1022, %v1062
    %v1085 = vsub.f32 %v1027, %v1065
    %v1086 = vsub.f32 %v1032, %v1068
    %v1087 = vsub.f32 %v1037, %v1071
    %v1088 = vsub.f32 %v1042, %v1074
    %v1089 = vsub.f32 %v1047, %v1077
    %v1090 = vsub.f32 %v1052, %v1080
    %v1091 = vsub.f32 %v1057, %v1083
    %v1092 = vmul.f32 %v1084, 1.442695
    %v1093 = vpow.pop %v1092
    %v1094 = vmul.f32 %v1085, 1.442695
    %v1095 = vpow.pop %v1094
    %v1096 = vmul.f32 %v1086, 1.442695
    %v1097 = vpow.pop %v1096
    %v1098 = vmul.f32 %v1087, 1.442695
    %v1099 = vpow.pop %v1098
    %v1100 = vmul.f32 %v1088, 1.442695
    %v1101 = vpow.pop %v1100
    %v1102 = vmul.f32 %v1089, 1.442695
    %v1103 = vpow.pop %v1102
    %v1104 = vmul.f32 %v1090, 1.442695
    %v1105 = vpow.pop %v1104
    %v1106 = vmul.f32 %v1091, 1.442695
    %v1107 = vpow.pop %v1106
    %v1108 = vsel %vm673, %v1093, 0.0
    %1109 = vadd.xlane.f32.xlu0 %v1108
    %v1110 = vpop.xlane.xlu0 %1109
    %v1111 = vsel %vm673, %v1095, 0.0
    %1112 = vadd.xlane.f32.xlu0 %v1111
    %v1113 = vpop.xlane.xlu0 %1112
    %v1114 = vsel %vm673, %v1097, 0.0
    %1115 = vadd.xlane.f32.xlu0 %v1114
    %v1116 = vpop.xlane.xlu0 %1115
    %v1117 = vsel %vm673, %v1099, 0.0
    %1118 = vadd.xlane.f32.xlu0 %v1117
    %v1119 = vpop.xlane.xlu0 %1118
    %v1120 = vsel %vm673, %v1101, 0.0
    %1121 = vadd.xlane.f32.xlu0 %v1120
    %v1122 = vpop.xlane.xlu0 %1121
    %v1123 = vsel %vm673, %v1103, 0.0
    %1124 = vadd.xlane.f32.xlu0 %v1123
    %v1125 = vpop.xlane.xlu0 %1124
    %v1126 = vsel %vm673, %v1105, 0.0
    %1127 = vadd.xlane.f32.xlu0 %v1126
    %v1128 = vpop.xlane.xlu0 %1127
    %v1129 = vsel %vm673, %v1107, 0.0
    %1130 = vadd.xlane.f32.xlu0 %v1129
    %v1131 = vpop.xlane.xlu0 %1130
    %v1132 = vrcp.pop %v1110
    %v1133 = vrcp.pop %v1113
    %v1134 = vrcp.pop %v1116
    %v1135 = vrcp.pop %v1119
    %v1136 = vrcp.pop %v1122
    %v1137 = vrcp.pop %v1125
    %v1138 = vrcp.pop %v1128
    %v1139 = vrcp.pop %v1131
    %v1140 = vmul.f32 %v1093, %v1132
    %v1141 = vmul.f32 %v1095, %v1133
    %v1142 = vmul.f32 %v1097, %v1134
    %v1143 = vmul.f32 %v1099, %v1135
    %v1144 = vmul.f32 %v1101, %v1136
    %v1145 = vmul.f32 %v1103, %v1137
    %v1146 = vmul.f32 %v1105, %v1138
    %v1147 = vmul.f32 %v1107, %v1139
    %1156 = vrot.lane.b32.xlu0 %v473, 120
    %v1157 = vpop.permute.xlu0 %1156
    %1158 = vrot.lane.b32.xlu0 %v478, 120
    %v1159 = vpop.permute.xlu0 %1158
    %1160 = vrot.lane.b32.xlu0 %v483, 120
    %v1161 = vpop.permute.xlu0 %1160
    %1162 = vrot.lane.b32.xlu0 %v488, 120
    %v1163 = vpop.permute.xlu0 %1162
    %1164 = vrot.lane.b32.xlu0 %v493, 120
    %v1165 = vpop.permute.xlu0 %1164
    %1166 = vrot.lane.b32.xlu0 %v498, 120
    %v1167 = vpop.permute.xlu0 %1166
    %1168 = vrot.lane.b32.xlu0 %v503, 120
    %v1169 = vpop.permute.xlu0 %1168
    %1170 = vrot.lane.b32.xlu0 %v508, 120
    %v1171 = vpop.permute.xlu0 %1170
    %v1181 = vsel %vm673, %v1140, 0
    %v1184 = vsel %vm673, %v1141, 0
    %v1187 = vsel %vm673, %v1142, 0
    %v1190 = vsel %vm673, %v1143, 0
    %v1193 = vsel %vm673, %v1144, 0
    %v1196 = vsel %vm673, %v1145, 0
    %v1199 = vsel %vm673, %v1146, 0
    %v1202 = vsel %vm673, %v1147, 0
    %1204 = vmatprep.subr.mxu0 0.0
    %1205 = vmatpush1.msra.mxu0 %v1157
    %1206 = vmatprep.subr.mxu0 0.0
    %1207 = vmatpush1.msra.mxu0 %v1159
    %1208 = vmatprep.subr.mxu0 0.0
    %1209 = vmatpush1.msra.mxu0 %v1161
    %1210 = vmatprep.subr.mxu0 0.0
    %1211 = vmatpush1.msra.mxu0 %v1163
    %1212 = vmatprep.subr.mxu0 0.0
    %1213 = vmatpush1.msra.mxu0 %v1165
    %1214 = vmatprep.subr.mxu0 0.0
    %1215 = vmatpush1.msra.mxu0 %v1167
    %1216 = vmatprep.subr.mxu0 0.0
    %1217 = vmatpush1.msra.mxu0 %v1169
    %1218 = vmatprep.subr.mxu0 0.0
    %1219 = vmatpush1.msra.mxu0 %v1171
    %1220 = vmatprep.subr.mxu0 0.0
    %1221 = vmatpush1.msra.mxu0 0.0
    %1222 = vmatprep.subr.mxu0 0.0
    %1223 = vmatpush1.msra.mxu0 0.0
    %1224 = vmatprep.subr.mxu0 0.0
    %1225 = vmatpush1.msra.mxu0 0.0
    %1226 = vmatprep.subr.mxu0 0.0
    %1227 = vmatpush1.msra.mxu0 0.0
    %1228 = vmatprep.subr.mxu0 0.0
    %1229 = vmatpush1.msra.mxu0 0.0
    %1230 = vmatprep.subr.mxu0 0.0
    %1231 = vmatpush1.msra.mxu0 0.0
    %1232 = vmatprep.subr.mxu0 0.0
    %1233 = vmatpush1.msra.mxu0 0.0
    %1234 = vmatprep.subr.mxu0 0.0
    %1235 = vmatpush1.msra.mxu0 0.0
    %1236 = vmatprep.subr.mxu0 0.0
    %1237 = vmatpush1.msra.mxu0 0.0
    %1238 = vmatprep.subr.mxu0 0.0
    %1239 = vmatpush1.msra.mxu0 0.0
    %1240 = vmatprep.subr.mxu0 0.0
    %1241 = vmatpush1.msra.mxu0 0.0
    %1242 = vmatprep.subr.mxu0 0.0
    %1243 = vmatpush1.msra.mxu0 0.0
    %1244 = vmatprep.subr.mxu0 0.0
    %1245 = vmatpush1.msra.mxu0 0.0
    %1246 = vmatprep.subr.mxu0 0.0
    %1247 = vmatpush1.msra.mxu0 0.0
    %1248 = vmatprep.subr.mxu0 0.0
    %1249 = vmatpush1.msra.mxu0 0.0
    %1250 = vmatprep.subr.mxu0 0.0
    %1251 = vmatpush1.msra.mxu0 0.0
    %1252 = vmatprep.subr.mxu0 0.0
    %1253 = vmatpush1.msra.mxu0 0.0
    %1254 = vmatprep.subr.mxu0 0.0
    %1255 = vmatpush1.msra.mxu0 0.0
    %1256 = vmatprep.subr.mxu0 0.0
    %1257 = vmatpush1.msra.mxu0 0.0
    %1258 = vmatprep.subr.mxu0 0.0
    %1259 = vmatpush1.msra.mxu0 0.0
    %1260 = vmatprep.subr.mxu0 0.0
    %1261 = vmatpush1.msra.mxu0 0.0
    %1262 = vmatprep.subr.mxu0 0.0
    %1263 = vmatpush1.msra.mxu0 0.0
    %1264 = vmatprep.subr.mxu0 0.0
    %1265 = vmatpush1.msra.mxu0 0.0
    %1266 = vmatprep.subr.mxu0 0.0
    %1267 = vmatpush1.msra.mxu0 0.0
    %1268 = vmatprep.mubr.f32.mxu0 0.0
    %1269 = vmatmul.mubr.f32.gmra.mrb[0].mxu0 %v1181
    %v1270 = vpop.f32.mrb[0].mxu0
    %v1271 = vadd.f32 0.0, %v1270
    %v1272 = vpop.f32.mrb[0].mxu0
    %1273 = vmatprep.mubr.f32.mxu0 0.0
    %1274 = vmatmul.mubr.f32.gmra.mrb[0].mxu0 %v1184
    %v1275 = vpop.f32.mrb[0].mxu0
    %v1276 = vadd.f32 0.0, %v1275
    %v1277 = vpop.f32.mrb[0].mxu0
    %1278 = vmatprep.mubr.f32.mxu0 0.0
    %1279 = vmatmul.mubr.f32.gmra.mrb[0].mxu0 %v1187
    %v1280 = vpop.f32.mrb[0].mxu0
    %v1281 = vadd.f32 0.0, %v1280
    %v1282 = vpop.f32.mrb[0].mxu0
    %1283 = vmatprep.mubr.f32.mxu0 0.0
    %1284 = vmatmul.mubr.f32.gmra.mrb[0].mxu0 %v1190
    %v1285 = vpop.f32.mrb[0].mxu0
    %v1286 = vadd.f32 0.0, %v1285
    %v1287 = vpop.f32.mrb[0].mxu0
    %1288 = vmatprep.mubr.f32.mxu0 0.0
    %1289 = vmatmul.mubr.f32.gmra.mrb[0].mxu0 %v1193
    %v1290 = vpop.f32.mrb[0].mxu0
    %v1291 = vadd.f32 0.0, %v1290
    %v1292 = vpop.f32.mrb[0].mxu0
    %1293 = vmatprep.mubr.f32.mxu0 0.0
    %1294 = vmatmul.mubr.f32.gmra.mrb[0].mxu0 %v1196
    %v1295 = vpop.f32.mrb[0].mxu0
    %v1296 = vadd.f32 0.0, %v1295
    %v1297 = vpop.f32.mrb[0].mxu0
    %1298 = vmatprep.mubr.f32.mxu0 0.0
    %1299 = vmatmul.mubr.f32.gmra.mrb[0].mxu0 %v1199
    %v1300 = vpop.f32.mrb[0].mxu0
    %v1301 = vadd.f32 0.0, %v1300
    %v1302 = vpop.f32.mrb[0].mxu0
    %1303 = vmatprep.mubr.f32.mxu0 0.0
    %1304 = vmatmul.mubr.f32.gmra.mrb[0].mxu0 %v1202
    %v1305 = vpop.f32.mrb[0].mxu0
    %v1306 = vadd.f32 0.0, %v1305
    %v1307 = vpop.f32.mrb[0].mxu0
    %1308 = vdwg.mxu0
    %1309 = vrot.lane.b32.xlu0 %v123, 32
    %v1310 = vpop.permute.xlu0 %1309
    %v1313 = vsel %vm519, %v1271, 0
    %v1316 = vsel %vm519, %v1276, 0
    %v1319 = vsel %vm519, %v1281, 0
    %v1322 = vsel %vm519, %v1286, 0
    %v1325 = vsel %vm519, %v1291, 0
    %v1328 = vsel %vm519, %v1296, 0
    %v1331 = vsel %vm519, %v1301, 0
    %v1334 = vsel %vm519, %v1306, 0
    %1336 = vmatprep.subr.mxu0 0.0
    %1337 = vmatpush1.msra.mxu0 %v1310
    %1338 = vmatprep.subr.mxu0 0.0
    %1339 = vmatpush1.msra.mxu0 0.0
    %1340 = vmatprep.subr.mxu0 0.0
    %1341 = vmatpush1.msra.mxu0 0.0
    %1342 = vmatprep.subr.mxu0 0.0
    %1343 = vmatpush1.msra.mxu0 0.0
    %1344 = vmatprep.subr.mxu0 0.0
    %1345 = vmatpush1.msra.mxu0 0.0
    %1346 = vmatprep.subr.mxu0 0.0
    %1347 = vmatpush1.msra.mxu0 0.0
    %1348 = vmatprep.subr.mxu0 0.0
    %1349 = vmatpush1.msra.mxu0 0.0
    %1350 = vmatprep.subr.mxu0 0.0
    %1351 = vmatpush1.msra.mxu0 0.0
    %1352 = vmatprep.subr.mxu0 0.0
    %1353 = vmatpush1.msra.mxu0 0.0
    %1354 = vmatprep.subr.mxu0 0.0
    %1355 = vmatpush1.msra.mxu0 0.0
    %1356 = vmatprep.subr.mxu0 0.0
    %1357 = vmatpush1.msra.mxu0 0.0
    %1358 = vmatprep.subr.mxu0 0.0
    %1359 = vmatpush1.msra.mxu0 0.0
    %1360 = vmatprep.subr.mxu0 0.0
    %1361 = vmatpush1.msra.mxu0 0.0
    %1362 = vmatprep.subr.mxu0 0.0
    %1363 = vmatpush1.msra.mxu0 0.0
    %1364 = vmatprep.subr.mxu0 0.0
    %1365 = vmatpush1.msra.mxu0 0.0
    %1366 = vmatprep.subr.mxu0 0.0
    %1367 = vmatpush1.msra.mxu0 0.0
    %1368 = vmatprep.subr.mxu0 0.0
    %1369 = vmatpush1.msra.mxu0 0.0
    %1370 = vmatprep.subr.mxu0 0.0
    %1371 = vmatpush1.msra.mxu0 0.0
    %1372 = vmatprep.subr.mxu0 0.0
    %1373 = vmatpush1.msra.mxu0 0.0
    %1374 = vmatprep.subr.mxu0 0.0
    %1375 = vmatpush1.msra.mxu0 0.0
    %1376 = vmatprep.subr.mxu0 0.0
    %1377 = vmatpush1.msra.mxu0 0.0
    %1378 = vmatprep.subr.mxu0 0.0
    %1379 = vmatpush1.msra.mxu0 0.0
    %1380 = vmatprep.subr.mxu0 0.0
    %1381 = vmatpush1.msra.mxu0 0.0
    %1382 = vmatprep.subr.mxu0 0.0
    %1383 = vmatpush1.msra.mxu0 0.0
    %1384 = vmatprep.subr.mxu0 0.0
    %1385 = vmatpush1.msra.mxu0 0.0
    %1386 = vmatprep.subr.mxu0 0.0
    %1387 = vmatpush1.msra.mxu0 0.0
    %1388 = vmatprep.subr.mxu0 0.0
    %1389 = vmatpush1.msra.mxu0 0.0
    %1390 = vmatprep.subr.mxu0 0.0
    %1391 = vmatpush1.msra.mxu0 0.0
    %1392 = vmatprep.subr.mxu0 0.0
    %1393 = vmatpush1.msra.mxu0 0.0
    %1394 = vmatprep.subr.mxu0 0.0
    %1395 = vmatpush1.msra.mxu0 0.0
    %1396 = vmatprep.subr.mxu0 0.0
    %1397 = vmatpush1.msra.mxu0 0.0
    %1398 = vmatprep.subr.mxu0 0.0
    %1399 = vmatpush1.msra.mxu0 0.0
    %1400 = vmatprep.mubr.f32.mxu0 0.0
    %1401 = vmatmul.mubr.f32.gmra.mrb[0].mxu0 %v1313
    %v1402 = vpop.f32.mrb[0].mxu0
    %v1403 = vadd.f32 0.0, %v1402
    %v1404 = vpop.f32.mrb[0].mxu0
    %1405 = vmatprep.mubr.f32.mxu0 0.0
    %1406 = vmatmul.mubr.f32.gmra.mrb[0].mxu0 %v1316
    %v1407 = vpop.f32.mrb[0].mxu0
    %v1408 = vadd.f32 0.0, %v1407
    %v1409 = vpop.f32.mrb[0].mxu0
    %1410 = vmatprep.mubr.f32.mxu0 0.0
    %1411 = vmatmul.mubr.f32.gmra.mrb[0].mxu0 %v1319
    %v1412 = vpop.f32.mrb[0].mxu0
    %v1413 = vadd.f32 0.0, %v1412
    %v1414 = vpop.f32.mrb[0].mxu0
    %1415 = vmatprep.mubr.f32.mxu0 0.0
    %1416 = vmatmul.mubr.f32.gmra.mrb[0].mxu0 %v1322
    %v1417 = vpop.f32.mrb[0].mxu0
    %v1418 = vadd.f32 0.0, %v1417
    %v1419 = vpop.f32.mrb[0].mxu0
    %1420 = vmatprep.mubr.f32.mxu0 0.0
    %1421 = vmatmul.mubr.f32.gmra.mrb[0].mxu0 %v1325
    %v1422 = vpop.f32.mrb[0].mxu0
    %v1423 = vadd.f32 0.0, %v1422
    %v1424 = vpop.f32.mrb[0].mxu0
    %1425 = vmatprep.mubr.f32.mxu0 0.0
    %1426 = vmatmul.mubr.f32.gmra.mrb[0].mxu0 %v1328
    %v1427 = vpop.f32.mrb[0].mxu0
    %v1428 = vadd.f32 0.0, %v1427
    %v1429 = vpop.f32.mrb[0].mxu0
    %1430 = vmatprep.mubr.f32.mxu0 0.0
    %1431 = vmatmul.mubr.f32.gmra.mrb[0].mxu0 %v1331
    %v1432 = vpop.f32.mrb[0].mxu0
    %v1433 = vadd.f32 0.0, %v1432
    %v1434 = vpop.f32.mrb[0].mxu0
    %1435 = vmatprep.mubr.f32.mxu0 0.0
    %1436 = vmatmul.mubr.f32.gmra.mrb[0].mxu0 %v1334
    %v1437 = vpop.f32.mrb[0].mxu0
    %v1438 = vadd.f32 0.0, %v1437
    %v1439 = vpop.f32.mrb[0].mxu0
    %1440 = vdwg.mxu0
    %1441 = vrot.lane.b32.xlu0 %v121, 32
    %v1442 = vpop.permute.xlu0 %1441
    %v1445 = vsel %vm519, %v853, 0
    %v1448 = vsel %vm519, %v858, 0
    %v1451 = vsel %vm519, %v863, 0
    %v1454 = vsel %vm519, %v868, 0
    %v1457 = vsel %vm519, %v873, 0
    %v1460 = vsel %vm519, %v878, 0
    %v1463 = vsel %vm519, %v883, 0
    %v1466 = vsel %vm519, %v888, 0
    %1468 = vmatprep.subr.mxu0 0.0
    %1469 = vmatpush1.msra.mxu0 %v1442
    %1470 = vmatprep.subr.mxu0 0.0
    %1471 = vmatpush1.msra.mxu0 0.0
    %1472 = vmatprep.subr.mxu0 0.0
    %1473 = vmatpush1.msra.mxu0 0.0
    %1474 = vmatprep.subr.mxu0 0.0
    %1475 = vmatpush1.msra.mxu0 0.0
    %1476 = vmatprep.subr.mxu0 0.0
    %1477 = vmatpush1.msra.mxu0 0.0
    %1478 = vmatprep.subr.mxu0 0.0
    %1479 = vmatpush1.msra.mxu0 0.0
    %1480 = vmatprep.subr.mxu0 0.0
    %1481 = vmatpush1.msra.mxu0 0.0
    %1482 = vmatprep.subr.mxu0 0.0
    %1483 = vmatpush1.msra.mxu0 0.0
    %1484 = vmatprep.subr.mxu0 0.0
    %1485 = vmatpush1.msra.mxu0 0.0
    %1486 = vmatprep.subr.mxu0 0.0
    %1487 = vmatpush1.msra.mxu0 0.0
    %1488 = vmatprep.subr.mxu0 0.0
    %1489 = vmatpush1.msra.mxu0 0.0
    %1490 = vmatprep.subr.mxu0 0.0
    %1491 = vmatpush1.msra.mxu0 0.0
    %1492 = vmatprep.subr.mxu0 0.0
    %1493 = vmatpush1.msra.mxu0 0.0
    %1494 = vmatprep.subr.mxu0 0.0
    %1495 = vmatpush1.msra.mxu0 0.0
    %1496 = vmatprep.subr.mxu0 0.0
    %1497 = vmatpush1.msra.mxu0 0.0
    %1498 = vmatprep.subr.mxu0 0.0
    %1499 = vmatpush1.msra.mxu0 0.0
    %1500 = vmatprep.subr.mxu0 0.0
    %1501 = vmatpush1.msra.mxu0 0.0
    %1502 = vmatprep.subr.mxu0 0.0
    %1503 = vmatpush1.msra.mxu0 0.0
    %1504 = vmatprep.subr.mxu0 0.0
    %1505 = vmatpush1.msra.mxu0 0.0
    %1506 = vmatprep.subr.mxu0 0.0
    %1507 = vmatpush1.msra.mxu0 0.0
    %1508 = vmatprep.subr.mxu0 0.0
    %1509 = vmatpush1.msra.mxu0 0.0
    %1510 = vmatprep.subr.mxu0 0.0
    %1511 = vmatpush1.msra.mxu0 0.0
    %1512 = vmatprep.subr.mxu0 0.0
    %1513 = vmatpush1.msra.mxu0 0.0
    %1514 = vmatprep.subr.mxu0 0.0
    %1515 = vmatpush1.msra.mxu0 0.0
    %1516 = vmatprep.subr.mxu0 0.0
    %1517 = vmatpush1.msra.mxu0 0.0
    %1518 = vmatprep.subr.mxu0 0.0
    %1519 = vmatpush1.msra.mxu0 0.0
    %1520 = vmatprep.subr.mxu0 0.0
    %1521 = vmatpush1.msra.mxu0 0.0
    %1522 = vmatprep.subr.mxu0 0.0
    %1523 = vmatpush1.msra.mxu0 0.0
    %1524 = vmatprep.subr.mxu0 0.0
    %1525 = vmatpush1.msra.mxu0 0.0
    %1526 = vmatprep.subr.mxu0 0.0
    %1527 = vmatpush1.msra.mxu0 0.0
    %1528 = vmatprep.subr.mxu0 0.0
    %1529 = vmatpush1.msra.mxu0 0.0
    %1530 = vmatprep.subr.mxu0 0.0
    %1531 = vmatpush1.msra.mxu0 0.0
    %1532 = vmatprep.mubr.f32.mxu0 0.0
    %1533 = vmatmul.mubr.f32.gmra.mrb[0].mxu0 %v1445
    %v1534 = vpop.f32.mrb[0].mxu0
    %v1535 = vadd.f32 %v1403, %v1534
    %v1536 = vpop.f32.mrb[0].mxu0
    %1537 = vmatprep.mubr.f32.mxu0 0.0
    %1538 = vmatmul.mubr.f32.gmra.mrb[0].mxu0 %v1448
    %v1539 = vpop.f32.mrb[0].mxu0
    %v1540 = vadd.f32 %v1408, %v1539
    %v1541 = vpop.f32.mrb[0].mxu0
    %1542 = vmatprep.mubr.f32.mxu0 0.0
    %1543 = vmatmul.mubr.f32.gmra.mrb[0].mxu0 %v1451
    %v1544 = vpop.f32.mrb[0].mxu0
    %v1545 = vadd.f32 %v1413, %v1544
    %v1546 = vpop.f32.mrb[0].mxu0
    %1547 = vmatprep.mubr.f32.mxu0 0.0
    %1548 = vmatmul.mubr.f32.gmra.mrb[0].mxu0 %v1454
    %v1549 = vpop.f32.mrb[0].mxu0
    %v1550 = vadd.f32 %v1418, %v1549
    %v1551 = vpop.f32.mrb[0].mxu0
    %1552 = vmatprep.mubr.f32.mxu0 0.0
    %1553 = vmatmul.mubr.f32.gmra.mrb[0].mxu0 %v1457
    %v1554 = vpop.f32.mrb[0].mxu0
    %v1555 = vadd.f32 %v1423, %v1554
    %v1556 = vpop.f32.mrb[0].mxu0
    %1557 = vmatprep.mubr.f32.mxu0 0.0
    %1558 = vmatmul.mubr.f32.gmra.mrb[0].mxu0 %v1460
    %v1559 = vpop.f32.mrb[0].mxu0
    %v1560 = vadd.f32 %v1428, %v1559
    %v1561 = vpop.f32.mrb[0].mxu0
    %1562 = vmatprep.mubr.f32.mxu0 0.0
    %1563 = vmatmul.mubr.f32.gmra.mrb[0].mxu0 %v1463
    %v1564 = vpop.f32.mrb[0].mxu0
    %v1565 = vadd.f32 %v1433, %v1564
    %v1566 = vpop.f32.mrb[0].mxu0
    %1567 = vmatprep.mubr.f32.mxu0 0.0
    %1568 = vmatmul.mubr.f32.gmra.mrb[0].mxu0 %v1466
    %v1569 = vpop.f32.mrb[0].mxu0
    %v1570 = vadd.f32 %v1438, %v1569
    %v1571 = vpop.f32.mrb[0].mxu0
    %1572 = vdwg.mxu0
    %1573 = vrot.lane.b32.xlu0 %v511, 112
    %v1574 = vpop.permute.xlu0 %1573
    %1575 = vrot.lane.b32.xlu0 %v512, 112
    %v1576 = vpop.permute.xlu0 %1575
    %1577 = vrot.lane.b32.xlu0 %v513, 112
    %v1578 = vpop.permute.xlu0 %1577
    %1579 = vrot.lane.b32.xlu0 %v514, 112
    %v1580 = vpop.permute.xlu0 %1579
    %1581 = vrot.lane.b32.xlu0 %v515, 112
    %v1582 = vpop.permute.xlu0 %1581
    %1583 = vrot.lane.b32.xlu0 %v516, 112
    %v1584 = vpop.permute.xlu0 %1583
    %1585 = vrot.lane.b32.xlu0 %v517, 112
    %v1586 = vpop.permute.xlu0 %1585
    %1587 = vrot.lane.b32.xlu0 %v518, 112
    %v1588 = vpop.permute.xlu0 %1587
    %1589 = vrot.lane.b32.xlu0 %v352, 112
    %v1590 = vpop.permute.xlu0 %1589
    %1591 = vrot.lane.b32.xlu0 %v357, 112
    %v1592 = vpop.permute.xlu0 %1591
    %1593 = vrot.lane.b32.xlu0 %v362, 112
    %v1594 = vpop.permute.xlu0 %1593
    %1595 = vrot.lane.b32.xlu0 %v367, 112
    %v1596 = vpop.permute.xlu0 %1595
    %1597 = vrot.lane.b32.xlu0 %v372, 112
    %v1598 = vpop.permute.xlu0 %1597
    %1599 = vrot.lane.b32.xlu0 %v377, 112
    %v1600 = vpop.permute.xlu0 %1599
    %1601 = vrot.lane.b32.xlu0 %v382, 112
    %v1602 = vpop.permute.xlu0 %1601
    %1603 = vrot.lane.b32.xlu0 %v387, 112
    %v1604 = vpop.permute.xlu0 %1603
    %v1605 = vsel %vm519, %v1574, 0
    %v1607 = vsel %vm519, %v1576, 0
    %v1609 = vsel %vm519, %v1578, 0
    %v1611 = vsel %vm519, %v1580, 0
    %v1613 = vsel %vm519, %v1582, 0
    %v1615 = vsel %vm519, %v1584, 0
    %v1617 = vsel %vm519, %v1586, 0
    %v1619 = vsel %vm519, %v1588, 0
    %v1621 = vsel %vm519, %v1590, 0
    %v1623 = vsel %vm519, %v1592, 0
    %v1625 = vsel %vm519, %v1594, 0
    %v1627 = vsel %vm519, %v1596, 0
    %v1629 = vsel %vm519, %v1598, 0
    %v1631 = vsel %vm519, %v1600, 0
    %v1633 = vsel %vm519, %v1602, 0
    %v1635 = vsel %vm519, %v1604, 0
    %1637 = vmatprep.subr.mxu0 0.0
    %1638 = vmatpush1.xpose.msra.mxu0 %v1621
    %1639 = vmatprep.subr.mxu0 0.0
    %1640 = vmatpush1.xpose.msra.mxu0 %v1623
    %1641 = vmatprep.subr.mxu0 0.0
    %1642 = vmatpush1.xpose.msra.mxu0 %v1625
    %1643 = vmatprep.subr.mxu0 0.0
    %1644 = vmatpush1.xpose.msra.mxu0 %v1627
    %1645 = vmatprep.subr.mxu0 0.0
    %1646 = vmatpush1.xpose.msra.mxu0 %v1629
    %1647 = vmatprep.subr.mxu0 0.0
    %1648 = vmatpush1.xpose.msra.mxu0 %v1631
    %1649 = vmatprep.subr.mxu0 0.0
    %1650 = vmatpush1.xpose.msra.mxu0 %v1633
    %1651 = vmatprep.subr.mxu0 0.0
    %1652 = vmatpush1.xpose.msra.mxu0 %v1635
    %1653 = vmatprep.subr.mxu0 0.0
    %1654 = vmatpush1.xpose.msra.mxu0 0.0
    %1655 = vmatprep.subr.mxu0 0.0
    %1656 = vmatpush1.xpose.msra.mxu0 0.0
    %1657 = vmatprep.subr.mxu0 0.0
    %1658 = vmatpush1.xpose.msra.mxu0 0.0
    %1659 = vmatprep.subr.mxu0 0.0
    %1660 = vmatpush1.xpose.msra.mxu0 0.0
    %1661 = vmatprep.subr.mxu0 0.0
    %1662 = vmatpush1.xpose.msra.mxu0 0.0
    %1663 = vmatprep.subr.mxu0 0.0
    %1664 = vmatpush1.xpose.msra.mxu0 0.0
    %1665 = vmatprep.subr.mxu0 0.0
    %1666 = vmatpush1.xpose.msra.mxu0 0.0
    %1667 = vmatprep.subr.mxu0 0.0
    %1668 = vmatpush1.xpose.msra.mxu0 0.0
    %1669 = vmatprep.subr.mxu0 0.0
    %1670 = vmatpush1.xpose.msra.mxu0 0.0
    %1671 = vmatprep.subr.mxu0 0.0
    %1672 = vmatpush1.xpose.msra.mxu0 0.0
    %1673 = vmatprep.subr.mxu0 0.0
    %1674 = vmatpush1.xpose.msra.mxu0 0.0
    %1675 = vmatprep.subr.mxu0 0.0
    %1676 = vmatpush1.xpose.msra.mxu0 0.0
    %1677 = vmatprep.subr.mxu0 0.0
    %1678 = vmatpush1.xpose.msra.mxu0 0.0
    %1679 = vmatprep.subr.mxu0 0.0
    %1680 = vmatpush1.xpose.msra.mxu0 0.0
    %1681 = vmatprep.subr.mxu0 0.0
    %1682 = vmatpush1.xpose.msra.mxu0 0.0
    %1683 = vmatprep.subr.mxu0 0.0
    %1684 = vmatpush1.xpose.msra.mxu0 0.0
    %1685 = vmatprep.subr.mxu0 0.0
    %1686 = vmatpush1.xpose.msra.mxu0 0.0
    %1687 = vmatprep.subr.mxu0 0.0
    %1688 = vmatpush1.xpose.msra.mxu0 0.0
    %1689 = vmatprep.subr.mxu0 0.0
    %1690 = vmatpush1.xpose.msra.mxu0 0.0
    %1691 = vmatprep.subr.mxu0 0.0
    %1692 = vmatpush1.xpose.msra.mxu0 0.0
    %1693 = vmatprep.subr.mxu0 0.0
    %1694 = vmatpush1.xpose.msra.mxu0 0.0
    %1695 = vmatprep.subr.mxu0 0.0
    %1696 = vmatpush1.xpose.msra.mxu0 0.0
    %1697 = vmatprep.subr.mxu0 0.0
    %1698 = vmatpush1.xpose.msra.mxu0 0.0
    %1699 = vmatprep.subr.mxu0 0.0
    %1700 = vmatpush1.xpose.msra.mxu0 0.0
    %1701 = vmatprep.mubr.f32.mxu0 0.0
    %1702 = vmatmul.mubr.f32.gmra.mrb[0].mxu0 %v1605
    %v1703 = vpop.f32.mrb[0].mxu0
    %v1704 = vadd.f32 %v112, %v1703
    %v1705 = vpop.f32.mrb[0].mxu0
    %1706 = vmatprep.mubr.f32.mxu0 0.0
    %1707 = vmatmul.mubr.f32.gmra.mrb[0].mxu0 %v1607
    %v1708 = vpop.f32.mrb[0].mxu0
    %v1709 = vadd.f32 %v113, %v1708
    %v1710 = vpop.f32.mrb[0].mxu0
    %1711 = vmatprep.mubr.f32.mxu0 0.0
    %1712 = vmatmul.mubr.f32.gmra.mrb[0].mxu0 %v1609
    %v1713 = vpop.f32.mrb[0].mxu0
    %v1714 = vadd.f32 %v114, %v1713
    %v1715 = vpop.f32.mrb[0].mxu0
    %1716 = vmatprep.mubr.f32.mxu0 0.0
    %1717 = vmatmul.mubr.f32.gmra.mrb[0].mxu0 %v1611
    %v1718 = vpop.f32.mrb[0].mxu0
    %v1719 = vadd.f32 %v115, %v1718
    %v1720 = vpop.f32.mrb[0].mxu0
    %1721 = vmatprep.mubr.f32.mxu0 0.0
    %1722 = vmatmul.mubr.f32.gmra.mrb[0].mxu0 %v1613
    %v1723 = vpop.f32.mrb[0].mxu0
    %v1724 = vadd.f32 %v116, %v1723
    %v1725 = vpop.f32.mrb[0].mxu0
    %1726 = vmatprep.mubr.f32.mxu0 0.0
    %1727 = vmatmul.mubr.f32.gmra.mrb[0].mxu0 %v1615
    %v1728 = vpop.f32.mrb[0].mxu0
    %v1729 = vadd.f32 %v117, %v1728
    %v1730 = vpop.f32.mrb[0].mxu0
    %1731 = vmatprep.mubr.f32.mxu0 0.0
    %1732 = vmatmul.mubr.f32.gmra.mrb[0].mxu0 %v1617
    %v1733 = vpop.f32.mrb[0].mxu0
    %v1734 = vadd.f32 %v118, %v1733
    %v1735 = vpop.f32.mrb[0].mxu0
    %1736 = vmatprep.mubr.f32.mxu0 0.0
    %1737 = vmatmul.mubr.f32.gmra.mrb[0].mxu0 %v1619
    %v1738 = vpop.f32.mrb[0].mxu0
    %v1739 = vadd.f32 %v119, %v1738
    %v1740 = vpop.f32.mrb[0].mxu0
    %1741 = vdwg.mxu0
    %v1742 = vsel %vm673, %v1704, -inf
    %1743 = vmax.xlane.f32.xlu0 %v1742
    %v1744 = vpop.xlane.xlu0 %1743
    %v1745 = vsel %vm673, %v1709, -inf
    %1746 = vmax.xlane.f32.xlu0 %v1745
    %v1747 = vpop.xlane.xlu0 %1746
    %v1748 = vsel %vm673, %v1714, -inf
    %1749 = vmax.xlane.f32.xlu0 %v1748
    %v1750 = vpop.xlane.xlu0 %1749
    %v1751 = vsel %vm673, %v1719, -inf
    %1752 = vmax.xlane.f32.xlu0 %v1751
    %v1753 = vpop.xlane.xlu0 %1752
    %v1754 = vsel %vm673, %v1724, -inf
    %1755 = vmax.xlane.f32.xlu0 %v1754
    %v1756 = vpop.xlane.xlu0 %1755
    %v1757 = vsel %vm673, %v1729, -inf
    %1758 = vmax.xlane.f32.xlu0 %v1757
    %v1759 = vpop.xlane.xlu0 %1758
    %v1760 = vsel %vm673, %v1734, -inf
    %1761 = vmax.xlane.f32.xlu0 %v1760
    %v1762 = vpop.xlane.xlu0 %1761
    %v1763 = vsel %vm673, %v1739, -inf
    %1764 = vmax.xlane.f32.xlu0 %v1763
    %v1765 = vpop.xlane.xlu0 %1764
    %v1766 = vsub.f32 %v1704, %v1744
    %v1767 = vsub.f32 %v1709, %v1747
    %v1768 = vsub.f32 %v1714, %v1750
    %v1769 = vsub.f32 %v1719, %v1753
    %v1770 = vsub.f32 %v1724, %v1756
    %v1771 = vsub.f32 %v1729, %v1759
    %v1772 = vsub.f32 %v1734, %v1762
    %v1773 = vsub.f32 %v1739, %v1765
    %v1774 = vmul.f32 %v1766, 1.442695
    %v1775 = vpow.pop %v1774
    %v1776 = vmul.f32 %v1767, 1.442695
    %v1777 = vpow.pop %v1776
    %v1778 = vmul.f32 %v1768, 1.442695
    %v1779 = vpow.pop %v1778
    %v1780 = vmul.f32 %v1769, 1.442695
    %v1781 = vpow.pop %v1780
    %v1782 = vmul.f32 %v1770, 1.442695
    %v1783 = vpow.pop %v1782
    %v1784 = vmul.f32 %v1771, 1.442695
    %v1785 = vpow.pop %v1784
    %v1786 = vmul.f32 %v1772, 1.442695
    %v1787 = vpow.pop %v1786
    %v1788 = vmul.f32 %v1773, 1.442695
    %v1789 = vpow.pop %v1788
    %v1790 = vsel %vm673, %v1775, 0.0
    %1791 = vadd.xlane.f32.xlu0 %v1790
    %v1792 = vpop.xlane.xlu0 %1791
    %v1793 = vsel %vm673, %v1777, 0.0
    %1794 = vadd.xlane.f32.xlu0 %v1793
    %v1795 = vpop.xlane.xlu0 %1794
    %v1796 = vsel %vm673, %v1779, 0.0
    %1797 = vadd.xlane.f32.xlu0 %v1796
    %v1798 = vpop.xlane.xlu0 %1797
    %v1799 = vsel %vm673, %v1781, 0.0
    %1800 = vadd.xlane.f32.xlu0 %v1799
    %v1801 = vpop.xlane.xlu0 %1800
    %v1802 = vsel %vm673, %v1783, 0.0
    %1803 = vadd.xlane.f32.xlu0 %v1802
    %v1804 = vpop.xlane.xlu0 %1803
    %v1805 = vsel %vm673, %v1785, 0.0
    %1806 = vadd.xlane.f32.xlu0 %v1805
    %v1807 = vpop.xlane.xlu0 %1806
    %v1808 = vsel %vm673, %v1787, 0.0
    %1809 = vadd.xlane.f32.xlu0 %v1808
    %v1810 = vpop.xlane.xlu0 %1809
    %v1811 = vsel %vm673, %v1789, 0.0
    %1812 = vadd.xlane.f32.xlu0 %v1811
    %v1813 = vpop.xlane.xlu0 %1812
    %v1814 = vrcp.pop %v1792
    %v1815 = vrcp.pop %v1795
    %v1816 = vrcp.pop %v1798
    %v1817 = vrcp.pop %v1801
    %v1818 = vrcp.pop %v1804
    %v1819 = vrcp.pop %v1807
    %v1820 = vrcp.pop %v1810
    %v1821 = vrcp.pop %v1813
    %v1822 = vmul.f32 %v1775, %v1814
    %v1823 = vmul.f32 %v1777, %v1815
    %v1824 = vmul.f32 %v1779, %v1816
    %v1825 = vmul.f32 %v1781, %v1817
    %v1826 = vmul.f32 %v1783, %v1818
    %v1827 = vmul.f32 %v1785, %v1819
    %v1828 = vmul.f32 %v1787, %v1820
    %v1829 = vmul.f32 %v1789, %v1821
    %1830 = vrot.lane.b32.xlu0 %v473, 112
    %v1831 = vpop.permute.xlu0 %1830
    %1832 = vrot.lane.b32.xlu0 %v478, 112
    %v1833 = vpop.permute.xlu0 %1832
    %1834 = vrot.lane.b32.xlu0 %v483, 112
    %v1835 = vpop.permute.xlu0 %1834
    %1836 = vrot.lane.b32.xlu0 %v488, 112
    %v1837 = vpop.permute.xlu0 %1836
    %1838 = vrot.lane.b32.xlu0 %v493, 112
    %v1839 = vpop.permute.xlu0 %1838
    %1840 = vrot.lane.b32.xlu0 %v498, 112
    %v1841 = vpop.permute.xlu0 %1840
    %1842 = vrot.lane.b32.xlu0 %v503, 112
    %v1843 = vpop.permute.xlu0 %1842
    %1844 = vrot.lane.b32.xlu0 %v508, 112
    %v1845 = vpop.permute.xlu0 %1844
    %v1855 = vsel %vm673, %v1822, 0
    %v1858 = vsel %vm673, %v1823, 0
    %v1861 = vsel %vm673, %v1824, 0
    %v1864 = vsel %vm673, %v1825, 0
    %v1867 = vsel %vm673, %v1826, 0
    %v1870 = vsel %vm673, %v1827, 0
    %v1873 = vsel %vm673, %v1828, 0
    %v1876 = vsel %vm673, %v1829, 0
    %1878 = vmatprep.subr.mxu0 0.0
    %1879 = vmatpush1.msra.mxu0 %v1831
    %1880 = vmatprep.subr.mxu0 0.0
    %1881 = vmatpush1.msra.mxu0 %v1833
    %1882 = vmatprep.subr.mxu0 0.0
    %1883 = vmatpush1.msra.mxu0 %v1835
    %1884 = vmatprep.subr.mxu0 0.0
    %1885 = vmatpush1.msra.mxu0 %v1837
    %1886 = vmatprep.subr.mxu0 0.0
    %1887 = vmatpush1.msra.mxu0 %v1839
    %1888 = vmatprep.subr.mxu0 0.0
    %1889 = vmatpush1.msra.mxu0 %v1841
    %1890 = vmatprep.subr.mxu0 0.0
    %1891 = vmatpush1.msra.mxu0 %v1843
    %1892 = vmatprep.subr.mxu0 0.0
    %1893 = vmatpush1.msra.mxu0 %v1845
    %1894 = vmatprep.subr.mxu0 0.0
    %1895 = vmatpush1.msra.mxu0 0.0
    %1896 = vmatprep.subr.mxu0 0.0
    %1897 = vmatpush1.msra.mxu0 0.0
    %1898 = vmatprep.subr.mxu0 0.0
    %1899 = vmatpush1.msra.mxu0 0.0
    %1900 = vmatprep.subr.mxu0 0.0
    %1901 = vmatpush1.msra.mxu0 0.0
    %1902 = vmatprep.subr.mxu0 0.0
    %1903 = vmatpush1.msra.mxu0 0.0
    %1904 = vmatprep.subr.mxu0 0.0
    %1905 = vmatpush1.msra.mxu0 0.0
    %1906 = vmatprep.subr.mxu0 0.0
    %1907 = vmatpush1.msra.mxu0 0.0
    %1908 = vmatprep.subr.mxu0 0.0
    %1909 = vmatpush1.msra.mxu0 0.0
    %1910 = vmatprep.subr.mxu0 0.0
    %1911 = vmatpush1.msra.mxu0 0.0
    %1912 = vmatprep.subr.mxu0 0.0
    %1913 = vmatpush1.msra.mxu0 0.0
    %1914 = vmatprep.subr.mxu0 0.0
    %1915 = vmatpush1.msra.mxu0 0.0
    %1916 = vmatprep.subr.mxu0 0.0
    %1917 = vmatpush1.msra.mxu0 0.0
    %1918 = vmatprep.subr.mxu0 0.0
    %1919 = vmatpush1.msra.mxu0 0.0
    %1920 = vmatprep.subr.mxu0 0.0
    %1921 = vmatpush1.msra.mxu0 0.0
    %1922 = vmatprep.subr.mxu0 0.0
    %1923 = vmatpush1.msra.mxu0 0.0
    %1924 = vmatprep.subr.mxu0 0.0
    %1925 = vmatpush1.msra.mxu0 0.0
    %1926 = vmatprep.subr.mxu0 0.0
    %1927 = vmatpush1.msra.mxu0 0.0
    %1928 = vmatprep.subr.mxu0 0.0
    %1929 = vmatpush1.msra.mxu0 0.0
    %1930 = vmatprep.subr.mxu0 0.0
    %1931 = vmatpush1.msra.mxu0 0.0
    %1932 = vmatprep.subr.mxu0 0.0
    %1933 = vmatpush1.msra.mxu0 0.0
    %1934 = vmatprep.subr.mxu0 0.0
    %1935 = vmatpush1.msra.mxu0 0.0
    %1936 = vmatprep.subr.mxu0 0.0
    %1937 = vmatpush1.msra.mxu0 0.0
    %1938 = vmatprep.subr.mxu0 0.0
    %1939 = vmatpush1.msra.mxu0 0.0
    %1940 = vmatprep.subr.mxu0 0.0
    %1941 = vmatpush1.msra.mxu0 0.0
    %1942 = vmatprep.mubr.f32.mxu0 0.0
    %1943 = vmatmul.mubr.f32.gmra.mrb[0].mxu0 %v1855
    %v1944 = vpop.f32.mrb[0].mxu0
    %v1945 = vadd.f32 0.0, %v1944
    %v1946 = vpop.f32.mrb[0].mxu0
    %1947 = vmatprep.mubr.f32.mxu0 0.0
    %1948 = vmatmul.mubr.f32.gmra.mrb[0].mxu0 %v1858
    %v1949 = vpop.f32.mrb[0].mxu0
    %v1950 = vadd.f32 0.0, %v1949
    %v1951 = vpop.f32.mrb[0].mxu0
    %1952 = vmatprep.mubr.f32.mxu0 0.0
    %1953 = vmatmul.mubr.f32.gmra.mrb[0].mxu0 %v1861
    %v1954 = vpop.f32.mrb[0].mxu0
    %v1955 = vadd.f32 0.0, %v1954
    %v1956 = vpop.f32.mrb[0].mxu0
    %1957 = vmatprep.mubr.f32.mxu0 0.0
    %1958 = vmatmul.mubr.f32.gmra.mrb[0].mxu0 %v1864
    %v1959 = vpop.f32.mrb[0].mxu0
    %v1960 = vadd.f32 0.0, %v1959
    %v1961 = vpop.f32.mrb[0].mxu0
    %1962 = vmatprep.mubr.f32.mxu0 0.0
    %1963 = vmatmul.mubr.f32.gmra.mrb[0].mxu0 %v1867
    %v1964 = vpop.f32.mrb[0].mxu0
    %v1965 = vadd.f32 0.0, %v1964
    %v1966 = vpop.f32.mrb[0].mxu0
    %1967 = vmatprep.mubr.f32.mxu0 0.0
    %1968 = vmatmul.mubr.f32.gmra.mrb[0].mxu0 %v1870
    %v1969 = vpop.f32.mrb[0].mxu0
    %v1970 = vadd.f32 0.0, %v1969
    %v1971 = vpop.f32.mrb[0].mxu0
    %1972 = vmatprep.mubr.f32.mxu0 0.0
    %1973 = vmatmul.mubr.f32.gmra.mrb[0].mxu0 %v1873
    %v1974 = vpop.f32.mrb[0].mxu0
    %v1975 = vadd.f32 0.0, %v1974
    %v1976 = vpop.f32.mrb[0].mxu0
    %1977 = vmatprep.mubr.f32.mxu0 0.0
    %1978 = vmatmul.mubr.f32.gmra.mrb[0].mxu0 %v1876
    %v1979 = vpop.f32.mrb[0].mxu0
    %v1980 = vadd.f32 0.0, %v1979
    %v1981 = vpop.f32.mrb[0].mxu0
    %1982 = vdwg.mxu0
    %1983 = vrot.lane.b32.xlu0 %v125, 32
    %v1984 = vpop.permute.xlu0 %1983
    %v1987 = vsel %vm519, %v1945, 0
    %v1990 = vsel %vm519, %v1950, 0
    %v1993 = vsel %vm519, %v1955, 0
    %v1996 = vsel %vm519, %v1960, 0
    %v1999 = vsel %vm519, %v1965, 0
    %v2002 = vsel %vm519, %v1970, 0
    %v2005 = vsel %vm519, %v1975, 0
    %v2008 = vsel %vm519, %v1980, 0
    %2010 = vmatprep.subr.mxu0 0.0
    %2011 = vmatpush1.msra.mxu0 %v1984
    %2012 = vmatprep.subr.mxu0 0.0
    %2013 = vmatpush1.msra.mxu0 0.0
    %2014 = vmatprep.subr.mxu0 0.0
    %2015 = vmatpush1.msra.mxu0 0.0
    %2016 = vmatprep.subr.mxu0 0.0
    %2017 = vmatpush1.msra.mxu0 0.0
    %2018 = vmatprep.subr.mxu0 0.0
    %2019 = vmatpush1.msra.mxu0 0.0
    %2020 = vmatprep.subr.mxu0 0.0
    %2021 = vmatpush1.msra.mxu0 0.0
    %2022 = vmatprep.subr.mxu0 0.0
    %2023 = vmatpush1.msra.mxu0 0.0
    %2024 = vmatprep.subr.mxu0 0.0
    %2025 = vmatpush1.msra.mxu0 0.0
    %2026 = vmatprep.subr.mxu0 0.0
    %2027 = vmatpush1.msra.mxu0 0.0
    %2028 = vmatprep.subr.mxu0 0.0
    %2029 = vmatpush1.msra.mxu0 0.0
    %2030 = vmatprep.subr.mxu0 0.0
    %2031 = vmatpush1.msra.mxu0 0.0
    %2032 = vmatprep.subr.mxu0 0.0
    %2033 = vmatpush1.msra.mxu0 0.0
    %2034 = vmatprep.subr.mxu0 0.0
    %2035 = vmatpush1.msra.mxu0 0.0
    %2036 = vmatprep.subr.mxu0 0.0
    %2037 = vmatpush1.msra.mxu0 0.0
    %2038 = vmatprep.subr.mxu0 0.0
    %2039 = vmatpush1.msra.mxu0 0.0
    %2040 = vmatprep.subr.mxu0 0.0
    %2041 = vmatpush1.msra.mxu0 0.0
    %2042 = vmatprep.subr.mxu0 0.0
    %2043 = vmatpush1.msra.mxu0 0.0
    %2044 = vmatprep.subr.mxu0 0.0
    %2045 = vmatpush1.msra.mxu0 0.0
    %2046 = vmatprep.subr.mxu0 0.0
    %2047 = vmatpush1.msra.mxu0 0.0
    %2048 = vmatprep.subr.mxu0 0.0
    %2049 = vmatpush1.msra.mxu0 0.0
    %2050 = vmatprep.subr.mxu0 0.0
    %2051 = vmatpush1.msra.mxu0 0.0
    %2052 = vmatprep.subr.mxu0 0.0
    %2053 = vmatpush1.msra.mxu0 0.0
    %2054 = vmatprep.subr.mxu0 0.0
    %2055 = vmatpush1.msra.mxu0 0.0
    %2056 = vmatprep.subr.mxu0 0.0
    %2057 = vmatpush1.msra.mxu0 0.0
    %2058 = vmatprep.subr.mxu0 0.0
    %2059 = vmatpush1.msra.mxu0 0.0
    %2060 = vmatprep.subr.mxu0 0.0
    %2061 = vmatpush1.msra.mxu0 0.0
    %2062 = vmatprep.subr.mxu0 0.0
    %2063 = vmatpush1.msra.mxu0 0.0
    %2064 = vmatprep.subr.mxu0 0.0
    %2065 = vmatpush1.msra.mxu0 0.0
    %2066 = vmatprep.subr.mxu0 0.0
    %2067 = vmatpush1.msra.mxu0 0.0
    %2068 = vmatprep.subr.mxu0 0.0
    %2069 = vmatpush1.msra.mxu0 0.0
    %2070 = vmatprep.subr.mxu0 0.0
    %2071 = vmatpush1.msra.mxu0 0.0
    %2072 = vmatprep.subr.mxu0 0.0
    %2073 = vmatpush1.msra.mxu0 0.0
    %2074 = vmatprep.mubr.f32.mxu0 0.0
    %2075 = vmatmul.mubr.f32.gmra.mrb[0].mxu0 %v1987
    %v2076 = vpop.f32.mrb[0].mxu0
    %v2077 = vadd.f32 0.0, %v2076
    %v2078 = vpop.f32.mrb[0].mxu0
    %2079 = vmatprep.mubr.f32.mxu0 0.0
    %2080 = vmatmul.mubr.f32.gmra.mrb[0].mxu0 %v1990
    %v2081 = vpop.f32.mrb[0].mxu0
    %v2082 = vadd.f32 0.0, %v2081
    %v2083 = vpop.f32.mrb[0].mxu0
    %2084 = vmatprep.mubr.f32.mxu0 0.0
    %2085 = vmatmul.mubr.f32.gmra.mrb[0].mxu0 %v1993
    %v2086 = vpop.f32.mrb[0].mxu0
    %v2087 = vadd.f32 0.0, %v2086
    %v2088 = vpop.f32.mrb[0].mxu0
    %2089 = vmatprep.mubr.f32.mxu0 0.0
    %2090 = vmatmul.mubr.f32.gmra.mrb[0].mxu0 %v1996
    %v2091 = vpop.f32.mrb[0].mxu0
    %v2092 = vadd.f32 0.0, %v2091
    %v2093 = vpop.f32.mrb[0].mxu0
    %2094 = vmatprep.mubr.f32.mxu0 0.0
    %2095 = vmatmul.mubr.f32.gmra.mrb[0].mxu0 %v1999
    %v2096 = vpop.f32.mrb[0].mxu0
    %v2097 = vadd.f32 0.0, %v2096
    %v2098 = vpop.f32.mrb[0].mxu0
    %2099 = vmatprep.mubr.f32.mxu0 0.0
    %2100 = vmatmul.mubr.f32.gmra.mrb[0].mxu0 %v2002
    %v2101 = vpop.f32.mrb[0].mxu0
    %v2102 = vadd.f32 0.0, %v2101
    %v2103 = vpop.f32.mrb[0].mxu0
    %2104 = vmatprep.mubr.f32.mxu0 0.0
    %2105 = vmatmul.mubr.f32.gmra.mrb[0].mxu0 %v2005
    %v2106 = vpop.f32.mrb[0].mxu0
    %v2107 = vadd.f32 0.0, %v2106
    %v2108 = vpop.f32.mrb[0].mxu0
    %2109 = vmatprep.mubr.f32.mxu0 0.0
    %2110 = vmatmul.mubr.f32.gmra.mrb[0].mxu0 %v2008
    %v2111 = vpop.f32.mrb[0].mxu0
    %v2112 = vadd.f32 0.0, %v2111
    %v2113 = vpop.f32.mrb[0].mxu0
    %2114 = vdwg.mxu0
    %v2115 = vadd.f32 %v1535, %v2077
    %v2116 = vadd.f32 %v1540, %v2082
    %v2117 = vadd.f32 %v1545, %v2087
    %v2118 = vadd.f32 %v1550, %v2092
    %v2119 = vadd.f32 %v1555, %v2097
    %v2120 = vadd.f32 %v1560, %v2102
    %v2121 = vadd.f32 %v1565, %v2107
    %v2122 = vadd.f32 %v1570, %v2112
    %2123 = vrot.lane.b32.xlu0 %v511, 104
    %v2124 = vpop.permute.xlu0 %2123
    %2125 = vrot.lane.b32.xlu0 %v512, 104
    %v2126 = vpop.permute.xlu0 %2125
    %2127 = vrot.lane.b32.xlu0 %v513, 104
    %v2128 = vpop.permute.xlu0 %2127
    %2129 = vrot.lane.b32.xlu0 %v514, 104
    %v2130 = vpop.permute.xlu0 %2129
    %2131 = vrot.lane.b32.xlu0 %v515, 104
    %v2132 = vpop.permute.xlu0 %2131
    %2133 = vrot.lane.b32.xlu0 %v516, 104
    %v2134 = vpop.permute.xlu0 %2133
    %2135 = vrot.lane.b32.xlu0 %v517, 104
    %v2136 = vpop.permute.xlu0 %2135
    %2137 = vrot.lane.b32.xlu0 %v518, 104
    %v2138 = vpop.permute.xlu0 %2137
    %2139 = vrot.lane.b32.xlu0 %v352, 104
    %v2140 = vpop.permute.xlu0 %2139
    %2141 = vrot.lane.b32.xlu0 %v357, 104
    %v2142 = vpop.permute.xlu0 %2141
    %2143 = vrot.lane.b32.xlu0 %v362, 104
    %v2144 = vpop.permute.xlu0 %2143
    %2145 = vrot.lane.b32.xlu0 %v367, 104
    %v2146 = vpop.permute.xlu0 %2145
    %2147 = vrot.lane.b32.xlu0 %v372, 104
    %v2148 = vpop.permute.xlu0 %2147
    %2149 = vrot.lane.b32.xlu0 %v377, 104
    %v2150 = vpop.permute.xlu0 %2149
    %2151 = vrot.lane.b32.xlu0 %v382, 104
    %v2152 = vpop.permute.xlu0 %2151
    %2153 = vrot.lane.b32.xlu0 %v387, 104
    %v2154 = vpop.permute.xlu0 %2153
    %v2155 = vsel %vm519, %v2124, 0
    %v2157 = vsel %vm519, %v2126, 0
    %v2159 = vsel %vm519, %v2128, 0
    %v2161 = vsel %vm519, %v2130, 0
    %v2163 = vsel %vm519, %v2132, 0
    %v2165 = vsel %vm519, %v2134, 0
    %v2167 = vsel %vm519, %v2136, 0
    %v2169 = vsel %vm519, %v2138, 0
    %v2171 = vsel %vm519, %v2140, 0
    %v2173 = vsel %vm519, %v2142, 0
    %v2175 = vsel %vm519, %v2144, 0
    %v2177 = vsel %vm519, %v2146, 0
    %v2179 = vsel %vm519, %v2148, 0
    %v2181 = vsel %vm519, %v2150, 0
    %v2183 = vsel %vm519, %v2152, 0
    %v2185 = vsel %vm519, %v2154, 0
    %2187 = vmatprep.subr.mxu0 0.0
    %2188 = vmatpush1.xpose.msra.mxu0 %v2171
    %2189 = vmatprep.subr.mxu0 0.0
    %2190 = vmatpush1.xpose.msra.mxu0 %v2173
    %2191 = vmatprep.subr.mxu0 0.0
    %2192 = vmatpush1.xpose.msra.mxu0 %v2175
    %2193 = vmatprep.subr.mxu0 0.0
    %2194 = vmatpush1.xpose.msra.mxu0 %v2177
    %2195 = vmatprep.subr.mxu0 0.0
    %2196 = vmatpush1.xpose.msra.mxu0 %v2179
    %2197 = vmatprep.subr.mxu0 0.0
    %2198 = vmatpush1.xpose.msra.mxu0 %v2181
    %2199 = vmatprep.subr.mxu0 0.0
    %2200 = vmatpush1.xpose.msra.mxu0 %v2183
    %2201 = vmatprep.subr.mxu0 0.0
    %2202 = vmatpush1.xpose.msra.mxu0 %v2185
    %2203 = vmatprep.subr.mxu0 0.0
    %2204 = vmatpush1.xpose.msra.mxu0 0.0
    %2205 = vmatprep.subr.mxu0 0.0
    %2206 = vmatpush1.xpose.msra.mxu0 0.0
    %2207 = vmatprep.subr.mxu0 0.0
    %2208 = vmatpush1.xpose.msra.mxu0 0.0
    %2209 = vmatprep.subr.mxu0 0.0
    %2210 = vmatpush1.xpose.msra.mxu0 0.0
    %2211 = vmatprep.subr.mxu0 0.0
    %2212 = vmatpush1.xpose.msra.mxu0 0.0
    %2213 = vmatprep.subr.mxu0 0.0
    %2214 = vmatpush1.xpose.msra.mxu0 0.0
    %2215 = vmatprep.subr.mxu0 0.0
    %2216 = vmatpush1.xpose.msra.mxu0 0.0
    %2217 = vmatprep.subr.mxu0 0.0
    %2218 = vmatpush1.xpose.msra.mxu0 0.0
    %2219 = vmatprep.subr.mxu0 0.0
    %2220 = vmatpush1.xpose.msra.mxu0 0.0
    %2221 = vmatprep.subr.mxu0 0.0
    %2222 = vmatpush1.xpose.msra.mxu0 0.0
    %2223 = vmatprep.subr.mxu0 0.0
    %2224 = vmatpush1.xpose.msra.mxu0 0.0
    %2225 = vmatprep.subr.mxu0 0.0
    %2226 = vmatpush1.xpose.msra.mxu0 0.0
    %2227 = vmatprep.subr.mxu0 0.0
    %2228 = vmatpush1.xpose.msra.mxu0 0.0
    %2229 = vmatprep.subr.mxu0 0.0
    %2230 = vmatpush1.xpose.msra.mxu0 0.0
    %2231 = vmatprep.subr.mxu0 0.0
    %2232 = vmatpush1.xpose.msra.mxu0 0.0
    %2233 = vmatprep.subr.mxu0 0.0
    %2234 = vmatpush1.xpose.msra.mxu0 0.0
    %2235 = vmatprep.subr.mxu0 0.0
    %2236 = vmatpush1.xpose.msra.mxu0 0.0
    %2237 = vmatprep.subr.mxu0 0.0
    %2238 = vmatpush1.xpose.msra.mxu0 0.0
    %2239 = vmatprep.subr.mxu0 0.0
    %2240 = vmatpush1.xpose.msra.mxu0 0.0
    %2241 = vmatprep.subr.mxu0 0.0
    %2242 = vmatpush1.xpose.msra.mxu0 0.0
    %2243 = vmatprep.subr.mxu0 0.0
    %2244 = vmatpush1.xpose.msra.mxu0 0.0
    %2245 = vmatprep.subr.mxu0 0.0
    %2246 = vmatpush1.xpose.msra.mxu0 0.0
    %2247 = vmatprep.subr.mxu0 0.0
    %2248 = vmatpush1.xpose.msra.mxu0 0.0
    %2249 = vmatprep.subr.mxu0 0.0
    %2250 = vmatpush1.xpose.msra.mxu0 0.0
    %2251 = vmatprep.mubr.f32.mxu0 0.0
    %2252 = vmatmul.mubr.f32.gmra.mrb[0].mxu0 %v2155
    %v2253 = vpop.f32.mrb[0].mxu0
    %v2254 = vadd.f32 %v112, %v2253
    %v2255 = vpop.f32.mrb[0].mxu0
    %2256 = vmatprep.mubr.f32.mxu0 0.0
    %2257 = vmatmul.mubr.f32.gmra.mrb[0].mxu0 %v2157
    %v2258 = vpop.f32.mrb[0].mxu0
    %v2259 = vadd.f32 %v113, %v2258
    %v2260 = vpop.f32.mrb[0].mxu0
    %2261 = vmatprep.mubr.f32.mxu0 0.0
    %2262 = vmatmul.mubr.f32.gmra.mrb[0].mxu0 %v2159
    %v2263 = vpop.f32.mrb[0].mxu0
    %v2264 = vadd.f32 %v114, %v2263
    %v2265 = vpop.f32.mrb[0].mxu0
    %2266 = vmatprep.mubr.f32.mxu0 0.0
    %2267 = vmatmul.mubr.f32.gmra.mrb[0].mxu0 %v2161
    %v2268 = vpop.f32.mrb[0].mxu0
    %v2269 = vadd.f32 %v115, %v2268
    %v2270 = vpop.f32.mrb[0].mxu0
    %2271 = vmatprep.mubr.f32.mxu0 0.0
    %2272 = vmatmul.mubr.f32.gmra.mrb[0].mxu0 %v2163
    %v2273 = vpop.f32.mrb[0].mxu0
    %v2274 = vadd.f32 %v116, %v2273
    %v2275 = vpop.f32.mrb[0].mxu0
    %2276 = vmatprep.mubr.f32.mxu0 0.0
    %2277 = vmatmul.mubr.f32.gmra.mrb[0].mxu0 %v2165
    %v2278 = vpop.f32.mrb[0].mxu0
    %v2279 = vadd.f32 %v117, %v2278
    %v2280 = vpop.f32.mrb[0].mxu0
    %2281 = vmatprep.mubr.f32.mxu0 0.0
    %2282 = vmatmul.mubr.f32.gmra.mrb[0].mxu0 %v2167
    %v2283 = vpop.f32.mrb[0].mxu0
    %v2284 = vadd.f32 %v118, %v2283
    %v2285 = vpop.f32.mrb[0].mxu0
    %2286 = vmatprep.mubr.f32.mxu0 0.0
    %2287 = vmatmul.mubr.f32.gmra.mrb[0].mxu0 %v2169
    %v2288 = vpop.f32.mrb[0].mxu0
    %v2289 = vadd.f32 %v119, %v2288
    %v2290 = vpop.f32.mrb[0].mxu0
    %2291 = vdwg.mxu0
    %v2292 = vsel %vm673, %v2254, -inf
    %2293 = vmax.xlane.f32.xlu0 %v2292
    %v2294 = vpop.xlane.xlu0 %2293
    %v2295 = vsel %vm673, %v2259, -inf
    %2296 = vmax.xlane.f32.xlu0 %v2295
    %v2297 = vpop.xlane.xlu0 %2296
    %v2298 = vsel %vm673, %v2264, -inf
    %2299 = vmax.xlane.f32.xlu0 %v2298
    %v2300 = vpop.xlane.xlu0 %2299
    %v2301 = vsel %vm673, %v2269, -inf
    %2302 = vmax.xlane.f32.xlu0 %v2301
    %v2303 = vpop.xlane.xlu0 %2302
    %v2304 = vsel %vm673, %v2274, -inf
    %2305 = vmax.xlane.f32.xlu0 %v2304
    %v2306 = vpop.xlane.xlu0 %2305
    %v2307 = vsel %vm673, %v2279, -inf
    %2308 = vmax.xlane.f32.xlu0 %v2307
    %v2309 = vpop.xlane.xlu0 %2308
    %v2310 = vsel %vm673, %v2284, -inf
    %2311 = vmax.xlane.f32.xlu0 %v2310
    %v2312 = vpop.xlane.xlu0 %2311
    %v2313 = vsel %vm673, %v2289, -inf
    %2314 = vmax.xlane.f32.xlu0 %v2313
    %v2315 = vpop.xlane.xlu0 %2314
    %v2316 = vsub.f32 %v2254, %v2294
    %v2317 = vsub.f32 %v2259, %v2297
    %v2318 = vsub.f32 %v2264, %v2300
    %v2319 = vsub.f32 %v2269, %v2303
    %v2320 = vsub.f32 %v2274, %v2306
    %v2321 = vsub.f32 %v2279, %v2309
    %v2322 = vsub.f32 %v2284, %v2312
    %v2323 = vsub.f32 %v2289, %v2315
    %v2324 = vmul.f32 %v2316, 1.442695
    %v2325 = vpow.pop %v2324
    %v2326 = vmul.f32 %v2317, 1.442695
    %v2327 = vpow.pop %v2326
    %v2328 = vmul.f32 %v2318, 1.442695
    %v2329 = vpow.pop %v2328
    %v2330 = vmul.f32 %v2319, 1.442695
    %v2331 = vpow.pop %v2330
    %v2332 = vmul.f32 %v2320, 1.442695
    %v2333 = vpow.pop %v2332
    %v2334 = vmul.f32 %v2321, 1.442695
    %v2335 = vpow.pop %v2334
    %v2336 = vmul.f32 %v2322, 1.442695
    %v2337 = vpow.pop %v2336
    %v2338 = vmul.f32 %v2323, 1.442695
    %v2339 = vpow.pop %v2338
    %v2340 = vsel %vm673, %v2325, 0.0
    %2341 = vadd.xlane.f32.xlu0 %v2340
    %v2342 = vpop.xlane.xlu0 %2341
    %v2343 = vsel %vm673, %v2327, 0.0
    %2344 = vadd.xlane.f32.xlu0 %v2343
    %v2345 = vpop.xlane.xlu0 %2344
    %v2346 = vsel %vm673, %v2329, 0.0
    %2347 = vadd.xlane.f32.xlu0 %v2346
    %v2348 = vpop.xlane.xlu0 %2347
    %v2349 = vsel %vm673, %v2331, 0.0
    %2350 = vadd.xlane.f32.xlu0 %v2349
    %v2351 = vpop.xlane.xlu0 %2350
    %v2352 = vsel %vm673, %v2333, 0.0
    %2353 = vadd.xlane.f32.xlu0 %v2352
    %v2354 = vpop.xlane.xlu0 %2353
    %v2355 = vsel %vm673, %v2335, 0.0
    %2356 = vadd.xlane.f32.xlu0 %v2355
    %v2357 = vpop.xlane.xlu0 %2356
    %v2358 = vsel %vm673, %v2337, 0.0
    %2359 = vadd.xlane.f32.xlu0 %v2358
    %v2360 = vpop.xlane.xlu0 %2359
    %v2361 = vsel %vm673, %v2339, 0.0
    %2362 = vadd.xlane.f32.xlu0 %v2361
    %v2363 = vpop.xlane.xlu0 %2362
    %v2364 = vrcp.pop %v2342
    %v2365 = vrcp.pop %v2345
    %v2366 = vrcp.pop %v2348
    %v2367 = vrcp.pop %v2351
    %v2368 = vrcp.pop %v2354
    %v2369 = vrcp.pop %v2357
    %v2370 = vrcp.pop %v2360
    %v2371 = vrcp.pop %v2363
    %v2372 = vmul.f32 %v2325, %v2364
    %v2373 = vmul.f32 %v2327, %v2365
    %v2374 = vmul.f32 %v2329, %v2366
    %v2375 = vmul.f32 %v2331, %v2367
    %v2376 = vmul.f32 %v2333, %v2368
    %v2377 = vmul.f32 %v2335, %v2369
    %v2378 = vmul.f32 %v2337, %v2370
    %v2379 = vmul.f32 %v2339, %v2371
    %2380 = vrot.lane.b32.xlu0 %v473, 104
    %v2381 = vpop.permute.xlu0 %2380
    %2382 = vrot.lane.b32.xlu0 %v478, 104
    %v2383 = vpop.permute.xlu0 %2382
    %2384 = vrot.lane.b32.xlu0 %v483, 104
    %v2385 = vpop.permute.xlu0 %2384
    %2386 = vrot.lane.b32.xlu0 %v488, 104
    %v2387 = vpop.permute.xlu0 %2386
    %2388 = vrot.lane.b32.xlu0 %v493, 104
    %v2389 = vpop.permute.xlu0 %2388
    %2390 = vrot.lane.b32.xlu0 %v498, 104
    %v2391 = vpop.permute.xlu0 %2390
    %2392 = vrot.lane.b32.xlu0 %v503, 104
    %v2393 = vpop.permute.xlu0 %2392
    %2394 = vrot.lane.b32.xlu0 %v508, 104
    %v2395 = vpop.permute.xlu0 %2394
    %v2405 = vsel %vm673, %v2372, 0
    %v2408 = vsel %vm673, %v2373, 0
    %v2411 = vsel %vm673, %v2374, 0
    %v2414 = vsel %vm673, %v2375, 0
    %v2417 = vsel %vm673, %v2376, 0
    %v2420 = vsel %vm673, %v2377, 0
    %v2423 = vsel %vm673, %v2378, 0
    %v2426 = vsel %vm673, %v2379, 0
    %2428 = vmatprep.subr.mxu0 0.0
    %2429 = vmatpush1.msra.mxu0 %v2381
    %2430 = vmatprep.subr.mxu0 0.0
    %2431 = vmatpush1.msra.mxu0 %v2383
    %2432 = vmatprep.subr.mxu0 0.0
    %2433 = vmatpush1.msra.mxu0 %v2385
    %2434 = vmatprep.subr.mxu0 0.0
    %2435 = vmatpush1.msra.mxu0 %v2387
    %2436 = vmatprep.subr.mxu0 0.0
    %2437 = vmatpush1.msra.mxu0 %v2389
    %2438 = vmatprep.subr.mxu0 0.0
    %2439 = vmatpush1.msra.mxu0 %v2391
    %2440 = vmatprep.subr.mxu0 0.0
    %2441 = vmatpush1.msra.mxu0 %v2393
    %2442 = vmatprep.subr.mxu0 0.0
    %2443 = vmatpush1.msra.mxu0 %v2395
    %2444 = vmatprep.subr.mxu0 0.0
    %2445 = vmatpush1.msra.mxu0 0.0
    %2446 = vmatprep.subr.mxu0 0.0
    %2447 = vmatpush1.msra.mxu0 0.0
    %2448 = vmatprep.subr.mxu0 0.0
    %2449 = vmatpush1.msra.mxu0 0.0
    %2450 = vmatprep.subr.mxu0 0.0
    %2451 = vmatpush1.msra.mxu0 0.0
    %2452 = vmatprep.subr.mxu0 0.0
    %2453 = vmatpush1.msra.mxu0 0.0
    %2454 = vmatprep.subr.mxu0 0.0
    %2455 = vmatpush1.msra.mxu0 0.0
    %2456 = vmatprep.subr.mxu0 0.0
    %2457 = vmatpush1.msra.mxu0 0.0
    %2458 = vmatprep.subr.mxu0 0.0
    %2459 = vmatpush1.msra.mxu0 0.0
    %2460 = vmatprep.subr.mxu0 0.0
    %2461 = vmatpush1.msra.mxu0 0.0
    %2462 = vmatprep.subr.mxu0 0.0
    %2463 = vmatpush1.msra.mxu0 0.0
    %2464 = vmatprep.subr.mxu0 0.0
    %2465 = vmatpush1.msra.mxu0 0.0
    %2466 = vmatprep.subr.mxu0 0.0
    %2467 = vmatpush1.msra.mxu0 0.0
    %2468 = vmatprep.subr.mxu0 0.0
    %2469 = vmatpush1.msra.mxu0 0.0
    %2470 = vmatprep.subr.mxu0 0.0
    %2471 = vmatpush1.msra.mxu0 0.0
    %2472 = vmatprep.subr.mxu0 0.0
    %2473 = vmatpush1.msra.mxu0 0.0
    %2474 = vmatprep.subr.mxu0 0.0
    %2475 = vmatpush1.msra.mxu0 0.0
    %2476 = vmatprep.subr.mxu0 0.0
    %2477 = vmatpush1.msra.mxu0 0.0
    %2478 = vmatprep.subr.mxu0 0.0
    %2479 = vmatpush1.msra.mxu0 0.0
    %2480 = vmatprep.subr.mxu0 0.0
    %2481 = vmatpush1.msra.mxu0 0.0
    %2482 = vmatprep.subr.mxu0 0.0
    %2483 = vmatpush1.msra.mxu0 0.0
    %2484 = vmatprep.subr.mxu0 0.0
    %2485 = vmatpush1.msra.mxu0 0.0
    %2486 = vmatprep.subr.mxu0 0.0
    %2487 = vmatpush1.msra.mxu0 0.0
    %2488 = vmatprep.subr.mxu0 0.0
    %2489 = vmatpush1.msra.mxu0 0.0
    %2490 = vmatprep.subr.mxu0 0.0
    %2491 = vmatpush1.msra.mxu0 0.0
    %2492 = vmatprep.mubr.f32.mxu0 0.0
    %2493 = vmatmul.mubr.f32.gmra.mrb[0].mxu0 %v2405
    %v2494 = vpop.f32.mrb[0].mxu0
    %v2495 = vadd.f32 0.0, %v2494
    %v2496 = vpop.f32.mrb[0].mxu0
    %2497 = vmatprep.mubr.f32.mxu0 0.0
    %2498 = vmatmul.mubr.f32.gmra.mrb[0].mxu0 %v2408
    %v2499 = vpop.f32.mrb[0].mxu0
    %v2500 = vadd.f32 0.0, %v2499
    %v2501 = vpop.f32.mrb[0].mxu0
    %2502 = vmatprep.mubr.f32.mxu0 0.0
    %2503 = vmatmul.mubr.f32.gmra.mrb[0].mxu0 %v2411
    %v2504 = vpop.f32.mrb[0].mxu0
    %v2505 = vadd.f32 0.0, %v2504
    %v2506 = vpop.f32.mrb[0].mxu0
    %2507 = vmatprep.mubr.f32.mxu0 0.0
    %2508 = vmatmul.mubr.f32.gmra.mrb[0].mxu0 %v2414
    %v2509 = vpop.f32.mrb[0].mxu0
    %v2510 = vadd.f32 0.0, %v2509
    %v2511 = vpop.f32.mrb[0].mxu0
    %2512 = vmatprep.mubr.f32.mxu0 0.0
    %2513 = vmatmul.mubr.f32.gmra.mrb[0].mxu0 %v2417
    %v2514 = vpop.f32.mrb[0].mxu0
    %v2515 = vadd.f32 0.0, %v2514
    %v2516 = vpop.f32.mrb[0].mxu0
    %2517 = vmatprep.mubr.f32.mxu0 0.0
    %2518 = vmatmul.mubr.f32.gmra.mrb[0].mxu0 %v2420
    %v2519 = vpop.f32.mrb[0].mxu0
    %v2520 = vadd.f32 0.0, %v2519
    %v2521 = vpop.f32.mrb[0].mxu0
    %2522 = vmatprep.mubr.f32.mxu0 0.0
    %2523 = vmatmul.mubr.f32.gmra.mrb[0].mxu0 %v2423
    %v2524 = vpop.f32.mrb[0].mxu0
    %v2525 = vadd.f32 0.0, %v2524
    %v2526 = vpop.f32.mrb[0].mxu0
    %2527 = vmatprep.mubr.f32.mxu0 0.0
    %2528 = vmatmul.mubr.f32.gmra.mrb[0].mxu0 %v2426
    %v2529 = vpop.f32.mrb[0].mxu0
    %v2530 = vadd.f32 0.0, %v2529
    %v2531 = vpop.f32.mrb[0].mxu0
    %2532 = vdwg.mxu0
    %2533 = vrot.lane.b32.xlu0 %v127, 32
    %v2534 = vpop.permute.xlu0 %2533
    %v2537 = vsel %vm519, %v2495, 0
    %v2540 = vsel %vm519, %v2500, 0
    %v2543 = vsel %vm519, %v2505, 0
    %v2546 = vsel %vm519, %v2510, 0
    %v2549 = vsel %vm519, %v2515, 0
    %v2552 = vsel %vm519, %v2520, 0
    %v2555 = vsel %vm519, %v2525, 0
    %v2558 = vsel %vm519, %v2530, 0
    %2560 = vmatprep.subr.mxu0 0.0
    %2561 = vmatpush1.msra.mxu0 %v2534
    %2562 = vmatprep.subr.mxu0 0.0
    %2563 = vmatpush1.msra.mxu0 0.0
    %2564 = vmatprep.subr.mxu0 0.0
    %2565 = vmatpush1.msra.mxu0 0.0
    %2566 = vmatprep.subr.mxu0 0.0
    %2567 = vmatpush1.msra.mxu0 0.0
    %2568 = vmatprep.subr.mxu0 0.0
    %2569 = vmatpush1.msra.mxu0 0.0
    %2570 = vmatprep.subr.mxu0 0.0
    %2571 = vmatpush1.msra.mxu0 0.0
    %2572 = vmatprep.subr.mxu0 0.0
    %2573 = vmatpush1.msra.mxu0 0.0
    %2574 = vmatprep.subr.mxu0 0.0
    %2575 = vmatpush1.msra.mxu0 0.0
    %2576 = vmatprep.subr.mxu0 0.0
    %2577 = vmatpush1.msra.mxu0 0.0
    %2578 = vmatprep.subr.mxu0 0.0
    %2579 = vmatpush1.msra.mxu0 0.0
    %2580 = vmatprep.subr.mxu0 0.0
    %2581 = vmatpush1.msra.mxu0 0.0
    %2582 = vmatprep.subr.mxu0 0.0
    %2583 = vmatpush1.msra.mxu0 0.0
    %2584 = vmatprep.subr.mxu0 0.0
    %2585 = vmatpush1.msra.mxu0 0.0
    %2586 = vmatprep.subr.mxu0 0.0
    %2587 = vmatpush1.msra.mxu0 0.0
    %2588 = vmatprep.subr.mxu0 0.0
    %2589 = vmatpush1.msra.mxu0 0.0
    %2590 = vmatprep.subr.mxu0 0.0
    %2591 = vmatpush1.msra.mxu0 0.0
    %2592 = vmatprep.subr.mxu0 0.0
    %2593 = vmatpush1.msra.mxu0 0.0
    %2594 = vmatprep.subr.mxu0 0.0
    %2595 = vmatpush1.msra.mxu0 0.0
    %2596 = vmatprep.subr.mxu0 0.0
    %2597 = vmatpush1.msra.mxu0 0.0
    %2598 = vmatprep.subr.mxu0 0.0
    %2599 = vmatpush1.msra.mxu0 0.0
    %2600 = vmatprep.subr.mxu0 0.0
    %2601 = vmatpush1.msra.mxu0 0.0
    %2602 = vmatprep.subr.mxu0 0.0
    %2603 = vmatpush1.msra.mxu0 0.0
    %2604 = vmatprep.subr.mxu0 0.0
    %2605 = vmatpush1.msra.mxu0 0.0
    %2606 = vmatprep.subr.mxu0 0.0
    %2607 = vmatpush1.msra.mxu0 0.0
    %2608 = vmatprep.subr.mxu0 0.0
    %2609 = vmatpush1.msra.mxu0 0.0
    %2610 = vmatprep.subr.mxu0 0.0
    %2611 = vmatpush1.msra.mxu0 0.0
    %2612 = vmatprep.subr.mxu0 0.0
    %2613 = vmatpush1.msra.mxu0 0.0
    %2614 = vmatprep.subr.mxu0 0.0
    %2615 = vmatpush1.msra.mxu0 0.0
    %2616 = vmatprep.subr.mxu0 0.0
    %2617 = vmatpush1.msra.mxu0 0.0
    %2618 = vmatprep.subr.mxu0 0.0
    %2619 = vmatpush1.msra.mxu0 0.0
    %2620 = vmatprep.subr.mxu0 0.0
    %2621 = vmatpush1.msra.mxu0 0.0
    %2622 = vmatprep.subr.mxu0 0.0
    %2623 = vmatpush1.msra.mxu0 0.0
    %2624 = vmatprep.mubr.f32.mxu0 0.0
    %2625 = vmatmul.mubr.f32.gmra.mrb[0].mxu0 %v2537
    %v2626 = vpop.f32.mrb[0].mxu0
    %v2627 = vadd.f32 0.0, %v2626
    %v2628 = vpop.f32.mrb[0].mxu0
    %2629 = vmatprep.mubr.f32.mxu0 0.0
    %2630 = vmatmul.mubr.f32.gmra.mrb[0].mxu0 %v2540
    %v2631 = vpop.f32.mrb[0].mxu0
    %v2632 = vadd.f32 0.0, %v2631
    %v2633 = vpop.f32.mrb[0].mxu0
    %2634 = vmatprep.mubr.f32.mxu0 0.0
    %2635 = vmatmul.mubr.f32.gmra.mrb[0].mxu0 %v2543
    %v2636 = vpop.f32.mrb[0].mxu0
    %v2637 = vadd.f32 0.0, %v2636
    %v2638 = vpop.f32.mrb[0].mxu0
    %2639 = vmatprep.mubr.f32.mxu0 0.0
    %2640 = vmatmul.mubr.f32.gmra.mrb[0].mxu0 %v2546
    %v2641 = vpop.f32.mrb[0].mxu0
    %v2642 = vadd.f32 0.0, %v2641
    %v2643 = vpop.f32.mrb[0].mxu0
    %2644 = vmatprep.mubr.f32.mxu0 0.0
    %2645 = vmatmul.mubr.f32.gmra.mrb[0].mxu0 %v2549
    %v2646 = vpop.f32.mrb[0].mxu0
    %v2647 = vadd.f32 0.0, %v2646
    %v2648 = vpop.f32.mrb[0].mxu0
    %2649 = vmatprep.mubr.f32.mxu0 0.0
    %2650 = vmatmul.mubr.f32.gmra.mrb[0].mxu0 %v2552
    %v2651 = vpop.f32.mrb[0].mxu0
    %v2652 = vadd.f32 0.0, %v2651
    %v2653 = vpop.f32.mrb[0].mxu0
    %2654 = vmatprep.mubr.f32.mxu0 0.0
    %2655 = vmatmul.mubr.f32.gmra.mrb[0].mxu0 %v2555
    %v2656 = vpop.f32.mrb[0].mxu0
    %v2657 = vadd.f32 0.0, %v2656
    %v2658 = vpop.f32.mrb[0].mxu0
    %2659 = vmatprep.mubr.f32.mxu0 0.0
    %2660 = vmatmul.mubr.f32.gmra.mrb[0].mxu0 %v2558
    %v2661 = vpop.f32.mrb[0].mxu0
    %v2662 = vadd.f32 0.0, %v2661
    %v2663 = vpop.f32.mrb[0].mxu0
    %2664 = vdwg.mxu0
    %v2665 = vadd.f32 %v2115, %v2627
    %v2666 = vadd.f32 %v2116, %v2632
    %v2667 = vadd.f32 %v2117, %v2637
    %v2668 = vadd.f32 %v2118, %v2642
    %v2669 = vadd.f32 %v2119, %v2647
    %v2670 = vadd.f32 %v2120, %v2652
    %v2671 = vadd.f32 %v2121, %v2657
    %v2672 = vadd.f32 %v2122, %v2662
    %v2673 = vlaneseq
    %v2674 = vshrl.u32 %v2673, 7
    %v2675 = vsub.s32 3, %v2674
    %v2676 = vrot.slane %v129, %v2675
    %v2677 = vadd.f32 %v2665, %v2676
    %v2678 = vadd.f32 %v2666, %v2676
    %v2679 = vadd.f32 %v2667, %v2676
    %v2680 = vadd.f32 %v2668, %v2676
    %v2681 = vadd.f32 %v2669, %v2676
    %v2682 = vadd.f32 %v2670, %v2676
    %v2683 = vadd.f32 %v2671, %v2676
    %v2684 = vadd.f32 %v2672, %v2676
    %v2685 = vadd.f32 %v104, %v2677
    %v2686 = vadd.f32 %v105, %v2678
    %v2687 = vadd.f32 %v106, %v2679
    %v2688 = vadd.f32 %v107, %v2680
    %v2689 = vadd.f32 %v108, %v2681
    %v2690 = vadd.f32 %v109, %v2682
    %v2691 = vadd.f32 %v110, %v2683
    %v2692 = vadd.f32 %v111, %v2684
    %v2693 = vsel %vm135, %v2685, 0.0
    %2694 = vadd.xlane.f32.xlu0 %v2693
    %v2695 = vpop.xlane.xlu0 %2694
    %v2696 = vsel %vm135, %v2686, 0.0
    %2697 = vadd.xlane.f32.xlu0 %v2696
    %v2698 = vpop.xlane.xlu0 %2697
    %v2699 = vsel %vm135, %v2687, 0.0
    %2700 = vadd.xlane.f32.xlu0 %v2699
    %v2701 = vpop.xlane.xlu0 %2700
    %v2702 = vsel %vm135, %v2688, 0.0
    %2703 = vadd.xlane.f32.xlu0 %v2702
    %v2704 = vpop.xlane.xlu0 %2703
    %v2705 = vsel %vm135, %v2689, 0.0
    %2706 = vadd.xlane.f32.xlu0 %v2705
    %v2707 = vpop.xlane.xlu0 %2706
    %v2708 = vsel %vm135, %v2690, 0.0
    %2709 = vadd.xlane.f32.xlu0 %v2708
    %v2710 = vpop.xlane.xlu0 %2709
    %v2711 = vsel %vm135, %v2691, 0.0
    %2712 = vadd.xlane.f32.xlu0 %v2711
    %v2713 = vpop.xlane.xlu0 %2712
    %v2714 = vsel %vm135, %v2692, 0.0
    %2715 = vadd.xlane.f32.xlu0 %v2714
    %v2716 = vpop.xlane.xlu0 %2715
    %v2717 = vrcp.pop 32.0
    %v2718 = vmul.f32 %v2695, %v2717
    %v2719 = vmul.f32 %v2698, %v2717
    %v2720 = vmul.f32 %v2701, %v2717
    %v2721 = vmul.f32 %v2704, %v2717
    %v2722 = vmul.f32 %v2707, %v2717
    %v2723 = vmul.f32 %v2710, %v2717
    %v2724 = vmul.f32 %v2713, %v2717
    %v2725 = vmul.f32 %v2716, %v2717
    %v2726 = vsub.f32 %v2685, %v2718
    %v2727 = vsub.f32 %v2686, %v2719
    %v2728 = vsub.f32 %v2687, %v2720
    %v2729 = vsub.f32 %v2688, %v2721
    %v2730 = vsub.f32 %v2689, %v2722
    %v2731 = vsub.f32 %v2690, %v2723
    %v2732 = vsub.f32 %v2691, %v2724
    %v2733 = vsub.f32 %v2692, %v2725
    %v2734 = vmul.f32 %v2726, %v2726
    %v2735 = vmul.f32 %v2727, %v2727
    %v2736 = vmul.f32 %v2728, %v2728
    %v2737 = vmul.f32 %v2729, %v2729
    %v2738 = vmul.f32 %v2730, %v2730
    %v2739 = vmul.f32 %v2731, %v2731
    %v2740 = vmul.f32 %v2732, %v2732
    %v2741 = vmul.f32 %v2733, %v2733
    %v2742 = vsel %vm135, %v2734, 0.0
    %2743 = vadd.xlane.f32.xlu0 %v2742
    %v2744 = vpop.xlane.xlu0 %2743
    %v2745 = vsel %vm135, %v2735, 0.0
    %2746 = vadd.xlane.f32.xlu0 %v2745
    %v2747 = vpop.xlane.xlu0 %2746
    %v2748 = vsel %vm135, %v2736, 0.0
    %2749 = vadd.xlane.f32.xlu0 %v2748
    %v2750 = vpop.xlane.xlu0 %2749
    %v2751 = vsel %vm135, %v2737, 0.0
    %2752 = vadd.xlane.f32.xlu0 %v2751
    %v2753 = vpop.xlane.xlu0 %2752
    %v2754 = vsel %vm135, %v2738, 0.0
    %2755 = vadd.xlane.f32.xlu0 %v2754
    %v2756 = vpop.xlane.xlu0 %2755
    %v2757 = vsel %vm135, %v2739, 0.0
    %2758 = vadd.xlane.f32.xlu0 %v2757
    %v2759 = vpop.xlane.xlu0 %2758
    %v2760 = vsel %vm135, %v2740, 0.0
    %2761 = vadd.xlane.f32.xlu0 %v2760
    %v2762 = vpop.xlane.xlu0 %2761
    %v2763 = vsel %vm135, %v2741, 0.0
    %2764 = vadd.xlane.f32.xlu0 %v2763
    %v2765 = vpop.xlane.xlu0 %2764
    %v2766 = vmul.f32 %v2744, %v2717
    %v2767 = vmul.f32 %v2747, %v2717
    %v2768 = vmul.f32 %v2750, %v2717
    %v2769 = vmul.f32 %v2753, %v2717
    %v2770 = vmul.f32 %v2756, %v2717
    %v2771 = vmul.f32 %v2759, %v2717
    %v2772 = vmul.f32 %v2762, %v2717
    %v2773 = vmul.f32 %v2765, %v2717
    %v2774 = vadd.f32 %v2766, 1e-05
    %v2775 = vadd.f32 %v2767, 1e-05
    %v2776 = vadd.f32 %v2768, 1e-05
    %v2777 = vadd.f32 %v2769, 1e-05
    %v2778 = vadd.f32 %v2770, 1e-05
    %v2779 = vadd.f32 %v2771, 1e-05
    %v2780 = vadd.f32 %v2772, 1e-05
    %v2781 = vadd.f32 %v2773, 1e-05
    %v2782 = vrsqrt.pop %v2774
    %v2783 = vrsqrt.pop %v2775
    %v2784 = vrsqrt.pop %v2776
    %v2785 = vrsqrt.pop %v2777
    %v2786 = vrsqrt.pop %v2778
    %v2787 = vrsqrt.pop %v2779
    %v2788 = vrsqrt.pop %v2780
    %v2789 = vrsqrt.pop %v2781
    %v2790 = vmul.f32 %v2726, %v2782
    %v2791 = vmul.f32 %v2727, %v2783
    %v2792 = vmul.f32 %v2728, %v2784
    %v2793 = vmul.f32 %v2729, %v2785
    %v2794 = vmul.f32 %v2730, %v2786
    %v2795 = vmul.f32 %v2731, %v2787
    %v2796 = vmul.f32 %v2732, %v2788
    %v2797 = vmul.f32 %v2733, %v2789
    %v2798 = vlaneseq
    %v2799 = vshrl.u32 %v2798, 7
    %v2800 = vsub.s32 6, %v2799
    %v2801 = vrot.slane %v129, %v2800
    %v2802 = vmul.f32 %v2790, %v2801
    %v2803 = vmul.f32 %v2791, %v2801
    %v2804 = vmul.f32 %v2792, %v2801
    %v2805 = vmul.f32 %v2793, %v2801
    %v2806 = vmul.f32 %v2794, %v2801
    %v2807 = vmul.f32 %v2795, %v2801
    %v2808 = vmul.f32 %v2796, %v2801
    %v2809 = vmul.f32 %v2797, %v2801
    %v2810 = vlaneseq
    %v2811 = vshrl.u32 %v2810, 7
    %v2812 = vsub.s32 7, %v2811
    %v2813 = vrot.slane %v129, %v2812
    %v2814 = vadd.f32 %v2802, %v2813
    %v2815 = vadd.f32 %v2803, %v2813
    %v2816 = vadd.f32 %v2804, %v2813
    %v2817 = vadd.f32 %v2805, %v2813
    %v2818 = vadd.f32 %v2806, %v2813
    %v2819 = vadd.f32 %v2807, %v2813
    %v2820 = vadd.f32 %v2808, %v2813
    %v2821 = vadd.f32 %v2809, %v2813
    %v2822 = vlaneseq
    %v2823 = vshrl.u32 %v2822, 7
    %v2824 = vsub.s32 4, %v2823
    %v2825 = vrot.slane %v129, %v2824
    %v2827 = vsel %vm135, %v2814, 0
    %v2830 = vsel %vm135, %v2815, 0
    %v2833 = vsel %vm135, %v2816, 0
    %v2836 = vsel %vm135, %v2817, 0
    %v2839 = vsel %vm135, %v2818, 0
    %v2842 = vsel %vm135, %v2819, 0
    %v2845 = vsel %vm135, %v2820, 0
    %v2848 = vsel %vm135, %v2821, 0
    %2850 = vmatprep.subr.mxu0 0.0
    %2851 = vmatpush1.msra.mxu0 %v122
    %2852 = vmatprep.subr.mxu0 0.0
    %2853 = vmatpush1.msra.mxu0 %v124
    %2854 = vmatprep.subr.mxu0 0.0
    %2855 = vmatpush1.msra.mxu0 %v126
    %2856 = vmatprep.subr.mxu0 0.0
    %2857 = vmatpush1.msra.mxu0 %v128
    %2858 = vmatprep.subr.mxu0 0.0
    %2859 = vmatpush1.msra.mxu0 0.0
    %2860 = vmatprep.subr.mxu0 0.0
    %2861 = vmatpush1.msra.mxu0 0.0
    %2862 = vmatprep.subr.mxu0 0.0
    %2863 = vmatpush1.msra.mxu0 0.0
    %2864 = vmatprep.subr.mxu0 0.0
    %2865 = vmatpush1.msra.mxu0 0.0
    %2866 = vmatprep.subr.mxu0 0.0
    %2867 = vmatpush1.msra.mxu0 0.0
    %2868 = vmatprep.subr.mxu0 0.0
    %2869 = vmatpush1.msra.mxu0 0.0
    %2870 = vmatprep.subr.mxu0 0.0
    %2871 = vmatpush1.msra.mxu0 0.0
    %2872 = vmatprep.subr.mxu0 0.0
    %2873 = vmatpush1.msra.mxu0 0.0
    %2874 = vmatprep.subr.mxu0 0.0
    %2875 = vmatpush1.msra.mxu0 0.0
    %2876 = vmatprep.subr.mxu0 0.0
    %2877 = vmatpush1.msra.mxu0 0.0
    %2878 = vmatprep.subr.mxu0 0.0
    %2879 = vmatpush1.msra.mxu0 0.0
    %2880 = vmatprep.subr.mxu0 0.0
    %2881 = vmatpush1.msra.mxu0 0.0
    %2882 = vmatprep.subr.mxu0 0.0
    %2883 = vmatpush1.msra.mxu0 0.0
    %2884 = vmatprep.subr.mxu0 0.0
    %2885 = vmatpush1.msra.mxu0 0.0
    %2886 = vmatprep.subr.mxu0 0.0
    %2887 = vmatpush1.msra.mxu0 0.0
    %2888 = vmatprep.subr.mxu0 0.0
    %2889 = vmatpush1.msra.mxu0 0.0
    %2890 = vmatprep.subr.mxu0 0.0
    %2891 = vmatpush1.msra.mxu0 0.0
    %2892 = vmatprep.subr.mxu0 0.0
    %2893 = vmatpush1.msra.mxu0 0.0
    %2894 = vmatprep.subr.mxu0 0.0
    %2895 = vmatpush1.msra.mxu0 0.0
    %2896 = vmatprep.subr.mxu0 0.0
    %2897 = vmatpush1.msra.mxu0 0.0
    %2898 = vmatprep.subr.mxu0 0.0
    %2899 = vmatpush1.msra.mxu0 0.0
    %2900 = vmatprep.subr.mxu0 0.0
    %2901 = vmatpush1.msra.mxu0 0.0
    %2902 = vmatprep.subr.mxu0 0.0
    %2903 = vmatpush1.msra.mxu0 0.0
    %2904 = vmatprep.subr.mxu0 0.0
    %2905 = vmatpush1.msra.mxu0 0.0
    %2906 = vmatprep.subr.mxu0 0.0
    %2907 = vmatpush1.msra.mxu0 0.0
    %2908 = vmatprep.subr.mxu0 0.0
    %2909 = vmatpush1.msra.mxu0 0.0
    %2910 = vmatprep.subr.mxu0 0.0
    %2911 = vmatpush1.msra.mxu0 0.0
    %2912 = vmatprep.subr.mxu0 0.0
    %2913 = vmatpush1.msra.mxu0 0.0
    %2914 = vmatprep.mubr.f32.mxu0 0.0
    %2915 = vmatmul.mubr.f32.gmra.mrb[0].mxu0 %v2827
    %v2916 = vpop.f32.mrb[0].mxu0
    %v2917 = vadd.f32 %v2825, %v2916
    %v2918 = vpop.f32.mrb[0].mxu0
    %2919 = vmatprep.mubr.f32.mxu0 0.0
    %2920 = vmatmul.mubr.f32.gmra.mrb[0].mxu0 %v2830
    %v2921 = vpop.f32.mrb[0].mxu0
    %v2922 = vadd.f32 %v2825, %v2921
    %v2923 = vpop.f32.mrb[0].mxu0
    %2924 = vmatprep.mubr.f32.mxu0 0.0
    %2925 = vmatmul.mubr.f32.gmra.mrb[0].mxu0 %v2833
    %v2926 = vpop.f32.mrb[0].mxu0
    %v2927 = vadd.f32 %v2825, %v2926
    %v2928 = vpop.f32.mrb[0].mxu0
    %2929 = vmatprep.mubr.f32.mxu0 0.0
    %2930 = vmatmul.mubr.f32.gmra.mrb[0].mxu0 %v2836
    %v2931 = vpop.f32.mrb[0].mxu0
    %v2932 = vadd.f32 %v2825, %v2931
    %v2933 = vpop.f32.mrb[0].mxu0
    %2934 = vmatprep.mubr.f32.mxu0 0.0
    %2935 = vmatmul.mubr.f32.gmra.mrb[0].mxu0 %v2839
    %v2936 = vpop.f32.mrb[0].mxu0
    %v2937 = vadd.f32 %v2825, %v2936
    %v2938 = vpop.f32.mrb[0].mxu0
    %2939 = vmatprep.mubr.f32.mxu0 0.0
    %2940 = vmatmul.mubr.f32.gmra.mrb[0].mxu0 %v2842
    %v2941 = vpop.f32.mrb[0].mxu0
    %v2942 = vadd.f32 %v2825, %v2941
    %v2943 = vpop.f32.mrb[0].mxu0
    %2944 = vmatprep.mubr.f32.mxu0 0.0
    %2945 = vmatmul.mubr.f32.gmra.mrb[0].mxu0 %v2845
    %v2946 = vpop.f32.mrb[0].mxu0
    %v2947 = vadd.f32 %v2825, %v2946
    %v2948 = vpop.f32.mrb[0].mxu0
    %2949 = vmatprep.mubr.f32.mxu0 0.0
    %2950 = vmatmul.mubr.f32.gmra.mrb[0].mxu0 %v2848
    %v2951 = vpop.f32.mrb[0].mxu0
    %v2952 = vadd.f32 %v2825, %v2951
    %v2953 = vpop.f32.mrb[0].mxu0
    %2954 = vdwg.mxu0
    %v2955 = vmax.f32 %v2917, 0.0
    %v2956 = vmax.f32 %v2922, 0.0
    %v2957 = vmax.f32 %v2927, 0.0
    %v2958 = vmax.f32 %v2932, 0.0
    %v2959 = vmax.f32 %v2937, 0.0
    %v2960 = vmax.f32 %v2942, 0.0
    %v2961 = vmax.f32 %v2947, 0.0
    %v2962 = vmax.f32 %v2952, 0.0
    %v2963 = vlaneseq
    %v2964 = vshrl.u32 %v2963, 7
    %v2965 = vsub.s32 5, %v2964
    %v2966 = vrot.slane %v129, %v2965
    %2971 = vrot.lane.b32.xlu0 %v122, 96
    %v2972 = vpop.permute.xlu0 %2971
    %2973 = vrot.lane.b32.xlu0 %v124, 96
    %v2974 = vpop.permute.xlu0 %2973
    %2975 = vrot.lane.b32.xlu0 %v126, 96
    %v2976 = vpop.permute.xlu0 %2975
    %2977 = vrot.lane.b32.xlu0 %v128, 96
    %v2978 = vpop.permute.xlu0 %2977
    %v2984 = vsel %vm135, %v2955, 0
    %v2987 = vsel %vm135, %v2956, 0
    %v2990 = vsel %vm135, %v2957, 0
    %v2993 = vsel %vm135, %v2958, 0
    %v2996 = vsel %vm135, %v2959, 0
    %v2999 = vsel %vm135, %v2960, 0
    %v3002 = vsel %vm135, %v2961, 0
    %v3005 = vsel %vm135, %v2962, 0
    %3007 = vmatprep.subr.mxu0 0.0
    %3008 = vmatpush1.msra.mxu0 %v2972
    %3009 = vmatprep.subr.mxu0 0.0
    %3010 = vmatpush1.msra.mxu0 %v2974
    %3011 = vmatprep.subr.mxu0 0.0
    %3012 = vmatpush1.msra.mxu0 %v2976
    %3013 = vmatprep.subr.mxu0 0.0
    %3014 = vmatpush1.msra.mxu0 %v2978
    %3015 = vmatprep.subr.mxu0 0.0
    %3016 = vmatpush1.msra.mxu0 0.0
    %3017 = vmatprep.subr.mxu0 0.0
    %3018 = vmatpush1.msra.mxu0 0.0
    %3019 = vmatprep.subr.mxu0 0.0
    %3020 = vmatpush1.msra.mxu0 0.0
    %3021 = vmatprep.subr.mxu0 0.0
    %3022 = vmatpush1.msra.mxu0 0.0
    %3023 = vmatprep.subr.mxu0 0.0
    %3024 = vmatpush1.msra.mxu0 0.0
    %3025 = vmatprep.subr.mxu0 0.0
    %3026 = vmatpush1.msra.mxu0 0.0
    %3027 = vmatprep.subr.mxu0 0.0
    %3028 = vmatpush1.msra.mxu0 0.0
    %3029 = vmatprep.subr.mxu0 0.0
    %3030 = vmatpush1.msra.mxu0 0.0
    %3031 = vmatprep.subr.mxu0 0.0
    %3032 = vmatpush1.msra.mxu0 0.0
    %3033 = vmatprep.subr.mxu0 0.0
    %3034 = vmatpush1.msra.mxu0 0.0
    %3035 = vmatprep.subr.mxu0 0.0
    %3036 = vmatpush1.msra.mxu0 0.0
    %3037 = vmatprep.subr.mxu0 0.0
    %3038 = vmatpush1.msra.mxu0 0.0
    %3039 = vmatprep.subr.mxu0 0.0
    %3040 = vmatpush1.msra.mxu0 0.0
    %3041 = vmatprep.subr.mxu0 0.0
    %3042 = vmatpush1.msra.mxu0 0.0
    %3043 = vmatprep.subr.mxu0 0.0
    %3044 = vmatpush1.msra.mxu0 0.0
    %3045 = vmatprep.subr.mxu0 0.0
    %3046 = vmatpush1.msra.mxu0 0.0
    %3047 = vmatprep.subr.mxu0 0.0
    %3048 = vmatpush1.msra.mxu0 0.0
    %3049 = vmatprep.subr.mxu0 0.0
    %3050 = vmatpush1.msra.mxu0 0.0
    %3051 = vmatprep.subr.mxu0 0.0
    %3052 = vmatpush1.msra.mxu0 0.0
    %3053 = vmatprep.subr.mxu0 0.0
    %3054 = vmatpush1.msra.mxu0 0.0
    %3055 = vmatprep.subr.mxu0 0.0
    %3056 = vmatpush1.msra.mxu0 0.0
    %3057 = vmatprep.subr.mxu0 0.0
    %3058 = vmatpush1.msra.mxu0 0.0
    %3059 = vmatprep.subr.mxu0 0.0
    %3060 = vmatpush1.msra.mxu0 0.0
    %3061 = vmatprep.subr.mxu0 0.0
    %3062 = vmatpush1.msra.mxu0 0.0
    %3063 = vmatprep.subr.mxu0 0.0
    %3064 = vmatpush1.msra.mxu0 0.0
    %3065 = vmatprep.subr.mxu0 0.0
    %3066 = vmatpush1.msra.mxu0 0.0
    %3067 = vmatprep.subr.mxu0 0.0
    %3068 = vmatpush1.msra.mxu0 0.0
    %3069 = vmatprep.subr.mxu0 0.0
    %3070 = vmatpush1.msra.mxu0 0.0
    %3071 = vmatprep.mubr.f32.mxu0 0.0
    %3072 = vmatmul.mubr.f32.gmra.mrb[0].mxu0 %v2984
    %v3073 = vpop.f32.mrb[0].mxu0
    %v3074 = vadd.f32 %v2966, %v3073
    %v3075 = vpop.f32.mrb[0].mxu0
    %3076 = vmatprep.mubr.f32.mxu0 0.0
    %3077 = vmatmul.mubr.f32.gmra.mrb[0].mxu0 %v2987
    %v3078 = vpop.f32.mrb[0].mxu0
    %v3079 = vadd.f32 %v2966, %v3078
    %v3080 = vpop.f32.mrb[0].mxu0
    %3081 = vmatprep.mubr.f32.mxu0 0.0
    %3082 = vmatmul.mubr.f32.gmra.mrb[0].mxu0 %v2990
    %v3083 = vpop.f32.mrb[0].mxu0
    %v3084 = vadd.f32 %v2966, %v3083
    %v3085 = vpop.f32.mrb[0].mxu0
    %3086 = vmatprep.mubr.f32.mxu0 0.0
    %3087 = vmatmul.mubr.f32.gmra.mrb[0].mxu0 %v2993
    %v3088 = vpop.f32.mrb[0].mxu0
    %v3089 = vadd.f32 %v2966, %v3088
    %v3090 = vpop.f32.mrb[0].mxu0
    %3091 = vmatprep.mubr.f32.mxu0 0.0
    %3092 = vmatmul.mubr.f32.gmra.mrb[0].mxu0 %v2996
    %v3093 = vpop.f32.mrb[0].mxu0
    %v3094 = vadd.f32 %v2966, %v3093
    %v3095 = vpop.f32.mrb[0].mxu0
    %3096 = vmatprep.mubr.f32.mxu0 0.0
    %3097 = vmatmul.mubr.f32.gmra.mrb[0].mxu0 %v2999
    %v3098 = vpop.f32.mrb[0].mxu0
    %v3099 = vadd.f32 %v2966, %v3098
    %v3100 = vpop.f32.mrb[0].mxu0
    %3101 = vmatprep.mubr.f32.mxu0 0.0
    %3102 = vmatmul.mubr.f32.gmra.mrb[0].mxu0 %v3002
    %v3103 = vpop.f32.mrb[0].mxu0
    %v3104 = vadd.f32 %v2966, %v3103
    %v3105 = vpop.f32.mrb[0].mxu0
    %3106 = vmatprep.mubr.f32.mxu0 0.0
    %3107 = vmatmul.mubr.f32.gmra.mrb[0].mxu0 %v3005
    %v3108 = vpop.f32.mrb[0].mxu0
    %v3109 = vadd.f32 %v2966, %v3108
    %v3110 = vpop.f32.mrb[0].mxu0
    %3111 = vdwg.mxu0
    %v3112 = vadd.f32 %v2814, %v3074
    %v3113 = vadd.f32 %v2815, %v3079
    %v3114 = vadd.f32 %v2816, %v3084
    %v3115 = vadd.f32 %v2817, %v3089
    %v3116 = vadd.f32 %v2818, %v3094
    %v3117 = vadd.f32 %v2819, %v3099
    %v3118 = vadd.f32 %v2820, %v3104
    %v3119 = vadd.f32 %v2821, %v3109
    %v3120 = vsel %vm135, %v3112, 0.0
    %3121 = vadd.xlane.f32.xlu0 %v3120
    %v3122 = vpop.xlane.xlu0 %3121
    %v3123 = vsel %vm135, %v3113, 0.0
    %3124 = vadd.xlane.f32.xlu0 %v3123
    %v3125 = vpop.xlane.xlu0 %3124
    %v3126 = vsel %vm135, %v3114, 0.0
    %3127 = vadd.xlane.f32.xlu0 %v3126
    %v3128 = vpop.xlane.xlu0 %3127
    %v3129 = vsel %vm135, %v3115, 0.0
    %3130 = vadd.xlane.f32.xlu0 %v3129
    %v3131 = vpop.xlane.xlu0 %3130
    %v3132 = vsel %vm135, %v3116, 0.0
    %3133 = vadd.xlane.f32.xlu0 %v3132
    %v3134 = vpop.xlane.xlu0 %3133
    %v3135 = vsel %vm135, %v3117, 0.0
    %3136 = vadd.xlane.f32.xlu0 %v3135
    %v3137 = vpop.xlane.xlu0 %3136
    %v3138 = vsel %vm135, %v3118, 0.0
    %3139 = vadd.xlane.f32.xlu0 %v3138
    %v3140 = vpop.xlane.xlu0 %3139
    %v3141 = vsel %vm135, %v3119, 0.0
    %3142 = vadd.xlane.f32.xlu0 %v3141
    %v3143 = vpop.xlane.xlu0 %3142
    %v3144 = vmul.f32 %v3122, %v2717
    %v3145 = vmul.f32 %v3125, %v2717
    %v3146 = vmul.f32 %v3128, %v2717
    %v3147 = vmul.f32 %v3131, %v2717
    %v3148 = vmul.f32 %v3134, %v2717
    %v3149 = vmul.f32 %v3137, %v2717
    %v3150 = vmul.f32 %v3140, %v2717
    %v3151 = vmul.f32 %v3143, %v2717
    %v3152 = vsub.f32 %v3112, %v3144
    %v3153 = vsub.f32 %v3113, %v3145
    %v3154 = vsub.f32 %v3114, %v3146
    %v3155 = vsub.f32 %v3115, %v3147
    %v3156 = vsub.f32 %v3116, %v3148
    %v3157 = vsub.f32 %v3117, %v3149
    %v3158 = vsub.f32 %v3118, %v3150
    %v3159 = vsub.f32 %v3119, %v3151
    %v3160 = vmul.f32 %v3152, %v3152
    %v3161 = vmul.f32 %v3153, %v3153
    %v3162 = vmul.f32 %v3154, %v3154
    %v3163 = vmul.f32 %v3155, %v3155
    %v3164 = vmul.f32 %v3156, %v3156
    %v3165 = vmul.f32 %v3157, %v3157
    %v3166 = vmul.f32 %v3158, %v3158
    %v3167 = vmul.f32 %v3159, %v3159
    %v3168 = vsel %vm135, %v3160, 0.0
    %3169 = vadd.xlane.f32.xlu0 %v3168
    %v3170 = vpop.xlane.xlu0 %3169
    %v3171 = vsel %vm135, %v3161, 0.0
    %3172 = vadd.xlane.f32.xlu0 %v3171
    %v3173 = vpop.xlane.xlu0 %3172
    %v3174 = vsel %vm135, %v3162, 0.0
    %3175 = vadd.xlane.f32.xlu0 %v3174
    %v3176 = vpop.xlane.xlu0 %3175
    %v3177 = vsel %vm135, %v3163, 0.0
    %3178 = vadd.xlane.f32.xlu0 %v3177
    %v3179 = vpop.xlane.xlu0 %3178
    %v3180 = vsel %vm135, %v3164, 0.0
    %3181 = vadd.xlane.f32.xlu0 %v3180
    %v3182 = vpop.xlane.xlu0 %3181
    %v3183 = vsel %vm135, %v3165, 0.0
    %3184 = vadd.xlane.f32.xlu0 %v3183
    %v3185 = vpop.xlane.xlu0 %3184
    %v3186 = vsel %vm135, %v3166, 0.0
    %3187 = vadd.xlane.f32.xlu0 %v3186
    %v3188 = vpop.xlane.xlu0 %3187
    %v3189 = vsel %vm135, %v3167, 0.0
    %3190 = vadd.xlane.f32.xlu0 %v3189
    %v3191 = vpop.xlane.xlu0 %3190
    %v3192 = vmul.f32 %v3170, %v2717
    %v3193 = vmul.f32 %v3173, %v2717
    %v3194 = vmul.f32 %v3176, %v2717
    %v3195 = vmul.f32 %v3179, %v2717
    %v3196 = vmul.f32 %v3182, %v2717
    %v3197 = vmul.f32 %v3185, %v2717
    %v3198 = vmul.f32 %v3188, %v2717
    %v3199 = vmul.f32 %v3191, %v2717
    %v3200 = vadd.f32 %v3192, 1e-05
    %v3201 = vadd.f32 %v3193, 1e-05
    %v3202 = vadd.f32 %v3194, 1e-05
    %v3203 = vadd.f32 %v3195, 1e-05
    %v3204 = vadd.f32 %v3196, 1e-05
    %v3205 = vadd.f32 %v3197, 1e-05
    %v3206 = vadd.f32 %v3198, 1e-05
    %v3207 = vadd.f32 %v3199, 1e-05
    %v3208 = vrsqrt.pop %v3200
    %v3209 = vrsqrt.pop %v3201
    %v3210 = vrsqrt.pop %v3202
    %v3211 = vrsqrt.pop %v3203
    %v3212 = vrsqrt.pop %v3204
    %v3213 = vrsqrt.pop %v3205
    %v3214 = vrsqrt.pop %v3206
    %v3215 = vrsqrt.pop %v3207
    %v3216 = vmul.f32 %v3152, %v3208
    %v3217 = vmul.f32 %v3153, %v3209
    %v3218 = vmul.f32 %v3154, %v3210
    %v3219 = vmul.f32 %v3155, %v3211
    %v3220 = vmul.f32 %v3156, %v3212
    %v3221 = vmul.f32 %v3157, %v3213
    %v3222 = vmul.f32 %v3158, %v3214
    %v3223 = vmul.f32 %v3159, %v3215
    %v3224 = vlaneseq
    %v3225 = vshrl.u32 %v3224, 7
    %v3226 = vsub.s32 0, %v3225
    %v3227 = vrot.slane %v130, %v3226
    %v3228 = vmul.f32 %v3216, %v3227
    %v3229 = vmul.f32 %v3217, %v3227
    %v3230 = vmul.f32 %v3218, %v3227
    %v3231 = vmul.f32 %v3219, %v3227
    %v3232 = vmul.f32 %v3220, %v3227
    %v3233 = vmul.f32 %v3221, %v3227
    %v3234 = vmul.f32 %v3222, %v3227
    %v3235 = vmul.f32 %v3223, %v3227
    %v3236 = vlaneseq
    %v3237 = vshrl.u32 %v3236, 7
    %v3238 = vsub.s32 1, %v3237
    %v3239 = vrot.slane %v130, %v3238
    %v3240 = vadd.f32 %v3228, %v3239
    %v3241 = vadd.f32 %v3229, %v3239
    %v3242 = vadd.f32 %v3230, %v3239
    %v3243 = vadd.f32 %v3231, %v3239
    %v3244 = vadd.f32 %v3232, %v3239
    %v3245 = vadd.f32 %v3233, %v3239
    %v3246 = vadd.f32 %v3234, %v3239
    %v3247 = vadd.f32 %v3235, %v3239
    %s3248 = scalar_lea.vmem %s2, 64
    %v3249 = vld [vmem:[%s3248] sm:$0xff]
    %v3250 = vld [vmem:[%s3248 + $0x8] sm:$0xff]
    %v3251 = vld [vmem:[%s3248 + $0x10] sm:$0xff]
    %v3252 = vld [vmem:[%s3248 + $0x18] sm:$0xff]
    %v3253 = vld [vmem:[%s3248 + $0x20] sm:$0xff]
    %v3254 = vld [vmem:[%s3248 + $0x28] sm:$0xff]
    %v3255 = vld [vmem:[%s3248 + $0x30] sm:$0xff]
    %v3256 = vld [vmem:[%s3248 + $0x38] sm:$0xff]
    %s3257 = scalar_lea.vmem %s3, 16
    %v3258 = vld [vmem:[%s3257] sm:$0xff]
    %v3259 = vld [vmem:[%s3257 + $0x8] sm:$0x3]
    %v3260 = vlaneseq
    %v3261 = vshrl.u32 %v3260, 7
    %v3262 = vsub.s32 0, %v3261
    %v3263 = vrot.slane %v3258, %v3262
    %v3265 = vsel %vm135, %v3240, 0
    %v3268 = vsel %vm135, %v3241, 0
    %v3271 = vsel %vm135, %v3242, 0
    %v3274 = vsel %vm135, %v3243, 0
    %v3277 = vsel %vm135, %v3244, 0
    %v3280 = vsel %vm135, %v3245, 0
    %v3283 = vsel %vm135, %v3246, 0
    %v3286 = vsel %vm135, %v3247, 0
    %3288 = vmatprep.subr.mxu0 0.0
    %3289 = vmatpush1.msra.mxu0 %v3249
    %3290 = vmatprep.subr.mxu0 0.0
    %3291 = vmatpush1.msra.mxu0 %v3251
    %3292 = vmatprep.subr.mxu0 0.0
    %3293 = vmatpush1.msra.mxu0 %v3253
    %3294 = vmatprep.subr.mxu0 0.0
    %3295 = vmatpush1.msra.mxu0 %v3255
    %3296 = vmatprep.subr.mxu0 0.0
    %3297 = vmatpush1.msra.mxu0 0.0
    %3298 = vmatprep.subr.mxu0 0.0
    %3299 = vmatpush1.msra.mxu0 0.0
    %3300 = vmatprep.subr.mxu0 0.0
    %3301 = vmatpush1.msra.mxu0 0.0
    %3302 = vmatprep.subr.mxu0 0.0
    %3303 = vmatpush1.msra.mxu0 0.0
    %3304 = vmatprep.subr.mxu0 0.0
    %3305 = vmatpush1.msra.mxu0 0.0
    %3306 = vmatprep.subr.mxu0 0.0
    %3307 = vmatpush1.msra.mxu0 0.0
    %3308 = vmatprep.subr.mxu0 0.0
    %3309 = vmatpush1.msra.mxu0 0.0
    %3310 = vmatprep.subr.mxu0 0.0
    %3311 = vmatpush1.msra.mxu0 0.0
    %3312 = vmatprep.subr.mxu0 0.0
    %3313 = vmatpush1.msra.mxu0 0.0
    %3314 = vmatprep.subr.mxu0 0.0
    %3315 = vmatpush1.msra.mxu0 0.0
    %3316 = vmatprep.subr.mxu0 0.0
    %3317 = vmatpush1.msra.mxu0 0.0
    %3318 = vmatprep.subr.mxu0 0.0
    %3319 = vmatpush1.msra.mxu0 0.0
    %3320 = vmatprep.subr.mxu0 0.0
    %3321 = vmatpush1.msra.mxu0 0.0
    %3322 = vmatprep.subr.mxu0 0.0
    %3323 = vmatpush1.msra.mxu0 0.0
    %3324 = vmatprep.subr.mxu0 0.0
    %3325 = vmatpush1.msra.mxu0 0.0
    %3326 = vmatprep.subr.mxu0 0.0
    %3327 = vmatpush1.msra.mxu0 0.0
    %3328 = vmatprep.subr.mxu0 0.0
    %3329 = vmatpush1.msra.mxu0 0.0
    %3330 = vmatprep.subr.mxu0 0.0
    %3331 = vmatpush1.msra.mxu0 0.0
    %3332 = vmatprep.subr.mxu0 0.0
    %3333 = vmatpush1.msra.mxu0 0.0
    %3334 = vmatprep.subr.mxu0 0.0
    %3335 = vmatpush1.msra.mxu0 0.0
    %3336 = vmatprep.subr.mxu0 0.0
    %3337 = vmatpush1.msra.mxu0 0.0
    %3338 = vmatprep.subr.mxu0 0.0
    %3339 = vmatpush1.msra.mxu0 0.0
    %3340 = vmatprep.subr.mxu0 0.0
    %3341 = vmatpush1.msra.mxu0 0.0
    %3342 = vmatprep.subr.mxu0 0.0
    %3343 = vmatpush1.msra.mxu0 0.0
    %3344 = vmatprep.subr.mxu0 0.0
    %3345 = vmatpush1.msra.mxu0 0.0
    %3346 = vmatprep.subr.mxu0 0.0
    %3347 = vmatpush1.msra.mxu0 0.0
    %3348 = vmatprep.subr.mxu0 0.0
    %3349 = vmatpush1.msra.mxu0 0.0
    %3350 = vmatprep.subr.mxu0 0.0
    %3351 = vmatpush1.msra.mxu0 0.0
    %3352 = vmatprep.mubr.f32.mxu0 0.0
    %3353 = vmatmul.mubr.f32.gmra.mrb[0].mxu0 %v3265
    %v3354 = vpop.f32.mrb[0].mxu0
    %v3355 = vadd.f32 %v3263, %v3354
    %v3356 = vpop.f32.mrb[0].mxu0
    %3357 = vmatprep.mubr.f32.mxu0 0.0
    %3358 = vmatmul.mubr.f32.gmra.mrb[0].mxu0 %v3268
    %v3359 = vpop.f32.mrb[0].mxu0
    %v3360 = vadd.f32 %v3263, %v3359
    %v3361 = vpop.f32.mrb[0].mxu0
    %3362 = vmatprep.mubr.f32.mxu0 0.0
    %3363 = vmatmul.mubr.f32.gmra.mrb[0].mxu0 %v3271
    %v3364 = vpop.f32.mrb[0].mxu0
    %v3365 = vadd.f32 %v3263, %v3364
    %v3366 = vpop.f32.mrb[0].mxu0
    %3367 = vmatprep.mubr.f32.mxu0 0.0
    %3368 = vmatmul.mubr.f32.gmra.mrb[0].mxu0 %v3274
    %v3369 = vpop.f32.mrb[0].mxu0
    %v3370 = vadd.f32 %v3263, %v3369
    %v3371 = vpop.f32.mrb[0].mxu0
    %3372 = vmatprep.mubr.f32.mxu0 0.0
    %3373 = vmatmul.mubr.f32.gmra.mrb[0].mxu0 %v3277
    %v3374 = vpop.f32.mrb[0].mxu0
    %v3375 = vadd.f32 %v3263, %v3374
    %v3376 = vpop.f32.mrb[0].mxu0
    %3377 = vmatprep.mubr.f32.mxu0 0.0
    %3378 = vmatmul.mubr.f32.gmra.mrb[0].mxu0 %v3280
    %v3379 = vpop.f32.mrb[0].mxu0
    %v3380 = vadd.f32 %v3263, %v3379
    %v3381 = vpop.f32.mrb[0].mxu0
    %3382 = vmatprep.mubr.f32.mxu0 0.0
    %3383 = vmatmul.mubr.f32.gmra.mrb[0].mxu0 %v3283
    %v3384 = vpop.f32.mrb[0].mxu0
    %v3385 = vadd.f32 %v3263, %v3384
    %v3386 = vpop.f32.mrb[0].mxu0
    %3387 = vmatprep.mubr.f32.mxu0 0.0
    %3388 = vmatmul.mubr.f32.gmra.mrb[0].mxu0 %v3286
    %v3389 = vpop.f32.mrb[0].mxu0
    %v3390 = vadd.f32 %v3263, %v3389
    %v3391 = vpop.f32.mrb[0].mxu0
    %3392 = vdwg.mxu0
    %v3393 = vlaneseq
    %v3394 = vshrl.u32 %v3393, 7
    %v3395 = vsub.s32 1, %v3394
    %v3396 = vrot.slane %v3258, %v3395
    %3401 = vrot.lane.b32.xlu0 %v3249, 96
    %v3402 = vpop.permute.xlu0 %3401
    %3403 = vrot.lane.b32.xlu0 %v3251, 96
    %v3404 = vpop.permute.xlu0 %3403
    %3405 = vrot.lane.b32.xlu0 %v3253, 96
    %v3406 = vpop.permute.xlu0 %3405
    %3407 = vrot.lane.b32.xlu0 %v3255, 96
    %v3408 = vpop.permute.xlu0 %3407
    %3413 = vmatprep.subr.mxu0 0.0
    %3414 = vmatpush1.msra.mxu0 %v3402
    %3415 = vmatprep.subr.mxu0 0.0
    %3416 = vmatpush1.msra.mxu0 %v3404
    %3417 = vmatprep.subr.mxu0 0.0
    %3418 = vmatpush1.msra.mxu0 %v3406
    %3419 = vmatprep.subr.mxu0 0.0
    %3420 = vmatpush1.msra.mxu0 %v3408
    %3421 = vmatprep.subr.mxu0 0.0
    %3422 = vmatpush1.msra.mxu0 0.0
    %3423 = vmatprep.subr.mxu0 0.0
    %3424 = vmatpush1.msra.mxu0 0.0
    %3425 = vmatprep.subr.mxu0 0.0
    %3426 = vmatpush1.msra.mxu0 0.0
    %3427 = vmatprep.subr.mxu0 0.0
    %3428 = vmatpush1.msra.mxu0 0.0
    %3429 = vmatprep.subr.mxu0 0.0
    %3430 = vmatpush1.msra.mxu0 0.0
    %3431 = vmatprep.subr.mxu0 0.0
    %3432 = vmatpush1.msra.mxu0 0.0
    %3433 = vmatprep.subr.mxu0 0.0
    %3434 = vmatpush1.msra.mxu0 0.0
    %3435 = vmatprep.subr.mxu0 0.0
    %3436 = vmatpush1.msra.mxu0 0.0
    %3437 = vmatprep.subr.mxu0 0.0
    %3438 = vmatpush1.msra.mxu0 0.0
    %3439 = vmatprep.subr.mxu0 0.0
    %3440 = vmatpush1.msra.mxu0 0.0
    %3441 = vmatprep.subr.mxu0 0.0
    %3442 = vmatpush1.msra.mxu0 0.0
    %3443 = vmatprep.subr.mxu0 0.0
    %3444 = vmatpush1.msra.mxu0 0.0
    %3445 = vmatprep.subr.mxu0 0.0
    %3446 = vmatpush1.msra.mxu0 0.0
    %3447 = vmatprep.subr.mxu0 0.0
    %3448 = vmatpush1.msra.mxu0 0.0
    %3449 = vmatprep.subr.mxu0 0.0
    %3450 = vmatpush1.msra.mxu0 0.0
    %3451 = vmatprep.subr.mxu0 0.0
    %3452 = vmatpush1.msra.mxu0 0.0
    %3453 = vmatprep.subr.mxu0 0.0
    %3454 = vmatpush1.msra.mxu0 0.0
    %3455 = vmatprep.subr.mxu0 0.0
    %3456 = vmatpush1.msra.mxu0 0.0
    %3457 = vmatprep.subr.mxu0 0.0
    %3458 = vmatpush1.msra.mxu0 0.0
    %3459 = vmatprep.subr.mxu0 0.0
    %3460 = vmatpush1.msra.mxu0 0.0
    %3461 = vmatprep.subr.mxu0 0.0
    %3462 = vmatpush1.msra.mxu0 0.0
    %3463 = vmatprep.subr.mxu0 0.0
    %3464 = vmatpush1.msra.mxu0 0.0
    %3465 = vmatprep.subr.mxu0 0.0
    %3466 = vmatpush1.msra.mxu0 0.0
    %3467 = vmatprep.subr.mxu0 0.0
    %3468 = vmatpush1.msra.mxu0 0.0
    %3469 = vmatprep.subr.mxu0 0.0
    %3470 = vmatpush1.msra.mxu0 0.0
    %3471 = vmatprep.subr.mxu0 0.0
    %3472 = vmatpush1.msra.mxu0 0.0
    %3473 = vmatprep.subr.mxu0 0.0
    %3474 = vmatpush1.msra.mxu0 0.0
    %3475 = vmatprep.subr.mxu0 0.0
    %3476 = vmatpush1.msra.mxu0 0.0
    %3477 = vmatprep.mubr.f32.mxu0 0.0
    %3478 = vmatmul.mubr.f32.gmra.mrb[0].mxu0 %v3265
    %v3479 = vpop.f32.mrb[0].mxu0
    %v3480 = vadd.f32 %v3396, %v3479
    %v3481 = vpop.f32.mrb[0].mxu0
    %3482 = vmatprep.mubr.f32.mxu0 0.0
    %3483 = vmatmul.mubr.f32.gmra.mrb[0].mxu0 %v3268
    %v3484 = vpop.f32.mrb[0].mxu0
    %v3485 = vadd.f32 %v3396, %v3484
    %v3486 = vpop.f32.mrb[0].mxu0
    %3487 = vmatprep.mubr.f32.mxu0 0.0
    %3488 = vmatmul.mubr.f32.gmra.mrb[0].mxu0 %v3271
    %v3489 = vpop.f32.mrb[0].mxu0
    %v3490 = vadd.f32 %v3396, %v3489
    %v3491 = vpop.f32.mrb[0].mxu0
    %3492 = vmatprep.mubr.f32.mxu0 0.0
    %3493 = vmatmul.mubr.f32.gmra.mrb[0].mxu0 %v3274
    %v3494 = vpop.f32.mrb[0].mxu0
    %v3495 = vadd.f32 %v3396, %v3494
    %v3496 = vpop.f32.mrb[0].mxu0
    %3497 = vmatprep.mubr.f32.mxu0 0.0
    %3498 = vmatmul.mubr.f32.gmra.mrb[0].mxu0 %v3277
    %v3499 = vpop.f32.mrb[0].mxu0
    %v3500 = vadd.f32 %v3396, %v3499
    %v3501 = vpop.f32.mrb[0].mxu0
    %3502 = vmatprep.mubr.f32.mxu0 0.0
    %3503 = vmatmul.mubr.f32.gmra.mrb[0].mxu0 %v3280
    %v3504 = vpop.f32.mrb[0].mxu0
    %v3505 = vadd.f32 %v3396, %v3504
    %v3506 = vpop.f32.mrb[0].mxu0
    %3507 = vmatprep.mubr.f32.mxu0 0.0
    %3508 = vmatmul.mubr.f32.gmra.mrb[0].mxu0 %v3283
    %v3509 = vpop.f32.mrb[0].mxu0
    %v3510 = vadd.f32 %v3396, %v3509
    %v3511 = vpop.f32.mrb[0].mxu0
    %3512 = vmatprep.mubr.f32.mxu0 0.0
    %3513 = vmatmul.mubr.f32.gmra.mrb[0].mxu0 %v3286
    %v3514 = vpop.f32.mrb[0].mxu0
    %v3515 = vadd.f32 %v3396, %v3514
    %v3516 = vpop.f32.mrb[0].mxu0
    %3517 = vdwg.mxu0
    %v3518 = vlaneseq
    %v3519 = vshrl.u32 %v3518, 7
    %v3520 = vsub.s32 2, %v3519
    %v3521 = vrot.slane %v3258, %v3520
    %3522 = vrot.lane.b32.xlu0 %v3249, 64
    %v3523 = vpop.permute.xlu0 %3522
    %3524 = vrot.lane.b32.xlu0 %v3251, 64
    %v3525 = vpop.permute.xlu0 %3524
    %3526 = vrot.lane.b32.xlu0 %v3253, 64
    %v3527 = vpop.permute.xlu0 %3526
    %3528 = vrot.lane.b32.xlu0 %v3255, 64
    %v3529 = vpop.permute.xlu0 %3528
    %3534 = vmatprep.subr.mxu0 0.0
    %3535 = vmatpush1.msra.mxu0 %v3523
    %3536 = vmatprep.subr.mxu0 0.0
    %3537 = vmatpush1.msra.mxu0 %v3525
    %3538 = vmatprep.subr.mxu0 0.0
    %3539 = vmatpush1.msra.mxu0 %v3527
    %3540 = vmatprep.subr.mxu0 0.0
    %3541 = vmatpush1.msra.mxu0 %v3529
    %3542 = vmatprep.subr.mxu0 0.0
    %3543 = vmatpush1.msra.mxu0 0.0
    %3544 = vmatprep.subr.mxu0 0.0
    %3545 = vmatpush1.msra.mxu0 0.0
    %3546 = vmatprep.subr.mxu0 0.0
    %3547 = vmatpush1.msra.mxu0 0.0
    %3548 = vmatprep.subr.mxu0 0.0
    %3549 = vmatpush1.msra.mxu0 0.0
    %3550 = vmatprep.subr.mxu0 0.0
    %3551 = vmatpush1.msra.mxu0 0.0
    %3552 = vmatprep.subr.mxu0 0.0
    %3553 = vmatpush1.msra.mxu0 0.0
    %3554 = vmatprep.subr.mxu0 0.0
    %3555 = vmatpush1.msra.mxu0 0.0
    %3556 = vmatprep.subr.mxu0 0.0
    %3557 = vmatpush1.msra.mxu0 0.0
    %3558 = vmatprep.subr.mxu0 0.0
    %3559 = vmatpush1.msra.mxu0 0.0
    %3560 = vmatprep.subr.mxu0 0.0
    %3561 = vmatpush1.msra.mxu0 0.0
    %3562 = vmatprep.subr.mxu0 0.0
    %3563 = vmatpush1.msra.mxu0 0.0
    %3564 = vmatprep.subr.mxu0 0.0
    %3565 = vmatpush1.msra.mxu0 0.0
    %3566 = vmatprep.subr.mxu0 0.0
    %3567 = vmatpush1.msra.mxu0 0.0
    %3568 = vmatprep.subr.mxu0 0.0
    %3569 = vmatpush1.msra.mxu0 0.0
    %3570 = vmatprep.subr.mxu0 0.0
    %3571 = vmatpush1.msra.mxu0 0.0
    %3572 = vmatprep.subr.mxu0 0.0
    %3573 = vmatpush1.msra.mxu0 0.0
    %3574 = vmatprep.subr.mxu0 0.0
    %3575 = vmatpush1.msra.mxu0 0.0
    %3576 = vmatprep.subr.mxu0 0.0
    %3577 = vmatpush1.msra.mxu0 0.0
    %3578 = vmatprep.subr.mxu0 0.0
    %3579 = vmatpush1.msra.mxu0 0.0
    %3580 = vmatprep.subr.mxu0 0.0
    %3581 = vmatpush1.msra.mxu0 0.0
    %3582 = vmatprep.subr.mxu0 0.0
    %3583 = vmatpush1.msra.mxu0 0.0
    %3584 = vmatprep.subr.mxu0 0.0
    %3585 = vmatpush1.msra.mxu0 0.0
    %3586 = vmatprep.subr.mxu0 0.0
    %3587 = vmatpush1.msra.mxu0 0.0
    %3588 = vmatprep.subr.mxu0 0.0
    %3589 = vmatpush1.msra.mxu0 0.0
    %3590 = vmatprep.subr.mxu0 0.0
    %3591 = vmatpush1.msra.mxu0 0.0
    %3592 = vmatprep.subr.mxu0 0.0
    %3593 = vmatpush1.msra.mxu0 0.0
    %3594 = vmatprep.subr.mxu0 0.0
    %3595 = vmatpush1.msra.mxu0 0.0
    %3596 = vmatprep.subr.mxu0 0.0
    %3597 = vmatpush1.msra.mxu0 0.0
    %3598 = vmatprep.mubr.f32.mxu0 0.0
    %3599 = vmatmul.mubr.f32.gmra.mrb[0].mxu0 %v3265
    %v3600 = vpop.f32.mrb[0].mxu0
    %v3601 = vadd.f32 %v3521, %v3600
    %v3602 = vpop.f32.mrb[0].mxu0
    %3603 = vmatprep.mubr.f32.mxu0 0.0
    %3604 = vmatmul.mubr.f32.gmra.mrb[0].mxu0 %v3268
    %v3605 = vpop.f32.mrb[0].mxu0
    %v3606 = vadd.f32 %v3521, %v3605
    %v3607 = vpop.f32.mrb[0].mxu0
    %3608 = vmatprep.mubr.f32.mxu0 0.0
    %3609 = vmatmul.mubr.f32.gmra.mrb[0].mxu0 %v3271
    %v3610 = vpop.f32.mrb[0].mxu0
    %v3611 = vadd.f32 %v3521, %v3610
    %v3612 = vpop.f32.mrb[0].mxu0
    %3613 = vmatprep.mubr.f32.mxu0 0.0
    %3614 = vmatmul.mubr.f32.gmra.mrb[0].mxu0 %v3274
    %v3615 = vpop.f32.mrb[0].mxu0
    %v3616 = vadd.f32 %v3521, %v3615
    %v3617 = vpop.f32.mrb[0].mxu0
    %3618 = vmatprep.mubr.f32.mxu0 0.0
    %3619 = vmatmul.mubr.f32.gmra.mrb[0].mxu0 %v3277
    %v3620 = vpop.f32.mrb[0].mxu0
    %v3621 = vadd.f32 %v3521, %v3620
    %v3622 = vpop.f32.mrb[0].mxu0
    %3623 = vmatprep.mubr.f32.mxu0 0.0
    %3624 = vmatmul.mubr.f32.gmra.mrb[0].mxu0 %v3280
    %v3625 = vpop.f32.mrb[0].mxu0
    %v3626 = vadd.f32 %v3521, %v3625
    %v3627 = vpop.f32.mrb[0].mxu0
    %3628 = vmatprep.mubr.f32.mxu0 0.0
    %3629 = vmatmul.mubr.f32.gmra.mrb[0].mxu0 %v3283
    %v3630 = vpop.f32.mrb[0].mxu0
    %v3631 = vadd.f32 %v3521, %v3630
    %v3632 = vpop.f32.mrb[0].mxu0
    %3633 = vmatprep.mubr.f32.mxu0 0.0
    %3634 = vmatmul.mubr.f32.gmra.mrb[0].mxu0 %v3286
    %v3635 = vpop.f32.mrb[0].mxu0
    %v3636 = vadd.f32 %v3521, %v3635
    %v3637 = vpop.f32.mrb[0].mxu0
    %3638 = vdwg.mxu0
    %v3639 = vmul.f32 %v3355, 0.35355338
    %v3640 = vmul.f32 %v3360, 0.35355338
    %v3641 = vmul.f32 %v3365, 0.35355338
    %v3642 = vmul.f32 %v3370, 0.35355338
    %v3643 = vmul.f32 %v3375, 0.35355338
    %v3644 = vmul.f32 %v3380, 0.35355338
    %v3645 = vmul.f32 %v3385, 0.35355338
    %v3646 = vmul.f32 %v3390, 0.35355338
    %v3648 = vsel %vm519, %v3639, 0
    %v3651 = vsel %vm519, %v3640, 0
    %v3654 = vsel %vm519, %v3641, 0
    %v3657 = vsel %vm519, %v3642, 0
    %v3660 = vsel %vm519, %v3643, 0
    %v3663 = vsel %vm519, %v3644, 0
    %v3666 = vsel %vm519, %v3645, 0
    %v3669 = vsel %vm519, %v3646, 0
    %v3672 = vsel %vm519, %v3480, 0
    %v3675 = vsel %vm519, %v3485, 0
    %v3678 = vsel %vm519, %v3490, 0
    %v3681 = vsel %vm519, %v3495, 0
    %v3684 = vsel %vm519, %v3500, 0
    %v3687 = vsel %vm519, %v3505, 0
    %v3690 = vsel %vm519, %v3510, 0
    %v3693 = vsel %vm519, %v3515, 0
    %3695 = vmatprep.subr.mxu0 0.0
    %3696 = vmatpush1.xpose.msra.mxu0 %v3672
    %3697 = vmatprep.subr.mxu0 0.0
    %3698 = vmatpush1.xpose.msra.mxu0 %v3675
    %3699 = vmatprep.subr.mxu0 0.0
    %3700 = vmatpush1.xpose.msra.mxu0 %v3678
    %3701 = vmatprep.subr.mxu0 0.0
    %3702 = vmatpush1.xpose.msra.mxu0 %v3681
    %3703 = vmatprep.subr.mxu0 0.0
    %3704 = vmatpush1.xpose.msra.mxu0 %v3684
    %3705 = vmatprep.subr.mxu0 0.0
    %3706 = vmatpush1.xpose.msra.mxu0 %v3687
    %3707 = vmatprep.subr.mxu0 0.0
    %3708 = vmatpush1.xpose.msra.mxu0 %v3690
    %3709 = vmatprep.subr.mxu0 0.0
    %3710 = vmatpush1.xpose.msra.mxu0 %v3693
    %3711 = vmatprep.subr.mxu0 0.0
    %3712 = vmatpush1.xpose.msra.mxu0 0.0
    %3713 = vmatprep.subr.mxu0 0.0
    %3714 = vmatpush1.xpose.msra.mxu0 0.0
    %3715 = vmatprep.subr.mxu0 0.0
    %3716 = vmatpush1.xpose.msra.mxu0 0.0
    %3717 = vmatprep.subr.mxu0 0.0
    %3718 = vmatpush1.xpose.msra.mxu0 0.0
    %3719 = vmatprep.subr.mxu0 0.0
    %3720 = vmatpush1.xpose.msra.mxu0 0.0
    %3721 = vmatprep.subr.mxu0 0.0
    %3722 = vmatpush1.xpose.msra.mxu0 0.0
    %3723 = vmatprep.subr.mxu0 0.0
    %3724 = vmatpush1.xpose.msra.mxu0 0.0
    %3725 = vmatprep.subr.mxu0 0.0
    %3726 = vmatpush1.xpose.msra.mxu0 0.0
    %3727 = vmatprep.subr.mxu0 0.0
    %3728 = vmatpush1.xpose.msra.mxu0 0.0
    %3729 = vmatprep.subr.mxu0 0.0
    %3730 = vmatpush1.xpose.msra.mxu0 0.0
    %3731 = vmatprep.subr.mxu0 0.0
    %3732 = vmatpush1.xpose.msra.mxu0 0.0
    %3733 = vmatprep.subr.mxu0 0.0
    %3734 = vmatpush1.xpose.msra.mxu0 0.0
    %3735 = vmatprep.subr.mxu0 0.0
    %3736 = vmatpush1.xpose.msra.mxu0 0.0
    %3737 = vmatprep.subr.mxu0 0.0
    %3738 = vmatpush1.xpose.msra.mxu0 0.0
    %3739 = vmatprep.subr.mxu0 0.0
    %3740 = vmatpush1.xpose.msra.mxu0 0.0
    %3741 = vmatprep.subr.mxu0 0.0
    %3742 = vmatpush1.xpose.msra.mxu0 0.0
    %3743 = vmatprep.subr.mxu0 0.0
    %3744 = vmatpush1.xpose.msra.mxu0 0.0
    %3745 = vmatprep.subr.mxu0 0.0
    %3746 = vmatpush1.xpose.msra.mxu0 0.0
    %3747 = vmatprep.subr.mxu0 0.0
    %3748 = vmatpush1.xpose.msra.mxu0 0.0
    %3749 = vmatprep.subr.mxu0 0.0
    %3750 = vmatpush1.xpose.msra.mxu0 0.0
    %3751 = vmatprep.subr.mxu0 0.0
    %3752 = vmatpush1.xpose.msra.mxu0 0.0
    %3753 = vmatprep.subr.mxu0 0.0
    %3754 = vmatpush1.xpose.msra.mxu0 0.0
    %3755 = vmatprep.subr.mxu0 0.0
    %3756 = vmatpush1.xpose.msra.mxu0 0.0
    %3757 = vmatprep.subr.mxu0 0.0
    %3758 = vmatpush1.xpose.msra.mxu0 0.0
    %3759 = vmatprep.mubr.f32.mxu0 0.0
    %3760 = vmatmul.mubr.f32.gmra.mrb[0].mxu0 %v3648
    %v3761 = vpop.f32.mrb[0].mxu0
    %v3762 = vadd.f32 %v112, %v3761
    %v3763 = vpop.f32.mrb[0].mxu0
    %3764 = vmatprep.mubr.f32.mxu0 0.0
    %3765 = vmatmul.mubr.f32.gmra.mrb[0].mxu0 %v3651
    %v3766 = vpop.f32.mrb[0].mxu0
    %v3767 = vadd.f32 %v113, %v3766
    %v3768 = vpop.f32.mrb[0].mxu0
    %3769 = vmatprep.mubr.f32.mxu0 0.0
    %3770 = vmatmul.mubr.f32.gmra.mrb[0].mxu0 %v3654
    %v3771 = vpop.f32.mrb[0].mxu0
    %v3772 = vadd.f32 %v114, %v3771
    %v3773 = vpop.f32.mrb[0].mxu0
    %3774 = vmatprep.mubr.f32.mxu0 0.0
    %3775 = vmatmul.mubr.f32.gmra.mrb[0].mxu0 %v3657
    %v3776 = vpop.f32.mrb[0].mxu0
    %v3777 = vadd.f32 %v115, %v3776
    %v3778 = vpop.f32.mrb[0].mxu0
    %3779 = vmatprep.mubr.f32.mxu0 0.0
    %3780 = vmatmul.mubr.f32.gmra.mrb[0].mxu0 %v3660
    %v3781 = vpop.f32.mrb[0].mxu0
    %v3782 = vadd.f32 %v116, %v3781
    %v3783 = vpop.f32.mrb[0].mxu0
    %3784 = vmatprep.mubr.f32.mxu0 0.0
    %3785 = vmatmul.mubr.f32.gmra.mrb[0].mxu0 %v3663
    %v3786 = vpop.f32.mrb[0].mxu0
    %v3787 = vadd.f32 %v117, %v3786
    %v3788 = vpop.f32.mrb[0].mxu0
    %3789 = vmatprep.mubr.f32.mxu0 0.0
    %3790 = vmatmul.mubr.f32.gmra.mrb[0].mxu0 %v3666
    %v3791 = vpop.f32.mrb[0].mxu0
    %v3792 = vadd.f32 %v118, %v3791
    %v3793 = vpop.f32.mrb[0].mxu0
    %3794 = vmatprep.mubr.f32.mxu0 0.0
    %3795 = vmatmul.mubr.f32.gmra.mrb[0].mxu0 %v3669
    %v3796 = vpop.f32.mrb[0].mxu0
    %v3797 = vadd.f32 %v119, %v3796
    %v3798 = vpop.f32.mrb[0].mxu0
    %3799 = vdwg.mxu0
    %v3800 = vsel %vm673, %v3762, -inf
    %3801 = vmax.xlane.f32.xlu0 %v3800
    %v3802 = vpop.xlane.xlu0 %3801
    %v3803 = vsel %vm673, %v3767, -inf
    %3804 = vmax.xlane.f32.xlu0 %v3803
    %v3805 = vpop.xlane.xlu0 %3804
    %v3806 = vsel %vm673, %v3772, -inf
    %3807 = vmax.xlane.f32.xlu0 %v3806
    %v3808 = vpop.xlane.xlu0 %3807
    %v3809 = vsel %vm673, %v3777, -inf
    %3810 = vmax.xlane.f32.xlu0 %v3809
    %v3811 = vpop.xlane.xlu0 %3810
    %v3812 = vsel %vm673, %v3782, -inf
    %3813 = vmax.xlane.f32.xlu0 %v3812
    %v3814 = vpop.xlane.xlu0 %3813
    %v3815 = vsel %vm673, %v3787, -inf
    %3816 = vmax.xlane.f32.xlu0 %v3815
    %v3817 = vpop.xlane.xlu0 %3816
    %v3818 = vsel %vm673, %v3792, -inf
    %3819 = vmax.xlane.f32.xlu0 %v3818
    %v3820 = vpop.xlane.xlu0 %3819
    %v3821 = vsel %vm673, %v3797, -inf
    %3822 = vmax.xlane.f32.xlu0 %v3821
    %v3823 = vpop.xlane.xlu0 %3822
    %v3824 = vsub.f32 %v3762, %v3802
    %v3825 = vsub.f32 %v3767, %v3805
    %v3826 = vsub.f32 %v3772, %v3808
    %v3827 = vsub.f32 %v3777, %v3811
    %v3828 = vsub.f32 %v3782, %v3814
    %v3829 = vsub.f32 %v3787, %v3817
    %v3830 = vsub.f32 %v3792, %v3820
    %v3831 = vsub.f32 %v3797, %v3823
    %v3832 = vmul.f32 %v3824, 1.442695
    %v3833 = vpow.pop %v3832
    %v3834 = vmul.f32 %v3825, 1.442695
    %v3835 = vpow.pop %v3834
    %v3836 = vmul.f32 %v3826, 1.442695
    %v3837 = vpow.pop %v3836
    %v3838 = vmul.f32 %v3827, 1.442695
    %v3839 = vpow.pop %v3838
    %v3840 = vmul.f32 %v3828, 1.442695
    %v3841 = vpow.pop %v3840
    %v3842 = vmul.f32 %v3829, 1.442695
    %v3843 = vpow.pop %v3842
    %v3844 = vmul.f32 %v3830, 1.442695
    %v3845 = vpow.pop %v3844
    %v3846 = vmul.f32 %v3831, 1.442695
    %v3847 = vpow.pop %v3846
    %v3848 = vsel %vm673, %v3833, 0.0
    %3849 = vadd.xlane.f32.xlu0 %v3848
    %v3850 = vpop.xlane.xlu0 %3849
    %v3851 = vsel %vm673, %v3835, 0.0
    %3852 = vadd.xlane.f32.xlu0 %v3851
    %v3853 = vpop.xlane.xlu0 %3852
    %v3854 = vsel %vm673, %v3837, 0.0
    %3855 = vadd.xlane.f32.xlu0 %v3854
    %v3856 = vpop.xlane.xlu0 %3855
    %v3857 = vsel %vm673, %v3839, 0.0
    %3858 = vadd.xlane.f32.xlu0 %v3857
    %v3859 = vpop.xlane.xlu0 %3858
    %v3860 = vsel %vm673, %v3841, 0.0
    %3861 = vadd.xlane.f32.xlu0 %v3860
    %v3862 = vpop.xlane.xlu0 %3861
    %v3863 = vsel %vm673, %v3843, 0.0
    %3864 = vadd.xlane.f32.xlu0 %v3863
    %v3865 = vpop.xlane.xlu0 %3864
    %v3866 = vsel %vm673, %v3845, 0.0
    %3867 = vadd.xlane.f32.xlu0 %v3866
    %v3868 = vpop.xlane.xlu0 %3867
    %v3869 = vsel %vm673, %v3847, 0.0
    %3870 = vadd.xlane.f32.xlu0 %v3869
    %v3871 = vpop.xlane.xlu0 %3870
    %v3872 = vrcp.pop %v3850
    %v3873 = vrcp.pop %v3853
    %v3874 = vrcp.pop %v3856
    %v3875 = vrcp.pop %v3859
    %v3876 = vrcp.pop %v3862
    %v3877 = vrcp.pop %v3865
    %v3878 = vrcp.pop %v3868
    %v3879 = vrcp.pop %v3871
    %v3880 = vmul.f32 %v3833, %v3872
    %v3881 = vmul.f32 %v3835, %v3873
    %v3882 = vmul.f32 %v3837, %v3874
    %v3883 = vmul.f32 %v3839, %v3875
    %v3884 = vmul.f32 %v3841, %v3876
    %v3885 = vmul.f32 %v3843, %v3877
    %v3886 = vmul.f32 %v3845, %v3878
    %v3887 = vmul.f32 %v3847, %v3879
    %v3889 = vsel %vm673, %v3880, 0
    %v3892 = vsel %vm673, %v3881, 0
    %v3895 = vsel %vm673, %v3882, 0
    %v3898 = vsel %vm673, %v3883, 0
    %v3901 = vsel %vm673, %v3884, 0
    %v3904 = vsel %vm673, %v3885, 0
    %v3907 = vsel %vm673, %v3886, 0
    %v3910 = vsel %vm673, %v3887, 0
    %3912 = vmatprep.subr.mxu0 0.0
    %3913 = vmatpush1.msra.mxu0 %v3601
    %3914 = vmatprep.subr.mxu0 0.0
    %3915 = vmatpush1.msra.mxu0 %v3606
    %3916 = vmatprep.subr.mxu0 0.0
    %3917 = vmatpush1.msra.mxu0 %v3611
    %3918 = vmatprep.subr.mxu0 0.0
    %3919 = vmatpush1.msra.mxu0 %v3616
    %3920 = vmatprep.subr.mxu0 0.0
    %3921 = vmatpush1.msra.mxu0 %v3621
    %3922 = vmatprep.subr.mxu0 0.0
    %3923 = vmatpush1.msra.mxu0 %v3626
    %3924 = vmatprep.subr.mxu0 0.0
    %3925 = vmatpush1.msra.mxu0 %v3631
    %3926 = vmatprep.subr.mxu0 0.0
    %3927 = vmatpush1.msra.mxu0 %v3636
    %3928 = vmatprep.subr.mxu0 0.0
    %3929 = vmatpush1.msra.mxu0 0.0
    %3930 = vmatprep.subr.mxu0 0.0
    %3931 = vmatpush1.msra.mxu0 0.0
    %3932 = vmatprep.subr.mxu0 0.0
    %3933 = vmatpush1.msra.mxu0 0.0
    %3934 = vmatprep.subr.mxu0 0.0
    %3935 = vmatpush1.msra.mxu0 0.0
    %3936 = vmatprep.subr.mxu0 0.0
    %3937 = vmatpush1.msra.mxu0 0.0
    %3938 = vmatprep.subr.mxu0 0.0
    %3939 = vmatpush1.msra.mxu0 0.0
    %3940 = vmatprep.subr.mxu0 0.0
    %3941 = vmatpush1.msra.mxu0 0.0
    %3942 = vmatprep.subr.mxu0 0.0
    %3943 = vmatpush1.msra.mxu0 0.0
    %3944 = vmatprep.subr.mxu0 0.0
    %3945 = vmatpush1.msra.mxu0 0.0
    %3946 = vmatprep.subr.mxu0 0.0
    %3947 = vmatpush1.msra.mxu0 0.0
    %3948 = vmatprep.subr.mxu0 0.0
    %3949 = vmatpush1.msra.mxu0 0.0
    %3950 = vmatprep.subr.mxu0 0.0
    %3951 = vmatpush1.msra.mxu0 0.0
    %3952 = vmatprep.subr.mxu0 0.0
    %3953 = vmatpush1.msra.mxu0 0.0
    %3954 = vmatprep.subr.mxu0 0.0
    %3955 = vmatpush1.msra.mxu0 0.0
    %3956 = vmatprep.subr.mxu0 0.0
    %3957 = vmatpush1.msra.mxu0 0.0
    %3958 = vmatprep.subr.mxu0 0.0
    %3959 = vmatpush1.msra.mxu0 0.0
    %3960 = vmatprep.subr.mxu0 0.0
    %3961 = vmatpush1.msra.mxu0 0.0
    %3962 = vmatprep.subr.mxu0 0.0
    %3963 = vmatpush1.msra.mxu0 0.0
    %3964 = vmatprep.subr.mxu0 0.0
    %3965 = vmatpush1.msra.mxu0 0.0
    %3966 = vmatprep.subr.mxu0 0.0
    %3967 = vmatpush1.msra.mxu0 0.0
    %3968 = vmatprep.subr.mxu0 0.0
    %3969 = vmatpush1.msra.mxu0 0.0
    %3970 = vmatprep.subr.mxu0 0.0
    %3971 = vmatpush1.msra.mxu0 0.0
    %3972 = vmatprep.subr.mxu0 0.0
    %3973 = vmatpush1.msra.mxu0 0.0
    %3974 = vmatprep.subr.mxu0 0.0
    %3975 = vmatpush1.msra.mxu0 0.0
    %3976 = vmatprep.mubr.f32.mxu0 0.0
    %3977 = vmatmul.mubr.f32.gmra.mrb[0].mxu0 %v3889
    %v3978 = vpop.f32.mrb[0].mxu0
    %v3979 = vadd.f32 0.0, %v3978
    %v3980 = vpop.f32.mrb[0].mxu0
    %3981 = vmatprep.mubr.f32.mxu0 0.0
    %3982 = vmatmul.mubr.f32.gmra.mrb[0].mxu0 %v3892
    %v3983 = vpop.f32.mrb[0].mxu0
    %v3984 = vadd.f32 0.0, %v3983
    %v3985 = vpop.f32.mrb[0].mxu0
    %3986 = vmatprep.mubr.f32.mxu0 0.0
    %3987 = vmatmul.mubr.f32.gmra.mrb[0].mxu0 %v3895
    %v3988 = vpop.f32.mrb[0].mxu0
    %v3989 = vadd.f32 0.0, %v3988
    %v3990 = vpop.f32.mrb[0].mxu0
    %3991 = vmatprep.mubr.f32.mxu0 0.0
    %3992 = vmatmul.mubr.f32.gmra.mrb[0].mxu0 %v3898
    %v3993 = vpop.f32.mrb[0].mxu0
    %v3994 = vadd.f32 0.0, %v3993
    %v3995 = vpop.f32.mrb[0].mxu0
    %3996 = vmatprep.mubr.f32.mxu0 0.0
    %3997 = vmatmul.mubr.f32.gmra.mrb[0].mxu0 %v3901
    %v3998 = vpop.f32.mrb[0].mxu0
    %v3999 = vadd.f32 0.0, %v3998
    %v4000 = vpop.f32.mrb[0].mxu0
    %4001 = vmatprep.mubr.f32.mxu0 0.0
    %4002 = vmatmul.mubr.f32.gmra.mrb[0].mxu0 %v3904
    %v4003 = vpop.f32.mrb[0].mxu0
    %v4004 = vadd.f32 0.0, %v4003
    %v4005 = vpop.f32.mrb[0].mxu0
    %4006 = vmatprep.mubr.f32.mxu0 0.0
    %4007 = vmatmul.mubr.f32.gmra.mrb[0].mxu0 %v3907
    %v4008 = vpop.f32.mrb[0].mxu0
    %v4009 = vadd.f32 0.0, %v4008
    %v4010 = vpop.f32.mrb[0].mxu0
    %4011 = vmatprep.mubr.f32.mxu0 0.0
    %4012 = vmatmul.mubr.f32.gmra.mrb[0].mxu0 %v3910
    %v4013 = vpop.f32.mrb[0].mxu0
    %v4014 = vadd.f32 0.0, %v4013
    %v4015 = vpop.f32.mrb[0].mxu0
    %4016 = vdwg.mxu0
    %4017 = vrot.lane.b32.xlu0 %v3639, 120
    %v4018 = vpop.permute.xlu0 %4017
    %4019 = vrot.lane.b32.xlu0 %v3640, 120
    %v4020 = vpop.permute.xlu0 %4019
    %4021 = vrot.lane.b32.xlu0 %v3641, 120
    %v4022 = vpop.permute.xlu0 %4021
    %4023 = vrot.lane.b32.xlu0 %v3642, 120
    %v4024 = vpop.permute.xlu0 %4023
    %4025 = vrot.lane.b32.xlu0 %v3643, 120
    %v4026 = vpop.permute.xlu0 %4025
    %4027 = vrot.lane.b32.xlu0 %v3644, 120
    %v4028 = vpop.permute.xlu0 %4027
    %4029 = vrot.lane.b32.xlu0 %v3645, 120
    %v4030 = vpop.permute.xlu0 %4029
    %4031 = vrot.lane.b32.xlu0 %v3646, 120
    %v4032 = vpop.permute.xlu0 %4031
    %4033 = vrot.lane.b32.xlu0 %v3480, 120
    %v4034 = vpop.permute.xlu0 %4033
    %4035 = vrot.lane.b32.xlu0 %v3485, 120
    %v4036 = vpop.permute.xlu0 %4035
    %4037 = vrot.lane.b32.xlu0 %v3490, 120
    %v4038 = vpop.permute.xlu0 %4037
    %4039 = vrot.lane.b32.xlu0 %v3495, 120
    %v4040 = vpop.permute.xlu0 %4039
    %4041 = vrot.lane.b32.xlu0 %v3500, 120
    %v4042 = vpop.permute.xlu0 %4041
    %4043 = vrot.lane.b32.xlu0 %v3505, 120
    %v4044 = vpop.permute.xlu0 %4043
    %4045 = vrot.lane.b32.xlu0 %v3510, 120
    %v4046 = vpop.permute.xlu0 %4045
    %4047 = vrot.lane.b32.xlu0 %v3515, 120
    %v4048 = vpop.permute.xlu0 %4047
    %v4049 = vsel %vm519, %v4018, 0
    %v4051 = vsel %vm519, %v4020, 0
    %v4053 = vsel %vm519, %v4022, 0
    %v4055 = vsel %vm519, %v4024, 0
    %v4057 = vsel %vm519, %v4026, 0
    %v4059 = vsel %vm519, %v4028, 0
    %v4061 = vsel %vm519, %v4030, 0
    %v4063 = vsel %vm519, %v4032, 0
    %v4065 = vsel %vm519, %v4034, 0
    %v4067 = vsel %vm519, %v4036, 0
    %v4069 = vsel %vm519, %v4038, 0
    %v4071 = vsel %vm519, %v4040, 0
    %v4073 = vsel %vm519, %v4042, 0
    %v4075 = vsel %vm519, %v4044, 0
    %v4077 = vsel %vm519, %v4046, 0
    %v4079 = vsel %vm519, %v4048, 0
    %4081 = vmatprep.subr.mxu0 0.0
    %4082 = vmatpush1.xpose.msra.mxu0 %v4065
    %4083 = vmatprep.subr.mxu0 0.0
    %4084 = vmatpush1.xpose.msra.mxu0 %v4067
    %4085 = vmatprep.subr.mxu0 0.0
    %4086 = vmatpush1.xpose.msra.mxu0 %v4069
    %4087 = vmatprep.subr.mxu0 0.0
    %4088 = vmatpush1.xpose.msra.mxu0 %v4071
    %4089 = vmatprep.subr.mxu0 0.0
    %4090 = vmatpush1.xpose.msra.mxu0 %v4073
    %4091 = vmatprep.subr.mxu0 0.0
    %4092 = vmatpush1.xpose.msra.mxu0 %v4075
    %4093 = vmatprep.subr.mxu0 0.0
    %4094 = vmatpush1.xpose.msra.mxu0 %v4077
    %4095 = vmatprep.subr.mxu0 0.0
    %4096 = vmatpush1.xpose.msra.mxu0 %v4079
    %4097 = vmatprep.subr.mxu0 0.0
    %4098 = vmatpush1.xpose.msra.mxu0 0.0
    %4099 = vmatprep.subr.mxu0 0.0
    %4100 = vmatpush1.xpose.msra.mxu0 0.0
    %4101 = vmatprep.subr.mxu0 0.0
    %4102 = vmatpush1.xpose.msra.mxu0 0.0
    %4103 = vmatprep.subr.mxu0 0.0
    %4104 = vmatpush1.xpose.msra.mxu0 0.0
    %4105 = vmatprep.subr.mxu0 0.0
    %4106 = vmatpush1.xpose.msra.mxu0 0.0
    %4107 = vmatprep.subr.mxu0 0.0
    %4108 = vmatpush1.xpose.msra.mxu0 0.0
    %4109 = vmatprep.subr.mxu0 0.0
    %4110 = vmatpush1.xpose.msra.mxu0 0.0
    %4111 = vmatprep.subr.mxu0 0.0
    %4112 = vmatpush1.xpose.msra.mxu0 0.0
    %4113 = vmatprep.subr.mxu0 0.0
    %4114 = vmatpush1.xpose.msra.mxu0 0.0
    %4115 = vmatprep.subr.mxu0 0.0
    %4116 = vmatpush1.xpose.msra.mxu0 0.0
    %4117 = vmatprep.subr.mxu0 0.0
    %4118 = vmatpush1.xpose.msra.mxu0 0.0
    %4119 = vmatprep.subr.mxu0 0.0
    %4120 = vmatpush1.xpose.msra.mxu0 0.0
    %4121 = vmatprep.subr.mxu0 0.0
    %4122 = vmatpush1.xpose.msra.mxu0 0.0
    %4123 = vmatprep.subr.mxu0 0.0
    %4124 = vmatpush1.xpose.msra.mxu0 0.0
    %4125 = vmatprep.subr.mxu0 0.0
    %4126 = vmatpush1.xpose.msra.mxu0 0.0
    %4127 = vmatprep.subr.mxu0 0.0
    %4128 = vmatpush1.xpose.msra.mxu0 0.0
    %4129 = vmatprep.subr.mxu0 0.0
    %4130 = vmatpush1.xpose.msra.mxu0 0.0
    %4131 = vmatprep.subr.mxu0 0.0
    %4132 = vmatpush1.xpose.msra.mxu0 0.0
    %4133 = vmatprep.subr.mxu0 0.0
    %4134 = vmatpush1.xpose.msra.mxu0 0.0
    %4135 = vmatprep.subr.mxu0 0.0
    %4136 = vmatpush1.xpose.msra.mxu0 0.0
    %4137 = vmatprep.subr.mxu0 0.0
    %4138 = vmatpush1.xpose.msra.mxu0 0.0
    %4139 = vmatprep.subr.mxu0 0.0
    %4140 = vmatpush1.xpose.msra.mxu0 0.0
    %4141 = vmatprep.subr.mxu0 0.0
    %4142 = vmatpush1.xpose.msra.mxu0 0.0
    %4143 = vmatprep.subr.mxu0 0.0
    %4144 = vmatpush1.xpose.msra.mxu0 0.0
    %4145 = vmatprep.mubr.f32.mxu0 0.0
    %4146 = vmatmul.mubr.f32.gmra.mrb[0].mxu0 %v4049
    %v4147 = vpop.f32.mrb[0].mxu0
    %v4148 = vadd.f32 %v112, %v4147
    %v4149 = vpop.f32.mrb[0].mxu0
    %4150 = vmatprep.mubr.f32.mxu0 0.0
    %4151 = vmatmul.mubr.f32.gmra.mrb[0].mxu0 %v4051
    %v4152 = vpop.f32.mrb[0].mxu0
    %v4153 = vadd.f32 %v113, %v4152
    %v4154 = vpop.f32.mrb[0].mxu0
    %4155 = vmatprep.mubr.f32.mxu0 0.0
    %4156 = vmatmul.mubr.f32.gmra.mrb[0].mxu0 %v4053
    %v4157 = vpop.f32.mrb[0].mxu0
    %v4158 = vadd.f32 %v114, %v4157
    %v4159 = vpop.f32.mrb[0].mxu0
    %4160 = vmatprep.mubr.f32.mxu0 0.0
    %4161 = vmatmul.mubr.f32.gmra.mrb[0].mxu0 %v4055
    %v4162 = vpop.f32.mrb[0].mxu0
    %v4163 = vadd.f32 %v115, %v4162
    %v4164 = vpop.f32.mrb[0].mxu0
    %4165 = vmatprep.mubr.f32.mxu0 0.0
    %4166 = vmatmul.mubr.f32.gmra.mrb[0].mxu0 %v4057
    %v4167 = vpop.f32.mrb[0].mxu0
    %v4168 = vadd.f32 %v116, %v4167
    %v4169 = vpop.f32.mrb[0].mxu0
    %4170 = vmatprep.mubr.f32.mxu0 0.0
    %4171 = vmatmul.mubr.f32.gmra.mrb[0].mxu0 %v4059
    %v4172 = vpop.f32.mrb[0].mxu0
    %v4173 = vadd.f32 %v117, %v4172
    %v4174 = vpop.f32.mrb[0].mxu0
    %4175 = vmatprep.mubr.f32.mxu0 0.0
    %4176 = vmatmul.mubr.f32.gmra.mrb[0].mxu0 %v4061
    %v4177 = vpop.f32.mrb[0].mxu0
    %v4178 = vadd.f32 %v118, %v4177
    %v4179 = vpop.f32.mrb[0].mxu0
    %4180 = vmatprep.mubr.f32.mxu0 0.0
    %4181 = vmatmul.mubr.f32.gmra.mrb[0].mxu0 %v4063
    %v4182 = vpop.f32.mrb[0].mxu0
    %v4183 = vadd.f32 %v119, %v4182
    %v4184 = vpop.f32.mrb[0].mxu0
    %4185 = vdwg.mxu0
    %v4186 = vsel %vm673, %v4148, -inf
    %4187 = vmax.xlane.f32.xlu0 %v4186
    %v4188 = vpop.xlane.xlu0 %4187
    %v4189 = vsel %vm673, %v4153, -inf
    %4190 = vmax.xlane.f32.xlu0 %v4189
    %v4191 = vpop.xlane.xlu0 %4190
    %v4192 = vsel %vm673, %v4158, -inf
    %4193 = vmax.xlane.f32.xlu0 %v4192
    %v4194 = vpop.xlane.xlu0 %4193
    %v4195 = vsel %vm673, %v4163, -inf
    %4196 = vmax.xlane.f32.xlu0 %v4195
    %v4197 = vpop.xlane.xlu0 %4196
    %v4198 = vsel %vm673, %v4168, -inf
    %4199 = vmax.xlane.f32.xlu0 %v4198
    %v4200 = vpop.xlane.xlu0 %4199
    %v4201 = vsel %vm673, %v4173, -inf
    %4202 = vmax.xlane.f32.xlu0 %v4201
    %v4203 = vpop.xlane.xlu0 %4202
    %v4204 = vsel %vm673, %v4178, -inf
    %4205 = vmax.xlane.f32.xlu0 %v4204
    %v4206 = vpop.xlane.xlu0 %4205
    %v4207 = vsel %vm673, %v4183, -inf
    %4208 = vmax.xlane.f32.xlu0 %v4207
    %v4209 = vpop.xlane.xlu0 %4208
    %v4210 = vsub.f32 %v4148, %v4188
    %v4211 = vsub.f32 %v4153, %v4191
    %v4212 = vsub.f32 %v4158, %v4194
    %v4213 = vsub.f32 %v4163, %v4197
    %v4214 = vsub.f32 %v4168, %v4200
    %v4215 = vsub.f32 %v4173, %v4203
    %v4216 = vsub.f32 %v4178, %v4206
    %v4217 = vsub.f32 %v4183, %v4209
    %v4218 = vmul.f32 %v4210, 1.442695
    %v4219 = vpow.pop %v4218
    %v4220 = vmul.f32 %v4211, 1.442695
    %v4221 = vpow.pop %v4220
    %v4222 = vmul.f32 %v4212, 1.442695
    %v4223 = vpow.pop %v4222
    %v4224 = vmul.f32 %v4213, 1.442695
    %v4225 = vpow.pop %v4224
    %v4226 = vmul.f32 %v4214, 1.442695
    %v4227 = vpow.pop %v4226
    %v4228 = vmul.f32 %v4215, 1.442695
    %v4229 = vpow.pop %v4228
    %v4230 = vmul.f32 %v4216, 1.442695
    %v4231 = vpow.pop %v4230
    %v4232 = vmul.f32 %v4217, 1.442695
    %v4233 = vpow.pop %v4232
    %v4234 = vsel %vm673, %v4219, 0.0
    %4235 = vadd.xlane.f32.xlu0 %v4234
    %v4236 = vpop.xlane.xlu0 %4235
    %v4237 = vsel %vm673, %v4221, 0.0
    %4238 = vadd.xlane.f32.xlu0 %v4237
    %v4239 = vpop.xlane.xlu0 %4238
    %v4240 = vsel %vm673, %v4223, 0.0
    %4241 = vadd.xlane.f32.xlu0 %v4240
    %v4242 = vpop.xlane.xlu0 %4241
    %v4243 = vsel %vm673, %v4225, 0.0
    %4244 = vadd.xlane.f32.xlu0 %v4243
    %v4245 = vpop.xlane.xlu0 %4244
    %v4246 = vsel %vm673, %v4227, 0.0
    %4247 = vadd.xlane.f32.xlu0 %v4246
    %v4248 = vpop.xlane.xlu0 %4247
    %v4249 = vsel %vm673, %v4229, 0.0
    %4250 = vadd.xlane.f32.xlu0 %v4249
    %v4251 = vpop.xlane.xlu0 %4250
    %v4252 = vsel %vm673, %v4231, 0.0
    %4253 = vadd.xlane.f32.xlu0 %v4252
    %v4254 = vpop.xlane.xlu0 %4253
    %v4255 = vsel %vm673, %v4233, 0.0
    %4256 = vadd.xlane.f32.xlu0 %v4255
    %v4257 = vpop.xlane.xlu0 %4256
    %v4258 = vrcp.pop %v4236
    %v4259 = vrcp.pop %v4239
    %v4260 = vrcp.pop %v4242
    %v4261 = vrcp.pop %v4245
    %v4262 = vrcp.pop %v4248
    %v4263 = vrcp.pop %v4251
    %v4264 = vrcp.pop %v4254
    %v4265 = vrcp.pop %v4257
    %v4266 = vmul.f32 %v4219, %v4258
    %v4267 = vmul.f32 %v4221, %v4259
    %v4268 = vmul.f32 %v4223, %v4260
    %v4269 = vmul.f32 %v4225, %v4261
    %v4270 = vmul.f32 %v4227, %v4262
    %v4271 = vmul.f32 %v4229, %v4263
    %v4272 = vmul.f32 %v4231, %v4264
    %v4273 = vmul.f32 %v4233, %v4265
    %4282 = vrot.lane.b32.xlu0 %v3601, 120
    %v4283 = vpop.permute.xlu0 %4282
    %4284 = vrot.lane.b32.xlu0 %v3606, 120
    %v4285 = vpop.permute.xlu0 %4284
    %4286 = vrot.lane.b32.xlu0 %v3611, 120
    %v4287 = vpop.permute.xlu0 %4286
    %4288 = vrot.lane.b32.xlu0 %v3616, 120
    %v4289 = vpop.permute.xlu0 %4288
    %4290 = vrot.lane.b32.xlu0 %v3621, 120
    %v4291 = vpop.permute.xlu0 %4290
    %4292 = vrot.lane.b32.xlu0 %v3626, 120
    %v4293 = vpop.permute.xlu0 %4292
    %4294 = vrot.lane.b32.xlu0 %v3631, 120
    %v4295 = vpop.permute.xlu0 %4294
    %4296 = vrot.lane.b32.xlu0 %v3636, 120
    %v4297 = vpop.permute.xlu0 %4296
    %v4307 = vsel %vm673, %v4266, 0
    %v4310 = vsel %vm673, %v4267, 0
    %v4313 = vsel %vm673, %v4268, 0
    %v4316 = vsel %vm673, %v4269, 0
    %v4319 = vsel %vm673, %v4270, 0
    %v4322 = vsel %vm673, %v4271, 0
    %v4325 = vsel %vm673, %v4272, 0
    %v4328 = vsel %vm673, %v4273, 0
    %4330 = vmatprep.subr.mxu0 0.0
    %4331 = vmatpush1.msra.mxu0 %v4283
    %4332 = vmatprep.subr.mxu0 0.0
    %4333 = vmatpush1.msra.mxu0 %v4285
    %4334 = vmatprep.subr.mxu0 0.0
    %4335 = vmatpush1.msra.mxu0 %v4287
    %4336 = vmatprep.subr.mxu0 0.0
    %4337 = vmatpush1.msra.mxu0 %v4289
    %4338 = vmatprep.subr.mxu0 0.0
    %4339 = vmatpush1.msra.mxu0 %v4291
    %4340 = vmatprep.subr.mxu0 0.0
    %4341 = vmatpush1.msra.mxu0 %v4293
    %4342 = vmatprep.subr.mxu0 0.0
    %4343 = vmatpush1.msra.mxu0 %v4295
    %4344 = vmatprep.subr.mxu0 0.0
    %4345 = vmatpush1.msra.mxu0 %v4297
    %4346 = vmatprep.subr.mxu0 0.0
    %4347 = vmatpush1.msra.mxu0 0.0
    %4348 = vmatprep.subr.mxu0 0.0
    %4349 = vmatpush1.msra.mxu0 0.0
    %4350 = vmatprep.subr.mxu0 0.0
    %4351 = vmatpush1.msra.mxu0 0.0
    %4352 = vmatprep.subr.mxu0 0.0
    %4353 = vmatpush1.msra.mxu0 0.0
    %4354 = vmatprep.subr.mxu0 0.0
    %4355 = vmatpush1.msra.mxu0 0.0
    %4356 = vmatprep.subr.mxu0 0.0
    %4357 = vmatpush1.msra.mxu0 0.0
    %4358 = vmatprep.subr.mxu0 0.0
    %4359 = vmatpush1.msra.mxu0 0.0
    %4360 = vmatprep.subr.mxu0 0.0
    %4361 = vmatpush1.msra.mxu0 0.0
    %4362 = vmatprep.subr.mxu0 0.0
    %4363 = vmatpush1.msra.mxu0 0.0
    %4364 = vmatprep.subr.mxu0 0.0
    %4365 = vmatpush1.msra.mxu0 0.0
    %4366 = vmatprep.subr.mxu0 0.0
    %4367 = vmatpush1.msra.mxu0 0.0
    %4368 = vmatprep.subr.mxu0 0.0
    %4369 = vmatpush1.msra.mxu0 0.0
    %4370 = vmatprep.subr.mxu0 0.0
    %4371 = vmatpush1.msra.mxu0 0.0
    %4372 = vmatprep.subr.mxu0 0.0
    %4373 = vmatpush1.msra.mxu0 0.0
    %4374 = vmatprep.subr.mxu0 0.0
    %4375 = vmatpush1.msra.mxu0 0.0
    %4376 = vmatprep.subr.mxu0 0.0
    %4377 = vmatpush1.msra.mxu0 0.0
    %4378 = vmatprep.subr.mxu0 0.0
    %4379 = vmatpush1.msra.mxu0 0.0
    %4380 = vmatprep.subr.mxu0 0.0
    %4381 = vmatpush1.msra.mxu0 0.0
    %4382 = vmatprep.subr.mxu0 0.0
    %4383 = vmatpush1.msra.mxu0 0.0
    %4384 = vmatprep.subr.mxu0 0.0
    %4385 = vmatpush1.msra.mxu0 0.0
    %4386 = vmatprep.subr.mxu0 0.0
    %4387 = vmatpush1.msra.mxu0 0.0
    %4388 = vmatprep.subr.mxu0 0.0
    %4389 = vmatpush1.msra.mxu0 0.0
    %4390 = vmatprep.subr.mxu0 0.0
    %4391 = vmatpush1.msra.mxu0 0.0
    %4392 = vmatprep.subr.mxu0 0.0
    %4393 = vmatpush1.msra.mxu0 0.0
    %4394 = vmatprep.mubr.f32.mxu0 0.0
    %4395 = vmatmul.mubr.f32.gmra.mrb[0].mxu0 %v4307
    %v4396 = vpop.f32.mrb[0].mxu0
    %v4397 = vadd.f32 0.0, %v4396
    %v4398 = vpop.f32.mrb[0].mxu0
    %4399 = vmatprep.mubr.f32.mxu0 0.0
    %4400 = vmatmul.mubr.f32.gmra.mrb[0].mxu0 %v4310
    %v4401 = vpop.f32.mrb[0].mxu0
    %v4402 = vadd.f32 0.0, %v4401
    %v4403 = vpop.f32.mrb[0].mxu0
    %4404 = vmatprep.mubr.f32.mxu0 0.0
    %4405 = vmatmul.mubr.f32.gmra.mrb[0].mxu0 %v4313
    %v4406 = vpop.f32.mrb[0].mxu0
    %v4407 = vadd.f32 0.0, %v4406
    %v4408 = vpop.f32.mrb[0].mxu0
    %4409 = vmatprep.mubr.f32.mxu0 0.0
    %4410 = vmatmul.mubr.f32.gmra.mrb[0].mxu0 %v4316
    %v4411 = vpop.f32.mrb[0].mxu0
    %v4412 = vadd.f32 0.0, %v4411
    %v4413 = vpop.f32.mrb[0].mxu0
    %4414 = vmatprep.mubr.f32.mxu0 0.0
    %4415 = vmatmul.mubr.f32.gmra.mrb[0].mxu0 %v4319
    %v4416 = vpop.f32.mrb[0].mxu0
    %v4417 = vadd.f32 0.0, %v4416
    %v4418 = vpop.f32.mrb[0].mxu0
    %4419 = vmatprep.mubr.f32.mxu0 0.0
    %4420 = vmatmul.mubr.f32.gmra.mrb[0].mxu0 %v4322
    %v4421 = vpop.f32.mrb[0].mxu0
    %v4422 = vadd.f32 0.0, %v4421
    %v4423 = vpop.f32.mrb[0].mxu0
    %4424 = vmatprep.mubr.f32.mxu0 0.0
    %4425 = vmatmul.mubr.f32.gmra.mrb[0].mxu0 %v4325
    %v4426 = vpop.f32.mrb[0].mxu0
    %v4427 = vadd.f32 0.0, %v4426
    %v4428 = vpop.f32.mrb[0].mxu0
    %4429 = vmatprep.mubr.f32.mxu0 0.0
    %4430 = vmatmul.mubr.f32.gmra.mrb[0].mxu0 %v4328
    %v4431 = vpop.f32.mrb[0].mxu0
    %v4432 = vadd.f32 0.0, %v4431
    %v4433 = vpop.f32.mrb[0].mxu0
    %4434 = vdwg.mxu0
    %4435 = vrot.lane.b32.xlu0 %v3251, 32
    %v4436 = vpop.permute.xlu0 %4435
    %v4439 = vsel %vm519, %v4397, 0
    %v4442 = vsel %vm519, %v4402, 0
    %v4445 = vsel %vm519, %v4407, 0
    %v4448 = vsel %vm519, %v4412, 0
    %v4451 = vsel %vm519, %v4417, 0
    %v4454 = vsel %vm519, %v4422, 0
    %v4457 = vsel %vm519, %v4427, 0
    %v4460 = vsel %vm519, %v4432, 0
    %4462 = vmatprep.subr.mxu0 0.0
    %4463 = vmatpush1.msra.mxu0 %v4436
    %4464 = vmatprep.subr.mxu0 0.0
    %4465 = vmatpush1.msra.mxu0 0.0
    %4466 = vmatprep.subr.mxu0 0.0
    %4467 = vmatpush1.msra.mxu0 0.0
    %4468 = vmatprep.subr.mxu0 0.0
    %4469 = vmatpush1.msra.mxu0 0.0
    %4470 = vmatprep.subr.mxu0 0.0
    %4471 = vmatpush1.msra.mxu0 0.0
    %4472 = vmatprep.subr.mxu0 0.0
    %4473 = vmatpush1.msra.mxu0 0.0
    %4474 = vmatprep.subr.mxu0 0.0
    %4475 = vmatpush1.msra.mxu0 0.0
    %4476 = vmatprep.subr.mxu0 0.0
    %4477 = vmatpush1.msra.mxu0 0.0
    %4478 = vmatprep.subr.mxu0 0.0
    %4479 = vmatpush1.msra.mxu0 0.0
    %4480 = vmatprep.subr.mxu0 0.0
    %4481 = vmatpush1.msra.mxu0 0.0
    %4482 = vmatprep.subr.mxu0 0.0
    %4483 = vmatpush1.msra.mxu0 0.0
    %4484 = vmatprep.subr.mxu0 0.0
    %4485 = vmatpush1.msra.mxu0 0.0
    %4486 = vmatprep.subr.mxu0 0.0
    %4487 = vmatpush1.msra.mxu0 0.0
    %4488 = vmatprep.subr.mxu0 0.0
    %4489 = vmatpush1.msra.mxu0 0.0
    %4490 = vmatprep.subr.mxu0 0.0
    %4491 = vmatpush1.msra.mxu0 0.0
    %4492 = vmatprep.subr.mxu0 0.0
    %4493 = vmatpush1.msra.mxu0 0.0
    %4494 = vmatprep.subr.mxu0 0.0
    %4495 = vmatpush1.msra.mxu0 0.0
    %4496 = vmatprep.subr.mxu0 0.0
    %4497 = vmatpush1.msra.mxu0 0.0
    %4498 = vmatprep.subr.mxu0 0.0
    %4499 = vmatpush1.msra.mxu0 0.0
    %4500 = vmatprep.subr.mxu0 0.0
    %4501 = vmatpush1.msra.mxu0 0.0
    %4502 = vmatprep.subr.mxu0 0.0
    %4503 = vmatpush1.msra.mxu0 0.0
    %4504 = vmatprep.subr.mxu0 0.0
    %4505 = vmatpush1.msra.mxu0 0.0
    %4506 = vmatprep.subr.mxu0 0.0
    %4507 = vmatpush1.msra.mxu0 0.0
    %4508 = vmatprep.subr.mxu0 0.0
    %4509 = vmatpush1.msra.mxu0 0.0
    %4510 = vmatprep.subr.mxu0 0.0
    %4511 = vmatpush1.msra.mxu0 0.0
    %4512 = vmatprep.subr.mxu0 0.0
    %4513 = vmatpush1.msra.mxu0 0.0
    %4514 = vmatprep.subr.mxu0 0.0
    %4515 = vmatpush1.msra.mxu0 0.0
    %4516 = vmatprep.subr.mxu0 0.0
    %4517 = vmatpush1.msra.mxu0 0.0
    %4518 = vmatprep.subr.mxu0 0.0
    %4519 = vmatpush1.msra.mxu0 0.0
    %4520 = vmatprep.subr.mxu0 0.0
    %4521 = vmatpush1.msra.mxu0 0.0
    %4522 = vmatprep.subr.mxu0 0.0
    %4523 = vmatpush1.msra.mxu0 0.0
    %4524 = vmatprep.subr.mxu0 0.0
    %4525 = vmatpush1.msra.mxu0 0.0
    %4526 = vmatprep.mubr.f32.mxu0 0.0
    %4527 = vmatmul.mubr.f32.gmra.mrb[0].mxu0 %v4439
    %v4528 = vpop.f32.mrb[0].mxu0
    %v4529 = vadd.f32 0.0, %v4528
    %v4530 = vpop.f32.mrb[0].mxu0
    %4531 = vmatprep.mubr.f32.mxu0 0.0
    %4532 = vmatmul.mubr.f32.gmra.mrb[0].mxu0 %v4442
    %v4533 = vpop.f32.mrb[0].mxu0
    %v4534 = vadd.f32 0.0, %v4533
    %v4535 = vpop.f32.mrb[0].mxu0
    %4536 = vmatprep.mubr.f32.mxu0 0.0
    %4537 = vmatmul.mubr.f32.gmra.mrb[0].mxu0 %v4445
    %v4538 = vpop.f32.mrb[0].mxu0
    %v4539 = vadd.f32 0.0, %v4538
    %v4540 = vpop.f32.mrb[0].mxu0
    %4541 = vmatprep.mubr.f32.mxu0 0.0
    %4542 = vmatmul.mubr.f32.gmra.mrb[0].mxu0 %v4448
    %v4543 = vpop.f32.mrb[0].mxu0
    %v4544 = vadd.f32 0.0, %v4543
    %v4545 = vpop.f32.mrb[0].mxu0
    %4546 = vmatprep.mubr.f32.mxu0 0.0
    %4547 = vmatmul.mubr.f32.gmra.mrb[0].mxu0 %v4451
    %v4548 = vpop.f32.mrb[0].mxu0
    %v4549 = vadd.f32 0.0, %v4548
    %v4550 = vpop.f32.mrb[0].mxu0
    %4551 = vmatprep.mubr.f32.mxu0 0.0
    %4552 = vmatmul.mubr.f32.gmra.mrb[0].mxu0 %v4454
    %v4553 = vpop.f32.mrb[0].mxu0
    %v4554 = vadd.f32 0.0, %v4553
    %v4555 = vpop.f32.mrb[0].mxu0
    %4556 = vmatprep.mubr.f32.mxu0 0.0
    %4557 = vmatmul.mubr.f32.gmra.mrb[0].mxu0 %v4457
    %v4558 = vpop.f32.mrb[0].mxu0
    %v4559 = vadd.f32 0.0, %v4558
    %v4560 = vpop.f32.mrb[0].mxu0
    %4561 = vmatprep.mubr.f32.mxu0 0.0
    %4562 = vmatmul.mubr.f32.gmra.mrb[0].mxu0 %v4460
    %v4563 = vpop.f32.mrb[0].mxu0
    %v4564 = vadd.f32 0.0, %v4563
    %v4565 = vpop.f32.mrb[0].mxu0
    %4566 = vdwg.mxu0
    %4567 = vrot.lane.b32.xlu0 %v3249, 32
    %v4568 = vpop.permute.xlu0 %4567
    %v4571 = vsel %vm519, %v3979, 0
    %v4574 = vsel %vm519, %v3984, 0
    %v4577 = vsel %vm519, %v3989, 0
    %v4580 = vsel %vm519, %v3994, 0
    %v4583 = vsel %vm519, %v3999, 0
    %v4586 = vsel %vm519, %v4004, 0
    %v4589 = vsel %vm519, %v4009, 0
    %v4592 = vsel %vm519, %v4014, 0
    %4594 = vmatprep.subr.mxu0 0.0
    %4595 = vmatpush1.msra.mxu0 %v4568
    %4596 = vmatprep.subr.mxu0 0.0
    %4597 = vmatpush1.msra.mxu0 0.0
    %4598 = vmatprep.subr.mxu0 0.0
    %4599 = vmatpush1.msra.mxu0 0.0
    %4600 = vmatprep.subr.mxu0 0.0
    %4601 = vmatpush1.msra.mxu0 0.0
    %4602 = vmatprep.subr.mxu0 0.0
    %4603 = vmatpush1.msra.mxu0 0.0
    %4604 = vmatprep.subr.mxu0 0.0
    %4605 = vmatpush1.msra.mxu0 0.0
    %4606 = vmatprep.subr.mxu0 0.0
    %4607 = vmatpush1.msra.mxu0 0.0
    %4608 = vmatprep.subr.mxu0 0.0
    %4609 = vmatpush1.msra.mxu0 0.0
    %4610 = vmatprep.subr.mxu0 0.0
    %4611 = vmatpush1.msra.mxu0 0.0
    %4612 = vmatprep.subr.mxu0 0.0
    %4613 = vmatpush1.msra.mxu0 0.0
    %4614 = vmatprep.subr.mxu0 0.0
    %4615 = vmatpush1.msra.mxu0 0.0
    %4616 = vmatprep.subr.mxu0 0.0
    %4617 = vmatpush1.msra.mxu0 0.0
    %4618 = vmatprep.subr.mxu0 0.0
    %4619 = vmatpush1.msra.mxu0 0.0
    %4620 = vmatprep.subr.mxu0 0.0
    %4621 = vmatpush1.msra.mxu0 0.0
    %4622 = vmatprep.subr.mxu0 0.0
    %4623 = vmatpush1.msra.mxu0 0.0
    %4624 = vmatprep.subr.mxu0 0.0
    %4625 = vmatpush1.msra.mxu0 0.0
    %4626 = vmatprep.subr.mxu0 0.0
    %4627 = vmatpush1.msra.mxu0 0.0
    %4628 = vmatprep.subr.mxu0 0.0
    %4629 = vmatpush1.msra.mxu0 0.0
    %4630 = vmatprep.subr.mxu0 0.0
    %4631 = vmatpush1.msra.mxu0 0.0
    %4632 = vmatprep.subr.mxu0 0.0
    %4633 = vmatpush1.msra.mxu0 0.0
    %4634 = vmatprep.subr.mxu0 0.0
    %4635 = vmatpush1.msra.mxu0 0.0
    %4636 = vmatprep.subr.mxu0 0.0
    %4637 = vmatpush1.msra.mxu0 0.0
    %4638 = vmatprep.subr.mxu0 0.0
    %4639 = vmatpush1.msra.mxu0 0.0
    %4640 = vmatprep.subr.mxu0 0.0
    %4641 = vmatpush1.msra.mxu0 0.0
    %4642 = vmatprep.subr.mxu0 0.0
    %4643 = vmatpush1.msra.mxu0 0.0
    %4644 = vmatprep.subr.mxu0 0.0
    %4645 = vmatpush1.msra.mxu0 0.0
    %4646 = vmatprep.subr.mxu0 0.0
    %4647 = vmatpush1.msra.mxu0 0.0
    %4648 = vmatprep.subr.mxu0 0.0
    %4649 = vmatpush1.msra.mxu0 0.0
    %4650 = vmatprep.subr.mxu0 0.0
    %4651 = vmatpush1.msra.mxu0 0.0
    %4652 = vmatprep.subr.mxu0 0.0
    %4653 = vmatpush1.msra.mxu0 0.0
    %4654 = vmatprep.subr.mxu0 0.0
    %4655 = vmatpush1.msra.mxu0 0.0
    %4656 = vmatprep.subr.mxu0 0.0
    %4657 = vmatpush1.msra.mxu0 0.0
    %4658 = vmatprep.mubr.f32.mxu0 0.0
    %4659 = vmatmul.mubr.f32.gmra.mrb[0].mxu0 %v4571
    %v4660 = vpop.f32.mrb[0].mxu0
    %v4661 = vadd.f32 %v4529, %v4660
    %v4662 = vpop.f32.mrb[0].mxu0
    %4663 = vmatprep.mubr.f32.mxu0 0.0
    %4664 = vmatmul.mubr.f32.gmra.mrb[0].mxu0 %v4574
    %v4665 = vpop.f32.mrb[0].mxu0
    %v4666 = vadd.f32 %v4534, %v4665
    %v4667 = vpop.f32.mrb[0].mxu0
    %4668 = vmatprep.mubr.f32.mxu0 0.0
    %4669 = vmatmul.mubr.f32.gmra.mrb[0].mxu0 %v4577
    %v4670 = vpop.f32.mrb[0].mxu0
    %v4671 = vadd.f32 %v4539, %v4670
    %v4672 = vpop.f32.mrb[0].mxu0
    %4673 = vmatprep.mubr.f32.mxu0 0.0
    %4674 = vmatmul.mubr.f32.gmra.mrb[0].mxu0 %v4580
    %v4675 = vpop.f32.mrb[0].mxu0
    %v4676 = vadd.f32 %v4544, %v4675
    %v4677 = vpop.f32.mrb[0].mxu0
    %4678 = vmatprep.mubr.f32.mxu0 0.0
    %4679 = vmatmul.mubr.f32.gmra.mrb[0].mxu0 %v4583
    %v4680 = vpop.f32.mrb[0].mxu0
    %v4681 = vadd.f32 %v4549, %v4680
    %v4682 = vpop.f32.mrb[0].mxu0
    %4683 = vmatprep.mubr.f32.mxu0 0.0
    %4684 = vmatmul.mubr.f32.gmra.mrb[0].mxu0 %v4586
    %v4685 = vpop.f32.mrb[0].mxu0
    %v4686 = vadd.f32 %v4554, %v4685
    %v4687 = vpop.f32.mrb[0].mxu0
    %4688 = vmatprep.mubr.f32.mxu0 0.0
    %4689 = vmatmul.mubr.f32.gmra.mrb[0].mxu0 %v4589
    %v4690 = vpop.f32.mrb[0].mxu0
    %v4691 = vadd.f32 %v4559, %v4690
    %v4692 = vpop.f32.mrb[0].mxu0
    %4693 = vmatprep.mubr.f32.mxu0 0.0
    %4694 = vmatmul.mubr.f32.gmra.mrb[0].mxu0 %v4592
    %v4695 = vpop.f32.mrb[0].mxu0
    %v4696 = vadd.f32 %v4564, %v4695
    %v4697 = vpop.f32.mrb[0].mxu0
    %4698 = vdwg.mxu0
    %4699 = vrot.lane.b32.xlu0 %v3639, 112
    %v4700 = vpop.permute.xlu0 %4699
    %4701 = vrot.lane.b32.xlu0 %v3640, 112
    %v4702 = vpop.permute.xlu0 %4701
    %4703 = vrot.lane.b32.xlu0 %v3641, 112
    %v4704 = vpop.permute.xlu0 %4703
    %4705 = vrot.lane.b32.xlu0 %v3642, 112
    %v4706 = vpop.permute.xlu0 %4705
    %4707 = vrot.lane.b32.xlu0 %v3643, 112
    %v4708 = vpop.permute.xlu0 %4707
    %4709 = vrot.lane.b32.xlu0 %v3644, 112
    %v4710 = vpop.permute.xlu0 %4709
    %4711 = vrot.lane.b32.xlu0 %v3645, 112
    %v4712 = vpop.permute.xlu0 %4711
    %4713 = vrot.lane.b32.xlu0 %v3646, 112
    %v4714 = vpop.permute.xlu0 %4713
    %4715 = vrot.lane.b32.xlu0 %v3480, 112
    %v4716 = vpop.permute.xlu0 %4715
    %4717 = vrot.lane.b32.xlu0 %v3485, 112
    %v4718 = vpop.permute.xlu0 %4717
    %4719 = vrot.lane.b32.xlu0 %v3490, 112
    %v4720 = vpop.permute.xlu0 %4719
    %4721 = vrot.lane.b32.xlu0 %v3495, 112
    %v4722 = vpop.permute.xlu0 %4721
    %4723 = vrot.lane.b32.xlu0 %v3500, 112
    %v4724 = vpop.permute.xlu0 %4723
    %4725 = vrot.lane.b32.xlu0 %v3505, 112
    %v4726 = vpop.permute.xlu0 %4725
    %4727 = vrot.lane.b32.xlu0 %v3510, 112
    %v4728 = vpop.permute.xlu0 %4727
    %4729 = vrot.lane.b32.xlu0 %v3515, 112
    %v4730 = vpop.permute.xlu0 %4729
    %v4731 = vsel %vm519, %v4700, 0
    %v4733 = vsel %vm519, %v4702, 0
    %v4735 = vsel %vm519, %v4704, 0
    %v4737 = vsel %vm519, %v4706, 0
    %v4739 = vsel %vm519, %v4708, 0
    %v4741 = vsel %vm519, %v4710, 0
    %v4743 = vsel %vm519, %v4712, 0
    %v4745 = vsel %vm519, %v4714, 0
    %v4747 = vsel %vm519, %v4716, 0
    %v4749 = vsel %vm519, %v4718, 0
    %v4751 = vsel %vm519, %v4720, 0
    %v4753 = vsel %vm519, %v4722, 0
    %v4755 = vsel %vm519, %v4724, 0
    %v4757 = vsel %vm519, %v4726, 0
    %v4759 = vsel %vm519, %v4728, 0
    %v4761 = vsel %vm519, %v4730, 0
    %4763 = vmatprep.subr.mxu0 0.0
    %4764 = vmatpush1.xpose.msra.mxu0 %v4747
    %4765 = vmatprep.subr.mxu0 0.0
    %4766 = vmatpush1.xpose.msra.mxu0 %v4749
    %4767 = vmatprep.subr.mxu0 0.0
    %4768 = vmatpush1.xpose.msra.mxu0 %v4751
    %4769 = vmatprep.subr.mxu0 0.0
    %4770 = vmatpush1.xpose.msra.mxu0 %v4753
    %4771 = vmatprep.subr.mxu0 0.0
    %4772 = vmatpush1.xpose.msra.mxu0 %v4755
    %4773 = vmatprep.subr.mxu0 0.0
    %4774 = vmatpush1.xpose.msra.mxu0 %v4757
    %4775 = vmatprep.subr.mxu0 0.0
    %4776 = vmatpush1.xpose.msra.mxu0 %v4759
    %4777 = vmatprep.subr.mxu0 0.0
    %4778 = vmatpush1.xpose.msra.mxu0 %v4761
    %4779 = vmatprep.subr.mxu0 0.0
    %4780 = vmatpush1.xpose.msra.mxu0 0.0
    %4781 = vmatprep.subr.mxu0 0.0
    %4782 = vmatpush1.xpose.msra.mxu0 0.0
    %4783 = vmatprep.subr.mxu0 0.0
    %4784 = vmatpush1.xpose.msra.mxu0 0.0
    %4785 = vmatprep.subr.mxu0 0.0
    %4786 = vmatpush1.xpose.msra.mxu0 0.0
    %4787 = vmatprep.subr.mxu0 0.0
    %4788 = vmatpush1.xpose.msra.mxu0 0.0
    %4789 = vmatprep.subr.mxu0 0.0
    %4790 = vmatpush1.xpose.msra.mxu0 0.0
    %4791 = vmatprep.subr.mxu0 0.0
    %4792 = vmatpush1.xpose.msra.mxu0 0.0
    %4793 = vmatprep.subr.mxu0 0.0
    %4794 = vmatpush1.xpose.msra.mxu0 0.0
    %4795 = vmatprep.subr.mxu0 0.0
    %4796 = vmatpush1.xpose.msra.mxu0 0.0
    %4797 = vmatprep.subr.mxu0 0.0
    %4798 = vmatpush1.xpose.msra.mxu0 0.0
    %4799 = vmatprep.subr.mxu0 0.0
    %4800 = vmatpush1.xpose.msra.mxu0 0.0
    %4801 = vmatprep.subr.mxu0 0.0
    %4802 = vmatpush1.xpose.msra.mxu0 0.0
    %4803 = vmatprep.subr.mxu0 0.0
    %4804 = vmatpush1.xpose.msra.mxu0 0.0
    %4805 = vmatprep.subr.mxu0 0.0
    %4806 = vmatpush1.xpose.msra.mxu0 0.0
    %4807 = vmatprep.subr.mxu0 0.0
    %4808 = vmatpush1.xpose.msra.mxu0 0.0
    %4809 = vmatprep.subr.mxu0 0.0
    %4810 = vmatpush1.xpose.msra.mxu0 0.0
    %4811 = vmatprep.subr.mxu0 0.0
    %4812 = vmatpush1.xpose.msra.mxu0 0.0
    %4813 = vmatprep.subr.mxu0 0.0
    %4814 = vmatpush1.xpose.msra.mxu0 0.0
    %4815 = vmatprep.subr.mxu0 0.0
    %4816 = vmatpush1.xpose.msra.mxu0 0.0
    %4817 = vmatprep.subr.mxu0 0.0
    %4818 = vmatpush1.xpose.msra.mxu0 0.0
    %4819 = vmatprep.subr.mxu0 0.0
    %4820 = vmatpush1.xpose.msra.mxu0 0.0
    %4821 = vmatprep.subr.mxu0 0.0
    %4822 = vmatpush1.xpose.msra.mxu0 0.0
    %4823 = vmatprep.subr.mxu0 0.0
    %4824 = vmatpush1.xpose.msra.mxu0 0.0
    %4825 = vmatprep.subr.mxu0 0.0
    %4826 = vmatpush1.xpose.msra.mxu0 0.0
    %4827 = vmatprep.mubr.f32.mxu0 0.0
    %4828 = vmatmul.mubr.f32.gmra.mrb[0].mxu0 %v4731
    %v4829 = vpop.f32.mrb[0].mxu0
    %v4830 = vadd.f32 %v112, %v4829
    %v4831 = vpop.f32.mrb[0].mxu0
    %4832 = vmatprep.mubr.f32.mxu0 0.0
    %4833 = vmatmul.mubr.f32.gmra.mrb[0].mxu0 %v4733
    %v4834 = vpop.f32.mrb[0].mxu0
    %v4835 = vadd.f32 %v113, %v4834
    %v4836 = vpop.f32.mrb[0].mxu0
    %4837 = vmatprep.mubr.f32.mxu0 0.0
    %4838 = vmatmul.mubr.f32.gmra.mrb[0].mxu0 %v4735
    %v4839 = vpop.f32.mrb[0].mxu0
    %v4840 = vadd.f32 %v114, %v4839
    %v4841 = vpop.f32.mrb[0].mxu0
    %4842 = vmatprep.mubr.f32.mxu0 0.0
    %4843 = vmatmul.mubr.f32.gmra.mrb[0].mxu0 %v4737
    %v4844 = vpop.f32.mrb[0].mxu0
    %v4845 = vadd.f32 %v115, %v4844
    %v4846 = vpop.f32.mrb[0].mxu0
    %4847 = vmatprep.mubr.f32.mxu0 0.0
    %4848 = vmatmul.mubr.f32.gmra.mrb[0].mxu0 %v4739
    %v4849 = vpop.f32.mrb[0].mxu0
    %v4850 = vadd.f32 %v116, %v4849
    %v4851 = vpop.f32.mrb[0].mxu0
    %4852 = vmatprep.mubr.f32.mxu0 0.0
    %4853 = vmatmul.mubr.f32.gmra.mrb[0].mxu0 %v4741
    %v4854 = vpop.f32.mrb[0].mxu0
    %v4855 = vadd.f32 %v117, %v4854
    %v4856 = vpop.f32.mrb[0].mxu0
    %4857 = vmatprep.mubr.f32.mxu0 0.0
    %4858 = vmatmul.mubr.f32.gmra.mrb[0].mxu0 %v4743
    %v4859 = vpop.f32.mrb[0].mxu0
    %v4860 = vadd.f32 %v118, %v4859
    %v4861 = vpop.f32.mrb[0].mxu0
    %4862 = vmatprep.mubr.f32.mxu0 0.0
    %4863 = vmatmul.mubr.f32.gmra.mrb[0].mxu0 %v4745
    %v4864 = vpop.f32.mrb[0].mxu0
    %v4865 = vadd.f32 %v119, %v4864
    %v4866 = vpop.f32.mrb[0].mxu0
    %4867 = vdwg.mxu0
    %v4868 = vsel %vm673, %v4830, -inf
    %4869 = vmax.xlane.f32.xlu0 %v4868
    %v4870 = vpop.xlane.xlu0 %4869
    %v4871 = vsel %vm673, %v4835, -inf
    %4872 = vmax.xlane.f32.xlu0 %v4871
    %v4873 = vpop.xlane.xlu0 %4872
    %v4874 = vsel %vm673, %v4840, -inf
    %4875 = vmax.xlane.f32.xlu0 %v4874
    %v4876 = vpop.xlane.xlu0 %4875
    %v4877 = vsel %vm673, %v4845, -inf
    %4878 = vmax.xlane.f32.xlu0 %v4877
    %v4879 = vpop.xlane.xlu0 %4878
    %v4880 = vsel %vm673, %v4850, -inf
    %4881 = vmax.xlane.f32.xlu0 %v4880
    %v4882 = vpop.xlane.xlu0 %4881
    %v4883 = vsel %vm673, %v4855, -inf
    %4884 = vmax.xlane.f32.xlu0 %v4883
    %v4885 = vpop.xlane.xlu0 %4884
    %v4886 = vsel %vm673, %v4860, -inf
    %4887 = vmax.xlane.f32.xlu0 %v4886
    %v4888 = vpop.xlane.xlu0 %4887
    %v4889 = vsel %vm673, %v4865, -inf
    %4890 = vmax.xlane.f32.xlu0 %v4889
    %v4891 = vpop.xlane.xlu0 %4890
    %v4892 = vsub.f32 %v4830, %v4870
    %v4893 = vsub.f32 %v4835, %v4873
    %v4894 = vsub.f32 %v4840, %v4876
    %v4895 = vsub.f32 %v4845, %v4879
    %v4896 = vsub.f32 %v4850, %v4882
    %v4897 = vsub.f32 %v4855, %v4885
    %v4898 = vsub.f32 %v4860, %v4888
    %v4899 = vsub.f32 %v4865, %v4891
    %v4900 = vmul.f32 %v4892, 1.442695
    %v4901 = vpow.pop %v4900
    %v4902 = vmul.f32 %v4893, 1.442695
    %v4903 = vpow.pop %v4902
    %v4904 = vmul.f32 %v4894, 1.442695
    %v4905 = vpow.pop %v4904
    %v4906 = vmul.f32 %v4895, 1.442695
    %v4907 = vpow.pop %v4906
    %v4908 = vmul.f32 %v4896, 1.442695
    %v4909 = vpow.pop %v4908
    %v4910 = vmul.f32 %v4897, 1.442695
    %v4911 = vpow.pop %v4910
    %v4912 = vmul.f32 %v4898, 1.442695
    %v4913 = vpow.pop %v4912
    %v4914 = vmul.f32 %v4899, 1.442695
    %v4915 = vpow.pop %v4914
    %v4916 = vsel %vm673, %v4901, 0.0
    %4917 = vadd.xlane.f32.xlu0 %v4916
    %v4918 = vpop.xlane.xlu0 %4917
    %v4919 = vsel %vm673, %v4903, 0.0
    %4920 = vadd.xlane.f32.xlu0 %v4919
    %v4921 = vpop.xlane.xlu0 %4920
    %v4922 = vsel %vm673, %v4905, 0.0
    %4923 = vadd.xlane.f32.xlu0 %v4922
    %v4924 = vpop.xlane.xlu0 %4923
    %v4925 = vsel %vm673, %v4907, 0.0
    %4926 = vadd.xlane.f32.xlu0 %v4925
    %v4927 = vpop.xlane.xlu0 %4926
    %v4928 = vsel %vm673, %v4909, 0.0
    %4929 = vadd.xlane.f32.xlu0 %v4928
    %v4930 = vpop.xlane.xlu0 %4929
    %v4931 = vsel %vm673, %v4911, 0.0
    %4932 = vadd.xlane.f32.xlu0 %v4931
    %v4933 = vpop.xlane.xlu0 %4932
    %v4934 = vsel %vm673, %v4913, 0.0
    %4935 = vadd.xlane.f32.xlu0 %v4934
    %v4936 = vpop.xlane.xlu0 %4935
    %v4937 = vsel %vm673, %v4915, 0.0
    %4938 = vadd.xlane.f32.xlu0 %v4937
    %v4939 = vpop.xlane.xlu0 %4938
    %v4940 = vrcp.pop %v4918
    %v4941 = vrcp.pop %v4921
    %v4942 = vrcp.pop %v4924
    %v4943 = vrcp.pop %v4927
    %v4944 = vrcp.pop %v4930
    %v4945 = vrcp.pop %v4933
    %v4946 = vrcp.pop %v4936
    %v4947 = vrcp.pop %v4939
    %v4948 = vmul.f32 %v4901, %v4940
    %v4949 = vmul.f32 %v4903, %v4941
    %v4950 = vmul.f32 %v4905, %v4942
    %v4951 = vmul.f32 %v4907, %v4943
    %v4952 = vmul.f32 %v4909, %v4944
    %v4953 = vmul.f32 %v4911, %v4945
    %v4954 = vmul.f32 %v4913, %v4946
    %v4955 = vmul.f32 %v4915, %v4947
    %4956 = vrot.lane.b32.xlu0 %v3601, 112
    %v4957 = vpop.permute.xlu0 %4956
    %4958 = vrot.lane.b32.xlu0 %v3606, 112
    %v4959 = vpop.permute.xlu0 %4958
    %4960 = vrot.lane.b32.xlu0 %v3611, 112
    %v4961 = vpop.permute.xlu0 %4960
    %4962 = vrot.lane.b32.xlu0 %v3616, 112
    %v4963 = vpop.permute.xlu0 %4962
    %4964 = vrot.lane.b32.xlu0 %v3621, 112
    %v4965 = vpop.permute.xlu0 %4964
    %4966 = vrot.lane.b32.xlu0 %v3626, 112
    %v4967 = vpop.permute.xlu0 %4966
    %4968 = vrot.lane.b32.xlu0 %v3631, 112
    %v4969 = vpop.permute.xlu0 %4968
    %4970 = vrot.lane.b32.xlu0 %v3636, 112
    %v4971 = vpop.permute.xlu0 %4970
    %v4981 = vsel %vm673, %v4948, 0
    %v4984 = vsel %vm673, %v4949, 0
    %v4987 = vsel %vm673, %v4950, 0
    %v4990 = vsel %vm673, %v4951, 0
    %v4993 = vsel %vm673, %v4952, 0
    %v4996 = vsel %vm673, %v4953, 0
    %v4999 = vsel %vm673, %v4954, 0
    %v5002 = vsel %vm673, %v4955, 0
    %5004 = vmatprep.subr.mxu0 0.0
    %5005 = vmatpush1.msra.mxu0 %v4957
    %5006 = vmatprep.subr.mxu0 0.0
    %5007 = vmatpush1.msra.mxu0 %v4959
    %5008 = vmatprep.subr.mxu0 0.0
    %5009 = vmatpush1.msra.mxu0 %v4961
    %5010 = vmatprep.subr.mxu0 0.0
    %5011 = vmatpush1.msra.mxu0 %v4963
    %5012 = vmatprep.subr.mxu0 0.0
    %5013 = vmatpush1.msra.mxu0 %v4965
    %5014 = vmatprep.subr.mxu0 0.0
    %5015 = vmatpush1.msra.mxu0 %v4967
    %5016 = vmatprep.subr.mxu0 0.0
    %5017 = vmatpush1.msra.mxu0 %v4969
    %5018 = vmatprep.subr.mxu0 0.0
    %5019 = vmatpush1.msra.mxu0 %v4971
    %5020 = vmatprep.subr.mxu0 0.0
    %5021 = vmatpush1.msra.mxu0 0.0
    %5022 = vmatprep.subr.mxu0 0.0
    %5023 = vmatpush1.msra.mxu0 0.0
    %5024 = vmatprep.subr.mxu0 0.0
    %5025 = vmatpush1.msra.mxu0 0.0
    %5026 = vmatprep.subr.mxu0 0.0
    %5027 = vmatpush1.msra.mxu0 0.0
    %5028 = vmatprep.subr.mxu0 0.0
    %5029 = vmatpush1.msra.mxu0 0.0
    %5030 = vmatprep.subr.mxu0 0.0
    %5031 = vmatpush1.msra.mxu0 0.0
    %5032 = vmatprep.subr.mxu0 0.0
    %5033 = vmatpush1.msra.mxu0 0.0
    %5034 = vmatprep.subr.mxu0 0.0
    %5035 = vmatpush1.msra.mxu0 0.0
    %5036 = vmatprep.subr.mxu0 0.0
    %5037 = vmatpush1.msra.mxu0 0.0
    %5038 = vmatprep.subr.mxu0 0.0
    %5039 = vmatpush1.msra.mxu0 0.0
    %5040 = vmatprep.subr.mxu0 0.0
    %5041 = vmatpush1.msra.mxu0 0.0
    %5042 = vmatprep.subr.mxu0 0.0
    %5043 = vmatpush1.msra.mxu0 0.0
    %5044 = vmatprep.subr.mxu0 0.0
    %5045 = vmatpush1.msra.mxu0 0.0
    %5046 = vmatprep.subr.mxu0 0.0
    %5047 = vmatpush1.msra.mxu0 0.0
    %5048 = vmatprep.subr.mxu0 0.0
    %5049 = vmatpush1.msra.mxu0 0.0
    %5050 = vmatprep.subr.mxu0 0.0
    %5051 = vmatpush1.msra.mxu0 0.0
    %5052 = vmatprep.subr.mxu0 0.0
    %5053 = vmatpush1.msra.mxu0 0.0
    %5054 = vmatprep.subr.mxu0 0.0
    %5055 = vmatpush1.msra.mxu0 0.0
    %5056 = vmatprep.subr.mxu0 0.0
    %5057 = vmatpush1.msra.mxu0 0.0
    %5058 = vmatprep.subr.mxu0 0.0
    %5059 = vmatpush1.msra.mxu0 0.0
    %5060 = vmatprep.subr.mxu0 0.0
    %5061 = vmatpush1.msra.mxu0 0.0
    %5062 = vmatprep.subr.mxu0 0.0
    %5063 = vmatpush1.msra.mxu0 0.0
    %5064 = vmatprep.subr.mxu0 0.0
    %5065 = vmatpush1.msra.mxu0 0.0
    %5066 = vmatprep.subr.mxu0 0.0
    %5067 = vmatpush1.msra.mxu0 0.0
    %5068 = vmatprep.mubr.f32.mxu0 0.0
    %5069 = vmatmul.mubr.f32.gmra.mrb[0].mxu0 %v4981
    %v5070 = vpop.f32.mrb[0].mxu0
    %v5071 = vadd.f32 0.0, %v5070
    %v5072 = vpop.f32.mrb[0].mxu0
    %5073 = vmatprep.mubr.f32.mxu0 0.0
    %5074 = vmatmul.mubr.f32.gmra.mrb[0].mxu0 %v4984
    %v5075 = vpop.f32.mrb[0].mxu0
    %v5076 = vadd.f32 0.0, %v5075
    %v5077 = vpop.f32.mrb[0].mxu0
    %5078 = vmatprep.mubr.f32.mxu0 0.0
    %5079 = vmatmul.mubr.f32.gmra.mrb[0].mxu0 %v4987
    %v5080 = vpop.f32.mrb[0].mxu0
    %v5081 = vadd.f32 0.0, %v5080
    %v5082 = vpop.f32.mrb[0].mxu0
    %5083 = vmatprep.mubr.f32.mxu0 0.0
    %5084 = vmatmul.mubr.f32.gmra.mrb[0].mxu0 %v4990
    %v5085 = vpop.f32.mrb[0].mxu0
    %v5086 = vadd.f32 0.0, %v5085
    %v5087 = vpop.f32.mrb[0].mxu0
    %5088 = vmatprep.mubr.f32.mxu0 0.0
    %5089 = vmatmul.mubr.f32.gmra.mrb[0].mxu0 %v4993
    %v5090 = vpop.f32.mrb[0].mxu0
    %v5091 = vadd.f32 0.0, %v5090
    %v5092 = vpop.f32.mrb[0].mxu0
    %5093 = vmatprep.mubr.f32.mxu0 0.0
    %5094 = vmatmul.mubr.f32.gmra.mrb[0].mxu0 %v4996
    %v5095 = vpop.f32.mrb[0].mxu0
    %v5096 = vadd.f32 0.0, %v5095
    %v5097 = vpop.f32.mrb[0].mxu0
    %5098 = vmatprep.mubr.f32.mxu0 0.0
    %5099 = vmatmul.mubr.f32.gmra.mrb[0].mxu0 %v4999
    %v5100 = vpop.f32.mrb[0].mxu0
    %v5101 = vadd.f32 0.0, %v5100
    %v5102 = vpop.f32.mrb[0].mxu0
    %5103 = vmatprep.mubr.f32.mxu0 0.0
    %5104 = vmatmul.mubr.f32.gmra.mrb[0].mxu0 %v5002
    %v5105 = vpop.f32.mrb[0].mxu0
    %v5106 = vadd.f32 0.0, %v5105
    %v5107 = vpop.f32.mrb[0].mxu0
    %5108 = vdwg.mxu0
    %5109 = vrot.lane.b32.xlu0 %v3253, 32
    %v5110 = vpop.permute.xlu0 %5109
    %v5113 = vsel %vm519, %v5071, 0
    %v5116 = vsel %vm519, %v5076, 0
    %v5119 = vsel %vm519, %v5081, 0
    %v5122 = vsel %vm519, %v5086, 0
    %v5125 = vsel %vm519, %v5091, 0
    %v5128 = vsel %vm519, %v5096, 0
    %v5131 = vsel %vm519, %v5101, 0
    %v5134 = vsel %vm519, %v5106, 0
    %5136 = vmatprep.subr.mxu0 0.0
    %5137 = vmatpush1.msra.mxu0 %v5110
    %5138 = vmatprep.subr.mxu0 0.0
    %5139 = vmatpush1.msra.mxu0 0.0
    %5140 = vmatprep.subr.mxu0 0.0
    %5141 = vmatpush1.msra.mxu0 0.0
    %5142 = vmatprep.subr.mxu0 0.0
    %5143 = vmatpush1.msra.mxu0 0.0
    %5144 = vmatprep.subr.mxu0 0.0
    %5145 = vmatpush1.msra.mxu0 0.0
    %5146 = vmatprep.subr.mxu0 0.0
    %5147 = vmatpush1.msra.mxu0 0.0
    %5148 = vmatprep.subr.mxu0 0.0
    %5149 = vmatpush1.msra.mxu0 0.0
    %5150 = vmatprep.subr.mxu0 0.0
    %5151 = vmatpush1.msra.mxu0 0.0
    %5152 = vmatprep.subr.mxu0 0.0
    %5153 = vmatpush1.msra.mxu0 0.0
    %5154 = vmatprep.subr.mxu0 0.0
    %5155 = vmatpush1.msra.mxu0 0.0
    %5156 = vmatprep.subr.mxu0 0.0
    %5157 = vmatpush1.msra.mxu0 0.0
    %5158 = vmatprep.subr.mxu0 0.0
    %5159 = vmatpush1.msra.mxu0 0.0
    %5160 = vmatprep.subr.mxu0 0.0
    %5161 = vmatpush1.msra.mxu0 0.0
    %5162 = vmatprep.subr.mxu0 0.0
    %5163 = vmatpush1.msra.mxu0 0.0
    %5164 = vmatprep.subr.mxu0 0.0
    %5165 = vmatpush1.msra.mxu0 0.0
    %5166 = vmatprep.subr.mxu0 0.0
    %5167 = vmatpush1.msra.mxu0 0.0
    %5168 = vmatprep.subr.mxu0 0.0
    %5169 = vmatpush1.msra.mxu0 0.0
    %5170 = vmatprep.subr.mxu0 0.0
    %5171 = vmatpush1.msra.mxu0 0.0
    %5172 = vmatprep.subr.mxu0 0.0
    %5173 = vmatpush1.msra.mxu0 0.0
    %5174 = vmatprep.subr.mxu0 0.0
    %5175 = vmatpush1.msra.mxu0 0.0
    %5176 = vmatprep.subr.mxu0 0.0
    %5177 = vmatpush1.msra.mxu0 0.0
    %5178 = vmatprep.subr.mxu0 0.0
    %5179 = vmatpush1.msra.mxu0 0.0
    %5180 = vmatprep.subr.mxu0 0.0
    %5181 = vmatpush1.msra.mxu0 0.0
    %5182 = vmatprep.subr.mxu0 0.0
    %5183 = vmatpush1.msra.mxu0 0.0
    %5184 = vmatprep.subr.mxu0 0.0
    %5185 = vmatpush1.msra.mxu0 0.0
    %5186 = vmatprep.subr.mxu0 0.0
    %5187 = vmatpush1.msra.mxu0 0.0
    %5188 = vmatprep.subr.mxu0 0.0
    %5189 = vmatpush1.msra.mxu0 0.0
    %5190 = vmatprep.subr.mxu0 0.0
    %5191 = vmatpush1.msra.mxu0 0.0
    %5192 = vmatprep.subr.mxu0 0.0
    %5193 = vmatpush1.msra.mxu0 0.0
    %5194 = vmatprep.subr.mxu0 0.0
    %5195 = vmatpush1.msra.mxu0 0.0
    %5196 = vmatprep.subr.mxu0 0.0
    %5197 = vmatpush1.msra.mxu0 0.0
    %5198 = vmatprep.subr.mxu0 0.0
    %5199 = vmatpush1.msra.mxu0 0.0
    %5200 = vmatprep.mubr.f32.mxu0 0.0
    %5201 = vmatmul.mubr.f32.gmra.mrb[0].mxu0 %v5113
    %v5202 = vpop.f32.mrb[0].mxu0
    %v5203 = vadd.f32 0.0, %v5202
    %v5204 = vpop.f32.mrb[0].mxu0
    %5205 = vmatprep.mubr.f32.mxu0 0.0
    %5206 = vmatmul.mubr.f32.gmra.mrb[0].mxu0 %v5116
    %v5207 = vpop.f32.mrb[0].mxu0
    %v5208 = vadd.f32 0.0, %v5207
    %v5209 = vpop.f32.mrb[0].mxu0
    %5210 = vmatprep.mubr.f32.mxu0 0.0
    %5211 = vmatmul.mubr.f32.gmra.mrb[0].mxu0 %v5119
    %v5212 = vpop.f32.mrb[0].mxu0
    %v5213 = vadd.f32 0.0, %v5212
    %v5214 = vpop.f32.mrb[0].mxu0
    %5215 = vmatprep.mubr.f32.mxu0 0.0
    %5216 = vmatmul.mubr.f32.gmra.mrb[0].mxu0 %v5122
    %v5217 = vpop.f32.mrb[0].mxu0
    %v5218 = vadd.f32 0.0, %v5217
    %v5219 = vpop.f32.mrb[0].mxu0
    %5220 = vmatprep.mubr.f32.mxu0 0.0
    %5221 = vmatmul.mubr.f32.gmra.mrb[0].mxu0 %v5125
    %v5222 = vpop.f32.mrb[0].mxu0
    %v5223 = vadd.f32 0.0, %v5222
    %v5224 = vpop.f32.mrb[0].mxu0
    %5225 = vmatprep.mubr.f32.mxu0 0.0
    %5226 = vmatmul.mubr.f32.gmra.mrb[0].mxu0 %v5128
    %v5227 = vpop.f32.mrb[0].mxu0
    %v5228 = vadd.f32 0.0, %v5227
    %v5229 = vpop.f32.mrb[0].mxu0
    %5230 = vmatprep.mubr.f32.mxu0 0.0
    %5231 = vmatmul.mubr.f32.gmra.mrb[0].mxu0 %v5131
    %v5232 = vpop.f32.mrb[0].mxu0
    %v5233 = vadd.f32 0.0, %v5232
    %v5234 = vpop.f32.mrb[0].mxu0
    %5235 = vmatprep.mubr.f32.mxu0 0.0
    %5236 = vmatmul.mubr.f32.gmra.mrb[0].mxu0 %v5134
    %v5237 = vpop.f32.mrb[0].mxu0
    %v5238 = vadd.f32 0.0, %v5237
    %v5239 = vpop.f32.mrb[0].mxu0
    %5240 = vdwg.mxu0
    %v5241 = vadd.f32 %v4661, %v5203
    %v5242 = vadd.f32 %v4666, %v5208
    %v5243 = vadd.f32 %v4671, %v5213
    %v5244 = vadd.f32 %v4676, %v5218
    %v5245 = vadd.f32 %v4681, %v5223
    %v5246 = vadd.f32 %v4686, %v5228
    %v5247 = vadd.f32 %v4691, %v5233
    %v5248 = vadd.f32 %v4696, %v5238
    %5249 = vrot.lane.b32.xlu0 %v3639, 104
    %v5250 = vpop.permute.xlu0 %5249
    %5251 = vrot.lane.b32.xlu0 %v3640, 104
    %v5252 = vpop.permute.xlu0 %5251
    %5253 = vrot.lane.b32.xlu0 %v3641, 104
    %v5254 = vpop.permute.xlu0 %5253
    %5255 = vrot.lane.b32.xlu0 %v3642, 104
    %v5256 = vpop.permute.xlu0 %5255
    %5257 = vrot.lane.b32.xlu0 %v3643, 104
    %v5258 = vpop.permute.xlu0 %5257
    %5259 = vrot.lane.b32.xlu0 %v3644, 104
    %v5260 = vpop.permute.xlu0 %5259
    %5261 = vrot.lane.b32.xlu0 %v3645, 104
    %v5262 = vpop.permute.xlu0 %5261
    %5263 = vrot.lane.b32.xlu0 %v3646, 104
    %v5264 = vpop.permute.xlu0 %5263
    %5265 = vrot.lane.b32.xlu0 %v3480, 104
    %v5266 = vpop.permute.xlu0 %5265
    %5267 = vrot.lane.b32.xlu0 %v3485, 104
    %v5268 = vpop.permute.xlu0 %5267
    %5269 = vrot.lane.b32.xlu0 %v3490, 104
    %v5270 = vpop.permute.xlu0 %5269
    %5271 = vrot.lane.b32.xlu0 %v3495, 104
    %v5272 = vpop.permute.xlu0 %5271
    %5273 = vrot.lane.b32.xlu0 %v3500, 104
    %v5274 = vpop.permute.xlu0 %5273
    %5275 = vrot.lane.b32.xlu0 %v3505, 104
    %v5276 = vpop.permute.xlu0 %5275
    %5277 = vrot.lane.b32.xlu0 %v3510, 104
    %v5278 = vpop.permute.xlu0 %5277
    %5279 = vrot.lane.b32.xlu0 %v3515, 104
    %v5280 = vpop.permute.xlu0 %5279
    %v5281 = vsel %vm519, %v5250, 0
    %v5283 = vsel %vm519, %v5252, 0
    %v5285 = vsel %vm519, %v5254, 0
    %v5287 = vsel %vm519, %v5256, 0
    %v5289 = vsel %vm519, %v5258, 0
    %v5291 = vsel %vm519, %v5260, 0
    %v5293 = vsel %vm519, %v5262, 0
    %v5295 = vsel %vm519, %v5264, 0
    %v5297 = vsel %vm519, %v5266, 0
    %v5299 = vsel %vm519, %v5268, 0
    %v5301 = vsel %vm519, %v5270, 0
    %v5303 = vsel %vm519, %v5272, 0
    %v5305 = vsel %vm519, %v5274, 0
    %v5307 = vsel %vm519, %v5276, 0
    %v5309 = vsel %vm519, %v5278, 0
    %v5311 = vsel %vm519, %v5280, 0
    %5313 = vmatprep.subr.mxu0 0.0
    %5314 = vmatpush1.xpose.msra.mxu0 %v5297
    %5315 = vmatprep.subr.mxu0 0.0
    %5316 = vmatpush1.xpose.msra.mxu0 %v5299
    %5317 = vmatprep.subr.mxu0 0.0
    %5318 = vmatpush1.xpose.msra.mxu0 %v5301
    %5319 = vmatprep.subr.mxu0 0.0
    %5320 = vmatpush1.xpose.msra.mxu0 %v5303
    %5321 = vmatprep.subr.mxu0 0.0
    %5322 = vmatpush1.xpose.msra.mxu0 %v5305
    %5323 = vmatprep.subr.mxu0 0.0
    %5324 = vmatpush1.xpose.msra.mxu0 %v5307
    %5325 = vmatprep.subr.mxu0 0.0
    %5326 = vmatpush1.xpose.msra.mxu0 %v5309
    %5327 = vmatprep.subr.mxu0 0.0
    %5328 = vmatpush1.xpose.msra.mxu0 %v5311
    %5329 = vmatprep.subr.mxu0 0.0
    %5330 = vmatpush1.xpose.msra.mxu0 0.0
    %5331 = vmatprep.subr.mxu0 0.0
    %5332 = vmatpush1.xpose.msra.mxu0 0.0
    %5333 = vmatprep.subr.mxu0 0.0
    %5334 = vmatpush1.xpose.msra.mxu0 0.0
    %5335 = vmatprep.subr.mxu0 0.0
    %5336 = vmatpush1.xpose.msra.mxu0 0.0
    %5337 = vmatprep.subr.mxu0 0.0
    %5338 = vmatpush1.xpose.msra.mxu0 0.0
    %5339 = vmatprep.subr.mxu0 0.0
    %5340 = vmatpush1.xpose.msra.mxu0 0.0
    %5341 = vmatprep.subr.mxu0 0.0
    %5342 = vmatpush1.xpose.msra.mxu0 0.0
    %5343 = vmatprep.subr.mxu0 0.0
    %5344 = vmatpush1.xpose.msra.mxu0 0.0
    %5345 = vmatprep.subr.mxu0 0.0
    %5346 = vmatpush1.xpose.msra.mxu0 0.0
    %5347 = vmatprep.subr.mxu0 0.0
    %5348 = vmatpush1.xpose.msra.mxu0 0.0
    %5349 = vmatprep.subr.mxu0 0.0
    %5350 = vmatpush1.xpose.msra.mxu0 0.0
    %5351 = vmatprep.subr.mxu0 0.0
    %5352 = vmatpush1.xpose.msra.mxu0 0.0
    %5353 = vmatprep.subr.mxu0 0.0
    %5354 = vmatpush1.xpose.msra.mxu0 0.0
    %5355 = vmatprep.subr.mxu0 0.0
    %5356 = vmatpush1.xpose.msra.mxu0 0.0
    %5357 = vmatprep.subr.mxu0 0.0
    %5358 = vmatpush1.xpose.msra.mxu0 0.0
    %5359 = vmatprep.subr.mxu0 0.0
    %5360 = vmatpush1.xpose.msra.mxu0 0.0
    %5361 = vmatprep.subr.mxu0 0.0
    %5362 = vmatpush1.xpose.msra.mxu0 0.0
    %5363 = vmatprep.subr.mxu0 0.0
    %5364 = vmatpush1.xpose.msra.mxu0 0.0
    %5365 = vmatprep.subr.mxu0 0.0
    %5366 = vmatpush1.xpose.msra.mxu0 0.0
    %5367 = vmatprep.subr.mxu0 0.0
    %5368 = vmatpush1.xpose.msra.mxu0 0.0
    %5369 = vmatprep.subr.mxu0 0.0
    %5370 = vmatpush1.xpose.msra.mxu0 0.0
    %5371 = vmatprep.subr.mxu0 0.0
    %5372 = vmatpush1.xpose.msra.mxu0 0.0
    %5373 = vmatprep.subr.mxu0 0.0
    %5374 = vmatpush1.xpose.msra.mxu0 0.0
    %5375 = vmatprep.subr.mxu0 0.0
    %5376 = vmatpush1.xpose.msra.mxu0 0.0
    %5377 = vmatprep.mubr.f32.mxu0 0.0
    %5378 = vmatmul.mubr.f32.gmra.mrb[0].mxu0 %v5281
    %v5379 = vpop.f32.mrb[0].mxu0
    %v5380 = vadd.f32 %v112, %v5379
    %v5381 = vpop.f32.mrb[0].mxu0
    %5382 = vmatprep.mubr.f32.mxu0 0.0
    %5383 = vmatmul.mubr.f32.gmra.mrb[0].mxu0 %v5283
    %v5384 = vpop.f32.mrb[0].mxu0
    %v5385 = vadd.f32 %v113, %v5384
    %v5386 = vpop.f32.mrb[0].mxu0
    %5387 = vmatprep.mubr.f32.mxu0 0.0
    %5388 = vmatmul.mubr.f32.gmra.mrb[0].mxu0 %v5285
    %v5389 = vpop.f32.mrb[0].mxu0
    %v5390 = vadd.f32 %v114, %v5389
    %v5391 = vpop.f32.mrb[0].mxu0
    %5392 = vmatprep.mubr.f32.mxu0 0.0
    %5393 = vmatmul.mubr.f32.gmra.mrb[0].mxu0 %v5287
    %v5394 = vpop.f32.mrb[0].mxu0
    %v5395 = vadd.f32 %v115, %v5394
    %v5396 = vpop.f32.mrb[0].mxu0
    %5397 = vmatprep.mubr.f32.mxu0 0.0
    %5398 = vmatmul.mubr.f32.gmra.mrb[0].mxu0 %v5289
    %v5399 = vpop.f32.mrb[0].mxu0
    %v5400 = vadd.f32 %v116, %v5399
    %v5401 = vpop.f32.mrb[0].mxu0
    %5402 = vmatprep.mubr.f32.mxu0 0.0
    %5403 = vmatmul.mubr.f32.gmra.mrb[0].mxu0 %v5291
    %v5404 = vpop.f32.mrb[0].mxu0
    %v5405 = vadd.f32 %v117, %v5404
    %v5406 = vpop.f32.mrb[0].mxu0
    %5407 = vmatprep.mubr.f32.mxu0 0.0
    %5408 = vmatmul.mubr.f32.gmra.mrb[0].mxu0 %v5293
    %v5409 = vpop.f32.mrb[0].mxu0
    %v5410 = vadd.f32 %v118, %v5409
    %v5411 = vpop.f32.mrb[0].mxu0
    %5412 = vmatprep.mubr.f32.mxu0 0.0
    %5413 = vmatmul.mubr.f32.gmra.mrb[0].mxu0 %v5295
    %v5414 = vpop.f32.mrb[0].mxu0
    %v5415 = vadd.f32 %v119, %v5414
    %v5416 = vpop.f32.mrb[0].mxu0
    %5417 = vdwg.mxu0
    %v5418 = vsel %vm673, %v5380, -inf
    %5419 = vmax.xlane.f32.xlu0 %v5418
    %v5420 = vpop.xlane.xlu0 %5419
    %v5421 = vsel %vm673, %v5385, -inf
    %5422 = vmax.xlane.f32.xlu0 %v5421
    %v5423 = vpop.xlane.xlu0 %5422
    %v5424 = vsel %vm673, %v5390, -inf
    %5425 = vmax.xlane.f32.xlu0 %v5424
    %v5426 = vpop.xlane.xlu0 %5425
    %v5427 = vsel %vm673, %v5395, -inf
    %5428 = vmax.xlane.f32.xlu0 %v5427
    %v5429 = vpop.xlane.xlu0 %5428
    %v5430 = vsel %vm673, %v5400, -inf
    %5431 = vmax.xlane.f32.xlu0 %v5430
    %v5432 = vpop.xlane.xlu0 %5431
    %v5433 = vsel %vm673, %v5405, -inf
    %5434 = vmax.xlane.f32.xlu0 %v5433
    %v5435 = vpop.xlane.xlu0 %5434
    %v5436 = vsel %vm673, %v5410, -inf
    %5437 = vmax.xlane.f32.xlu0 %v5436
    %v5438 = vpop.xlane.xlu0 %5437
    %v5439 = vsel %vm673, %v5415, -inf
    %5440 = vmax.xlane.f32.xlu0 %v5439
    %v5441 = vpop.xlane.xlu0 %5440
    %v5442 = vsub.f32 %v5380, %v5420
    %v5443 = vsub.f32 %v5385, %v5423
    %v5444 = vsub.f32 %v5390, %v5426
    %v5445 = vsub.f32 %v5395, %v5429
    %v5446 = vsub.f32 %v5400, %v5432
    %v5447 = vsub.f32 %v5405, %v5435
    %v5448 = vsub.f32 %v5410, %v5438
    %v5449 = vsub.f32 %v5415, %v5441
    %v5450 = vmul.f32 %v5442, 1.442695
    %v5451 = vpow.pop %v5450
    %v5452 = vmul.f32 %v5443, 1.442695
    %v5453 = vpow.pop %v5452
    %v5454 = vmul.f32 %v5444, 1.442695
    %v5455 = vpow.pop %v5454
    %v5456 = vmul.f32 %v5445, 1.442695
    %v5457 = vpow.pop %v5456
    %v5458 = vmul.f32 %v5446, 1.442695
    %v5459 = vpow.pop %v5458
    %v5460 = vmul.f32 %v5447, 1.442695
    %v5461 = vpow.pop %v5460
    %v5462 = vmul.f32 %v5448, 1.442695
    %v5463 = vpow.pop %v5462
    %v5464 = vmul.f32 %v5449, 1.442695
    %v5465 = vpow.pop %v5464
    %v5466 = vsel %vm673, %v5451, 0.0
    %5467 = vadd.xlane.f32.xlu0 %v5466
    %v5468 = vpop.xlane.xlu0 %5467
    %v5469 = vsel %vm673, %v5453, 0.0
    %5470 = vadd.xlane.f32.xlu0 %v5469
    %v5471 = vpop.xlane.xlu0 %5470
    %v5472 = vsel %vm673, %v5455, 0.0
    %5473 = vadd.xlane.f32.xlu0 %v5472
    %v5474 = vpop.xlane.xlu0 %5473
    %v5475 = vsel %vm673, %v5457, 0.0
    %5476 = vadd.xlane.f32.xlu0 %v5475
    %v5477 = vpop.xlane.xlu0 %5476
    %v5478 = vsel %vm673, %v5459, 0.0
    %5479 = vadd.xlane.f32.xlu0 %v5478
    %v5480 = vpop.xlane.xlu0 %5479
    %v5481 = vsel %vm673, %v5461, 0.0
    %5482 = vadd.xlane.f32.xlu0 %v5481
    %v5483 = vpop.xlane.xlu0 %5482
    %v5484 = vsel %vm673, %v5463, 0.0
    %5485 = vadd.xlane.f32.xlu0 %v5484
    %v5486 = vpop.xlane.xlu0 %5485
    %v5487 = vsel %vm673, %v5465, 0.0
    %5488 = vadd.xlane.f32.xlu0 %v5487
    %v5489 = vpop.xlane.xlu0 %5488
    %v5490 = vrcp.pop %v5468
    %v5491 = vrcp.pop %v5471
    %v5492 = vrcp.pop %v5474
    %v5493 = vrcp.pop %v5477
    %v5494 = vrcp.pop %v5480
    %v5495 = vrcp.pop %v5483
    %v5496 = vrcp.pop %v5486
    %v5497 = vrcp.pop %v5489
    %v5498 = vmul.f32 %v5451, %v5490
    %v5499 = vmul.f32 %v5453, %v5491
    %v5500 = vmul.f32 %v5455, %v5492
    %v5501 = vmul.f32 %v5457, %v5493
    %v5502 = vmul.f32 %v5459, %v5494
    %v5503 = vmul.f32 %v5461, %v5495
    %v5504 = vmul.f32 %v5463, %v5496
    %v5505 = vmul.f32 %v5465, %v5497
    %5506 = vrot.lane.b32.xlu0 %v3601, 104
    %v5507 = vpop.permute.xlu0 %5506
    %5508 = vrot.lane.b32.xlu0 %v3606, 104
    %v5509 = vpop.permute.xlu0 %5508
    %5510 = vrot.lane.b32.xlu0 %v3611, 104
    %v5511 = vpop.permute.xlu0 %5510
    %5512 = vrot.lane.b32.xlu0 %v3616, 104
    %v5513 = vpop.permute.xlu0 %5512
    %5514 = vrot.lane.b32.xlu0 %v3621, 104
    %v5515 = vpop.permute.xlu0 %5514
    %5516 = vrot.lane.b32.xlu0 %v3626, 104
    %v5517 = vpop.permute.xlu0 %5516
    %5518 = vrot.lane.b32.xlu0 %v3631, 104
    %v5519 = vpop.permute.xlu0 %5518
    %5520 = vrot.lane.b32.xlu0 %v3636, 104
    %v5521 = vpop.permute.xlu0 %5520
    %v5531 = vsel %vm673, %v5498, 0
    %v5534 = vsel %vm673, %v5499, 0
    %v5537 = vsel %vm673, %v5500, 0
    %v5540 = vsel %vm673, %v5501, 0
    %v5543 = vsel %vm673, %v5502, 0
    %v5546 = vsel %vm673, %v5503, 0
    %v5549 = vsel %vm673, %v5504, 0
    %v5552 = vsel %vm673, %v5505, 0
    %5554 = vmatprep.subr.mxu0 0.0
    %5555 = vmatpush1.msra.mxu0 %v5507
    %5556 = vmatprep.subr.mxu0 0.0
    %5557 = vmatpush1.msra.mxu0 %v5509
    %5558 = vmatprep.subr.mxu0 0.0
    %5559 = vmatpush1.msra.mxu0 %v5511
    %5560 = vmatprep.subr.mxu0 0.0
    %5561 = vmatpush1.msra.mxu0 %v5513
    %5562 = vmatprep.subr.mxu0 0.0
    %5563 = vmatpush1.msra.mxu0 %v5515
    %5564 = vmatprep.subr.mxu0 0.0
    %5565 = vmatpush1.msra.mxu0 %v5517
    %5566 = vmatprep.subr.mxu0 0.0
    %5567 = vmatpush1.msra.mxu0 %v5519
    %5568 = vmatprep.subr.mxu0 0.0
    %5569 = vmatpush1.msra.mxu0 %v5521
    %5570 = vmatprep.subr.mxu0 0.0
    %5571 = vmatpush1.msra.mxu0 0.0
    %5572 = vmatprep.subr.mxu0 0.0
    %5573 = vmatpush1.msra.mxu0 0.0
    %5574 = vmatprep.subr.mxu0 0.0
    %5575 = vmatpush1.msra.mxu0 0.0
    %5576 = vmatprep.subr.mxu0 0.0
    %5577 = vmatpush1.msra.mxu0 0.0
    %5578 = vmatprep.subr.mxu0 0.0
    %5579 = vmatpush1.msra.mxu0 0.0
    %5580 = vmatprep.subr.mxu0 0.0
    %5581 = vmatpush1.msra.mxu0 0.0
    %5582 = vmatprep.subr.mxu0 0.0
    %5583 = vmatpush1.msra.mxu0 0.0
    %5584 = vmatprep.subr.mxu0 0.0
    %5585 = vmatpush1.msra.mxu0 0.0
    %5586 = vmatprep.subr.mxu0 0.0
    %5587 = vmatpush1.msra.mxu0 0.0
    %5588 = vmatprep.subr.mxu0 0.0
    %5589 = vmatpush1.msra.mxu0 0.0
    %5590 = vmatprep.subr.mxu0 0.0
    %5591 = vmatpush1.msra.mxu0 0.0
    %5592 = vmatprep.subr.mxu0 0.0
    %5593 = vmatpush1.msra.mxu0 0.0
    %5594 = vmatprep.subr.mxu0 0.0
    %5595 = vmatpush1.msra.mxu0 0.0
    %5596 = vmatprep.subr.mxu0 0.0
    %5597 = vmatpush1.msra.mxu0 0.0
    %5598 = vmatprep.subr.mxu0 0.0
    %5599 = vmatpush1.msra.mxu0 0.0
    %5600 = vmatprep.subr.mxu0 0.0
    %5601 = vmatpush1.msra.mxu0 0.0
    %5602 = vmatprep.subr.mxu0 0.0
    %5603 = vmatpush1.msra.mxu0 0.0
    %5604 = vmatprep.subr.mxu0 0.0
    %5605 = vmatpush1.msra.mxu0 0.0
    %5606 = vmatprep.subr.mxu0 0.0
    %5607 = vmatpush1.msra.mxu0 0.0
    %5608 = vmatprep.subr.mxu0 0.0
    %5609 = vmatpush1.msra.mxu0 0.0
    %5610 = vmatprep.subr.mxu0 0.0
    %5611 = vmatpush1.msra.mxu0 0.0
    %5612 = vmatprep.subr.mxu0 0.0
    %5613 = vmatpush1.msra.mxu0 0.0
    %5614 = vmatprep.subr.mxu0 0.0
    %5615 = vmatpush1.msra.mxu0 0.0
    %5616 = vmatprep.subr.mxu0 0.0
    %5617 = vmatpush1.msra.mxu0 0.0
    %5618 = vmatprep.mubr.f32.mxu0 0.0
    %5619 = vmatmul.mubr.f32.gmra.mrb[0].mxu0 %v5531
    %v5620 = vpop.f32.mrb[0].mxu0
    %v5621 = vadd.f32 0.0, %v5620
    %v5622 = vpop.f32.mrb[0].mxu0
    %5623 = vmatprep.mubr.f32.mxu0 0.0
    %5624 = vmatmul.mubr.f32.gmra.mrb[0].mxu0 %v5534
    %v5625 = vpop.f32.mrb[0].mxu0
    %v5626 = vadd.f32 0.0, %v5625
    %v5627 = vpop.f32.mrb[0].mxu0
    %5628 = vmatprep.mubr.f32.mxu0 0.0
    %5629 = vmatmul.mubr.f32.gmra.mrb[0].mxu0 %v5537
    %v5630 = vpop.f32.mrb[0].mxu0
    %v5631 = vadd.f32 0.0, %v5630
    %v5632 = vpop.f32.mrb[0].mxu0
    %5633 = vmatprep.mubr.f32.mxu0 0.0
    %5634 = vmatmul.mubr.f32.gmra.mrb[0].mxu0 %v5540
    %v5635 = vpop.f32.mrb[0].mxu0
    %v5636 = vadd.f32 0.0, %v5635
    %v5637 = vpop.f32.mrb[0].mxu0
    %5638 = vmatprep.mubr.f32.mxu0 0.0
    %5639 = vmatmul.mubr.f32.gmra.mrb[0].mxu0 %v5543
    %v5640 = vpop.f32.mrb[0].mxu0
    %v5641 = vadd.f32 0.0, %v5640
    %v5642 = vpop.f32.mrb[0].mxu0
    %5643 = vmatprep.mubr.f32.mxu0 0.0
    %5644 = vmatmul.mubr.f32.gmra.mrb[0].mxu0 %v5546
    %v5645 = vpop.f32.mrb[0].mxu0
    %v5646 = vadd.f32 0.0, %v5645
    %v5647 = vpop.f32.mrb[0].mxu0
    %5648 = vmatprep.mubr.f32.mxu0 0.0
    %5649 = vmatmul.mubr.f32.gmra.mrb[0].mxu0 %v5549
    %v5650 = vpop.f32.mrb[0].mxu0
    %v5651 = vadd.f32 0.0, %v5650
    %v5652 = vpop.f32.mrb[0].mxu0
    %5653 = vmatprep.mubr.f32.mxu0 0.0
    %5654 = vmatmul.mubr.f32.gmra.mrb[0].mxu0 %v5552
    %v5655 = vpop.f32.mrb[0].mxu0
    %v5656 = vadd.f32 0.0, %v5655
    %v5657 = vpop.f32.mrb[0].mxu0
    %5658 = vdwg.mxu0
    %5659 = vrot.lane.b32.xlu0 %v3255, 32
    %v5660 = vpop.permute.xlu0 %5659
    %v5663 = vsel %vm519, %v5621, 0
    %v5666 = vsel %vm519, %v5626, 0
    %v5669 = vsel %vm519, %v5631, 0
    %v5672 = vsel %vm519, %v5636, 0
    %v5675 = vsel %vm519, %v5641, 0
    %v5678 = vsel %vm519, %v5646, 0
    %v5681 = vsel %vm519, %v5651, 0
    %v5684 = vsel %vm519, %v5656, 0
    %5686 = vmatprep.subr.mxu0 0.0
    %5687 = vmatpush1.msra.mxu0 %v5660
    %5688 = vmatprep.subr.mxu0 0.0
    %5689 = vmatpush1.msra.mxu0 0.0
    %5690 = vmatprep.subr.mxu0 0.0
    %5691 = vmatpush1.msra.mxu0 0.0
    %5692 = vmatprep.subr.mxu0 0.0
    %5693 = vmatpush1.msra.mxu0 0.0
    %5694 = vmatprep.subr.mxu0 0.0
    %5695 = vmatpush1.msra.mxu0 0.0
    %5696 = vmatprep.subr.mxu0 0.0
    %5697 = vmatpush1.msra.mxu0 0.0
    %5698 = vmatprep.subr.mxu0 0.0
    %5699 = vmatpush1.msra.mxu0 0.0
    %5700 = vmatprep.subr.mxu0 0.0
    %5701 = vmatpush1.msra.mxu0 0.0
    %5702 = vmatprep.subr.mxu0 0.0
    %5703 = vmatpush1.msra.mxu0 0.0
    %5704 = vmatprep.subr.mxu0 0.0
    %5705 = vmatpush1.msra.mxu0 0.0
    %5706 = vmatprep.subr.mxu0 0.0
    %5707 = vmatpush1.msra.mxu0 0.0
    %5708 = vmatprep.subr.mxu0 0.0
    %5709 = vmatpush1.msra.mxu0 0.0
    %5710 = vmatprep.subr.mxu0 0.0
    %5711 = vmatpush1.msra.mxu0 0.0
    %5712 = vmatprep.subr.mxu0 0.0
    %5713 = vmatpush1.msra.mxu0 0.0
    %5714 = vmatprep.subr.mxu0 0.0
    %5715 = vmatpush1.msra.mxu0 0.0
    %5716 = vmatprep.subr.mxu0 0.0
    %5717 = vmatpush1.msra.mxu0 0.0
    %5718 = vmatprep.subr.mxu0 0.0
    %5719 = vmatpush1.msra.mxu0 0.0
    %5720 = vmatprep.subr.mxu0 0.0
    %5721 = vmatpush1.msra.mxu0 0.0
    %5722 = vmatprep.subr.mxu0 0.0
    %5723 = vmatpush1.msra.mxu0 0.0
    %5724 = vmatprep.subr.mxu0 0.0
    %5725 = vmatpush1.msra.mxu0 0.0
    %5726 = vmatprep.subr.mxu0 0.0
    %5727 = vmatpush1.msra.mxu0 0.0
    %5728 = vmatprep.subr.mxu0 0.0
    %5729 = vmatpush1.msra.mxu0 0.0
    %5730 = vmatprep.subr.mxu0 0.0
    %5731 = vmatpush1.msra.mxu0 0.0
    %5732 = vmatprep.subr.mxu0 0.0
    %5733 = vmatpush1.msra.mxu0 0.0
    %5734 = vmatprep.subr.mxu0 0.0
    %5735 = vmatpush1.msra.mxu0 0.0
    %5736 = vmatprep.subr.mxu0 0.0
    %5737 = vmatpush1.msra.mxu0 0.0
    %5738 = vmatprep.subr.mxu0 0.0
    %5739 = vmatpush1.msra.mxu0 0.0
    %5740 = vmatprep.subr.mxu0 0.0
    %5741 = vmatpush1.msra.mxu0 0.0
    %5742 = vmatprep.subr.mxu0 0.0
    %5743 = vmatpush1.msra.mxu0 0.0
    %5744 = vmatprep.subr.mxu0 0.0
    %5745 = vmatpush1.msra.mxu0 0.0
    %5746 = vmatprep.subr.mxu0 0.0
    %5747 = vmatpush1.msra.mxu0 0.0
    %5748 = vmatprep.subr.mxu0 0.0
    %5749 = vmatpush1.msra.mxu0 0.0
    %5750 = vmatprep.mubr.f32.mxu0 0.0
    %5751 = vmatmul.mubr.f32.gmra.mrb[0].mxu0 %v5663
    %v5752 = vpop.f32.mrb[0].mxu0
    %v5753 = vadd.f32 0.0, %v5752
    %v5754 = vpop.f32.mrb[0].mxu0
    %5755 = vmatprep.mubr.f32.mxu0 0.0
    %5756 = vmatmul.mubr.f32.gmra.mrb[0].mxu0 %v5666
    %v5757 = vpop.f32.mrb[0].mxu0
    %v5758 = vadd.f32 0.0, %v5757
    %v5759 = vpop.f32.mrb[0].mxu0
    %5760 = vmatprep.mubr.f32.mxu0 0.0
    %5761 = vmatmul.mubr.f32.gmra.mrb[0].mxu0 %v5669
    %v5762 = vpop.f32.mrb[0].mxu0
    %v5763 = vadd.f32 0.0, %v5762
    %v5764 = vpop.f32.mrb[0].mxu0
    %5765 = vmatprep.mubr.f32.mxu0 0.0
    %5766 = vmatmul.mubr.f32.gmra.mrb[0].mxu0 %v5672
    %v5767 = vpop.f32.mrb[0].mxu0
    %v5768 = vadd.f32 0.0, %v5767
    %v5769 = vpop.f32.mrb[0].mxu0
    %5770 = vmatprep.mubr.f32.mxu0 0.0
    %5771 = vmatmul.mubr.f32.gmra.mrb[0].mxu0 %v5675
    %v5772 = vpop.f32.mrb[0].mxu0
    %v5773 = vadd.f32 0.0, %v5772
    %v5774 = vpop.f32.mrb[0].mxu0
    %5775 = vmatprep.mubr.f32.mxu0 0.0
    %5776 = vmatmul.mubr.f32.gmra.mrb[0].mxu0 %v5678
    %v5777 = vpop.f32.mrb[0].mxu0
    %v5778 = vadd.f32 0.0, %v5777
    %v5779 = vpop.f32.mrb[0].mxu0
    %5780 = vmatprep.mubr.f32.mxu0 0.0
    %5781 = vmatmul.mubr.f32.gmra.mrb[0].mxu0 %v5681
    %v5782 = vpop.f32.mrb[0].mxu0
    %v5783 = vadd.f32 0.0, %v5782
    %v5784 = vpop.f32.mrb[0].mxu0
    %5785 = vmatprep.mubr.f32.mxu0 0.0
    %5786 = vmatmul.mubr.f32.gmra.mrb[0].mxu0 %v5684
    %v5787 = vpop.f32.mrb[0].mxu0
    %v5788 = vadd.f32 0.0, %v5787
    %v5789 = vpop.f32.mrb[0].mxu0
    %5790 = vdwg.mxu0
    %v5791 = vadd.f32 %v5241, %v5753
    %v5792 = vadd.f32 %v5242, %v5758
    %v5793 = vadd.f32 %v5243, %v5763
    %v5794 = vadd.f32 %v5244, %v5768
    %v5795 = vadd.f32 %v5245, %v5773
    %v5796 = vadd.f32 %v5246, %v5778
    %v5797 = vadd.f32 %v5247, %v5783
    %v5798 = vadd.f32 %v5248, %v5788
    %v5799 = vlaneseq
    %v5800 = vshrl.u32 %v5799, 7
    %v5801 = vsub.s32 3, %v5800
    %v5802 = vrot.slane %v3258, %v5801
    %v5803 = vadd.f32 %v5791, %v5802
    %v5804 = vadd.f32 %v5792, %v5802
    %v5805 = vadd.f32 %v5793, %v5802
    %v5806 = vadd.f32 %v5794, %v5802
    %v5807 = vadd.f32 %v5795, %v5802
    %v5808 = vadd.f32 %v5796, %v5802
    %v5809 = vadd.f32 %v5797, %v5802
    %v5810 = vadd.f32 %v5798, %v5802
    %v5811 = vadd.f32 %v3240, %v5803
    %v5812 = vadd.f32 %v3241, %v5804
    %v5813 = vadd.f32 %v3242, %v5805
    %v5814 = vadd.f32 %v3243, %v5806
    %v5815 = vadd.f32 %v3244, %v5807
    %v5816 = vadd.f32 %v3245, %v5808
    %v5817 = vadd.f32 %v3246, %v5809
    %v5818 = vadd.f32 %v3247, %v5810
    %v5819 = vsel %vm135, %v5811, 0.0
    %5820 = vadd.xlane.f32.xlu0 %v5819
    %v5821 = vpop.xlane.xlu0 %5820
    %v5822 = vsel %vm135, %v5812, 0.0
    %5823 = vadd.xlane.f32.xlu0 %v5822
    %v5824 = vpop.xlane.xlu0 %5823
    %v5825 = vsel %vm135, %v5813, 0.0
    %5826 = vadd.xlane.f32.xlu0 %v5825
    %v5827 = vpop.xlane.xlu0 %5826
    %v5828 = vsel %vm135, %v5814, 0.0
    %5829 = vadd.xlane.f32.xlu0 %v5828
    %v5830 = vpop.xlane.xlu0 %5829
    %v5831 = vsel %vm135, %v5815, 0.0
    %5832 = vadd.xlane.f32.xlu0 %v5831
    %v5833 = vpop.xlane.xlu0 %5832
    %v5834 = vsel %vm135, %v5816, 0.0
    %5835 = vadd.xlane.f32.xlu0 %v5834
    %v5836 = vpop.xlane.xlu0 %5835
    %v5837 = vsel %vm135, %v5817, 0.0
    %5838 = vadd.xlane.f32.xlu0 %v5837
    %v5839 = vpop.xlane.xlu0 %5838
    %v5840 = vsel %vm135, %v5818, 0.0
    %5841 = vadd.xlane.f32.xlu0 %v5840
    %v5842 = vpop.xlane.xlu0 %5841
    %v5843 = vmul.f32 %v5821, %v2717
    %v5844 = vmul.f32 %v5824, %v2717
    %v5845 = vmul.f32 %v5827, %v2717
    %v5846 = vmul.f32 %v5830, %v2717
    %v5847 = vmul.f32 %v5833, %v2717
    %v5848 = vmul.f32 %v5836, %v2717
    %v5849 = vmul.f32 %v5839, %v2717
    %v5850 = vmul.f32 %v5842, %v2717
    %v5851 = vsub.f32 %v5811, %v5843
    %v5852 = vsub.f32 %v5812, %v5844
    %v5853 = vsub.f32 %v5813, %v5845
    %v5854 = vsub.f32 %v5814, %v5846
    %v5855 = vsub.f32 %v5815, %v5847
    %v5856 = vsub.f32 %v5816, %v5848
    %v5857 = vsub.f32 %v5817, %v5849
    %v5858 = vsub.f32 %v5818, %v5850
    %v5859 = vmul.f32 %v5851, %v5851
    %v5860 = vmul.f32 %v5852, %v5852
    %v5861 = vmul.f32 %v5853, %v5853
    %v5862 = vmul.f32 %v5854, %v5854
    %v5863 = vmul.f32 %v5855, %v5855
    %v5864 = vmul.f32 %v5856, %v5856
    %v5865 = vmul.f32 %v5857, %v5857
    %v5866 = vmul.f32 %v5858, %v5858
    %v5867 = vsel %vm135, %v5859, 0.0
    %5868 = vadd.xlane.f32.xlu0 %v5867
    %v5869 = vpop.xlane.xlu0 %5868
    %v5870 = vsel %vm135, %v5860, 0.0
    %5871 = vadd.xlane.f32.xlu0 %v5870
    %v5872 = vpop.xlane.xlu0 %5871
    %v5873 = vsel %vm135, %v5861, 0.0
    %5874 = vadd.xlane.f32.xlu0 %v5873
    %v5875 = vpop.xlane.xlu0 %5874
    %v5876 = vsel %vm135, %v5862, 0.0
    %5877 = vadd.xlane.f32.xlu0 %v5876
    %v5878 = vpop.xlane.xlu0 %5877
    %v5879 = vsel %vm135, %v5863, 0.0
    %5880 = vadd.xlane.f32.xlu0 %v5879
    %v5881 = vpop.xlane.xlu0 %5880
    %v5882 = vsel %vm135, %v5864, 0.0
    %5883 = vadd.xlane.f32.xlu0 %v5882
    %v5884 = vpop.xlane.xlu0 %5883
    %v5885 = vsel %vm135, %v5865, 0.0
    %5886 = vadd.xlane.f32.xlu0 %v5885
    %v5887 = vpop.xlane.xlu0 %5886
    %v5888 = vsel %vm135, %v5866, 0.0
    %5889 = vadd.xlane.f32.xlu0 %v5888
    %v5890 = vpop.xlane.xlu0 %5889
    %v5891 = vmul.f32 %v5869, %v2717
    %v5892 = vmul.f32 %v5872, %v2717
    %v5893 = vmul.f32 %v5875, %v2717
    %v5894 = vmul.f32 %v5878, %v2717
    %v5895 = vmul.f32 %v5881, %v2717
    %v5896 = vmul.f32 %v5884, %v2717
    %v5897 = vmul.f32 %v5887, %v2717
    %v5898 = vmul.f32 %v5890, %v2717
    %v5899 = vadd.f32 %v5891, 1e-05
    %v5900 = vadd.f32 %v5892, 1e-05
    %v5901 = vadd.f32 %v5893, 1e-05
    %v5902 = vadd.f32 %v5894, 1e-05
    %v5903 = vadd.f32 %v5895, 1e-05
    %v5904 = vadd.f32 %v5896, 1e-05
    %v5905 = vadd.f32 %v5897, 1e-05
    %v5906 = vadd.f32 %v5898, 1e-05
    %v5907 = vrsqrt.pop %v5899
    %v5908 = vrsqrt.pop %v5900
    %v5909 = vrsqrt.pop %v5901
    %v5910 = vrsqrt.pop %v5902
    %v5911 = vrsqrt.pop %v5903
    %v5912 = vrsqrt.pop %v5904
    %v5913 = vrsqrt.pop %v5905
    %v5914 = vrsqrt.pop %v5906
    %v5915 = vmul.f32 %v5851, %v5907
    %v5916 = vmul.f32 %v5852, %v5908
    %v5917 = vmul.f32 %v5853, %v5909
    %v5918 = vmul.f32 %v5854, %v5910
    %v5919 = vmul.f32 %v5855, %v5911
    %v5920 = vmul.f32 %v5856, %v5912
    %v5921 = vmul.f32 %v5857, %v5913
    %v5922 = vmul.f32 %v5858, %v5914
    %v5923 = vlaneseq
    %v5924 = vshrl.u32 %v5923, 7
    %v5925 = vsub.s32 6, %v5924
    %v5926 = vrot.slane %v3258, %v5925
    %v5927 = vmul.f32 %v5915, %v5926
    %v5928 = vmul.f32 %v5916, %v5926
    %v5929 = vmul.f32 %v5917, %v5926
    %v5930 = vmul.f32 %v5918, %v5926
    %v5931 = vmul.f32 %v5919, %v5926
    %v5932 = vmul.f32 %v5920, %v5926
    %v5933 = vmul.f32 %v5921, %v5926
    %v5934 = vmul.f32 %v5922, %v5926
    %v5935 = vlaneseq
    %v5936 = vshrl.u32 %v5935, 7
    %v5937 = vsub.s32 7, %v5936
    %v5938 = vrot.slane %v3258, %v5937
    %v5939 = vadd.f32 %v5927, %v5938
    %v5940 = vadd.f32 %v5928, %v5938
    %v5941 = vadd.f32 %v5929, %v5938
    %v5942 = vadd.f32 %v5930, %v5938
    %v5943 = vadd.f32 %v5931, %v5938
    %v5944 = vadd.f32 %v5932, %v5938
    %v5945 = vadd.f32 %v5933, %v5938
    %v5946 = vadd.f32 %v5934, %v5938
    %v5947 = vlaneseq
    %v5948 = vshrl.u32 %v5947, 7
    %v5949 = vsub.s32 4, %v5948
    %v5950 = vrot.slane %v3258, %v5949
    %v5952 = vsel %vm135, %v5939, 0
    %v5955 = vsel %vm135, %v5940, 0
    %v5958 = vsel %vm135, %v5941, 0
    %v5961 = vsel %vm135, %v5942, 0
    %v5964 = vsel %vm135, %v5943, 0
    %v5967 = vsel %vm135, %v5944, 0
    %v5970 = vsel %vm135, %v5945, 0
    %v5973 = vsel %vm135, %v5946, 0
    %5975 = vmatprep.subr.mxu0 0.0
    %5976 = vmatpush1.msra.mxu0 %v3250
    %5977 = vmatprep.subr.mxu0 0.0
    %5978 = vmatpush1.msra.mxu0 %v3252
    %5979 = vmatprep.subr.mxu0 0.0
    %5980 = vmatpush1.msra.mxu0 %v3254
    %5981 = vmatprep.subr.mxu0 0.0
    %5982 = vmatpush1.msra.mxu0 %v3256
    %5983 = vmatprep.subr.mxu0 0.0
    %5984 = vmatpush1.msra.mxu0 0.0
    %5985 = vmatprep.subr.mxu0 0.0
    %5986 = vmatpush1.msra.mxu0 0.0
    %5987 = vmatprep.subr.mxu0 0.0
    %5988 = vmatpush1.msra.mxu0 0.0
    %5989 = vmatprep.subr.mxu0 0.0
    %5990 = vmatpush1.msra.mxu0 0.0
    %5991 = vmatprep.subr.mxu0 0.0
    %5992 = vmatpush1.msra.mxu0 0.0
    %5993 = vmatprep.subr.mxu0 0.0
    %5994 = vmatpush1.msra.mxu0 0.0
    %5995 = vmatprep.subr.mxu0 0.0
    %5996 = vmatpush1.msra.mxu0 0.0
    %5997 = vmatprep.subr.mxu0 0.0
    %5998 = vmatpush1.msra.mxu0 0.0
    %5999 = vmatprep.subr.mxu0 0.0
    %6000 = vmatpush1.msra.mxu0 0.0
    %6001 = vmatprep.subr.mxu0 0.0
    %6002 = vmatpush1.msra.mxu0 0.0
    %6003 = vmatprep.subr.mxu0 0.0
    %6004 = vmatpush1.msra.mxu0 0.0
    %6005 = vmatprep.subr.mxu0 0.0
    %6006 = vmatpush1.msra.mxu0 0.0
    %6007 = vmatprep.subr.mxu0 0.0
    %6008 = vmatpush1.msra.mxu0 0.0
    %6009 = vmatprep.subr.mxu0 0.0
    %6010 = vmatpush1.msra.mxu0 0.0
    %6011 = vmatprep.subr.mxu0 0.0
    %6012 = vmatpush1.msra.mxu0 0.0
    %6013 = vmatprep.subr.mxu0 0.0
    %6014 = vmatpush1.msra.mxu0 0.0
    %6015 = vmatprep.subr.mxu0 0.0
    %6016 = vmatpush1.msra.mxu0 0.0
    %6017 = vmatprep.subr.mxu0 0.0
    %6018 = vmatpush1.msra.mxu0 0.0
    %6019 = vmatprep.subr.mxu0 0.0
    %6020 = vmatpush1.msra.mxu0 0.0
    %6021 = vmatprep.subr.mxu0 0.0
    %6022 = vmatpush1.msra.mxu0 0.0
    %6023 = vmatprep.subr.mxu0 0.0
    %6024 = vmatpush1.msra.mxu0 0.0
    %6025 = vmatprep.subr.mxu0 0.0
    %6026 = vmatpush1.msra.mxu0 0.0
    %6027 = vmatprep.subr.mxu0 0.0
    %6028 = vmatpush1.msra.mxu0 0.0
    %6029 = vmatprep.subr.mxu0 0.0
    %6030 = vmatpush1.msra.mxu0 0.0
    %6031 = vmatprep.subr.mxu0 0.0
    %6032 = vmatpush1.msra.mxu0 0.0
    %6033 = vmatprep.subr.mxu0 0.0
    %6034 = vmatpush1.msra.mxu0 0.0
    %6035 = vmatprep.subr.mxu0 0.0
    %6036 = vmatpush1.msra.mxu0 0.0
    %6037 = vmatprep.subr.mxu0 0.0
    %6038 = vmatpush1.msra.mxu0 0.0
    %6039 = vmatprep.mubr.f32.mxu0 0.0
    %6040 = vmatmul.mubr.f32.gmra.mrb[0].mxu0 %v5952
    %v6041 = vpop.f32.mrb[0].mxu0
    %v6042 = vadd.f32 %v5950, %v6041
    %v6043 = vpop.f32.mrb[0].mxu0
    %6044 = vmatprep.mubr.f32.mxu0 0.0
    %6045 = vmatmul.mubr.f32.gmra.mrb[0].mxu0 %v5955
    %v6046 = vpop.f32.mrb[0].mxu0
    %v6047 = vadd.f32 %v5950, %v6046
    %v6048 = vpop.f32.mrb[0].mxu0
    %6049 = vmatprep.mubr.f32.mxu0 0.0
    %6050 = vmatmul.mubr.f32.gmra.mrb[0].mxu0 %v5958
    %v6051 = vpop.f32.mrb[0].mxu0
    %v6052 = vadd.f32 %v5950, %v6051
    %v6053 = vpop.f32.mrb[0].mxu0
    %6054 = vmatprep.mubr.f32.mxu0 0.0
    %6055 = vmatmul.mubr.f32.gmra.mrb[0].mxu0 %v5961
    %v6056 = vpop.f32.mrb[0].mxu0
    %v6057 = vadd.f32 %v5950, %v6056
    %v6058 = vpop.f32.mrb[0].mxu0
    %6059 = vmatprep.mubr.f32.mxu0 0.0
    %6060 = vmatmul.mubr.f32.gmra.mrb[0].mxu0 %v5964
    %v6061 = vpop.f32.mrb[0].mxu0
    %v6062 = vadd.f32 %v5950, %v6061
    %v6063 = vpop.f32.mrb[0].mxu0
    %6064 = vmatprep.mubr.f32.mxu0 0.0
    %6065 = vmatmul.mubr.f32.gmra.mrb[0].mxu0 %v5967
    %v6066 = vpop.f32.mrb[0].mxu0
    %v6067 = vadd.f32 %v5950, %v6066
    %v6068 = vpop.f32.mrb[0].mxu0
    %6069 = vmatprep.mubr.f32.mxu0 0.0
    %6070 = vmatmul.mubr.f32.gmra.mrb[0].mxu0 %v5970
    %v6071 = vpop.f32.mrb[0].mxu0
    %v6072 = vadd.f32 %v5950, %v6071
    %v6073 = vpop.f32.mrb[0].mxu0
    %6074 = vmatprep.mubr.f32.mxu0 0.0
    %6075 = vmatmul.mubr.f32.gmra.mrb[0].mxu0 %v5973
    %v6076 = vpop.f32.mrb[0].mxu0
    %v6077 = vadd.f32 %v5950, %v6076
    %v6078 = vpop.f32.mrb[0].mxu0
    %6079 = vdwg.mxu0
    %v6080 = vmax.f32 %v6042, 0.0
    %v6081 = vmax.f32 %v6047, 0.0
    %v6082 = vmax.f32 %v6052, 0.0
    %v6083 = vmax.f32 %v6057, 0.0
    %v6084 = vmax.f32 %v6062, 0.0
    %v6085 = vmax.f32 %v6067, 0.0
    %v6086 = vmax.f32 %v6072, 0.0
    %v6087 = vmax.f32 %v6077, 0.0
    %v6088 = vlaneseq
    %v6089 = vshrl.u32 %v6088, 7
    %v6090 = vsub.s32 5, %v6089
    %v6091 = vrot.slane %v3258, %v6090
    %6096 = vrot.lane.b32.xlu0 %v3250, 96
    %v6097 = vpop.permute.xlu0 %6096
    %6098 = vrot.lane.b32.xlu0 %v3252, 96
    %v6099 = vpop.permute.xlu0 %6098
    %6100 = vrot.lane.b32.xlu0 %v3254, 96
    %v6101 = vpop.permute.xlu0 %6100
    %6102 = vrot.lane.b32.xlu0 %v3256, 96
    %v6103 = vpop.permute.xlu0 %6102
    %v6109 = vsel %vm135, %v6080, 0
    %v6112 = vsel %vm135, %v6081, 0
    %v6115 = vsel %vm135, %v6082, 0
    %v6118 = vsel %vm135, %v6083, 0
    %v6121 = vsel %vm135, %v6084, 0
    %v6124 = vsel %vm135, %v6085, 0
    %v6127 = vsel %vm135, %v6086, 0
    %v6130 = vsel %vm135, %v6087, 0
    %6132 = vmatprep.subr.mxu0 0.0
    %6133 = vmatpush1.msra.mxu0 %v6097
    %6134 = vmatprep.subr.mxu0 0.0
    %6135 = vmatpush1.msra.mxu0 %v6099
    %6136 = vmatprep.subr.mxu0 0.0
    %6137 = vmatpush1.msra.mxu0 %v6101
    %6138 = vmatprep.subr.mxu0 0.0
    %6139 = vmatpush1.msra.mxu0 %v6103
    %6140 = vmatprep.subr.mxu0 0.0
    %6141 = vmatpush1.msra.mxu0 0.0
    %6142 = vmatprep.subr.mxu0 0.0
    %6143 = vmatpush1.msra.mxu0 0.0
    %6144 = vmatprep.subr.mxu0 0.0
    %6145 = vmatpush1.msra.mxu0 0.0
    %6146 = vmatprep.subr.mxu0 0.0
    %6147 = vmatpush1.msra.mxu0 0.0
    %6148 = vmatprep.subr.mxu0 0.0
    %6149 = vmatpush1.msra.mxu0 0.0
    %6150 = vmatprep.subr.mxu0 0.0
    %6151 = vmatpush1.msra.mxu0 0.0
    %6152 = vmatprep.subr.mxu0 0.0
    %6153 = vmatpush1.msra.mxu0 0.0
    %6154 = vmatprep.subr.mxu0 0.0
    %6155 = vmatpush1.msra.mxu0 0.0
    %6156 = vmatprep.subr.mxu0 0.0
    %6157 = vmatpush1.msra.mxu0 0.0
    %6158 = vmatprep.subr.mxu0 0.0
    %6159 = vmatpush1.msra.mxu0 0.0
    %6160 = vmatprep.subr.mxu0 0.0
    %6161 = vmatpush1.msra.mxu0 0.0
    %6162 = vmatprep.subr.mxu0 0.0
    %6163 = vmatpush1.msra.mxu0 0.0
    %6164 = vmatprep.subr.mxu0 0.0
    %6165 = vmatpush1.msra.mxu0 0.0
    %6166 = vmatprep.subr.mxu0 0.0
    %6167 = vmatpush1.msra.mxu0 0.0
    %6168 = vmatprep.subr.mxu0 0.0
    %6169 = vmatpush1.msra.mxu0 0.0
    %6170 = vmatprep.subr.mxu0 0.0
    %6171 = vmatpush1.msra.mxu0 0.0
    %6172 = vmatprep.subr.mxu0 0.0
    %6173 = vmatpush1.msra.mxu0 0.0
    %6174 = vmatprep.subr.mxu0 0.0
    %6175 = vmatpush1.msra.mxu0 0.0
    %6176 = vmatprep.subr.mxu0 0.0
    %6177 = vmatpush1.msra.mxu0 0.0
    %6178 = vmatprep.subr.mxu0 0.0
    %6179 = vmatpush1.msra.mxu0 0.0
    %6180 = vmatprep.subr.mxu0 0.0
    %6181 = vmatpush1.msra.mxu0 0.0
    %6182 = vmatprep.subr.mxu0 0.0
    %6183 = vmatpush1.msra.mxu0 0.0
    %6184 = vmatprep.subr.mxu0 0.0
    %6185 = vmatpush1.msra.mxu0 0.0
    %6186 = vmatprep.subr.mxu0 0.0
    %6187 = vmatpush1.msra.mxu0 0.0
    %6188 = vmatprep.subr.mxu0 0.0
    %6189 = vmatpush1.msra.mxu0 0.0
    %6190 = vmatprep.subr.mxu0 0.0
    %6191 = vmatpush1.msra.mxu0 0.0
    %6192 = vmatprep.subr.mxu0 0.0
    %6193 = vmatpush1.msra.mxu0 0.0
    %6194 = vmatprep.subr.mxu0 0.0
    %6195 = vmatpush1.msra.mxu0 0.0
    %6196 = vmatprep.mubr.f32.mxu0 0.0
    %6197 = vmatmul.mubr.f32.gmra.mrb[0].mxu0 %v6109
    %v6198 = vpop.f32.mrb[0].mxu0
    %v6199 = vadd.f32 %v6091, %v6198
    %v6200 = vpop.f32.mrb[0].mxu0
    %6201 = vmatprep.mubr.f32.mxu0 0.0
    %6202 = vmatmul.mubr.f32.gmra.mrb[0].mxu0 %v6112
    %v6203 = vpop.f32.mrb[0].mxu0
    %v6204 = vpop.f32.mrb[0].mxu0
    %6205 = vmatprep.mubr.f32.mxu0 0.0
    %6206 = vmatmul.mubr.f32.gmra.mrb[0].mxu0 %v6115
    %v6207 = vpop.f32.mrb[0].mxu0
    %v6208 = vpop.f32.mrb[0].mxu0
    %6209 = vmatprep.mubr.f32.mxu0 0.0
    %6210 = vmatmul.mubr.f32.gmra.mrb[0].mxu0 %v6118
    %v6211 = vpop.f32.mrb[0].mxu0
    %v6212 = vpop.f32.mrb[0].mxu0
    %6213 = vmatprep.mubr.f32.mxu0 0.0
    %6214 = vmatmul.mubr.f32.gmra.mrb[0].mxu0 %v6121
    %v6215 = vpop.f32.mrb[0].mxu0
    %v6216 = vpop.f32.mrb[0].mxu0
    %6217 = vmatprep.mubr.f32.mxu0 0.0
    %6218 = vmatmul.mubr.f32.gmra.mrb[0].mxu0 %v6124
    %v6219 = vpop.f32.mrb[0].mxu0
    %v6220 = vpop.f32.mrb[0].mxu0
    %6221 = vmatprep.mubr.f32.mxu0 0.0
    %6222 = vmatmul.mubr.f32.gmra.mrb[0].mxu0 %v6127
    %v6223 = vpop.f32.mrb[0].mxu0
    %v6224 = vpop.f32.mrb[0].mxu0
    %6225 = vmatprep.mubr.f32.mxu0 0.0
    %6226 = vmatmul.mubr.f32.gmra.mrb[0].mxu0 %v6130
    %v6227 = vpop.f32.mrb[0].mxu0
    %v6228 = vpop.f32.mrb[0].mxu0
    %6229 = vdwg.mxu0
    %v6230 = vadd.f32 %v5939, %v6199
    %v6231 = vsel %vm135, %v6230, 0.0
    %6232 = vadd.xlane.f32.xlu0 %v6231
    %v6233 = vpop.xlane.xlu0 %6232
    %v6234 = vmul.f32 %v6233, %v2717
    %v6235 = vsub.f32 %v6230, %v6234
    %v6236 = vmul.f32 %v6235, %v6235
    %v6237 = vsel %vm135, %v6236, 0.0
    %6238 = vadd.xlane.f32.xlu0 %v6237
    %v6239 = vpop.xlane.xlu0 %6238
    %v6240 = vmul.f32 %v6239, %v2717
    %v6241 = vadd.f32 %v6240, 1e-05
    %v6242 = vrsqrt.pop %v6241
    %v6243 = vmul.f32 %v6235, %v6242
    %v6244 = vlaneseq
    %v6245 = vshrl.u32 %v6244, 7
    %v6246 = vsub.s32 0, %v6245
    %v6247 = vrot.slane %v3259, %v6246
    %v6248 = vmul.f32 %v6243, %v6247
    %v6249 = vlaneseq
    %v6250 = vshrl.u32 %v6249, 7
    %v6251 = vsub.s32 1, %v6250
    %v6252 = vrot.slane %v3259, %v6251
    %v6253 = vadd.f32 %v6248, %v6252
    %v6254 = vsel %vm135, %v6253, 0.0
    %6255 = vadd.xlane.f32.xlu0 %v6254
    %v6256 = vpop.xlane.xlu0 %6255
    %v6257 = vmul.f32 %v6256, %v2717
    %v6258 = vsub.f32 %v6253, %v6257
    %v6259 = vmul.f32 %v6258, %v6258
    %v6260 = vsel %vm135, %v6259, 0.0
    %6261 = vadd.xlane.f32.xlu0 %v6260
    %v6262 = vpop.xlane.xlu0 %6261
    %v6263 = vmul.f32 %v6262, %v2717
    %v6264 = vadd.f32 %v6263, 1e-05
    %v6265 = vrsqrt.pop %v6264
    %v6266 = vmul.f32 %v6258, %v6265
    %v6267 = vlaneseq
    %v6268 = vshrl.u32 %v6267, 7
    %v6269 = vsub.s32 0, %v6268
    %v6270 = vrot.slane %v120, %v6269
    %v6271 = vmul.f32 %v6266, %v6270
    %v6272 = vlaneseq
    %v6273 = vshrl.u32 %v6272, 7
    %v6274 = vsub.s32 1, %v6273
    %v6275 = vrot.slane %v120, %v6274
    %v6276 = vadd.f32 %v6271, %v6275
    %v6277 = vld [vmem:[%s4] sm:$0xff]
    %v6278 = vld [vmem:[%s4 + $0x8] sm:$0xff]
    %v6279 = vld [vmem:[%s4 + $0x10] sm:$0xff]
    %v6280 = vld [vmem:[%s4 + $0x18] sm:$0xff]
    %v6281 = vld [vmem:[%s4 + $0x20] sm:$0xff]
    %v6282 = vld [vmem:[%s4 + $0x28] sm:$0xff]
    %v6283 = vld [vmem:[%s4 + $0x30] sm:$0xff]
    %v6284 = vld [vmem:[%s4 + $0x38] sm:$0xff]
    %v6285 = vld [vmem:[%s5] sm:$0xff]
    %v6286 = vld [vmem:[%s5 + $0x8] sm:$0x3]
    %v6287 = vlaneseq
    %v6288 = vshrl.u32 %v6287, 7
    %v6289 = vsub.s32 0, %v6288
    %v6290 = vrot.slane %v6285, %v6289
    %v6292 = vsel %vm135, %v6276, 0
    %6294 = vmatprep.subr.mxu0 0.0
    %6295 = vmatpush1.msra.mxu0 %v6277
    %6296 = vmatprep.subr.mxu0 0.0
    %6297 = vmatpush1.msra.mxu0 %v6279
    %6298 = vmatprep.subr.mxu0 0.0
    %6299 = vmatpush1.msra.mxu0 %v6281
    %6300 = vmatprep.subr.mxu0 0.0
    %6301 = vmatpush1.msra.mxu0 %v6283
    %6302 = vmatprep.subr.mxu0 0.0
    %6303 = vmatpush1.msra.mxu0 0.0
    %6304 = vmatprep.subr.mxu0 0.0
    %6305 = vmatpush1.msra.mxu0 0.0
    %6306 = vmatprep.subr.mxu0 0.0
    %6307 = vmatpush1.msra.mxu0 0.0
    %6308 = vmatprep.subr.mxu0 0.0
    %6309 = vmatpush1.msra.mxu0 0.0
    %6310 = vmatprep.subr.mxu0 0.0
    %6311 = vmatpush1.msra.mxu0 0.0
    %6312 = vmatprep.subr.mxu0 0.0
    %6313 = vmatpush1.msra.mxu0 0.0
    %6314 = vmatprep.subr.mxu0 0.0
    %6315 = vmatpush1.msra.mxu0 0.0
    %6316 = vmatprep.subr.mxu0 0.0
    %6317 = vmatpush1.msra.mxu0 0.0
    %6318 = vmatprep.subr.mxu0 0.0
    %6319 = vmatpush1.msra.mxu0 0.0
    %6320 = vmatprep.subr.mxu0 0.0
    %6321 = vmatpush1.msra.mxu0 0.0
    %6322 = vmatprep.subr.mxu0 0.0
    %6323 = vmatpush1.msra.mxu0 0.0
    %6324 = vmatprep.subr.mxu0 0.0
    %6325 = vmatpush1.msra.mxu0 0.0
    %6326 = vmatprep.subr.mxu0 0.0
    %6327 = vmatpush1.msra.mxu0 0.0
    %6328 = vmatprep.subr.mxu0 0.0
    %6329 = vmatpush1.msra.mxu0 0.0
    %6330 = vmatprep.subr.mxu0 0.0
    %6331 = vmatpush1.msra.mxu0 0.0
    %6332 = vmatprep.subr.mxu0 0.0
    %6333 = vmatpush1.msra.mxu0 0.0
    %6334 = vmatprep.subr.mxu0 0.0
    %6335 = vmatpush1.msra.mxu0 0.0
    %6336 = vmatprep.subr.mxu0 0.0
    %6337 = vmatpush1.msra.mxu0 0.0
    %6338 = vmatprep.subr.mxu0 0.0
    %6339 = vmatpush1.msra.mxu0 0.0
    %6340 = vmatprep.subr.mxu0 0.0
    %6341 = vmatpush1.msra.mxu0 0.0
    %6342 = vmatprep.subr.mxu0 0.0
    %6343 = vmatpush1.msra.mxu0 0.0
    %6344 = vmatprep.subr.mxu0 0.0
    %6345 = vmatpush1.msra.mxu0 0.0
    %6346 = vmatprep.subr.mxu0 0.0
    %6347 = vmatpush1.msra.mxu0 0.0
    %6348 = vmatprep.subr.mxu0 0.0
    %6349 = vmatpush1.msra.mxu0 0.0
    %6350 = vmatprep.subr.mxu0 0.0
    %6351 = vmatpush1.msra.mxu0 0.0
    %6352 = vmatprep.subr.mxu0 0.0
    %6353 = vmatpush1.msra.mxu0 0.0
    %6354 = vmatprep.subr.mxu0 0.0
    %6355 = vmatpush1.msra.mxu0 0.0
    %6356 = vmatprep.subr.mxu0 0.0
    %6357 = vmatpush1.msra.mxu0 0.0
    %6358 = vmatprep.mubr.f32.mxu0 0.0
    %6359 = vmatmul.mubr.f32.gmra.mrb[0].mxu0 %v6292
    %v6360 = vpop.f32.mrb[0].mxu0
    %v6361 = vadd.f32 %v6290, %v6360
    %v6362 = vpop.f32.mrb[0].mxu0
    %6363 = vdwg.mxu0
    %v6364 = vlaneseq
    %v6365 = vshrl.u32 %v6364, 7
    %v6366 = vsub.s32 1, %v6365
    %v6367 = vrot.slane %v6285, %v6366
    %6372 = vrot.lane.b32.xlu0 %v6277, 96
    %v6373 = vpop.permute.xlu0 %6372
    %6374 = vrot.lane.b32.xlu0 %v6279, 96
    %v6375 = vpop.permute.xlu0 %6374
    %6376 = vrot.lane.b32.xlu0 %v6281, 96
    %v6377 = vpop.permute.xlu0 %6376
    %6378 = vrot.lane.b32.xlu0 %v6283, 96
    %v6379 = vpop.permute.xlu0 %6378
    %6384 = vmatprep.subr.mxu0 0.0
    %6385 = vmatpush1.msra.mxu0 %v6373
    %6386 = vmatprep.subr.mxu0 0.0
    %6387 = vmatpush1.msra.mxu0 %v6375
    %6388 = vmatprep.subr.mxu0 0.0
    %6389 = vmatpush1.msra.mxu0 %v6377
    %6390 = vmatprep.subr.mxu0 0.0
    %6391 = vmatpush1.msra.mxu0 %v6379
    %6392 = vmatprep.subr.mxu0 0.0
    %6393 = vmatpush1.msra.mxu0 0.0
    %6394 = vmatprep.subr.mxu0 0.0
    %6395 = vmatpush1.msra.mxu0 0.0
    %6396 = vmatprep.subr.mxu0 0.0
    %6397 = vmatpush1.msra.mxu0 0.0
    %6398 = vmatprep.subr.mxu0 0.0
    %6399 = vmatpush1.msra.mxu0 0.0
    %6400 = vmatprep.subr.mxu0 0.0
    %6401 = vmatpush1.msra.mxu0 0.0
    %6402 = vmatprep.subr.mxu0 0.0
    %6403 = vmatpush1.msra.mxu0 0.0
    %6404 = vmatprep.subr.mxu0 0.0
    %6405 = vmatpush1.msra.mxu0 0.0
    %6406 = vmatprep.subr.mxu0 0.0
    %6407 = vmatpush1.msra.mxu0 0.0
    %6408 = vmatprep.subr.mxu0 0.0
    %6409 = vmatpush1.msra.mxu0 0.0
    %6410 = vmatprep.subr.mxu0 0.0
    %6411 = vmatpush1.msra.mxu0 0.0
    %6412 = vmatprep.subr.mxu0 0.0
    %6413 = vmatpush1.msra.mxu0 0.0
    %6414 = vmatprep.subr.mxu0 0.0
    %6415 = vmatpush1.msra.mxu0 0.0
    %6416 = vmatprep.subr.mxu0 0.0
    %6417 = vmatpush1.msra.mxu0 0.0
    %6418 = vmatprep.subr.mxu0 0.0
    %6419 = vmatpush1.msra.mxu0 0.0
    %6420 = vmatprep.subr.mxu0 0.0
    %6421 = vmatpush1.msra.mxu0 0.0
    %6422 = vmatprep.subr.mxu0 0.0
    %6423 = vmatpush1.msra.mxu0 0.0
    %6424 = vmatprep.subr.mxu0 0.0
    %6425 = vmatpush1.msra.mxu0 0.0
    %6426 = vmatprep.subr.mxu0 0.0
    %6427 = vmatpush1.msra.mxu0 0.0
    %6428 = vmatprep.subr.mxu0 0.0
    %6429 = vmatpush1.msra.mxu0 0.0
    %6430 = vmatprep.subr.mxu0 0.0
    %6431 = vmatpush1.msra.mxu0 0.0
    %6432 = vmatprep.subr.mxu0 0.0
    %6433 = vmatpush1.msra.mxu0 0.0
    %6434 = vmatprep.subr.mxu0 0.0
    %6435 = vmatpush1.msra.mxu0 0.0
    %6436 = vmatprep.subr.mxu0 0.0
    %6437 = vmatpush1.msra.mxu0 0.0
    %6438 = vmatprep.subr.mxu0 0.0
    %6439 = vmatpush1.msra.mxu0 0.0
    %6440 = vmatprep.subr.mxu0 0.0
    %6441 = vmatpush1.msra.mxu0 0.0
    %6442 = vmatprep.subr.mxu0 0.0
    %6443 = vmatpush1.msra.mxu0 0.0
    %6444 = vmatprep.subr.mxu0 0.0
    %6445 = vmatpush1.msra.mxu0 0.0
    %6446 = vmatprep.subr.mxu0 0.0
    %6447 = vmatpush1.msra.mxu0 0.0
    %6448 = vmatprep.mubr.f32.mxu0 0.0
    %6449 = vmatmul.mubr.f32.gmra.mrb[0].mxu0 %v6292
    %v6450 = vpop.f32.mrb[0].mxu0
    %v6451 = vadd.f32 %v6367, %v6450
    %v6452 = vpop.f32.mrb[0].mxu0
    %6453 = vdwg.mxu0
    %v6454 = vlaneseq
    %v6455 = vshrl.u32 %v6454, 7
    %v6456 = vsub.s32 2, %v6455
    %v6457 = vrot.slane %v6285, %v6456
    %6458 = vrot.lane.b32.xlu0 %v6277, 64
    %v6459 = vpop.permute.xlu0 %6458
    %6460 = vrot.lane.b32.xlu0 %v6279, 64
    %v6461 = vpop.permute.xlu0 %6460
    %6462 = vrot.lane.b32.xlu0 %v6281, 64
    %v6463 = vpop.permute.xlu0 %6462
    %6464 = vrot.lane.b32.xlu0 %v6283, 64
    %v6465 = vpop.permute.xlu0 %6464
    %6470 = vmatprep.subr.mxu0 0.0
    %6471 = vmatpush1.msra.mxu0 %v6459
    %6472 = vmatprep.subr.mxu0 0.0
    %6473 = vmatpush1.msra.mxu0 %v6461
    %6474 = vmatprep.subr.mxu0 0.0
    %6475 = vmatpush1.msra.mxu0 %v6463
    %6476 = vmatprep.subr.mxu0 0.0
    %6477 = vmatpush1.msra.mxu0 %v6465
    %6478 = vmatprep.subr.mxu0 0.0
    %6479 = vmatpush1.msra.mxu0 0.0
    %6480 = vmatprep.subr.mxu0 0.0
    %6481 = vmatpush1.msra.mxu0 0.0
    %6482 = vmatprep.subr.mxu0 0.0
    %6483 = vmatpush1.msra.mxu0 0.0
    %6484 = vmatprep.subr.mxu0 0.0
    %6485 = vmatpush1.msra.mxu0 0.0
    %6486 = vmatprep.subr.mxu0 0.0
    %6487 = vmatpush1.msra.mxu0 0.0
    %6488 = vmatprep.subr.mxu0 0.0
    %6489 = vmatpush1.msra.mxu0 0.0
    %6490 = vmatprep.subr.mxu0 0.0
    %6491 = vmatpush1.msra.mxu0 0.0
    %6492 = vmatprep.subr.mxu0 0.0
    %6493 = vmatpush1.msra.mxu0 0.0
    %6494 = vmatprep.subr.mxu0 0.0
    %6495 = vmatpush1.msra.mxu0 0.0
    %6496 = vmatprep.subr.mxu0 0.0
    %6497 = vmatpush1.msra.mxu0 0.0
    %6498 = vmatprep.subr.mxu0 0.0
    %6499 = vmatpush1.msra.mxu0 0.0
    %6500 = vmatprep.subr.mxu0 0.0
    %6501 = vmatpush1.msra.mxu0 0.0
    %6502 = vmatprep.subr.mxu0 0.0
    %6503 = vmatpush1.msra.mxu0 0.0
    %6504 = vmatprep.subr.mxu0 0.0
    %6505 = vmatpush1.msra.mxu0 0.0
    %6506 = vmatprep.subr.mxu0 0.0
    %6507 = vmatpush1.msra.mxu0 0.0
    %6508 = vmatprep.subr.mxu0 0.0
    %6509 = vmatpush1.msra.mxu0 0.0
    %6510 = vmatprep.subr.mxu0 0.0
    %6511 = vmatpush1.msra.mxu0 0.0
    %6512 = vmatprep.subr.mxu0 0.0
    %6513 = vmatpush1.msra.mxu0 0.0
    %6514 = vmatprep.subr.mxu0 0.0
    %6515 = vmatpush1.msra.mxu0 0.0
    %6516 = vmatprep.subr.mxu0 0.0
    %6517 = vmatpush1.msra.mxu0 0.0
    %6518 = vmatprep.subr.mxu0 0.0
    %6519 = vmatpush1.msra.mxu0 0.0
    %6520 = vmatprep.subr.mxu0 0.0
    %6521 = vmatpush1.msra.mxu0 0.0
    %6522 = vmatprep.subr.mxu0 0.0
    %6523 = vmatpush1.msra.mxu0 0.0
    %6524 = vmatprep.subr.mxu0 0.0
    %6525 = vmatpush1.msra.mxu0 0.0
    %6526 = vmatprep.subr.mxu0 0.0
    %6527 = vmatpush1.msra.mxu0 0.0
    %6528 = vmatprep.subr.mxu0 0.0
    %6529 = vmatpush1.msra.mxu0 0.0
    %6530 = vmatprep.subr.mxu0 0.0
    %6531 = vmatpush1.msra.mxu0 0.0
    %6532 = vmatprep.subr.mxu0 0.0
    %6533 = vmatpush1.msra.mxu0 0.0
    %6534 = vmatprep.mubr.f32.mxu0 0.0
    %6535 = vmatmul.mubr.f32.gmra.mrb[0].mxu0 %v6292
    %v6536 = vpop.f32.mrb[0].mxu0
    %v6537 = vadd.f32 %v6457, %v6536
    %v6538 = vpop.f32.mrb[0].mxu0
    %6539 = vdwg.mxu0
    %v6540 = vmul.f32 %v6361, 0.35355338
    %v6542 = vsel %vm519, %v6540, 0
    %v6545 = vsel %vm519, %v6451, 0
    %6547 = vmatprep.subr.mxu0 0.0
    %6548 = vmatpush1.xpose.msra.mxu0 %v6545
    %6549 = vmatprep.subr.mxu0 0.0
    %6550 = vmatpush1.xpose.msra.mxu0 0.0
    %6551 = vmatprep.subr.mxu0 0.0
    %6552 = vmatpush1.xpose.msra.mxu0 0.0
    %6553 = vmatprep.subr.mxu0 0.0
    %6554 = vmatpush1.xpose.msra.mxu0 0.0
    %6555 = vmatprep.subr.mxu0 0.0
    %6556 = vmatpush1.xpose.msra.mxu0 0.0
    %6557 = vmatprep.subr.mxu0 0.0
    %6558 = vmatpush1.xpose.msra.mxu0 0.0
    %6559 = vmatprep.subr.mxu0 0.0
    %6560 = vmatpush1.xpose.msra.mxu0 0.0
    %6561 = vmatprep.subr.mxu0 0.0
    %6562 = vmatpush1.xpose.msra.mxu0 0.0
    %6563 = vmatprep.subr.mxu0 0.0
    %6564 = vmatpush1.xpose.msra.mxu0 0.0
    %6565 = vmatprep.subr.mxu0 0.0
    %6566 = vmatpush1.xpose.msra.mxu0 0.0
    %6567 = vmatprep.subr.mxu0 0.0
    %6568 = vmatpush1.xpose.msra.mxu0 0.0
    %6569 = vmatprep.subr.mxu0 0.0
    %6570 = vmatpush1.xpose.msra.mxu0 0.0
    %6571 = vmatprep.subr.mxu0 0.0
    %6572 = vmatpush1.xpose.msra.mxu0 0.0
    %6573 = vmatprep.subr.mxu0 0.0
    %6574 = vmatpush1.xpose.msra.mxu0 0.0
    %6575 = vmatprep.subr.mxu0 0.0
    %6576 = vmatpush1.xpose.msra.mxu0 0.0
    %6577 = vmatprep.subr.mxu0 0.0
    %6578 = vmatpush1.xpose.msra.mxu0 0.0
    %6579 = vmatprep.subr.mxu0 0.0
    %6580 = vmatpush1.xpose.msra.mxu0 0.0
    %6581 = vmatprep.subr.mxu0 0.0
    %6582 = vmatpush1.xpose.msra.mxu0 0.0
    %6583 = vmatprep.subr.mxu0 0.0
    %6584 = vmatpush1.xpose.msra.mxu0 0.0
    %6585 = vmatprep.subr.mxu0 0.0
    %6586 = vmatpush1.xpose.msra.mxu0 0.0
    %6587 = vmatprep.subr.mxu0 0.0
    %6588 = vmatpush1.xpose.msra.mxu0 0.0
    %6589 = vmatprep.subr.mxu0 0.0
    %6590 = vmatpush1.xpose.msra.mxu0 0.0
    %6591 = vmatprep.subr.mxu0 0.0
    %6592 = vmatpush1.xpose.msra.mxu0 0.0
    %6593 = vmatprep.subr.mxu0 0.0
    %6594 = vmatpush1.xpose.msra.mxu0 0.0
    %6595 = vmatprep.subr.mxu0 0.0
    %6596 = vmatpush1.xpose.msra.mxu0 0.0
    %6597 = vmatprep.subr.mxu0 0.0
    %6598 = vmatpush1.xpose.msra.mxu0 0.0
    %6599 = vmatprep.subr.mxu0 0.0
    %6600 = vmatpush1.xpose.msra.mxu0 0.0
    %6601 = vmatprep.subr.mxu0 0.0
    %6602 = vmatpush1.xpose.msra.mxu0 0.0
    %6603 = vmatprep.subr.mxu0 0.0
    %6604 = vmatpush1.xpose.msra.mxu0 0.0
    %6605 = vmatprep.subr.mxu0 0.0
    %6606 = vmatpush1.xpose.msra.mxu0 0.0
    %6607 = vmatprep.subr.mxu0 0.0
    %6608 = vmatpush1.xpose.msra.mxu0 0.0
    %6609 = vmatprep.subr.mxu0 0.0
    %6610 = vmatpush1.xpose.msra.mxu0 0.0
    %6611 = vmatprep.mubr.f32.mxu0 0.0
    %6612 = vmatmul.mubr.f32.gmra.mrb[0].mxu0 %v6542
    %v6613 = vpop.f32.mrb[0].mxu0
    %v6614 = vadd.f32 0.0, %v6613
    %v6615 = vpop.f32.mrb[0].mxu0
    %6616 = vdwg.mxu0
    %vm6617 = vcmask 27648
    %v6618 = vsel %vm6617, %v6614, -inf
    %6619 = vmax.xlane.f32.xlu0 %v6618
    %v6620 = vpop.xlane.xlu0 %6619
    %v6621 = vsub.f32 %v6614, %v6620
    %v6622 = vmul.f32 %v6621, 1.442695
    %v6623 = vpow.pop %v6622
    %v6624 = vsel %vm6617, %v6623, 0.0
    %6625 = vadd.xlane.f32.xlu0 %v6624
    %v6626 = vpop.xlane.xlu0 %6625
    %v6627 = vrcp.pop %v6626
    %v6628 = vmul.f32 %v6623, %v6627
    %vm6629 = vcmask 31744
    %v6631 = vsel %vm6629, %v6628, 0
    %vm6633 = vcmask 1043456
    %v6635 = vsel %vm6633, %v6537, 0
    %6637 = vmatprep.subr.mxu0 0.0
    %6638 = vmatpush1.msra.mxu0 %v6635
    %6639 = vmatprep.subr.mxu0 0.0
    %6640 = vmatpush1.msra.mxu0 0.0
    %6641 = vmatprep.subr.mxu0 0.0
    %6642 = vmatpush1.msra.mxu0 0.0
    %6643 = vmatprep.subr.mxu0 0.0
    %6644 = vmatpush1.msra.mxu0 0.0
    %6645 = vmatprep.subr.mxu0 0.0
    %6646 = vmatpush1.msra.mxu0 0.0
    %6647 = vmatprep.subr.mxu0 0.0
    %6648 = vmatpush1.msra.mxu0 0.0
    %6649 = vmatprep.subr.mxu0 0.0
    %6650 = vmatpush1.msra.mxu0 0.0
    %6651 = vmatprep.subr.mxu0 0.0
    %6652 = vmatpush1.msra.mxu0 0.0
    %6653 = vmatprep.subr.mxu0 0.0
    %6654 = vmatpush1.msra.mxu0 0.0
    %6655 = vmatprep.subr.mxu0 0.0
    %6656 = vmatpush1.msra.mxu0 0.0
    %6657 = vmatprep.subr.mxu0 0.0
    %6658 = vmatpush1.msra.mxu0 0.0
    %6659 = vmatprep.subr.mxu0 0.0
    %6660 = vmatpush1.msra.mxu0 0.0
    %6661 = vmatprep.subr.mxu0 0.0
    %6662 = vmatpush1.msra.mxu0 0.0
    %6663 = vmatprep.subr.mxu0 0.0
    %6664 = vmatpush1.msra.mxu0 0.0
    %6665 = vmatprep.subr.mxu0 0.0
    %6666 = vmatpush1.msra.mxu0 0.0
    %6667 = vmatprep.subr.mxu0 0.0
    %6668 = vmatpush1.msra.mxu0 0.0
    %6669 = vmatprep.subr.mxu0 0.0
    %6670 = vmatpush1.msra.mxu0 0.0
    %6671 = vmatprep.subr.mxu0 0.0
    %6672 = vmatpush1.msra.mxu0 0.0
    %6673 = vmatprep.subr.mxu0 0.0
    %6674 = vmatpush1.msra.mxu0 0.0
    %6675 = vmatprep.subr.mxu0 0.0
    %6676 = vmatpush1.msra.mxu0 0.0
    %6677 = vmatprep.subr.mxu0 0.0
    %6678 = vmatpush1.msra.mxu0 0.0
    %6679 = vmatprep.subr.mxu0 0.0
    %6680 = vmatpush1.msra.mxu0 0.0
    %6681 = vmatprep.subr.mxu0 0.0
    %6682 = vmatpush1.msra.mxu0 0.0
    %6683 = vmatprep.subr.mxu0 0.0
    %6684 = vmatpush1.msra.mxu0 0.0
    %6685 = vmatprep.subr.mxu0 0.0
    %6686 = vmatpush1.msra.mxu0 0.0
    %6687 = vmatprep.subr.mxu0 0.0
    %6688 = vmatpush1.msra.mxu0 0.0
    %6689 = vmatprep.subr.mxu0 0.0
    %6690 = vmatpush1.msra.mxu0 0.0
    %6691 = vmatprep.subr.mxu0 0.0
    %6692 = vmatpush1.msra.mxu0 0.0
    %6693 = vmatprep.subr.mxu0 0.0
    %6694 = vmatpush1.msra.mxu0 0.0
    %6695 = vmatprep.subr.mxu0 0.0
    %6696 = vmatpush1.msra.mxu0 0.0
    %6697 = vmatprep.subr.mxu0 0.0
    %6698 = vmatpush1.msra.mxu0 0.0
    %6699 = vmatprep.subr.mxu0 0.0
    %6700 = vmatpush1.msra.mxu0 0.0
    %6701 = vmatprep.mubr.f32.mxu0 0.0
    %6702 = vmatmul.mubr.f32.gmra.mrb[0].mxu0 %v6631
    %v6703 = vpop.f32.mrb[0].mxu0
    %v6704 = vadd.f32 0.0, %v6703
    %v6705 = vpop.f32.mrb[0].mxu0
    %6706 = vdwg.mxu0
    %6707 = vrot.lane.b32.xlu0 %v6540, 120
    %v6708 = vpop.permute.xlu0 %6707
    %6709 = vrot.lane.b32.xlu0 %v6451, 120
    %v6710 = vpop.permute.xlu0 %6709
    %v6711 = vsel %vm519, %v6708, 0
    %v6713 = vsel %vm519, %v6710, 0
    %6715 = vmatprep.subr.mxu0 0.0
    %6716 = vmatpush1.xpose.msra.mxu0 %v6713
    %6717 = vmatprep.subr.mxu0 0.0
    %6718 = vmatpush1.xpose.msra.mxu0 0.0
    %6719 = vmatprep.subr.mxu0 0.0
    %6720 = vmatpush1.xpose.msra.mxu0 0.0
    %6721 = vmatprep.subr.mxu0 0.0
    %6722 = vmatpush1.xpose.msra.mxu0 0.0
    %6723 = vmatprep.subr.mxu0 0.0
    %6724 = vmatpush1.xpose.msra.mxu0 0.0
    %6725 = vmatprep.subr.mxu0 0.0
    %6726 = vmatpush1.xpose.msra.mxu0 0.0
    %6727 = vmatprep.subr.mxu0 0.0
    %6728 = vmatpush1.xpose.msra.mxu0 0.0
    %6729 = vmatprep.subr.mxu0 0.0
    %6730 = vmatpush1.xpose.msra.mxu0 0.0
    %6731 = vmatprep.subr.mxu0 0.0
    %6732 = vmatpush1.xpose.msra.mxu0 0.0
    %6733 = vmatprep.subr.mxu0 0.0
    %6734 = vmatpush1.xpose.msra.mxu0 0.0
    %6735 = vmatprep.subr.mxu0 0.0
    %6736 = vmatpush1.xpose.msra.mxu0 0.0
    %6737 = vmatprep.subr.mxu0 0.0
    %6738 = vmatpush1.xpose.msra.mxu0 0.0
    %6739 = vmatprep.subr.mxu0 0.0
    %6740 = vmatpush1.xpose.msra.mxu0 0.0
    %6741 = vmatprep.subr.mxu0 0.0
    %6742 = vmatpush1.xpose.msra.mxu0 0.0
    %6743 = vmatprep.subr.mxu0 0.0
    %6744 = vmatpush1.xpose.msra.mxu0 0.0
    %6745 = vmatprep.subr.mxu0 0.0
    %6746 = vmatpush1.xpose.msra.mxu0 0.0
    %6747 = vmatprep.subr.mxu0 0.0
    %6748 = vmatpush1.xpose.msra.mxu0 0.0
    %6749 = vmatprep.subr.mxu0 0.0
    %6750 = vmatpush1.xpose.msra.mxu0 0.0
    %6751 = vmatprep.subr.mxu0 0.0
    %6752 = vmatpush1.xpose.msra.mxu0 0.0
    %6753 = vmatprep.subr.mxu0 0.0
    %6754 = vmatpush1.xpose.msra.mxu0 0.0
    %6755 = vmatprep.subr.mxu0 0.0
    %6756 = vmatpush1.xpose.msra.mxu0 0.0
    %6757 = vmatprep.subr.mxu0 0.0
    %6758 = vmatpush1.xpose.msra.mxu0 0.0
    %6759 = vmatprep.subr.mxu0 0.0
    %6760 = vmatpush1.xpose.msra.mxu0 0.0
    %6761 = vmatprep.subr.mxu0 0.0
    %6762 = vmatpush1.xpose.msra.mxu0 0.0
    %6763 = vmatprep.subr.mxu0 0.0
    %6764 = vmatpush1.xpose.msra.mxu0 0.0
    %6765 = vmatprep.subr.mxu0 0.0
    %6766 = vmatpush1.xpose.msra.mxu0 0.0
    %6767 = vmatprep.subr.mxu0 0.0
    %6768 = vmatpush1.xpose.msra.mxu0 0.0
    %6769 = vmatprep.subr.mxu0 0.0
    %6770 = vmatpush1.xpose.msra.mxu0 0.0
    %6771 = vmatprep.subr.mxu0 0.0
    %6772 = vmatpush1.xpose.msra.mxu0 0.0
    %6773 = vmatprep.subr.mxu0 0.0
    %6774 = vmatpush1.xpose.msra.mxu0 0.0
    %6775 = vmatprep.subr.mxu0 0.0
    %6776 = vmatpush1.xpose.msra.mxu0 0.0
    %6777 = vmatprep.subr.mxu0 0.0
    %6778 = vmatpush1.xpose.msra.mxu0 0.0
    %6779 = vmatprep.mubr.f32.mxu0 0.0
    %6780 = vmatmul.mubr.f32.gmra.mrb[0].mxu0 %v6711
    %v6781 = vpop.f32.mrb[0].mxu0
    %v6782 = vadd.f32 0.0, %v6781
    %v6783 = vpop.f32.mrb[0].mxu0
    %6784 = vdwg.mxu0
    %v6785 = vsel %vm6617, %v6782, -inf
    %6786 = vmax.xlane.f32.xlu0 %v6785
    %v6787 = vpop.xlane.xlu0 %6786
    %v6788 = vsub.f32 %v6782, %v6787
    %v6789 = vmul.f32 %v6788, 1.442695
    %v6790 = vpow.pop %v6789
    %v6791 = vsel %vm6617, %v6790, 0.0
    %6792 = vadd.xlane.f32.xlu0 %v6791
    %v6793 = vpop.xlane.xlu0 %6792
    %v6794 = vrcp.pop %v6793
    %v6795 = vmul.f32 %v6790, %v6794
    %6796 = vrot.lane.b32.xlu0 %v6537, 120
    %v6797 = vpop.permute.xlu0 %6796
    %v6799 = vsel %vm6629, %v6795, 0
    %v6801 = vsel %vm6633, %v6797, 0
    %6803 = vmatprep.subr.mxu0 0.0
    %6804 = vmatpush1.msra.mxu0 %v6801
    %6805 = vmatprep.subr.mxu0 0.0
    %6806 = vmatpush1.msra.mxu0 0.0
    %6807 = vmatprep.subr.mxu0 0.0
    %6808 = vmatpush1.msra.mxu0 0.0
    %6809 = vmatprep.subr.mxu0 0.0
    %6810 = vmatpush1.msra.mxu0 0.0
    %6811 = vmatprep.subr.mxu0 0.0
    %6812 = vmatpush1.msra.mxu0 0.0
    %6813 = vmatprep.subr.mxu0 0.0
    %6814 = vmatpush1.msra.mxu0 0.0
    %6815 = vmatprep.subr.mxu0 0.0
    %6816 = vmatpush1.msra.mxu0 0.0
    %6817 = vmatprep.subr.mxu0 0.0
    %6818 = vmatpush1.msra.mxu0 0.0
    %6819 = vmatprep.subr.mxu0 0.0
    %6820 = vmatpush1.msra.mxu0 0.0
    %6821 = vmatprep.subr.mxu0 0.0
    %6822 = vmatpush1.msra.mxu0 0.0
    %6823 = vmatprep.subr.mxu0 0.0
    %6824 = vmatpush1.msra.mxu0 0.0
    %6825 = vmatprep.subr.mxu0 0.0
    %6826 = vmatpush1.msra.mxu0 0.0
    %6827 = vmatprep.subr.mxu0 0.0
    %6828 = vmatpush1.msra.mxu0 0.0
    %6829 = vmatprep.subr.mxu0 0.0
    %6830 = vmatpush1.msra.mxu0 0.0
    %6831 = vmatprep.subr.mxu0 0.0
    %6832 = vmatpush1.msra.mxu0 0.0
    %6833 = vmatprep.subr.mxu0 0.0
    %6834 = vmatpush1.msra.mxu0 0.0
    %6835 = vmatprep.subr.mxu0 0.0
    %6836 = vmatpush1.msra.mxu0 0.0
    %6837 = vmatprep.subr.mxu0 0.0
    %6838 = vmatpush1.msra.mxu0 0.0
    %6839 = vmatprep.subr.mxu0 0.0
    %6840 = vmatpush1.msra.mxu0 0.0
    %6841 = vmatprep.subr.mxu0 0.0
    %6842 = vmatpush1.msra.mxu0 0.0
    %6843 = vmatprep.subr.mxu0 0.0
    %6844 = vmatpush1.msra.mxu0 0.0
    %6845 = vmatprep.subr.mxu0 0.0
    %6846 = vmatpush1.msra.mxu0 0.0
    %6847 = vmatprep.subr.mxu0 0.0
    %6848 = vmatpush1.msra.mxu0 0.0
    %6849 = vmatprep.subr.mxu0 0.0
    %6850 = vmatpush1.msra.mxu0 0.0
    %6851 = vmatprep.subr.mxu0 0.0
    %6852 = vmatpush1.msra.mxu0 0.0
    %6853 = vmatprep.subr.mxu0 0.0
    %6854 = vmatpush1.msra.mxu0 0.0
    %6855 = vmatprep.subr.mxu0 0.0
    %6856 = vmatpush1.msra.mxu0 0.0
    %6857 = vmatprep.subr.mxu0 0.0
    %6858 = vmatpush1.msra.mxu0 0.0
    %6859 = vmatprep.subr.mxu0 0.0
    %6860 = vmatpush1.msra.mxu0 0.0
    %6861 = vmatprep.subr.mxu0 0.0
    %6862 = vmatpush1.msra.mxu0 0.0
    %6863 = vmatprep.subr.mxu0 0.0
    %6864 = vmatpush1.msra.mxu0 0.0
    %6865 = vmatprep.subr.mxu0 0.0
    %6866 = vmatpush1.msra.mxu0 0.0
    %6867 = vmatprep.mubr.f32.mxu0 0.0
    %6868 = vmatmul.mubr.f32.gmra.mrb[0].mxu0 %v6799
    %v6869 = vpop.f32.mrb[0].mxu0
    %v6870 = vadd.f32 0.0, %v6869
    %v6871 = vpop.f32.mrb[0].mxu0
    %6872 = vdwg.mxu0
    %6873 = vrot.lane.b32.xlu0 %v6279, 32
    %v6874 = vpop.permute.xlu0 %6873
    %v6877 = vsel %vm519, %v6870, 0
    %6879 = vmatprep.subr.mxu0 0.0
    %6880 = vmatpush1.msra.mxu0 %v6874
    %6881 = vmatprep.subr.mxu0 0.0
    %6882 = vmatpush1.msra.mxu0 0.0
    %6883 = vmatprep.subr.mxu0 0.0
    %6884 = vmatpush1.msra.mxu0 0.0
    %6885 = vmatprep.subr.mxu0 0.0
    %6886 = vmatpush1.msra.mxu0 0.0
    %6887 = vmatprep.subr.mxu0 0.0
    %6888 = vmatpush1.msra.mxu0 0.0
    %6889 = vmatprep.subr.mxu0 0.0
    %6890 = vmatpush1.msra.mxu0 0.0
    %6891 = vmatprep.subr.mxu0 0.0
    %6892 = vmatpush1.msra.mxu0 0.0
    %6893 = vmatprep.subr.mxu0 0.0
    %6894 = vmatpush1.msra.mxu0 0.0
    %6895 = vmatprep.subr.mxu0 0.0
    %6896 = vmatpush1.msra.mxu0 0.0
    %6897 = vmatprep.subr.mxu0 0.0
    %6898 = vmatpush1.msra.mxu0 0.0
    %6899 = vmatprep.subr.mxu0 0.0
    %6900 = vmatpush1.msra.mxu0 0.0
    %6901 = vmatprep.subr.mxu0 0.0
    %6902 = vmatpush1.msra.mxu0 0.0
    %6903 = vmatprep.subr.mxu0 0.0
    %6904 = vmatpush1.msra.mxu0 0.0
    %6905 = vmatprep.subr.mxu0 0.0
    %6906 = vmatpush1.msra.mxu0 0.0
    %6907 = vmatprep.subr.mxu0 0.0
    %6908 = vmatpush1.msra.mxu0 0.0
    %6909 = vmatprep.subr.mxu0 0.0
    %6910 = vmatpush1.msra.mxu0 0.0
    %6911 = vmatprep.subr.mxu0 0.0
    %6912 = vmatpush1.msra.mxu0 0.0
    %6913 = vmatprep.subr.mxu0 0.0
    %6914 = vmatpush1.msra.mxu0 0.0
    %6915 = vmatprep.subr.mxu0 0.0
    %6916 = vmatpush1.msra.mxu0 0.0
    %6917 = vmatprep.subr.mxu0 0.0
    %6918 = vmatpush1.msra.mxu0 0.0
    %6919 = vmatprep.subr.mxu0 0.0
    %6920 = vmatpush1.msra.mxu0 0.0
    %6921 = vmatprep.subr.mxu0 0.0
    %6922 = vmatpush1.msra.mxu0 0.0
    %6923 = vmatprep.subr.mxu0 0.0
    %6924 = vmatpush1.msra.mxu0 0.0
    %6925 = vmatprep.subr.mxu0 0.0
    %6926 = vmatpush1.msra.mxu0 0.0
    %6927 = vmatprep.subr.mxu0 0.0
    %6928 = vmatpush1.msra.mxu0 0.0
    %6929 = vmatprep.subr.mxu0 0.0
    %6930 = vmatpush1.msra.mxu0 0.0
    %6931 = vmatprep.subr.mxu0 0.0
    %6932 = vmatpush1.msra.mxu0 0.0
    %6933 = vmatprep.subr.mxu0 0.0
    %6934 = vmatpush1.msra.mxu0 0.0
    %6935 = vmatprep.subr.mxu0 0.0
    %6936 = vmatpush1.msra.mxu0 0.0
    %6937 = vmatprep.subr.mxu0 0.0
    %6938 = vmatpush1.msra.mxu0 0.0
    %6939 = vmatprep.subr.mxu0 0.0
    %6940 = vmatpush1.msra.mxu0 0.0
    %6941 = vmatprep.subr.mxu0 0.0
    %6942 = vmatpush1.msra.mxu0 0.0
    %6943 = vmatprep.mubr.f32.mxu0 0.0
    %6944 = vmatmul.mubr.f32.gmra.mrb[0].mxu0 %v6877
    %v6945 = vpop.f32.mrb[0].mxu0
    %v6946 = vadd.f32 0.0, %v6945
    %v6947 = vpop.f32.mrb[0].mxu0
    %6948 = vdwg.mxu0
    %6949 = vrot.lane.b32.xlu0 %v6277, 32
    %v6950 = vpop.permute.xlu0 %6949
    %v6953 = vsel %vm519, %v6704, 0
    %6955 = vmatprep.subr.mxu0 0.0
    %6956 = vmatpush1.msra.mxu0 %v6950
    %6957 = vmatprep.subr.mxu0 0.0
    %6958 = vmatpush1.msra.mxu0 0.0
    %6959 = vmatprep.subr.mxu0 0.0
    %6960 = vmatpush1.msra.mxu0 0.0
    %6961 = vmatprep.subr.mxu0 0.0
    %6962 = vmatpush1.msra.mxu0 0.0
    %6963 = vmatprep.subr.mxu0 0.0
    %6964 = vmatpush1.msra.mxu0 0.0
    %6965 = vmatprep.subr.mxu0 0.0
    %6966 = vmatpush1.msra.mxu0 0.0
    %6967 = vmatprep.subr.mxu0 0.0
    %6968 = vmatpush1.msra.mxu0 0.0
    %6969 = vmatprep.subr.mxu0 0.0
    %6970 = vmatpush1.msra.mxu0 0.0
    %6971 = vmatprep.subr.mxu0 0.0
    %6972 = vmatpush1.msra.mxu0 0.0
    %6973 = vmatprep.subr.mxu0 0.0
    %6974 = vmatpush1.msra.mxu0 0.0
    %6975 = vmatprep.subr.mxu0 0.0
    %6976 = vmatpush1.msra.mxu0 0.0
    %6977 = vmatprep.subr.mxu0 0.0
    %6978 = vmatpush1.msra.mxu0 0.0
    %6979 = vmatprep.subr.mxu0 0.0
    %6980 = vmatpush1.msra.mxu0 0.0
    %6981 = vmatprep.subr.mxu0 0.0
    %6982 = vmatpush1.msra.mxu0 0.0
    %6983 = vmatprep.subr.mxu0 0.0
    %6984 = vmatpush1.msra.mxu0 0.0
    %6985 = vmatprep.subr.mxu0 0.0
    %6986 = vmatpush1.msra.mxu0 0.0
    %6987 = vmatprep.subr.mxu0 0.0
    %6988 = vmatpush1.msra.mxu0 0.0
    %6989 = vmatprep.subr.mxu0 0.0
    %6990 = vmatpush1.msra.mxu0 0.0
    %6991 = vmatprep.subr.mxu0 0.0
    %6992 = vmatpush1.msra.mxu0 0.0
    %6993 = vmatprep.subr.mxu0 0.0
    %6994 = vmatpush1.msra.mxu0 0.0
    %6995 = vmatprep.subr.mxu0 0.0
    %6996 = vmatpush1.msra.mxu0 0.0
    %6997 = vmatprep.subr.mxu0 0.0
    %6998 = vmatpush1.msra.mxu0 0.0
    %6999 = vmatprep.subr.mxu0 0.0
    %7000 = vmatpush1.msra.mxu0 0.0
    %7001 = vmatprep.subr.mxu0 0.0
    %7002 = vmatpush1.msra.mxu0 0.0
    %7003 = vmatprep.subr.mxu0 0.0
    %7004 = vmatpush1.msra.mxu0 0.0
    %7005 = vmatprep.subr.mxu0 0.0
    %7006 = vmatpush1.msra.mxu0 0.0
    %7007 = vmatprep.subr.mxu0 0.0
    %7008 = vmatpush1.msra.mxu0 0.0
    %7009 = vmatprep.subr.mxu0 0.0
    %7010 = vmatpush1.msra.mxu0 0.0
    %7011 = vmatprep.subr.mxu0 0.0
    %7012 = vmatpush1.msra.mxu0 0.0
    %7013 = vmatprep.subr.mxu0 0.0
    %7014 = vmatpush1.msra.mxu0 0.0
    %7015 = vmatprep.subr.mxu0 0.0
    %7016 = vmatpush1.msra.mxu0 0.0
    %7017 = vmatprep.subr.mxu0 0.0
    %7018 = vmatpush1.msra.mxu0 0.0
    %7019 = vmatprep.mubr.f32.mxu0 0.0
    %7020 = vmatmul.mubr.f32.gmra.mrb[0].mxu0 %v6953
    %v7021 = vpop.f32.mrb[0].mxu0
    %v7022 = vadd.f32 %v6946, %v7021
    %v7023 = vpop.f32.mrb[0].mxu0
    %7024 = vdwg.mxu0
    %7025 = vrot.lane.b32.xlu0 %v6540, 112
    %v7026 = vpop.permute.xlu0 %7025
    %7027 = vrot.lane.b32.xlu0 %v6451, 112
    %v7028 = vpop.permute.xlu0 %7027
    %v7029 = vsel %vm519, %v7026, 0
    %v7031 = vsel %vm519, %v7028, 0
    %7033 = vmatprep.subr.mxu0 0.0
    %7034 = vmatpush1.xpose.msra.mxu0 %v7031
    %7035 = vmatprep.subr.mxu0 0.0
    %7036 = vmatpush1.xpose.msra.mxu0 0.0
    %7037 = vmatprep.subr.mxu0 0.0
    %7038 = vmatpush1.xpose.msra.mxu0 0.0
    %7039 = vmatprep.subr.mxu0 0.0
    %7040 = vmatpush1.xpose.msra.mxu0 0.0
    %7041 = vmatprep.subr.mxu0 0.0
    %7042 = vmatpush1.xpose.msra.mxu0 0.0
    %7043 = vmatprep.subr.mxu0 0.0
    %7044 = vmatpush1.xpose.msra.mxu0 0.0
    %7045 = vmatprep.subr.mxu0 0.0
    %7046 = vmatpush1.xpose.msra.mxu0 0.0
    %7047 = vmatprep.subr.mxu0 0.0
    %7048 = vmatpush1.xpose.msra.mxu0 0.0
    %7049 = vmatprep.subr.mxu0 0.0
    %7050 = vmatpush1.xpose.msra.mxu0 0.0
    %7051 = vmatprep.subr.mxu0 0.0
    %7052 = vmatpush1.xpose.msra.mxu0 0.0
    %7053 = vmatprep.subr.mxu0 0.0
    %7054 = vmatpush1.xpose.msra.mxu0 0.0
    %7055 = vmatprep.subr.mxu0 0.0
    %7056 = vmatpush1.xpose.msra.mxu0 0.0
    %7057 = vmatprep.subr.mxu0 0.0
    %7058 = vmatpush1.xpose.msra.mxu0 0.0
    %7059 = vmatprep.subr.mxu0 0.0
    %7060 = vmatpush1.xpose.msra.mxu0 0.0
    %7061 = vmatprep.subr.mxu0 0.0
    %7062 = vmatpush1.xpose.msra.mxu0 0.0
    %7063 = vmatprep.subr.mxu0 0.0
    %7064 = vmatpush1.xpose.msra.mxu0 0.0
    %7065 = vmatprep.subr.mxu0 0.0
    %7066 = vmatpush1.xpose.msra.mxu0 0.0
    %7067 = vmatprep.subr.mxu0 0.0
    %7068 = vmatpush1.xpose.msra.mxu0 0.0
    %7069 = vmatprep.subr.mxu0 0.0
    %7070 = vmatpush1.xpose.msra.mxu0 0.0
    %7071 = vmatprep.subr.mxu0 0.0
    %7072 = vmatpush1.xpose.msra.mxu0 0.0
    %7073 = vmatprep.subr.mxu0 0.0
    %7074 = vmatpush1.xpose.msra.mxu0 0.0
    %7075 = vmatprep.subr.mxu0 0.0
    %7076 = vmatpush1.xpose.msra.mxu0 0.0
    %7077 = vmatprep.subr.mxu0 0.0
    %7078 = vmatpush1.xpose.msra.mxu0 0.0
    %7079 = vmatprep.subr.mxu0 0.0
    %7080 = vmatpush1.xpose.msra.mxu0 0.0
    %7081 = vmatprep.subr.mxu0 0.0
    %7082 = vmatpush1.xpose.msra.mxu0 0.0
    %7083 = vmatprep.subr.mxu0 0.0
    %7084 = vmatpush1.xpose.msra.mxu0 0.0
    %7085 = vmatprep.subr.mxu0 0.0
    %7086 = vmatpush1.xpose.msra.mxu0 0.0
    %7087 = vmatprep.subr.mxu0 0.0
    %7088 = vmatpush1.xpose.msra.mxu0 0.0
    %7089 = vmatprep.subr.mxu0 0.0
    %7090 = vmatpush1.xpose.msra.mxu0 0.0
    %7091 = vmatprep.subr.mxu0 0.0
    %7092 = vmatpush1.xpose.msra.mxu0 0.0
    %7093 = vmatprep.subr.mxu0 0.0
    %7094 = vmatpush1.xpose.msra.mxu0 0.0
    %7095 = vmatprep.subr.mxu0 0.0
    %7096 = vmatpush1.xpose.msra.mxu0 0.0
    %7097 = vmatprep.mubr.f32.mxu0 0.0
    %7098 = vmatmul.mubr.f32.gmra.mrb[0].mxu0 %v7029
    %v7099 = vpop.f32.mrb[0].mxu0
    %v7100 = vadd.f32 0.0, %v7099
    %v7101 = vpop.f32.mrb[0].mxu0
    %7102 = vdwg.mxu0
    %v7103 = vsel %vm6617, %v7100, -inf
    %7104 = vmax.xlane.f32.xlu0 %v7103
    %v7105 = vpop.xlane.xlu0 %7104
    %v7106 = vsub.f32 %v7100, %v7105
    %v7107 = vmul.f32 %v7106, 1.442695
    %v7108 = vpow.pop %v7107
    %v7109 = vsel %vm6617, %v7108, 0.0
    %7110 = vadd.xlane.f32.xlu0 %v7109
    %v7111 = vpop.xlane.xlu0 %7110
    %v7112 = vrcp.pop %v7111
    %v7113 = vmul.f32 %v7108, %v7112
    %7114 = vrot.lane.b32.xlu0 %v6537, 112
    %v7115 = vpop.permute.xlu0 %7114
    %v7117 = vsel %vm6629, %v7113, 0
    %v7119 = vsel %vm6633, %v7115, 0
    %7121 = vmatprep.subr.mxu0 0.0
    %7122 = vmatpush1.msra.mxu0 %v7119
    %7123 = vmatprep.subr.mxu0 0.0
    %7124 = vmatpush1.msra.mxu0 0.0
    %7125 = vmatprep.subr.mxu0 0.0
    %7126 = vmatpush1.msra.mxu0 0.0
    %7127 = vmatprep.subr.mxu0 0.0
    %7128 = vmatpush1.msra.mxu0 0.0
    %7129 = vmatprep.subr.mxu0 0.0
    %7130 = vmatpush1.msra.mxu0 0.0
    %7131 = vmatprep.subr.mxu0 0.0
    %7132 = vmatpush1.msra.mxu0 0.0
    %7133 = vmatprep.subr.mxu0 0.0
    %7134 = vmatpush1.msra.mxu0 0.0
    %7135 = vmatprep.subr.mxu0 0.0
    %7136 = vmatpush1.msra.mxu0 0.0
    %7137 = vmatprep.subr.mxu0 0.0
    %7138 = vmatpush1.msra.mxu0 0.0
    %7139 = vmatprep.subr.mxu0 0.0
    %7140 = vmatpush1.msra.mxu0 0.0
    %7141 = vmatprep.subr.mxu0 0.0
    %7142 = vmatpush1.msra.mxu0 0.0
    %7143 = vmatprep.subr.mxu0 0.0
    %7144 = vmatpush1.msra.mxu0 0.0
    %7145 = vmatprep.subr.mxu0 0.0
    %7146 = vmatpush1.msra.mxu0 0.0
    %7147 = vmatprep.subr.mxu0 0.0
    %7148 = vmatpush1.msra.mxu0 0.0
    %7149 = vmatprep.subr.mxu0 0.0
    %7150 = vmatpush1.msra.mxu0 0.0
    %7151 = vmatprep.subr.mxu0 0.0
    %7152 = vmatpush1.msra.mxu0 0.0
    %7153 = vmatprep.subr.mxu0 0.0
    %7154 = vmatpush1.msra.mxu0 0.0
    %7155 = vmatprep.subr.mxu0 0.0
    %7156 = vmatpush1.msra.mxu0 0.0
    %7157 = vmatprep.subr.mxu0 0.0
    %7158 = vmatpush1.msra.mxu0 0.0
    %7159 = vmatprep.subr.mxu0 0.0
    %7160 = vmatpush1.msra.mxu0 0.0
    %7161 = vmatprep.subr.mxu0 0.0
    %7162 = vmatpush1.msra.mxu0 0.0
    %7163 = vmatprep.subr.mxu0 0.0
    %7164 = vmatpush1.msra.mxu0 0.0
    %7165 = vmatprep.subr.mxu0 0.0
    %7166 = vmatpush1.msra.mxu0 0.0
    %7167 = vmatprep.subr.mxu0 0.0
    %7168 = vmatpush1.msra.mxu0 0.0
    %7169 = vmatprep.subr.mxu0 0.0
    %7170 = vmatpush1.msra.mxu0 0.0
    %7171 = vmatprep.subr.mxu0 0.0
    %7172 = vmatpush1.msra.mxu0 0.0
    %7173 = vmatprep.subr.mxu0 0.0
    %7174 = vmatpush1.msra.mxu0 0.0
    %7175 = vmatprep.subr.mxu0 0.0
    %7176 = vmatpush1.msra.mxu0 0.0
    %7177 = vmatprep.subr.mxu0 0.0
    %7178 = vmatpush1.msra.mxu0 0.0
    %7179 = vmatprep.subr.mxu0 0.0
    %7180 = vmatpush1.msra.mxu0 0.0
    %7181 = vmatprep.subr.mxu0 0.0
    %7182 = vmatpush1.msra.mxu0 0.0
    %7183 = vmatprep.subr.mxu0 0.0
    %7184 = vmatpush1.msra.mxu0 0.0
    %7185 = vmatprep.mubr.f32.mxu0 0.0
    %7186 = vmatmul.mubr.f32.gmra.mrb[0].mxu0 %v7117
    %v7187 = vpop.f32.mrb[0].mxu0
    %v7188 = vadd.f32 0.0, %v7187
    %v7189 = vpop.f32.mrb[0].mxu0
    %7190 = vdwg.mxu0
    %7191 = vrot.lane.b32.xlu0 %v6281, 32
    %v7192 = vpop.permute.xlu0 %7191
    %v7195 = vsel %vm519, %v7188, 0
    %7197 = vmatprep.subr.mxu0 0.0
    %7198 = vmatpush1.msra.mxu0 %v7192
    %7199 = vmatprep.subr.mxu0 0.0
    %7200 = vmatpush1.msra.mxu0 0.0
    %7201 = vmatprep.subr.mxu0 0.0
    %7202 = vmatpush1.msra.mxu0 0.0
    %7203 = vmatprep.subr.mxu0 0.0
    %7204 = vmatpush1.msra.mxu0 0.0
    %7205 = vmatprep.subr.mxu0 0.0
    %7206 = vmatpush1.msra.mxu0 0.0
    %7207 = vmatprep.subr.mxu0 0.0
    %7208 = vmatpush1.msra.mxu0 0.0
    %7209 = vmatprep.subr.mxu0 0.0
    %7210 = vmatpush1.msra.mxu0 0.0
    %7211 = vmatprep.subr.mxu0 0.0
    %7212 = vmatpush1.msra.mxu0 0.0
    %7213 = vmatprep.subr.mxu0 0.0
    %7214 = vmatpush1.msra.mxu0 0.0
    %7215 = vmatprep.subr.mxu0 0.0
    %7216 = vmatpush1.msra.mxu0 0.0
    %7217 = vmatprep.subr.mxu0 0.0
    %7218 = vmatpush1.msra.mxu0 0.0
    %7219 = vmatprep.subr.mxu0 0.0
    %7220 = vmatpush1.msra.mxu0 0.0
    %7221 = vmatprep.subr.mxu0 0.0
    %7222 = vmatpush1.msra.mxu0 0.0
    %7223 = vmatprep.subr.mxu0 0.0
    %7224 = vmatpush1.msra.mxu0 0.0
    %7225 = vmatprep.subr.mxu0 0.0
    %7226 = vmatpush1.msra.mxu0 0.0
    %7227 = vmatprep.subr.mxu0 0.0
    %7228 = vmatpush1.msra.mxu0 0.0
    %7229 = vmatprep.subr.mxu0 0.0
    %7230 = vmatpush1.msra.mxu0 0.0
    %7231 = vmatprep.subr.mxu0 0.0
    %7232 = vmatpush1.msra.mxu0 0.0
    %7233 = vmatprep.subr.mxu0 0.0
    %7234 = vmatpush1.msra.mxu0 0.0
    %7235 = vmatprep.subr.mxu0 0.0
    %7236 = vmatpush1.msra.mxu0 0.0
    %7237 = vmatprep.subr.mxu0 0.0
    %7238 = vmatpush1.msra.mxu0 0.0
    %7239 = vmatprep.subr.mxu0 0.0
    %7240 = vmatpush1.msra.mxu0 0.0
    %7241 = vmatprep.subr.mxu0 0.0
    %7242 = vmatpush1.msra.mxu0 0.0
    %7243 = vmatprep.subr.mxu0 0.0
    %7244 = vmatpush1.msra.mxu0 0.0
    %7245 = vmatprep.subr.mxu0 0.0
    %7246 = vmatpush1.msra.mxu0 0.0
    %7247 = vmatprep.subr.mxu0 0.0
    %7248 = vmatpush1.msra.mxu0 0.0
    %7249 = vmatprep.subr.mxu0 0.0
    %7250 = vmatpush1.msra.mxu0 0.0
    %7251 = vmatprep.subr.mxu0 0.0
    %7252 = vmatpush1.msra.mxu0 0.0
    %7253 = vmatprep.subr.mxu0 0.0
    %7254 = vmatpush1.msra.mxu0 0.0
    %7255 = vmatprep.subr.mxu0 0.0
    %7256 = vmatpush1.msra.mxu0 0.0
    %7257 = vmatprep.subr.mxu0 0.0
    %7258 = vmatpush1.msra.mxu0 0.0
    %7259 = vmatprep.subr.mxu0 0.0
    %7260 = vmatpush1.msra.mxu0 0.0
    %7261 = vmatprep.mubr.f32.mxu0 0.0
    %7262 = vmatmul.mubr.f32.gmra.mrb[0].mxu0 %v7195
    %v7263 = vpop.f32.mrb[0].mxu0
    %v7264 = vadd.f32 0.0, %v7263
    %v7265 = vpop.f32.mrb[0].mxu0
    %7266 = vdwg.mxu0
    %v7267 = vadd.f32 %v7022, %v7264
    %7268 = vrot.lane.b32.xlu0 %v6540, 104
    %v7269 = vpop.permute.xlu0 %7268
    %7270 = vrot.lane.b32.xlu0 %v6451, 104
    %v7271 = vpop.permute.xlu0 %7270
    %v7272 = vsel %vm519, %v7269, 0
    %v7274 = vsel %vm519, %v7271, 0
    %7276 = vmatprep.subr.mxu0 0.0
    %7277 = vmatpush1.xpose.msra.mxu0 %v7274
    %7278 = vmatprep.subr.mxu0 0.0
    %7279 = vmatpush1.xpose.msra.mxu0 0.0
    %7280 = vmatprep.subr.mxu0 0.0
    %7281 = vmatpush1.xpose.msra.mxu0 0.0
    %7282 = vmatprep.subr.mxu0 0.0
    %7283 = vmatpush1.xpose.msra.mxu0 0.0
    %7284 = vmatprep.subr.mxu0 0.0
    %7285 = vmatpush1.xpose.msra.mxu0 0.0
    %7286 = vmatprep.subr.mxu0 0.0
    %7287 = vmatpush1.xpose.msra.mxu0 0.0
    %7288 = vmatprep.subr.mxu0 0.0
    %7289 = vmatpush1.xpose.msra.mxu0 0.0
    %7290 = vmatprep.subr.mxu0 0.0
    %7291 = vmatpush1.xpose.msra.mxu0 0.0
    %7292 = vmatprep.subr.mxu0 0.0
    %7293 = vmatpush1.xpose.msra.mxu0 0.0
    %7294 = vmatprep.subr.mxu0 0.0
    %7295 = vmatpush1.xpose.msra.mxu0 0.0
    %7296 = vmatprep.subr.mxu0 0.0
    %7297 = vmatpush1.xpose.msra.mxu0 0.0
    %7298 = vmatprep.subr.mxu0 0.0
    %7299 = vmatpush1.xpose.msra.mxu0 0.0
    %7300 = vmatprep.subr.mxu0 0.0
    %7301 = vmatpush1.xpose.msra.mxu0 0.0
    %7302 = vmatprep.subr.mxu0 0.0
    %7303 = vmatpush1.xpose.msra.mxu0 0.0
    %7304 = vmatprep.subr.mxu0 0.0
    %7305 = vmatpush1.xpose.msra.mxu0 0.0
    %7306 = vmatprep.subr.mxu0 0.0
    %7307 = vmatpush1.xpose.msra.mxu0 0.0
    %7308 = vmatprep.subr.mxu0 0.0
    %7309 = vmatpush1.xpose.msra.mxu0 0.0
    %7310 = vmatprep.subr.mxu0 0.0
    %7311 = vmatpush1.xpose.msra.mxu0 0.0
    %7312 = vmatprep.subr.mxu0 0.0
    %7313 = vmatpush1.xpose.msra.mxu0 0.0
    %7314 = vmatprep.subr.mxu0 0.0
    %7315 = vmatpush1.xpose.msra.mxu0 0.0
    %7316 = vmatprep.subr.mxu0 0.0
    %7317 = vmatpush1.xpose.msra.mxu0 0.0
    %7318 = vmatprep.subr.mxu0 0.0
    %7319 = vmatpush1.xpose.msra.mxu0 0.0
    %7320 = vmatprep.subr.mxu0 0.0
    %7321 = vmatpush1.xpose.msra.mxu0 0.0
    %7322 = vmatprep.subr.mxu0 0.0
    %7323 = vmatpush1.xpose.msra.mxu0 0.0
    %7324 = vmatprep.subr.mxu0 0.0
    %7325 = vmatpush1.xpose.msra.mxu0 0.0
    %7326 = vmatprep.subr.mxu0 0.0
    %7327 = vmatpush1.xpose.msra.mxu0 0.0
    %7328 = vmatprep.subr.mxu0 0.0
    %7329 = vmatpush1.xpose.msra.mxu0 0.0
    %7330 = vmatprep.subr.mxu0 0.0
    %7331 = vmatpush1.xpose.msra.mxu0 0.0
    %7332 = vmatprep.subr.mxu0 0.0
    %7333 = vmatpush1.xpose.msra.mxu0 0.0
    %7334 = vmatprep.subr.mxu0 0.0
    %7335 = vmatpush1.xpose.msra.mxu0 0.0
    %7336 = vmatprep.subr.mxu0 0.0
    %7337 = vmatpush1.xpose.msra.mxu0 0.0
    %7338 = vmatprep.subr.mxu0 0.0
    %7339 = vmatpush1.xpose.msra.mxu0 0.0
    %7340 = vmatprep.mubr.f32.mxu0 0.0
    %7341 = vmatmul.mubr.f32.gmra.mrb[0].mxu0 %v7272
    %v7342 = vpop.f32.mrb[0].mxu0
    %v7343 = vadd.f32 0.0, %v7342
    %v7344 = vpop.f32.mrb[0].mxu0
    %7345 = vdwg.mxu0
    %v7346 = vsel %vm6617, %v7343, -inf
    %7347 = vmax.xlane.f32.xlu0 %v7346
    %v7348 = vpop.xlane.xlu0 %7347
    %v7349 = vsub.f32 %v7343, %v7348
    %v7350 = vmul.f32 %v7349, 1.442695
    %v7351 = vpow.pop %v7350
    %v7352 = vsel %vm6617, %v7351, 0.0
    %7353 = vadd.xlane.f32.xlu0 %v7352
    %v7354 = vpop.xlane.xlu0 %7353
    %v7355 = vrcp.pop %v7354
    %v7356 = vmul.f32 %v7351, %v7355
    %7357 = vrot.lane.b32.xlu0 %v6537, 104
    %v7358 = vpop.permute.xlu0 %7357
    %v7360 = vsel %vm6629, %v7356, 0
    %v7362 = vsel %vm6633, %v7358, 0
    %7364 = vmatprep.subr.mxu0 0.0
    %7365 = vmatpush1.msra.mxu0 %v7362
    %7366 = vmatprep.subr.mxu0 0.0
    %7367 = vmatpush1.msra.mxu0 0.0
    %7368 = vmatprep.subr.mxu0 0.0
    %7369 = vmatpush1.msra.mxu0 0.0
    %7370 = vmatprep.subr.mxu0 0.0
    %7371 = vmatpush1.msra.mxu0 0.0
    %7372 = vmatprep.subr.mxu0 0.0
    %7373 = vmatpush1.msra.mxu0 0.0
    %7374 = vmatprep.subr.mxu0 0.0
    %7375 = vmatpush1.msra.mxu0 0.0
    %7376 = vmatprep.subr.mxu0 0.0
    %7377 = vmatpush1.msra.mxu0 0.0
    %7378 = vmatprep.subr.mxu0 0.0
    %7379 = vmatpush1.msra.mxu0 0.0
    %7380 = vmatprep.subr.mxu0 0.0
    %7381 = vmatpush1.msra.mxu0 0.0
    %7382 = vmatprep.subr.mxu0 0.0
    %7383 = vmatpush1.msra.mxu0 0.0
    %7384 = vmatprep.subr.mxu0 0.0
    %7385 = vmatpush1.msra.mxu0 0.0
    %7386 = vmatprep.subr.mxu0 0.0
    %7387 = vmatpush1.msra.mxu0 0.0
    %7388 = vmatprep.subr.mxu0 0.0
    %7389 = vmatpush1.msra.mxu0 0.0
    %7390 = vmatprep.subr.mxu0 0.0
    %7391 = vmatpush1.msra.mxu0 0.0
    %7392 = vmatprep.subr.mxu0 0.0
    %7393 = vmatpush1.msra.mxu0 0.0
    %7394 = vmatprep.subr.mxu0 0.0
    %7395 = vmatpush1.msra.mxu0 0.0
    %7396 = vmatprep.subr.mxu0 0.0
    %7397 = vmatpush1.msra.mxu0 0.0
    %7398 = vmatprep.subr.mxu0 0.0
    %7399 = vmatpush1.msra.mxu0 0.0
    %7400 = vmatprep.subr.mxu0 0.0
    %7401 = vmatpush1.msra.mxu0 0.0
    %7402 = vmatprep.subr.mxu0 0.0
    %7403 = vmatpush1.msra.mxu0 0.0
    %7404 = vmatprep.subr.mxu0 0.0
    %7405 = vmatpush1.msra.mxu0 0.0
    %7406 = vmatprep.subr.mxu0 0.0
    %7407 = vmatpush1.msra.mxu0 0.0
    %7408 = vmatprep.subr.mxu0 0.0
    %7409 = vmatpush1.msra.mxu0 0.0
    %7410 = vmatprep.subr.mxu0 0.0
    %7411 = vmatpush1.msra.mxu0 0.0
    %7412 = vmatprep.subr.mxu0 0.0
    %7413 = vmatpush1.msra.mxu0 0.0
    %7414 = vmatprep.subr.mxu0 0.0
    %7415 = vmatpush1.msra.mxu0 0.0
    %7416 = vmatprep.subr.mxu0 0.0
    %7417 = vmatpush1.msra.mxu0 0.0
    %7418 = vmatprep.subr.mxu0 0.0
    %7419 = vmatpush1.msra.mxu0 0.0
    %7420 = vmatprep.subr.mxu0 0.0
    %7421 = vmatpush1.msra.mxu0 0.0
    %7422 = vmatprep.subr.mxu0 0.0
    %7423 = vmatpush1.msra.mxu0 0.0
    %7424 = vmatprep.subr.mxu0 0.0
    %7425 = vmatpush1.msra.mxu0 0.0
    %7426 = vmatprep.subr.mxu0 0.0
    %7427 = vmatpush1.msra.mxu0 0.0
    %7428 = vmatprep.mubr.f32.mxu0 0.0
    %7429 = vmatmul.mubr.f32.gmra.mrb[0].mxu0 %v7360
    %v7430 = vpop.f32.mrb[0].mxu0
    %v7431 = vadd.f32 0.0, %v7430
    %v7432 = vpop.f32.mrb[0].mxu0
    %7433 = vdwg.mxu0
    %7434 = vrot.lane.b32.xlu0 %v6283, 32
    %v7435 = vpop.permute.xlu0 %7434
    %v7438 = vsel %vm519, %v7431, 0
    %7440 = vmatprep.subr.mxu0 0.0
    %7441 = vmatpush1.msra.mxu0 %v7435
    %7442 = vmatprep.subr.mxu0 0.0
    %7443 = vmatpush1.msra.mxu0 0.0
    %7444 = vmatprep.subr.mxu0 0.0
    %7445 = vmatpush1.msra.mxu0 0.0
    %7446 = vmatprep.subr.mxu0 0.0
    %7447 = vmatpush1.msra.mxu0 0.0
    %7448 = vmatprep.subr.mxu0 0.0
    %7449 = vmatpush1.msra.mxu0 0.0
    %7450 = vmatprep.subr.mxu0 0.0
    %7451 = vmatpush1.msra.mxu0 0.0
    %7452 = vmatprep.subr.mxu0 0.0
    %7453 = vmatpush1.msra.mxu0 0.0
    %7454 = vmatprep.subr.mxu0 0.0
    %7455 = vmatpush1.msra.mxu0 0.0
    %7456 = vmatprep.subr.mxu0 0.0
    %7457 = vmatpush1.msra.mxu0 0.0
    %7458 = vmatprep.subr.mxu0 0.0
    %7459 = vmatpush1.msra.mxu0 0.0
    %7460 = vmatprep.subr.mxu0 0.0
    %7461 = vmatpush1.msra.mxu0 0.0
    %7462 = vmatprep.subr.mxu0 0.0
    %7463 = vmatpush1.msra.mxu0 0.0
    %7464 = vmatprep.subr.mxu0 0.0
    %7465 = vmatpush1.msra.mxu0 0.0
    %7466 = vmatprep.subr.mxu0 0.0
    %7467 = vmatpush1.msra.mxu0 0.0
    %7468 = vmatprep.subr.mxu0 0.0
    %7469 = vmatpush1.msra.mxu0 0.0
    %7470 = vmatprep.subr.mxu0 0.0
    %7471 = vmatpush1.msra.mxu0 0.0
    %7472 = vmatprep.subr.mxu0 0.0
    %7473 = vmatpush1.msra.mxu0 0.0
    %7474 = vmatprep.subr.mxu0 0.0
    %7475 = vmatpush1.msra.mxu0 0.0
    %7476 = vmatprep.subr.mxu0 0.0
    %7477 = vmatpush1.msra.mxu0 0.0
    %7478 = vmatprep.subr.mxu0 0.0
    %7479 = vmatpush1.msra.mxu0 0.0
    %7480 = vmatprep.subr.mxu0 0.0
    %7481 = vmatpush1.msra.mxu0 0.0
    %7482 = vmatprep.subr.mxu0 0.0
    %7483 = vmatpush1.msra.mxu0 0.0
    %7484 = vmatprep.subr.mxu0 0.0
    %7485 = vmatpush1.msra.mxu0 0.0
    %7486 = vmatprep.subr.mxu0 0.0
    %7487 = vmatpush1.msra.mxu0 0.0
    %7488 = vmatprep.subr.mxu0 0.0
    %7489 = vmatpush1.msra.mxu0 0.0
    %7490 = vmatprep.subr.mxu0 0.0
    %7491 = vmatpush1.msra.mxu0 0.0
    %7492 = vmatprep.subr.mxu0 0.0
    %7493 = vmatpush1.msra.mxu0 0.0
    %7494 = vmatprep.subr.mxu0 0.0
    %7495 = vmatpush1.msra.mxu0 0.0
    %7496 = vmatprep.subr.mxu0 0.0
    %7497 = vmatpush1.msra.mxu0 0.0
    %7498 = vmatprep.subr.mxu0 0.0
    %7499 = vmatpush1.msra.mxu0 0.0
    %7500 = vmatprep.subr.mxu0 0.0
    %7501 = vmatpush1.msra.mxu0 0.0
    %7502 = vmatprep.subr.mxu0 0.0
    %7503 = vmatpush1.msra.mxu0 0.0
    %7504 = vmatprep.mubr.f32.mxu0 0.0
    %7505 = vmatmul.mubr.f32.gmra.mrb[0].mxu0 %v7438
    %v7506 = vpop.f32.mrb[0].mxu0
    %v7507 = vadd.f32 0.0, %v7506
    %v7508 = vpop.f32.mrb[0].mxu0
    %7509 = vdwg.mxu0
    %v7510 = vadd.f32 %v7267, %v7507
    %v7511 = vlaneseq
    %v7512 = vshrl.u32 %v7511, 7
    %v7513 = vsub.s32 3, %v7512
    %v7514 = vrot.slane %v6285, %v7513
    %v7515 = vadd.f32 %v7510, %v7514
    %v7516 = vadd.f32 %v6276, %v7515
    %vm7517 = vcmask 257024
    %v7518 = vsel %vm7517, %v7516, 0.0
    %7519 = vadd.xlane.f32.xlu0 %v7518
    %v7520 = vpop.xlane.xlu0 %7519
    %v7521 = vmul.f32 %v7520, %v2717
    %v7522 = vsub.f32 %v7516, %v7521
    %v7523 = vmul.f32 %v7522, %v7522
    %v7524 = vsel %vm7517, %v7523, 0.0
    %7525 = vadd.xlane.f32.xlu0 %v7524
    %v7526 = vpop.xlane.xlu0 %7525
    %v7527 = vmul.f32 %v7526, %v2717
    %v7528 = vadd.f32 %v7527, 1e-05
    %v7529 = vrsqrt.pop %v7528
    %v7530 = vmul.f32 %v7522, %v7529
    %v7531 = vlaneseq
    %v7532 = vshrl.u32 %v7531, 7
    %v7533 = vsub.s32 6, %v7532
    %v7534 = vrot.slane %v6285, %v7533
    %v7535 = vmul.f32 %v7530, %v7534
    %v7536 = vlaneseq
    %v7537 = vshrl.u32 %v7536, 7
    %v7538 = vsub.s32 7, %v7537
    %v7539 = vrot.slane %v6285, %v7538
    %v7540 = vadd.f32 %v7535, %v7539
    %v7541 = vlaneseq
    %v7542 = vshrl.u32 %v7541, 7
    %v7543 = vsub.s32 4, %v7542
    %v7544 = vrot.slane %v6285, %v7543
    %v7546 = vsel %vm135, %v7540, 0
    %7548 = vmatprep.subr.mxu0 0.0
    %7549 = vmatpush1.msra.mxu0 %v6278
    %7550 = vmatprep.subr.mxu0 0.0
    %7551 = vmatpush1.msra.mxu0 %v6280
    %7552 = vmatprep.subr.mxu0 0.0
    %7553 = vmatpush1.msra.mxu0 %v6282
    %7554 = vmatprep.subr.mxu0 0.0
    %7555 = vmatpush1.msra.mxu0 %v6284
    %7556 = vmatprep.subr.mxu0 0.0
    %7557 = vmatpush1.msra.mxu0 0.0
    %7558 = vmatprep.subr.mxu0 0.0
    %7559 = vmatpush1.msra.mxu0 0.0
    %7560 = vmatprep.subr.mxu0 0.0
    %7561 = vmatpush1.msra.mxu0 0.0
    %7562 = vmatprep.subr.mxu0 0.0
    %7563 = vmatpush1.msra.mxu0 0.0
    %7564 = vmatprep.subr.mxu0 0.0
    %7565 = vmatpush1.msra.mxu0 0.0
    %7566 = vmatprep.subr.mxu0 0.0
    %7567 = vmatpush1.msra.mxu0 0.0
    %7568 = vmatprep.subr.mxu0 0.0
    %7569 = vmatpush1.msra.mxu0 0.0
    %7570 = vmatprep.subr.mxu0 0.0
    %7571 = vmatpush1.msra.mxu0 0.0
    %7572 = vmatprep.subr.mxu0 0.0
    %7573 = vmatpush1.msra.mxu0 0.0
    %7574 = vmatprep.subr.mxu0 0.0
    %7575 = vmatpush1.msra.mxu0 0.0
    %7576 = vmatprep.subr.mxu0 0.0
    %7577 = vmatpush1.msra.mxu0 0.0
    %7578 = vmatprep.subr.mxu0 0.0
    %7579 = vmatpush1.msra.mxu0 0.0
    %7580 = vmatprep.subr.mxu0 0.0
    %7581 = vmatpush1.msra.mxu0 0.0
    %7582 = vmatprep.subr.mxu0 0.0
    %7583 = vmatpush1.msra.mxu0 0.0
    %7584 = vmatprep.subr.mxu0 0.0
    %7585 = vmatpush1.msra.mxu0 0.0
    %7586 = vmatprep.subr.mxu0 0.0
    %7587 = vmatpush1.msra.mxu0 0.0
    %7588 = vmatprep.subr.mxu0 0.0
    %7589 = vmatpush1.msra.mxu0 0.0
    %7590 = vmatprep.subr.mxu0 0.0
    %7591 = vmatpush1.msra.mxu0 0.0
    %7592 = vmatprep.subr.mxu0 0.0
    %7593 = vmatpush1.msra.mxu0 0.0
    %7594 = vmatprep.subr.mxu0 0.0
    %7595 = vmatpush1.msra.mxu0 0.0
    %7596 = vmatprep.subr.mxu0 0.0
    %7597 = vmatpush1.msra.mxu0 0.0
    %7598 = vmatprep.subr.mxu0 0.0
    %7599 = vmatpush1.msra.mxu0 0.0
    %7600 = vmatprep.subr.mxu0 0.0
    %7601 = vmatpush1.msra.mxu0 0.0
    %7602 = vmatprep.subr.mxu0 0.0
    %7603 = vmatpush1.msra.mxu0 0.0
    %7604 = vmatprep.subr.mxu0 0.0
    %7605 = vmatpush1.msra.mxu0 0.0
    %7606 = vmatprep.subr.mxu0 0.0
    %7607 = vmatpush1.msra.mxu0 0.0
    %7608 = vmatprep.subr.mxu0 0.0
    %7609 = vmatpush1.msra.mxu0 0.0
    %7610 = vmatprep.subr.mxu0 0.0
    %7611 = vmatpush1.msra.mxu0 0.0
    %7612 = vmatprep.mubr.f32.mxu0 0.0
    %7613 = vmatmul.mubr.f32.gmra.mrb[0].mxu0 %v7546
    %v7614 = vpop.f32.mrb[0].mxu0
    %v7615 = vadd.f32 %v7544, %v7614
    %v7616 = vpop.f32.mrb[0].mxu0
    %7617 = vdwg.mxu0
    %v7618 = vmax.f32 %v7615, 0.0
    %v7619 = vlaneseq
    %v7620 = vshrl.u32 %v7619, 7
    %v7621 = vsub.s32 5, %v7620
    %v7622 = vrot.slane %v6285, %v7621
    %7627 = vrot.lane.b32.xlu0 %v6278, 96
    %v7628 = vpop.permute.xlu0 %7627
    %7629 = vrot.lane.b32.xlu0 %v6280, 96
    %v7630 = vpop.permute.xlu0 %7629
    %7631 = vrot.lane.b32.xlu0 %v6282, 96
    %v7632 = vpop.permute.xlu0 %7631
    %7633 = vrot.lane.b32.xlu0 %v6284, 96
    %v7634 = vpop.permute.xlu0 %7633
    %v7640 = vsel %vm135, %v7618, 0
    %7642 = vmatprep.subr.mxu0 0.0
    %7643 = vmatpush1.msra.mxu0 %v7628
    %7644 = vmatprep.subr.mxu0 0.0
    %7645 = vmatpush1.msra.mxu0 %v7630
    %7646 = vmatprep.subr.mxu0 0.0
    %7647 = vmatpush1.msra.mxu0 %v7632
    %7648 = vmatprep.subr.mxu0 0.0
    %7649 = vmatpush1.msra.mxu0 %v7634
    %7650 = vmatprep.subr.mxu0 0.0
    %7651 = vmatpush1.msra.mxu0 0.0
    %7652 = vmatprep.subr.mxu0 0.0
    %7653 = vmatpush1.msra.mxu0 0.0
    %7654 = vmatprep.subr.mxu0 0.0
    %7655 = vmatpush1.msra.mxu0 0.0
    %7656 = vmatprep.subr.mxu0 0.0
    %7657 = vmatpush1.msra.mxu0 0.0
    %7658 = vmatprep.subr.mxu0 0.0
    %7659 = vmatpush1.msra.mxu0 0.0
    %7660 = vmatprep.subr.mxu0 0.0
    %7661 = vmatpush1.msra.mxu0 0.0
    %7662 = vmatprep.subr.mxu0 0.0
    %7663 = vmatpush1.msra.mxu0 0.0
    %7664 = vmatprep.subr.mxu0 0.0
    %7665 = vmatpush1.msra.mxu0 0.0
    %7666 = vmatprep.subr.mxu0 0.0
    %7667 = vmatpush1.msra.mxu0 0.0
    %7668 = vmatprep.subr.mxu0 0.0
    %7669 = vmatpush1.msra.mxu0 0.0
    %7670 = vmatprep.subr.mxu0 0.0
    %7671 = vmatpush1.msra.mxu0 0.0
    %7672 = vmatprep.subr.mxu0 0.0
    %7673 = vmatpush1.msra.mxu0 0.0
    %7674 = vmatprep.subr.mxu0 0.0
    %7675 = vmatpush1.msra.mxu0 0.0
    %7676 = vmatprep.subr.mxu0 0.0
    %7677 = vmatpush1.msra.mxu0 0.0
    %7678 = vmatprep.subr.mxu0 0.0
    %7679 = vmatpush1.msra.mxu0 0.0
    %7680 = vmatprep.subr.mxu0 0.0
    %7681 = vmatpush1.msra.mxu0 0.0
    %7682 = vmatprep.subr.mxu0 0.0
    %7683 = vmatpush1.msra.mxu0 0.0
    %7684 = vmatprep.subr.mxu0 0.0
    %7685 = vmatpush1.msra.mxu0 0.0
    %7686 = vmatprep.subr.mxu0 0.0
    %7687 = vmatpush1.msra.mxu0 0.0
    %7688 = vmatprep.subr.mxu0 0.0
    %7689 = vmatpush1.msra.mxu0 0.0
    %7690 = vmatprep.subr.mxu0 0.0
    %7691 = vmatpush1.msra.mxu0 0.0
    %7692 = vmatprep.subr.mxu0 0.0
    %7693 = vmatpush1.msra.mxu0 0.0
    %7694 = vmatprep.subr.mxu0 0.0
    %7695 = vmatpush1.msra.mxu0 0.0
    %7696 = vmatprep.subr.mxu0 0.0
    %7697 = vmatpush1.msra.mxu0 0.0
    %7698 = vmatprep.subr.mxu0 0.0
    %7699 = vmatpush1.msra.mxu0 0.0
    %7700 = vmatprep.subr.mxu0 0.0
    %7701 = vmatpush1.msra.mxu0 0.0
    %7702 = vmatprep.subr.mxu0 0.0
    %7703 = vmatpush1.msra.mxu0 0.0
    %7704 = vmatprep.subr.mxu0 0.0
    %7705 = vmatpush1.msra.mxu0 0.0
    %7706 = vmatprep.mubr.f32.mxu0 0.0
    %7707 = vmatmul.mubr.f32.gmra.mrb[0].mxu0 %v7640
    %v7708 = vpop.f32.mrb[0].mxu0
    %v7709 = vadd.f32 %v7622, %v7708
    %v7710 = vpop.f32.mrb[0].mxu0
    %7711 = vdwg.mxu0
    %v7712 = vadd.f32 %v7540, %v7709
    %v7713 = vsel %vm7517, %v7712, 0.0
    %7714 = vadd.xlane.f32.xlu0 %v7713
    %v7715 = vpop.xlane.xlu0 %7714
    %v7716 = vmul.f32 %v7715, %v2717
    %v7717 = vsub.f32 %v7712, %v7716
    %v7718 = vmul.f32 %v7717, %v7717
    %v7719 = vsel %vm7517, %v7718, 0.0
    %7720 = vadd.xlane.f32.xlu0 %v7719
    %v7721 = vpop.xlane.xlu0 %7720
    %v7722 = vmul.f32 %v7721, %v2717
    %v7723 = vadd.f32 %v7722, 1e-05
    %v7724 = vrsqrt.pop %v7723
    %v7725 = vmul.f32 %v7717, %v7724
    %v7726 = vlaneseq
    %v7727 = vshrl.u32 %v7726, 7
    %v7728 = vsub.s32 0, %v7727
    %v7729 = vrot.slane %v6286, %v7728
    %v7730 = vmul.f32 %v7725, %v7729
    %v7731 = vlaneseq
    %v7732 = vshrl.u32 %v7731, 7
    %v7733 = vsub.s32 1, %v7732
    %v7734 = vrot.slane %v6286, %v7733
    %v7735 = vadd.f32 %v7730, %v7734
    %s7736 = scalar_lea.vmem %s4, 64
    %v7737 = vld [vmem:[%s7736] sm:$0xff]
    %v7738 = vld [vmem:[%s7736 + $0x8] sm:$0xff]
    %v7739 = vld [vmem:[%s7736 + $0x10] sm:$0xff]
    %v7740 = vld [vmem:[%s7736 + $0x18] sm:$0xff]
    %v7741 = vld [vmem:[%s7736 + $0x20] sm:$0xff]
    %v7742 = vld [vmem:[%s7736 + $0x28] sm:$0xff]
    %v7743 = vld [vmem:[%s7736 + $0x30] sm:$0xff]
    %v7744 = vld [vmem:[%s7736 + $0x38] sm:$0xff]
    %s7745 = scalar_lea.vmem %s5, 16
    %v7746 = vld [vmem:[%s7745] sm:$0xff]
    %v7747 = vld [vmem:[%s7745 + $0x8] sm:$0x3]
    %v7748 = vlaneseq
    %v7749 = vshrl.u32 %v7748, 7
    %v7750 = vsub.s32 0, %v7749
    %v7751 = vrot.slane %v7746, %v7750
    %v7753 = vsel %vm135, %v7735, 0
    %7755 = vmatprep.subr.mxu0 0.0
    %7756 = vmatpush1.msra.mxu0 %v7737
    %7757 = vmatprep.subr.mxu0 0.0
    %7758 = vmatpush1.msra.mxu0 %v7739
    %7759 = vmatprep.subr.mxu0 0.0
    %7760 = vmatpush1.msra.mxu0 %v7741
    %7761 = vmatprep.subr.mxu0 0.0
    %7762 = vmatpush1.msra.mxu0 %v7743
    %7763 = vmatprep.subr.mxu0 0.0
    %7764 = vmatpush1.msra.mxu0 0.0
    %7765 = vmatprep.subr.mxu0 0.0
    %7766 = vmatpush1.msra.mxu0 0.0
    %7767 = vmatprep.subr.mxu0 0.0
    %7768 = vmatpush1.msra.mxu0 0.0
    %7769 = vmatprep.subr.mxu0 0.0
    %7770 = vmatpush1.msra.mxu0 0.0
    %7771 = vmatprep.subr.mxu0 0.0
    %7772 = vmatpush1.msra.mxu0 0.0
    %7773 = vmatprep.subr.mxu0 0.0
    %7774 = vmatpush1.msra.mxu0 0.0
    %7775 = vmatprep.subr.mxu0 0.0
    %7776 = vmatpush1.msra.mxu0 0.0
    %7777 = vmatprep.subr.mxu0 0.0
    %7778 = vmatpush1.msra.mxu0 0.0
    %7779 = vmatprep.subr.mxu0 0.0
    %7780 = vmatpush1.msra.mxu0 0.0
    %7781 = vmatprep.subr.mxu0 0.0
    %7782 = vmatpush1.msra.mxu0 0.0
    %7783 = vmatprep.subr.mxu0 0.0
    %7784 = vmatpush1.msra.mxu0 0.0
    %7785 = vmatprep.subr.mxu0 0.0
    %7786 = vmatpush1.msra.mxu0 0.0
    %7787 = vmatprep.subr.mxu0 0.0
    %7788 = vmatpush1.msra.mxu0 0.0
    %7789 = vmatprep.subr.mxu0 0.0
    %7790 = vmatpush1.msra.mxu0 0.0
    %7791 = vmatprep.subr.mxu0 0.0
    %7792 = vmatpush1.msra.mxu0 0.0
    %7793 = vmatprep.subr.mxu0 0.0
    %7794 = vmatpush1.msra.mxu0 0.0
    %7795 = vmatprep.subr.mxu0 0.0
    %7796 = vmatpush1.msra.mxu0 0.0
    %7797 = vmatprep.subr.mxu0 0.0
    %7798 = vmatpush1.msra.mxu0 0.0
    %7799 = vmatprep.subr.mxu0 0.0
    %7800 = vmatpush1.msra.mxu0 0.0
    %7801 = vmatprep.subr.mxu0 0.0
    %7802 = vmatpush1.msra.mxu0 0.0
    %7803 = vmatprep.subr.mxu0 0.0
    %7804 = vmatpush1.msra.mxu0 0.0
    %7805 = vmatprep.subr.mxu0 0.0
    %7806 = vmatpush1.msra.mxu0 0.0
    %7807 = vmatprep.subr.mxu0 0.0
    %7808 = vmatpush1.msra.mxu0 0.0
    %7809 = vmatprep.subr.mxu0 0.0
    %7810 = vmatpush1.msra.mxu0 0.0
    %7811 = vmatprep.subr.mxu0 0.0
    %7812 = vmatpush1.msra.mxu0 0.0
    %7813 = vmatprep.subr.mxu0 0.0
    %7814 = vmatpush1.msra.mxu0 0.0
    %7815 = vmatprep.subr.mxu0 0.0
    %7816 = vmatpush1.msra.mxu0 0.0
    %7817 = vmatprep.subr.mxu0 0.0
    %7818 = vmatpush1.msra.mxu0 0.0
    %7819 = vmatprep.mubr.f32.mxu0 0.0
    %7820 = vmatmul.mubr.f32.gmra.mrb[0].mxu0 %v7753
    %v7821 = vpop.f32.mrb[0].mxu0
    %v7822 = vadd.f32 %v7751, %v7821
    %v7823 = vpop.f32.mrb[0].mxu0
    %7824 = vdwg.mxu0
    %v7825 = vlaneseq
    %v7826 = vshrl.u32 %v7825, 7
    %v7827 = vsub.s32 1, %v7826
    %v7828 = vrot.slane %v7746, %v7827
    %7833 = vrot.lane.b32.xlu0 %v7737, 96
    %v7834 = vpop.permute.xlu0 %7833
    %7835 = vrot.lane.b32.xlu0 %v7739, 96
    %v7836 = vpop.permute.xlu0 %7835
    %7837 = vrot.lane.b32.xlu0 %v7741, 96
    %v7838 = vpop.permute.xlu0 %7837
    %7839 = vrot.lane.b32.xlu0 %v7743, 96
    %v7840 = vpop.permute.xlu0 %7839
    %7845 = vmatprep.subr.mxu0 0.0
    %7846 = vmatpush1.msra.mxu0 %v7834
    %7847 = vmatprep.subr.mxu0 0.0
    %7848 = vmatpush1.msra.mxu0 %v7836
    %7849 = vmatprep.subr.mxu0 0.0
    %7850 = vmatpush1.msra.mxu0 %v7838
    %7851 = vmatprep.subr.mxu0 0.0
    %7852 = vmatpush1.msra.mxu0 %v7840
    %7853 = vmatprep.subr.mxu0 0.0
    %7854 = vmatpush1.msra.mxu0 0.0
    %7855 = vmatprep.subr.mxu0 0.0
    %7856 = vmatpush1.msra.mxu0 0.0
    %7857 = vmatprep.subr.mxu0 0.0
    %7858 = vmatpush1.msra.mxu0 0.0
    %7859 = vmatprep.subr.mxu0 0.0
    %7860 = vmatpush1.msra.mxu0 0.0
    %7861 = vmatprep.subr.mxu0 0.0
    %7862 = vmatpush1.msra.mxu0 0.0
    %7863 = vmatprep.subr.mxu0 0.0
    %7864 = vmatpush1.msra.mxu0 0.0
    %7865 = vmatprep.subr.mxu0 0.0
    %7866 = vmatpush1.msra.mxu0 0.0
    %7867 = vmatprep.subr.mxu0 0.0
    %7868 = vmatpush1.msra.mxu0 0.0
    %7869 = vmatprep.subr.mxu0 0.0
    %7870 = vmatpush1.msra.mxu0 0.0
    %7871 = vmatprep.subr.mxu0 0.0
    %7872 = vmatpush1.msra.mxu0 0.0
    %7873 = vmatprep.subr.mxu0 0.0
    %7874 = vmatpush1.msra.mxu0 0.0
    %7875 = vmatprep.subr.mxu0 0.0
    %7876 = vmatpush1.msra.mxu0 0.0
    %7877 = vmatprep.subr.mxu0 0.0
    %7878 = vmatpush1.msra.mxu0 0.0
    %7879 = vmatprep.subr.mxu0 0.0
    %7880 = vmatpush1.msra.mxu0 0.0
    %7881 = vmatprep.subr.mxu0 0.0
    %7882 = vmatpush1.msra.mxu0 0.0
    %7883 = vmatprep.subr.mxu0 0.0
    %7884 = vmatpush1.msra.mxu0 0.0
    %7885 = vmatprep.subr.mxu0 0.0
    %7886 = vmatpush1.msra.mxu0 0.0
    %7887 = vmatprep.subr.mxu0 0.0
    %7888 = vmatpush1.msra.mxu0 0.0
    %7889 = vmatprep.subr.mxu0 0.0
    %7890 = vmatpush1.msra.mxu0 0.0
    %7891 = vmatprep.subr.mxu0 0.0
    %7892 = vmatpush1.msra.mxu0 0.0
    %7893 = vmatprep.subr.mxu0 0.0
    %7894 = vmatpush1.msra.mxu0 0.0
    %7895 = vmatprep.subr.mxu0 0.0
    %7896 = vmatpush1.msra.mxu0 0.0
    %7897 = vmatprep.subr.mxu0 0.0
    %7898 = vmatpush1.msra.mxu0 0.0
    %7899 = vmatprep.subr.mxu0 0.0
    %7900 = vmatpush1.msra.mxu0 0.0
    %7901 = vmatprep.subr.mxu0 0.0
    %7902 = vmatpush1.msra.mxu0 0.0
    %7903 = vmatprep.subr.mxu0 0.0
    %7904 = vmatpush1.msra.mxu0 0.0
    %7905 = vmatprep.subr.mxu0 0.0
    %7906 = vmatpush1.msra.mxu0 0.0
    %7907 = vmatprep.subr.mxu0 0.0
    %7908 = vmatpush1.msra.mxu0 0.0
    %7909 = vmatprep.mubr.f32.mxu0 0.0
    %7910 = vmatmul.mubr.f32.gmra.mrb[0].mxu0 %v7753
    %v7911 = vpop.f32.mrb[0].mxu0
    %v7912 = vadd.f32 %v7828, %v7911
    %v7913 = vpop.f32.mrb[0].mxu0
    %7914 = vdwg.mxu0
    %v7915 = vlaneseq
    %v7916 = vshrl.u32 %v7915, 7
    %v7917 = vsub.s32 2, %v7916
    %v7918 = vrot.slane %v7746, %v7917
    %7919 = vrot.lane.b32.xlu0 %v7737, 64
    %v7920 = vpop.permute.xlu0 %7919
    %7921 = vrot.lane.b32.xlu0 %v7739, 64
    %v7922 = vpop.permute.xlu0 %7921
    %7923 = vrot.lane.b32.xlu0 %v7741, 64
    %v7924 = vpop.permute.xlu0 %7923
    %7925 = vrot.lane.b32.xlu0 %v7743, 64
    %v7926 = vpop.permute.xlu0 %7925
    %7931 = vmatprep.subr.mxu0 0.0
    %7932 = vmatpush1.msra.mxu0 %v7920
    %7933 = vmatprep.subr.mxu0 0.0
    %7934 = vmatpush1.msra.mxu0 %v7922
    %7935 = vmatprep.subr.mxu0 0.0
    %7936 = vmatpush1.msra.mxu0 %v7924
    %7937 = vmatprep.subr.mxu0 0.0
    %7938 = vmatpush1.msra.mxu0 %v7926
    %7939 = vmatprep.subr.mxu0 0.0
    %7940 = vmatpush1.msra.mxu0 0.0
    %7941 = vmatprep.subr.mxu0 0.0
    %7942 = vmatpush1.msra.mxu0 0.0
    %7943 = vmatprep.subr.mxu0 0.0
    %7944 = vmatpush1.msra.mxu0 0.0
    %7945 = vmatprep.subr.mxu0 0.0
    %7946 = vmatpush1.msra.mxu0 0.0
    %7947 = vmatprep.subr.mxu0 0.0
    %7948 = vmatpush1.msra.mxu0 0.0
    %7949 = vmatprep.subr.mxu0 0.0
    %7950 = vmatpush1.msra.mxu0 0.0
    %7951 = vmatprep.subr.mxu0 0.0
    %7952 = vmatpush1.msra.mxu0 0.0
    %7953 = vmatprep.subr.mxu0 0.0
    %7954 = vmatpush1.msra.mxu0 0.0
    %7955 = vmatprep.subr.mxu0 0.0
    %7956 = vmatpush1.msra.mxu0 0.0
    %7957 = vmatprep.subr.mxu0 0.0
    %7958 = vmatpush1.msra.mxu0 0.0
    %7959 = vmatprep.subr.mxu0 0.0
    %7960 = vmatpush1.msra.mxu0 0.0
    %7961 = vmatprep.subr.mxu0 0.0
    %7962 = vmatpush1.msra.mxu0 0.0
    %7963 = vmatprep.subr.mxu0 0.0
    %7964 = vmatpush1.msra.mxu0 0.0
    %7965 = vmatprep.subr.mxu0 0.0
    %7966 = vmatpush1.msra.mxu0 0.0
    %7967 = vmatprep.subr.mxu0 0.0
    %7968 = vmatpush1.msra.mxu0 0.0
    %7969 = vmatprep.subr.mxu0 0.0
    %7970 = vmatpush1.msra.mxu0 0.0
    %7971 = vmatprep.subr.mxu0 0.0
    %7972 = vmatpush1.msra.mxu0 0.0
    %7973 = vmatprep.subr.mxu0 0.0
    %7974 = vmatpush1.msra.mxu0 0.0
    %7975 = vmatprep.subr.mxu0 0.0
    %7976 = vmatpush1.msra.mxu0 0.0
    %7977 = vmatprep.subr.mxu0 0.0
    %7978 = vmatpush1.msra.mxu0 0.0
    %7979 = vmatprep.subr.mxu0 0.0
    %7980 = vmatpush1.msra.mxu0 0.0
    %7981 = vmatprep.subr.mxu0 0.0
    %7982 = vmatpush1.msra.mxu0 0.0
    %7983 = vmatprep.subr.mxu0 0.0
    %7984 = vmatpush1.msra.mxu0 0.0
    %7985 = vmatprep.subr.mxu0 0.0
    %7986 = vmatpush1.msra.mxu0 0.0
    %7987 = vmatprep.subr.mxu0 0.0
    %7988 = vmatpush1.msra.mxu0 0.0
    %7989 = vmatprep.subr.mxu0 0.0
    %7990 = vmatpush1.msra.mxu0 0.0
    %7991 = vmatprep.subr.mxu0 0.0
    %7992 = vmatpush1.msra.mxu0 0.0
    %7993 = vmatprep.subr.mxu0 0.0
    %7994 = vmatpush1.msra.mxu0 0.0
    %7995 = vmatprep.mubr.f32.mxu0 0.0
    %7996 = vmatmul.mubr.f32.gmra.mrb[0].mxu0 %v7753
    %v7997 = vpop.f32.mrb[0].mxu0
    %v7998 = vadd.f32 %v7918, %v7997
    %v7999 = vpop.f32.mrb[0].mxu0
    %8000 = vdwg.mxu0
    %v8001 = vmul.f32 %v7822, 0.35355338
    %v8003 = vsel %vm519, %v8001, 0
    %v8006 = vsel %vm519, %v7912, 0
    %8008 = vmatprep.subr.mxu0 0.0
    %8009 = vmatpush1.xpose.msra.mxu0 %v8006
    %8010 = vmatprep.subr.mxu0 0.0
    %8011 = vmatpush1.xpose.msra.mxu0 0.0
    %8012 = vmatprep.subr.mxu0 0.0
    %8013 = vmatpush1.xpose.msra.mxu0 0.0
    %8014 = vmatprep.subr.mxu0 0.0
    %8015 = vmatpush1.xpose.msra.mxu0 0.0
    %8016 = vmatprep.subr.mxu0 0.0
    %8017 = vmatpush1.xpose.msra.mxu0 0.0
    %8018 = vmatprep.subr.mxu0 0.0
    %8019 = vmatpush1.xpose.msra.mxu0 0.0
    %8020 = vmatprep.subr.mxu0 0.0
    %8021 = vmatpush1.xpose.msra.mxu0 0.0
    %8022 = vmatprep.subr.mxu0 0.0
    %8023 = vmatpush1.xpose.msra.mxu0 0.0
    %8024 = vmatprep.subr.mxu0 0.0
    %8025 = vmatpush1.xpose.msra.mxu0 0.0
    %8026 = vmatprep.subr.mxu0 0.0
    %8027 = vmatpush1.xpose.msra.mxu0 0.0
    %8028 = vmatprep.subr.mxu0 0.0
    %8029 = vmatpush1.xpose.msra.mxu0 0.0
    %8030 = vmatprep.subr.mxu0 0.0
    %8031 = vmatpush1.xpose.msra.mxu0 0.0
    %8032 = vmatprep.subr.mxu0 0.0
    %8033 = vmatpush1.xpose.msra.mxu0 0.0
    %8034 = vmatprep.subr.mxu0 0.0
    %8035 = vmatpush1.xpose.msra.mxu0 0.0
    %8036 = vmatprep.subr.mxu0 0.0
    %8037 = vmatpush1.xpose.msra.mxu0 0.0
    %8038 = vmatprep.subr.mxu0 0.0
    %8039 = vmatpush1.xpose.msra.mxu0 0.0
    %8040 = vmatprep.subr.mxu0 0.0
    %8041 = vmatpush1.xpose.msra.mxu0 0.0
    %8042 = vmatprep.subr.mxu0 0.0
    %8043 = vmatpush1.xpose.msra.mxu0 0.0
    %8044 = vmatprep.subr.mxu0 0.0
    %8045 = vmatpush1.xpose.msra.mxu0 0.0
    %8046 = vmatprep.subr.mxu0 0.0
    %8047 = vmatpush1.xpose.msra.mxu0 0.0
    %8048 = vmatprep.subr.mxu0 0.0
    %8049 = vmatpush1.xpose.msra.mxu0 0.0
    %8050 = vmatprep.subr.mxu0 0.0
    %8051 = vmatpush1.xpose.msra.mxu0 0.0
    %8052 = vmatprep.subr.mxu0 0.0
    %8053 = vmatpush1.xpose.msra.mxu0 0.0
    %8054 = vmatprep.subr.mxu0 0.0
    %8055 = vmatpush1.xpose.msra.mxu0 0.0
    %8056 = vmatprep.subr.mxu0 0.0
    %8057 = vmatpush1.xpose.msra.mxu0 0.0
    %8058 = vmatprep.subr.mxu0 0.0
    %8059 = vmatpush1.xpose.msra.mxu0 0.0
    %8060 = vmatprep.subr.mxu0 0.0
    %8061 = vmatpush1.xpose.msra.mxu0 0.0
    %8062 = vmatprep.subr.mxu0 0.0
    %8063 = vmatpush1.xpose.msra.mxu0 0.0
    %8064 = vmatprep.subr.mxu0 0.0
    %8065 = vmatpush1.xpose.msra.mxu0 0.0
    %8066 = vmatprep.subr.mxu0 0.0
    %8067 = vmatpush1.xpose.msra.mxu0 0.0
    %8068 = vmatprep.subr.mxu0 0.0
    %8069 = vmatpush1.xpose.msra.mxu0 0.0
    %8070 = vmatprep.subr.mxu0 0.0
    %8071 = vmatpush1.xpose.msra.mxu0 0.0
    %8072 = vmatprep.mubr.f32.mxu0 0.0
    %8073 = vmatmul.mubr.f32.gmra.mrb[0].mxu0 %v8003
    %v8074 = vpop.f32.mrb[0].mxu0
    %v8075 = vadd.f32 0.0, %v8074
    %v8076 = vpop.f32.mrb[0].mxu0
    %8077 = vdwg.mxu0
    %v8078 = vsel %vm6617, %v8075, -inf
    %8079 = vmax.xlane.f32.xlu0 %v8078
    %v8080 = vpop.xlane.xlu0 %8079
    %v8081 = vsub.f32 %v8075, %v8080
    %v8082 = vmul.f32 %v8081, 1.442695
    %v8083 = vpow.pop %v8082
    %v8084 = vsel %vm6617, %v8083, 0.0
    %8085 = vadd.xlane.f32.xlu0 %v8084
    %v8086 = vpop.xlane.xlu0 %8085
    %v8087 = vrcp.pop %v8086
    %v8088 = vmul.f32 %v8083, %v8087
    %v8090 = vsel %vm6629, %v8088, 0
    %v8093 = vsel %vm6633, %v7998, 0
    %8095 = vmatprep.subr.mxu0 0.0
    %8096 = vmatpush1.msra.mxu0 %v8093
    %8097 = vmatprep.subr.mxu0 0.0
    %8098 = vmatpush1.msra.mxu0 0.0
    %8099 = vmatprep.subr.mxu0 0.0
    %8100 = vmatpush1.msra.mxu0 0.0
    %8101 = vmatprep.subr.mxu0 0.0
    %8102 = vmatpush1.msra.mxu0 0.0
    %8103 = vmatprep.subr.mxu0 0.0
    %8104 = vmatpush1.msra.mxu0 0.0
    %8105 = vmatprep.subr.mxu0 0.0
    %8106 = vmatpush1.msra.mxu0 0.0
    %8107 = vmatprep.subr.mxu0 0.0
    %8108 = vmatpush1.msra.mxu0 0.0
    %8109 = vmatprep.subr.mxu0 0.0
    %8110 = vmatpush1.msra.mxu0 0.0
    %8111 = vmatprep.subr.mxu0 0.0
    %8112 = vmatpush1.msra.mxu0 0.0
    %8113 = vmatprep.subr.mxu0 0.0
    %8114 = vmatpush1.msra.mxu0 0.0
    %8115 = vmatprep.subr.mxu0 0.0
    %8116 = vmatpush1.msra.mxu0 0.0
    %8117 = vmatprep.subr.mxu0 0.0
    %8118 = vmatpush1.msra.mxu0 0.0
    %8119 = vmatprep.subr.mxu0 0.0
    %8120 = vmatpush1.msra.mxu0 0.0
    %8121 = vmatprep.subr.mxu0 0.0
    %8122 = vmatpush1.msra.mxu0 0.0
    %8123 = vmatprep.subr.mxu0 0.0
    %8124 = vmatpush1.msra.mxu0 0.0
    %8125 = vmatprep.subr.mxu0 0.0
    %8126 = vmatpush1.msra.mxu0 0.0
    %8127 = vmatprep.subr.mxu0 0.0
    %8128 = vmatpush1.msra.mxu0 0.0
    %8129 = vmatprep.subr.mxu0 0.0
    %8130 = vmatpush1.msra.mxu0 0.0
    %8131 = vmatprep.subr.mxu0 0.0
    %8132 = vmatpush1.msra.mxu0 0.0
    %8133 = vmatprep.subr.mxu0 0.0
    %8134 = vmatpush1.msra.mxu0 0.0
    %8135 = vmatprep.subr.mxu0 0.0
    %8136 = vmatpush1.msra.mxu0 0.0
    %8137 = vmatprep.subr.mxu0 0.0
    %8138 = vmatpush1.msra.mxu0 0.0
    %8139 = vmatprep.subr.mxu0 0.0
    %8140 = vmatpush1.msra.mxu0 0.0
    %8141 = vmatprep.subr.mxu0 0.0
    %8142 = vmatpush1.msra.mxu0 0.0
    %8143 = vmatprep.subr.mxu0 0.0
    %8144 = vmatpush1.msra.mxu0 0.0
    %8145 = vmatprep.subr.mxu0 0.0
    %8146 = vmatpush1.msra.mxu0 0.0
    %8147 = vmatprep.subr.mxu0 0.0
    %8148 = vmatpush1.msra.mxu0 0.0
    %8149 = vmatprep.subr.mxu0 0.0
    %8150 = vmatpush1.msra.mxu0 0.0
    %8151 = vmatprep.subr.mxu0 0.0
    %8152 = vmatpush1.msra.mxu0 0.0
    %8153 = vmatprep.subr.mxu0 0.0
    %8154 = vmatpush1.msra.mxu0 0.0
    %8155 = vmatprep.subr.mxu0 0.0
    %8156 = vmatpush1.msra.mxu0 0.0
    %8157 = vmatprep.subr.mxu0 0.0
    %8158 = vmatpush1.msra.mxu0 0.0
    %8159 = vmatprep.mubr.f32.mxu0 0.0
    %8160 = vmatmul.mubr.f32.gmra.mrb[0].mxu0 %v8090
    %v8161 = vpop.f32.mrb[0].mxu0
    %v8162 = vadd.f32 0.0, %v8161
    %v8163 = vpop.f32.mrb[0].mxu0
    %8164 = vdwg.mxu0
    %8165 = vrot.lane.b32.xlu0 %v8001, 120
    %v8166 = vpop.permute.xlu0 %8165
    %8167 = vrot.lane.b32.xlu0 %v7912, 120
    %v8168 = vpop.permute.xlu0 %8167
    %v8169 = vsel %vm519, %v8166, 0
    %v8171 = vsel %vm519, %v8168, 0
    %8173 = vmatprep.subr.mxu0 0.0
    %8174 = vmatpush1.xpose.msra.mxu0 %v8171
    %8175 = vmatprep.subr.mxu0 0.0
    %8176 = vmatpush1.xpose.msra.mxu0 0.0
    %8177 = vmatprep.subr.mxu0 0.0
    %8178 = vmatpush1.xpose.msra.mxu0 0.0
    %8179 = vmatprep.subr.mxu0 0.0
    %8180 = vmatpush1.xpose.msra.mxu0 0.0
    %8181 = vmatprep.subr.mxu0 0.0
    %8182 = vmatpush1.xpose.msra.mxu0 0.0
    %8183 = vmatprep.subr.mxu0 0.0
    %8184 = vmatpush1.xpose.msra.mxu0 0.0
    %8185 = vmatprep.subr.mxu0 0.0
    %8186 = vmatpush1.xpose.msra.mxu0 0.0
    %8187 = vmatprep.subr.mxu0 0.0
    %8188 = vmatpush1.xpose.msra.mxu0 0.0
    %8189 = vmatprep.subr.mxu0 0.0
    %8190 = vmatpush1.xpose.msra.mxu0 0.0
    %8191 = vmatprep.subr.mxu0 0.0
    %8192 = vmatpush1.xpose.msra.mxu0 0.0
    %8193 = vmatprep.subr.mxu0 0.0
    %8194 = vmatpush1.xpose.msra.mxu0 0.0
    %8195 = vmatprep.subr.mxu0 0.0
    %8196 = vmatpush1.xpose.msra.mxu0 0.0
    %8197 = vmatprep.subr.mxu0 0.0
    %8198 = vmatpush1.xpose.msra.mxu0 0.0
    %8199 = vmatprep.subr.mxu0 0.0
    %8200 = vmatpush1.xpose.msra.mxu0 0.0
    %8201 = vmatprep.subr.mxu0 0.0
    %8202 = vmatpush1.xpose.msra.mxu0 0.0
    %8203 = vmatprep.subr.mxu0 0.0
    %8204 = vmatpush1.xpose.msra.mxu0 0.0
    %8205 = vmatprep.subr.mxu0 0.0
    %8206 = vmatpush1.xpose.msra.mxu0 0.0
    %8207 = vmatprep.subr.mxu0 0.0
    %8208 = vmatpush1.xpose.msra.mxu0 0.0
    %8209 = vmatprep.subr.mxu0 0.0
    %8210 = vmatpush1.xpose.msra.mxu0 0.0
    %8211 = vmatprep.subr.mxu0 0.0
    %8212 = vmatpush1.xpose.msra.mxu0 0.0
    %8213 = vmatprep.subr.mxu0 0.0
    %8214 = vmatpush1.xpose.msra.mxu0 0.0
    %8215 = vmatprep.subr.mxu0 0.0
    %8216 = vmatpush1.xpose.msra.mxu0 0.0
    %8217 = vmatprep.subr.mxu0 0.0
    %8218 = vmatpush1.xpose.msra.mxu0 0.0
    %8219 = vmatprep.subr.mxu0 0.0
    %8220 = vmatpush1.xpose.msra.mxu0 0.0
    %8221 = vmatprep.subr.mxu0 0.0
    %8222 = vmatpush1.xpose.msra.mxu0 0.0
    %8223 = vmatprep.subr.mxu0 0.0
    %8224 = vmatpush1.xpose.msra.mxu0 0.0
    %8225 = vmatprep.subr.mxu0 0.0
    %8226 = vmatpush1.xpose.msra.mxu0 0.0
    %8227 = vmatprep.subr.mxu0 0.0
    %8228 = vmatpush1.xpose.msra.mxu0 0.0
    %8229 = vmatprep.subr.mxu0 0.0
    %8230 = vmatpush1.xpose.msra.mxu0 0.0
    %8231 = vmatprep.subr.mxu0 0.0
    %8232 = vmatpush1.xpose.msra.mxu0 0.0
    %8233 = vmatprep.subr.mxu0 0.0
    %8234 = vmatpush1.xpose.msra.mxu0 0.0
    %8235 = vmatprep.subr.mxu0 0.0
    %8236 = vmatpush1.xpose.msra.mxu0 0.0
    %8237 = vmatprep.mubr.f32.mxu0 0.0
    %8238 = vmatmul.mubr.f32.gmra.mrb[0].mxu0 %v8169
    %v8239 = vpop.f32.mrb[0].mxu0
    %v8240 = vadd.f32 0.0, %v8239
    %v8241 = vpop.f32.mrb[0].mxu0
    %8242 = vdwg.mxu0
    %v8243 = vsel %vm6617, %v8240, -inf
    %8244 = vmax.xlane.f32.xlu0 %v8243
    %v8245 = vpop.xlane.xlu0 %8244
    %v8246 = vsub.f32 %v8240, %v8245
    %v8247 = vmul.f32 %v8246, 1.442695
    %v8248 = vpow.pop %v8247
    %v8249 = vsel %vm6617, %v8248, 0.0
    %8250 = vadd.xlane.f32.xlu0 %v8249
    %v8251 = vpop.xlane.xlu0 %8250
    %v8252 = vrcp.pop %v8251
    %v8253 = vmul.f32 %v8248, %v8252
    %8254 = vrot.lane.b32.xlu0 %v7998, 120
    %v8255 = vpop.permute.xlu0 %8254
    %v8257 = vsel %vm6629, %v8253, 0
    %v8259 = vsel %vm6633, %v8255, 0
    %8261 = vmatprep.subr.mxu0 0.0
    %8262 = vmatpush1.msra.mxu0 %v8259
    %8263 = vmatprep.subr.mxu0 0.0
    %8264 = vmatpush1.msra.mxu0 0.0
    %8265 = vmatprep.subr.mxu0 0.0
    %8266 = vmatpush1.msra.mxu0 0.0
    %8267 = vmatprep.subr.mxu0 0.0
    %8268 = vmatpush1.msra.mxu0 0.0
    %8269 = vmatprep.subr.mxu0 0.0
    %8270 = vmatpush1.msra.mxu0 0.0
    %8271 = vmatprep.subr.mxu0 0.0
    %8272 = vmatpush1.msra.mxu0 0.0
    %8273 = vmatprep.subr.mxu0 0.0
    %8274 = vmatpush1.msra.mxu0 0.0
    %8275 = vmatprep.subr.mxu0 0.0
    %8276 = vmatpush1.msra.mxu0 0.0
    %8277 = vmatprep.subr.mxu0 0.0
    %8278 = vmatpush1.msra.mxu0 0.0
    %8279 = vmatprep.subr.mxu0 0.0
    %8280 = vmatpush1.msra.mxu0 0.0
    %8281 = vmatprep.subr.mxu0 0.0
    %8282 = vmatpush1.msra.mxu0 0.0
    %8283 = vmatprep.subr.mxu0 0.0
    %8284 = vmatpush1.msra.mxu0 0.0
    %8285 = vmatprep.subr.mxu0 0.0
    %8286 = vmatpush1.msra.mxu0 0.0
    %8287 = vmatprep.subr.mxu0 0.0
    %8288 = vmatpush1.msra.mxu0 0.0
    %8289 = vmatprep.subr.mxu0 0.0
    %8290 = vmatpush1.msra.mxu0 0.0
    %8291 = vmatprep.subr.mxu0 0.0
    %8292 = vmatpush1.msra.mxu0 0.0
    %8293 = vmatprep.subr.mxu0 0.0
    %8294 = vmatpush1.msra.mxu0 0.0
    %8295 = vmatprep.subr.mxu0 0.0
    %8296 = vmatpush1.msra.mxu0 0.0
    %8297 = vmatprep.subr.mxu0 0.0
    %8298 = vmatpush1.msra.mxu0 0.0
    %8299 = vmatprep.subr.mxu0 0.0
    %8300 = vmatpush1.msra.mxu0 0.0
    %8301 = vmatprep.subr.mxu0 0.0
    %8302 = vmatpush1.msra.mxu0 0.0
    %8303 = vmatprep.subr.mxu0 0.0
    %8304 = vmatpush1.msra.mxu0 0.0
    %8305 = vmatprep.subr.mxu0 0.0
    %8306 = vmatpush1.msra.mxu0 0.0
    %8307 = vmatprep.subr.mxu0 0.0
    %8308 = vmatpush1.msra.mxu0 0.0
    %8309 = vmatprep.subr.mxu0 0.0
    %8310 = vmatpush1.msra.mxu0 0.0
    %8311 = vmatprep.subr.mxu0 0.0
    %8312 = vmatpush1.msra.mxu0 0.0
    %8313 = vmatprep.subr.mxu0 0.0
    %8314 = vmatpush1.msra.mxu0 0.0
    %8315 = vmatprep.subr.mxu0 0.0
    %8316 = vmatpush1.msra.mxu0 0.0
    %8317 = vmatprep.subr.mxu0 0.0
    %8318 = vmatpush1.msra.mxu0 0.0
    %8319 = vmatprep.subr.mxu0 0.0
    %8320 = vmatpush1.msra.mxu0 0.0
    %8321 = vmatprep.subr.mxu0 0.0
    %8322 = vmatpush1.msra.mxu0 0.0
    %8323 = vmatprep.subr.mxu0 0.0
    %8324 = vmatpush1.msra.mxu0 0.0
    %8325 = vmatprep.mubr.f32.mxu0 0.0
    %8326 = vmatmul.mubr.f32.gmra.mrb[0].mxu0 %v8257
    %v8327 = vpop.f32.mrb[0].mxu0
    %v8328 = vadd.f32 0.0, %v8327
    %v8329 = vpop.f32.mrb[0].mxu0
    %8330 = vdwg.mxu0
    %8331 = vrot.lane.b32.xlu0 %v7739, 32
    %v8332 = vpop.permute.xlu0 %8331
    %v8335 = vsel %vm519, %v8328, 0
    %8337 = vmatprep.subr.mxu0 0.0
    %8338 = vmatpush1.msra.mxu0 %v8332
    %8339 = vmatprep.subr.mxu0 0.0
    %8340 = vmatpush1.msra.mxu0 0.0
    %8341 = vmatprep.subr.mxu0 0.0
    %8342 = vmatpush1.msra.mxu0 0.0
    %8343 = vmatprep.subr.mxu0 0.0
    %8344 = vmatpush1.msra.mxu0 0.0
    %8345 = vmatprep.subr.mxu0 0.0
    %8346 = vmatpush1.msra.mxu0 0.0
    %8347 = vmatprep.subr.mxu0 0.0
    %8348 = vmatpush1.msra.mxu0 0.0
    %8349 = vmatprep.subr.mxu0 0.0
    %8350 = vmatpush1.msra.mxu0 0.0
    %8351 = vmatprep.subr.mxu0 0.0
    %8352 = vmatpush1.msra.mxu0 0.0
    %8353 = vmatprep.subr.mxu0 0.0
    %8354 = vmatpush1.msra.mxu0 0.0
    %8355 = vmatprep.subr.mxu0 0.0
    %8356 = vmatpush1.msra.mxu0 0.0
    %8357 = vmatprep.subr.mxu0 0.0
    %8358 = vmatpush1.msra.mxu0 0.0
    %8359 = vmatprep.subr.mxu0 0.0
    %8360 = vmatpush1.msra.mxu0 0.0
    %8361 = vmatprep.subr.mxu0 0.0
    %8362 = vmatpush1.msra.mxu0 0.0
    %8363 = vmatprep.subr.mxu0 0.0
    %8364 = vmatpush1.msra.mxu0 0.0
    %8365 = vmatprep.subr.mxu0 0.0
    %8366 = vmatpush1.msra.mxu0 0.0
    %8367 = vmatprep.subr.mxu0 0.0
    %8368 = vmatpush1.msra.mxu0 0.0
    %8369 = vmatprep.subr.mxu0 0.0
    %8370 = vmatpush1.msra.mxu0 0.0
    %8371 = vmatprep.subr.mxu0 0.0
    %8372 = vmatpush1.msra.mxu0 0.0
    %8373 = vmatprep.subr.mxu0 0.0
    %8374 = vmatpush1.msra.mxu0 0.0
    %8375 = vmatprep.subr.mxu0 0.0
    %8376 = vmatpush1.msra.mxu0 0.0
    %8377 = vmatprep.subr.mxu0 0.0
    %8378 = vmatpush1.msra.mxu0 0.0
    %8379 = vmatprep.subr.mxu0 0.0
    %8380 = vmatpush1.msra.mxu0 0.0
    %8381 = vmatprep.subr.mxu0 0.0
    %8382 = vmatpush1.msra.mxu0 0.0
    %8383 = vmatprep.subr.mxu0 0.0
    %8384 = vmatpush1.msra.mxu0 0.0
    %8385 = vmatprep.subr.mxu0 0.0
    %8386 = vmatpush1.msra.mxu0 0.0
    %8387 = vmatprep.subr.mxu0 0.0
    %8388 = vmatpush1.msra.mxu0 0.0
    %8389 = vmatprep.subr.mxu0 0.0
    %8390 = vmatpush1.msra.mxu0 0.0
    %8391 = vmatprep.subr.mxu0 0.0
    %8392 = vmatpush1.msra.mxu0 0.0
    %8393 = vmatprep.subr.mxu0 0.0
    %8394 = vmatpush1.msra.mxu0 0.0
    %8395 = vmatprep.subr.mxu0 0.0
    %8396 = vmatpush1.msra.mxu0 0.0
    %8397 = vmatprep.subr.mxu0 0.0
    %8398 = vmatpush1.msra.mxu0 0.0
    %8399 = vmatprep.subr.mxu0 0.0
    %8400 = vmatpush1.msra.mxu0 0.0
    %8401 = vmatprep.mubr.f32.mxu0 0.0
    %8402 = vmatmul.mubr.f32.gmra.mrb[0].mxu0 %v8335
    %v8403 = vpop.f32.mrb[0].mxu0
    %v8404 = vadd.f32 0.0, %v8403
    %v8405 = vpop.f32.mrb[0].mxu0
    %8406 = vdwg.mxu0
    %8407 = vrot.lane.b32.xlu0 %v7737, 32
    %v8408 = vpop.permute.xlu0 %8407
    %v8411 = vsel %vm519, %v8162, 0
    %8413 = vmatprep.subr.mxu0 0.0
    %8414 = vmatpush1.msra.mxu0 %v8408
    %8415 = vmatprep.subr.mxu0 0.0
    %8416 = vmatpush1.msra.mxu0 0.0
    %8417 = vmatprep.subr.mxu0 0.0
    %8418 = vmatpush1.msra.mxu0 0.0
    %8419 = vmatprep.subr.mxu0 0.0
    %8420 = vmatpush1.msra.mxu0 0.0
    %8421 = vmatprep.subr.mxu0 0.0
    %8422 = vmatpush1.msra.mxu0 0.0
    %8423 = vmatprep.subr.mxu0 0.0
    %8424 = vmatpush1.msra.mxu0 0.0
    %8425 = vmatprep.subr.mxu0 0.0
    %8426 = vmatpush1.msra.mxu0 0.0
    %8427 = vmatprep.subr.mxu0 0.0
    %8428 = vmatpush1.msra.mxu0 0.0
    %8429 = vmatprep.subr.mxu0 0.0
    %8430 = vmatpush1.msra.mxu0 0.0
    %8431 = vmatprep.subr.mxu0 0.0
    %8432 = vmatpush1.msra.mxu0 0.0
    %8433 = vmatprep.subr.mxu0 0.0
    %8434 = vmatpush1.msra.mxu0 0.0
    %8435 = vmatprep.subr.mxu0 0.0
    %8436 = vmatpush1.msra.mxu0 0.0
    %8437 = vmatprep.subr.mxu0 0.0
    %8438 = vmatpush1.msra.mxu0 0.0
    %8439 = vmatprep.subr.mxu0 0.0
    %8440 = vmatpush1.msra.mxu0 0.0
    %8441 = vmatprep.subr.mxu0 0.0
    %8442 = vmatpush1.msra.mxu0 0.0
    %8443 = vmatprep.subr.mxu0 0.0
    %8444 = vmatpush1.msra.mxu0 0.0
    %8445 = vmatprep.subr.mxu0 0.0
    %8446 = vmatpush1.msra.mxu0 0.0
    %8447 = vmatprep.subr.mxu0 0.0
    %8448 = vmatpush1.msra.mxu0 0.0
    %8449 = vmatprep.subr.mxu0 0.0
    %8450 = vmatpush1.msra.mxu0 0.0
    %8451 = vmatprep.subr.mxu0 0.0
    %8452 = vmatpush1.msra.mxu0 0.0
    %8453 = vmatprep.subr.mxu0 0.0
    %8454 = vmatpush1.msra.mxu0 0.0
    %8455 = vmatprep.subr.mxu0 0.0
    %8456 = vmatpush1.msra.mxu0 0.0
    %8457 = vmatprep.subr.mxu0 0.0
    %8458 = vmatpush1.msra.mxu0 0.0
    %8459 = vmatprep.subr.mxu0 0.0
    %8460 = vmatpush1.msra.mxu0 0.0
    %8461 = vmatprep.subr.mxu0 0.0
    %8462 = vmatpush1.msra.mxu0 0.0
    %8463 = vmatprep.subr.mxu0 0.0
    %8464 = vmatpush1.msra.mxu0 0.0
    %8465 = vmatprep.subr.mxu0 0.0
    %8466 = vmatpush1.msra.mxu0 0.0
    %8467 = vmatprep.subr.mxu0 0.0
    %8468 = vmatpush1.msra.mxu0 0.0
    %8469 = vmatprep.subr.mxu0 0.0
    %8470 = vmatpush1.msra.mxu0 0.0
    %8471 = vmatprep.subr.mxu0 0.0
    %8472 = vmatpush1.msra.mxu0 0.0
    %8473 = vmatprep.subr.mxu0 0.0
    %8474 = vmatpush1.msra.mxu0 0.0
    %8475 = vmatprep.subr.mxu0 0.0
    %8476 = vmatpush1.msra.mxu0 0.0
    %8477 = vmatprep.mubr.f32.mxu0 0.0
    %8478 = vmatmul.mubr.f32.gmra.mrb[0].mxu0 %v8411
    %v8479 = vpop.f32.mrb[0].mxu0
    %v8480 = vadd.f32 %v8404, %v8479
    %v8481 = vpop.f32.mrb[0].mxu0
    %8482 = vdwg.mxu0
    %8483 = vrot.lane.b32.xlu0 %v8001, 112
    %v8484 = vpop.permute.xlu0 %8483
    %8485 = vrot.lane.b32.xlu0 %v7912, 112
    %v8486 = vpop.permute.xlu0 %8485
    %v8487 = vsel %vm519, %v8484, 0
    %v8489 = vsel %vm519, %v8486, 0
    %8491 = vmatprep.subr.mxu0 0.0
    %8492 = vmatpush1.xpose.msra.mxu0 %v8489
    %8493 = vmatprep.subr.mxu0 0.0
    %8494 = vmatpush1.xpose.msra.mxu0 0.0
    %8495 = vmatprep.subr.mxu0 0.0
    %8496 = vmatpush1.xpose.msra.mxu0 0.0
    %8497 = vmatprep.subr.mxu0 0.0
    %8498 = vmatpush1.xpose.msra.mxu0 0.0
    %8499 = vmatprep.subr.mxu0 0.0
    %8500 = vmatpush1.xpose.msra.mxu0 0.0
    %8501 = vmatprep.subr.mxu0 0.0
    %8502 = vmatpush1.xpose.msra.mxu0 0.0
    %8503 = vmatprep.subr.mxu0 0.0
    %8504 = vmatpush1.xpose.msra.mxu0 0.0
    %8505 = vmatprep.subr.mxu0 0.0
    %8506 = vmatpush1.xpose.msra.mxu0 0.0
    %8507 = vmatprep.subr.mxu0 0.0
    %8508 = vmatpush1.xpose.msra.mxu0 0.0
    %8509 = vmatprep.subr.mxu0 0.0
    %8510 = vmatpush1.xpose.msra.mxu0 0.0
    %8511 = vmatprep.subr.mxu0 0.0
    %8512 = vmatpush1.xpose.msra.mxu0 0.0
    %8513 = vmatprep.subr.mxu0 0.0
    %8514 = vmatpush1.xpose.msra.mxu0 0.0
    %8515 = vmatprep.subr.mxu0 0.0
    %8516 = vmatpush1.xpose.msra.mxu0 0.0
    %8517 = vmatprep.subr.mxu0 0.0
    %8518 = vmatpush1.xpose.msra.mxu0 0.0
    %8519 = vmatprep.subr.mxu0 0.0
    %8520 = vmatpush1.xpose.msra.mxu0 0.0
    %8521 = vmatprep.subr.mxu0 0.0
    %8522 = vmatpush1.xpose.msra.mxu0 0.0
    %8523 = vmatprep.subr.mxu0 0.0
    %8524 = vmatpush1.xpose.msra.mxu0 0.0
    %8525 = vmatprep.subr.mxu0 0.0
    %8526 = vmatpush1.xpose.msra.mxu0 0.0
    %8527 = vmatprep.subr.mxu0 0.0
    %8528 = vmatpush1.xpose.msra.mxu0 0.0
    %8529 = vmatprep.subr.mxu0 0.0
    %8530 = vmatpush1.xpose.msra.mxu0 0.0
    %8531 = vmatprep.subr.mxu0 0.0
    %8532 = vmatpush1.xpose.msra.mxu0 0.0
    %8533 = vmatprep.subr.mxu0 0.0
    %8534 = vmatpush1.xpose.msra.mxu0 0.0
    %8535 = vmatprep.subr.mxu0 0.0
    %8536 = vmatpush1.xpose.msra.mxu0 0.0
    %8537 = vmatprep.subr.mxu0 0.0
    %8538 = vmatpush1.xpose.msra.mxu0 0.0
    %8539 = vmatprep.subr.mxu0 0.0
    %8540 = vmatpush1.xpose.msra.mxu0 0.0
    %8541 = vmatprep.subr.mxu0 0.0
    %8542 = vmatpush1.xpose.msra.mxu0 0.0
    %8543 = vmatprep.subr.mxu0 0.0
    %8544 = vmatpush1.xpose.msra.mxu0 0.0
    %8545 = vmatprep.subr.mxu0 0.0
    %8546 = vmatpush1.xpose.msra.mxu0 0.0
    %8547 = vmatprep.subr.mxu0 0.0
    %8548 = vmatpush1.xpose.msra.mxu0 0.0
    %8549 = vmatprep.subr.mxu0 0.0
    %8550 = vmatpush1.xpose.msra.mxu0 0.0
    %8551 = vmatprep.subr.mxu0 0.0
    %8552 = vmatpush1.xpose.msra.mxu0 0.0
    %8553 = vmatprep.subr.mxu0 0.0
    %8554 = vmatpush1.xpose.msra.mxu0 0.0
    %8555 = vmatprep.mubr.f32.mxu0 0.0
    %8556 = vmatmul.mubr.f32.gmra.mrb[0].mxu0 %v8487
    %v8557 = vpop.f32.mrb[0].mxu0
    %v8558 = vadd.f32 0.0, %v8557
    %v8559 = vpop.f32.mrb[0].mxu0
    %8560 = vdwg.mxu0
    %v8561 = vsel %vm6617, %v8558, -inf
    %8562 = vmax.xlane.f32.xlu0 %v8561
    %v8563 = vpop.xlane.xlu0 %8562
    %v8564 = vsub.f32 %v8558, %v8563
    %v8565 = vmul.f32 %v8564, 1.442695
    %v8566 = vpow.pop %v8565
    %v8567 = vsel %vm6617, %v8566, 0.0
    %8568 = vadd.xlane.f32.xlu0 %v8567
    %v8569 = vpop.xlane.xlu0 %8568
    %v8570 = vrcp.pop %v8569
    %v8571 = vmul.f32 %v8566, %v8570
    %8572 = vrot.lane.b32.xlu0 %v7998, 112
    %v8573 = vpop.permute.xlu0 %8572
    %v8575 = vsel %vm6629, %v8571, 0
    %v8577 = vsel %vm6633, %v8573, 0
    %8579 = vmatprep.subr.mxu0 0.0
    %8580 = vmatpush1.msra.mxu0 %v8577
    %8581 = vmatprep.subr.mxu0 0.0
    %8582 = vmatpush1.msra.mxu0 0.0
    %8583 = vmatprep.subr.mxu0 0.0
    %8584 = vmatpush1.msra.mxu0 0.0
    %8585 = vmatprep.subr.mxu0 0.0
    %8586 = vmatpush1.msra.mxu0 0.0
    %8587 = vmatprep.subr.mxu0 0.0
    %8588 = vmatpush1.msra.mxu0 0.0
    %8589 = vmatprep.subr.mxu0 0.0
    %8590 = vmatpush1.msra.mxu0 0.0
    %8591 = vmatprep.subr.mxu0 0.0
    %8592 = vmatpush1.msra.mxu0 0.0
    %8593 = vmatprep.subr.mxu0 0.0
    %8594 = vmatpush1.msra.mxu0 0.0
    %8595 = vmatprep.subr.mxu0 0.0
    %8596 = vmatpush1.msra.mxu0 0.0
    %8597 = vmatprep.subr.mxu0 0.0
    %8598 = vmatpush1.msra.mxu0 0.0
    %8599 = vmatprep.subr.mxu0 0.0
    %8600 = vmatpush1.msra.mxu0 0.0
    %8601 = vmatprep.subr.mxu0 0.0
    %8602 = vmatpush1.msra.mxu0 0.0
    %8603 = vmatprep.subr.mxu0 0.0
    %8604 = vmatpush1.msra.mxu0 0.0
    %8605 = vmatprep.subr.mxu0 0.0
    %8606 = vmatpush1.msra.mxu0 0.0
    %8607 = vmatprep.subr.mxu0 0.0
    %8608 = vmatpush1.msra.mxu0 0.0
    %8609 = vmatprep.subr.mxu0 0.0
    %8610 = vmatpush1.msra.mxu0 0.0
    %8611 = vmatprep.subr.mxu0 0.0
    %8612 = vmatpush1.msra.mxu0 0.0
    %8613 = vmatprep.subr.mxu0 0.0
    %8614 = vmatpush1.msra.mxu0 0.0
    %8615 = vmatprep.subr.mxu0 0.0
    %8616 = vmatpush1.msra.mxu0 0.0
    %8617 = vmatprep.subr.mxu0 0.0
    %8618 = vmatpush1.msra.mxu0 0.0
    %8619 = vmatprep.subr.mxu0 0.0
    %8620 = vmatpush1.msra.mxu0 0.0
    %8621 = vmatprep.subr.mxu0 0.0
    %8622 = vmatpush1.msra.mxu0 0.0
    %8623 = vmatprep.subr.mxu0 0.0
    %8624 = vmatpush1.msra.mxu0 0.0
    %8625 = vmatprep.subr.mxu0 0.0
    %8626 = vmatpush1.msra.mxu0 0.0
    %8627 = vmatprep.subr.mxu0 0.0
    %8628 = vmatpush1.msra.mxu0 0.0
    %8629 = vmatprep.subr.mxu0 0.0
    %8630 = vmatpush1.msra.mxu0 0.0
    %8631 = vmatprep.subr.mxu0 0.0
    %8632 = vmatpush1.msra.mxu0 0.0
    %8633 = vmatprep.subr.mxu0 0.0
    %8634 = vmatpush1.msra.mxu0 0.0
    %8635 = vmatprep.subr.mxu0 0.0
    %8636 = vmatpush1.msra.mxu0 0.0
    %8637 = vmatprep.subr.mxu0 0.0
    %8638 = vmatpush1.msra.mxu0 0.0
    %8639 = vmatprep.subr.mxu0 0.0
    %8640 = vmatpush1.msra.mxu0 0.0
    %8641 = vmatprep.subr.mxu0 0.0
    %8642 = vmatpush1.msra.mxu0 0.0
    %8643 = vmatprep.mubr.f32.mxu0 0.0
    %8644 = vmatmul.mubr.f32.gmra.mrb[0].mxu0 %v8575
    %v8645 = vpop.f32.mrb[0].mxu0
    %v8646 = vadd.f32 0.0, %v8645
    %v8647 = vpop.f32.mrb[0].mxu0
    %8648 = vdwg.mxu0
    %8649 = vrot.lane.b32.xlu0 %v7741, 32
    %v8650 = vpop.permute.xlu0 %8649
    %v8653 = vsel %vm519, %v8646, 0
    %8655 = vmatprep.subr.mxu0 0.0
    %8656 = vmatpush1.msra.mxu0 %v8650
    %8657 = vmatprep.subr.mxu0 0.0
    %8658 = vmatpush1.msra.mxu0 0.0
    %8659 = vmatprep.subr.mxu0 0.0
    %8660 = vmatpush1.msra.mxu0 0.0
    %8661 = vmatprep.subr.mxu0 0.0
    %8662 = vmatpush1.msra.mxu0 0.0
    %8663 = vmatprep.subr.mxu0 0.0
    %8664 = vmatpush1.msra.mxu0 0.0
    %8665 = vmatprep.subr.mxu0 0.0
    %8666 = vmatpush1.msra.mxu0 0.0
    %8667 = vmatprep.subr.mxu0 0.0
    %8668 = vmatpush1.msra.mxu0 0.0
    %8669 = vmatprep.subr.mxu0 0.0
    %8670 = vmatpush1.msra.mxu0 0.0
    %8671 = vmatprep.subr.mxu0 0.0
    %8672 = vmatpush1.msra.mxu0 0.0
    %8673 = vmatprep.subr.mxu0 0.0
    %8674 = vmatpush1.msra.mxu0 0.0
    %8675 = vmatprep.subr.mxu0 0.0
    %8676 = vmatpush1.msra.mxu0 0.0
    %8677 = vmatprep.subr.mxu0 0.0
    %8678 = vmatpush1.msra.mxu0 0.0
    %8679 = vmatprep.subr.mxu0 0.0
    %8680 = vmatpush1.msra.mxu0 0.0
    %8681 = vmatprep.subr.mxu0 0.0
    %8682 = vmatpush1.msra.mxu0 0.0
    %8683 = vmatprep.subr.mxu0 0.0
    %8684 = vmatpush1.msra.mxu0 0.0
    %8685 = vmatprep.subr.mxu0 0.0
    %8686 = vmatpush1.msra.mxu0 0.0
    %8687 = vmatprep.subr.mxu0 0.0
    %8688 = vmatpush1.msra.mxu0 0.0
    %8689 = vmatprep.subr.mxu0 0.0
    %8690 = vmatpush1.msra.mxu0 0.0
    %8691 = vmatprep.subr.mxu0 0.0
    %8692 = vmatpush1.msra.mxu0 0.0
    %8693 = vmatprep.subr.mxu0 0.0
    %8694 = vmatpush1.msra.mxu0 0.0
    %8695 = vmatprep.subr.mxu0 0.0
    %8696 = vmatpush1.msra.mxu0 0.0
    %8697 = vmatprep.subr.mxu0 0.0
    %8698 = vmatpush1.msra.mxu0 0.0
    %8699 = vmatprep.subr.mxu0 0.0
    %8700 = vmatpush1.msra.mxu0 0.0
    %8701 = vmatprep.subr.mxu0 0.0
    %8702 = vmatpush1.msra.mxu0 0.0
    %8703 = vmatprep.subr.mxu0 0.0
    %8704 = vmatpush1.msra.mxu0 0.0
    %8705 = vmatprep.subr.mxu0 0.0
    %8706 = vmatpush1.msra.mxu0 0.0
    %8707 = vmatprep.subr.mxu0 0.0
    %8708 = vmatpush1.msra.mxu0 0.0
    %8709 = vmatprep.subr.mxu0 0.0
    %8710 = vmatpush1.msra.mxu0 0.0
    %8711 = vmatprep.subr.mxu0 0.0
    %8712 = vmatpush1.msra.mxu0 0.0
    %8713 = vmatprep.subr.mxu0 0.0
    %8714 = vmatpush1.msra.mxu0 0.0
    %8715 = vmatprep.subr.mxu0 0.0
    %8716 = vmatpush1.msra.mxu0 0.0
    %8717 = vmatprep.subr.mxu0 0.0
    %8718 = vmatpush1.msra.mxu0 0.0
    %8719 = vmatprep.mubr.f32.mxu0 0.0
    %8720 = vmatmul.mubr.f32.gmra.mrb[0].mxu0 %v8653
    %v8721 = vpop.f32.mrb[0].mxu0
    %v8722 = vadd.f32 0.0, %v8721
    %v8723 = vpop.f32.mrb[0].mxu0
    %8724 = vdwg.mxu0
    %v8725 = vadd.f32 %v8480, %v8722
    %8726 = vrot.lane.b32.xlu0 %v8001, 104
    %v8727 = vpop.permute.xlu0 %8726
    %8728 = vrot.lane.b32.xlu0 %v7912, 104
    %v8729 = vpop.permute.xlu0 %8728
    %v8730 = vsel %vm519, %v8727, 0
    %v8732 = vsel %vm519, %v8729, 0
    %8734 = vmatprep.subr.mxu0 0.0
    %8735 = vmatpush1.xpose.msra.mxu0 %v8732
    %8736 = vmatprep.subr.mxu0 0.0
    %8737 = vmatpush1.xpose.msra.mxu0 0.0
    %8738 = vmatprep.subr.mxu0 0.0
    %8739 = vmatpush1.xpose.msra.mxu0 0.0
    %8740 = vmatprep.subr.mxu0 0.0
    %8741 = vmatpush1.xpose.msra.mxu0 0.0
    %8742 = vmatprep.subr.mxu0 0.0
    %8743 = vmatpush1.xpose.msra.mxu0 0.0
    %8744 = vmatprep.subr.mxu0 0.0
    %8745 = vmatpush1.xpose.msra.mxu0 0.0
    %8746 = vmatprep.subr.mxu0 0.0
    %8747 = vmatpush1.xpose.msra.mxu0 0.0
    %8748 = vmatprep.subr.mxu0 0.0
    %8749 = vmatpush1.xpose.msra.mxu0 0.0
    %8750 = vmatprep.subr.mxu0 0.0
    %8751 = vmatpush1.xpose.msra.mxu0 0.0
    %8752 = vmatprep.subr.mxu0 0.0
    %8753 = vmatpush1.xpose.msra.mxu0 0.0
    %8754 = vmatprep.subr.mxu0 0.0
    %8755 = vmatpush1.xpose.msra.mxu0 0.0
    %8756 = vmatprep.subr.mxu0 0.0
    %8757 = vmatpush1.xpose.msra.mxu0 0.0
    %8758 = vmatprep.subr.mxu0 0.0
    %8759 = vmatpush1.xpose.msra.mxu0 0.0
    %8760 = vmatprep.subr.mxu0 0.0
    %8761 = vmatpush1.xpose.msra.mxu0 0.0
    %8762 = vmatprep.subr.mxu0 0.0
    %8763 = vmatpush1.xpose.msra.mxu0 0.0
    %8764 = vmatprep.subr.mxu0 0.0
    %8765 = vmatpush1.xpose.msra.mxu0 0.0
    %8766 = vmatprep.subr.mxu0 0.0
    %8767 = vmatpush1.xpose.msra.mxu0 0.0
    %8768 = vmatprep.subr.mxu0 0.0
    %8769 = vmatpush1.xpose.msra.mxu0 0.0
    %8770 = vmatprep.subr.mxu0 0.0
    %8771 = vmatpush1.xpose.msra.mxu0 0.0
    %8772 = vmatprep.subr.mxu0 0.0
    %8773 = vmatpush1.xpose.msra.mxu0 0.0
    %8774 = vmatprep.subr.mxu0 0.0
    %8775 = vmatpush1.xpose.msra.mxu0 0.0
    %8776 = vmatprep.subr.mxu0 0.0
    %8777 = vmatpush1.xpose.msra.mxu0 0.0
    %8778 = vmatprep.subr.mxu0 0.0
    %8779 = vmatpush1.xpose.msra.mxu0 0.0
    %8780 = vmatprep.subr.mxu0 0.0
    %8781 = vmatpush1.xpose.msra.mxu0 0.0
    %8782 = vmatprep.subr.mxu0 0.0
    %8783 = vmatpush1.xpose.msra.mxu0 0.0
    %8784 = vmatprep.subr.mxu0 0.0
    %8785 = vmatpush1.xpose.msra.mxu0 0.0
    %8786 = vmatprep.subr.mxu0 0.0
    %8787 = vmatpush1.xpose.msra.mxu0 0.0
    %8788 = vmatprep.subr.mxu0 0.0
    %8789 = vmatpush1.xpose.msra.mxu0 0.0
    %8790 = vmatprep.subr.mxu0 0.0
    %8791 = vmatpush1.xpose.msra.mxu0 0.0
    %8792 = vmatprep.subr.mxu0 0.0
    %8793 = vmatpush1.xpose.msra.mxu0 0.0
    %8794 = vmatprep.subr.mxu0 0.0
    %8795 = vmatpush1.xpose.msra.mxu0 0.0
    %8796 = vmatprep.subr.mxu0 0.0
    %8797 = vmatpush1.xpose.msra.mxu0 0.0
    %8798 = vmatprep.mubr.f32.mxu0 0.0
    %8799 = vmatmul.mubr.f32.gmra.mrb[0].mxu0 %v8730
    %v8800 = vpop.f32.mrb[0].mxu0
    %v8801 = vadd.f32 0.0, %v8800
    %v8802 = vpop.f32.mrb[0].mxu0
    %8803 = vdwg.mxu0
    %v8804 = vsel %vm6617, %v8801, -inf
    %8805 = vmax.xlane.f32.xlu0 %v8804
    %v8806 = vpop.xlane.xlu0 %8805
    %v8807 = vsub.f32 %v8801, %v8806
    %v8808 = vmul.f32 %v8807, 1.442695
    %v8809 = vpow.pop %v8808
    %v8810 = vsel %vm6617, %v8809, 0.0
    %8811 = vadd.xlane.f32.xlu0 %v8810
    %v8812 = vpop.xlane.xlu0 %8811
    %v8813 = vrcp.pop %v8812
    %v8814 = vmul.f32 %v8809, %v8813
    %8815 = vrot.lane.b32.xlu0 %v7998, 104
    %v8816 = vpop.permute.xlu0 %8815
    %v8818 = vsel %vm6629, %v8814, 0
    %v8820 = vsel %vm6633, %v8816, 0
    %8822 = vmatprep.subr.mxu0 0.0
    %8823 = vmatpush1.msra.mxu0 %v8820
    %8824 = vmatprep.subr.mxu0 0.0
    %8825 = vmatpush1.msra.mxu0 0.0
    %8826 = vmatprep.subr.mxu0 0.0
    %8827 = vmatpush1.msra.mxu0 0.0
    %8828 = vmatprep.subr.mxu0 0.0
    %8829 = vmatpush1.msra.mxu0 0.0
    %8830 = vmatprep.subr.mxu0 0.0
    %8831 = vmatpush1.msra.mxu0 0.0
    %8832 = vmatprep.subr.mxu0 0.0
    %8833 = vmatpush1.msra.mxu0 0.0
    %8834 = vmatprep.subr.mxu0 0.0
    %8835 = vmatpush1.msra.mxu0 0.0
    %8836 = vmatprep.subr.mxu0 0.0
    %8837 = vmatpush1.msra.mxu0 0.0
    %8838 = vmatprep.subr.mxu0 0.0
    %8839 = vmatpush1.msra.mxu0 0.0
    %8840 = vmatprep.subr.mxu0 0.0
    %8841 = vmatpush1.msra.mxu0 0.0
    %8842 = vmatprep.subr.mxu0 0.0
    %8843 = vmatpush1.msra.mxu0 0.0
    %8844 = vmatprep.subr.mxu0 0.0
    %8845 = vmatpush1.msra.mxu0 0.0
    %8846 = vmatprep.subr.mxu0 0.0
    %8847 = vmatpush1.msra.mxu0 0.0
    %8848 = vmatprep.subr.mxu0 0.0
    %8849 = vmatpush1.msra.mxu0 0.0
    %8850 = vmatprep.subr.mxu0 0.0
    %8851 = vmatpush1.msra.mxu0 0.0
    %8852 = vmatprep.subr.mxu0 0.0
    %8853 = vmatpush1.msra.mxu0 0.0
    %8854 = vmatprep.subr.mxu0 0.0
    %8855 = vmatpush1.msra.mxu0 0.0
    %8856 = vmatprep.subr.mxu0 0.0
    %8857 = vmatpush1.msra.mxu0 0.0
    %8858 = vmatprep.subr.mxu0 0.0
    %8859 = vmatpush1.msra.mxu0 0.0
    %8860 = vmatprep.subr.mxu0 0.0
    %8861 = vmatpush1.msra.mxu0 0.0
    %8862 = vmatprep.subr.mxu0 0.0
    %8863 = vmatpush1.msra.mxu0 0.0
    %8864 = vmatprep.subr.mxu0 0.0
    %8865 = vmatpush1.msra.mxu0 0.0
    %8866 = vmatprep.subr.mxu0 0.0
    %8867 = vmatpush1.msra.mxu0 0.0
    %8868 = vmatprep.subr.mxu0 0.0
    %8869 = vmatpush1.msra.mxu0 0.0
    %8870 = vmatprep.subr.mxu0 0.0
    %8871 = vmatpush1.msra.mxu0 0.0
    %8872 = vmatprep.subr.mxu0 0.0
    %8873 = vmatpush1.msra.mxu0 0.0
    %8874 = vmatprep.subr.mxu0 0.0
    %8875 = vmatpush1.msra.mxu0 0.0
    %8876 = vmatprep.subr.mxu0 0.0
    %8877 = vmatpush1.msra.mxu0 0.0
    %8878 = vmatprep.subr.mxu0 0.0
    %8879 = vmatpush1.msra.mxu0 0.0
    %8880 = vmatprep.subr.mxu0 0.0
    %8881 = vmatpush1.msra.mxu0 0.0
    %8882 = vmatprep.subr.mxu0 0.0
    %8883 = vmatpush1.msra.mxu0 0.0
    %8884 = vmatprep.subr.mxu0 0.0
    %8885 = vmatpush1.msra.mxu0 0.0
    %8886 = vmatprep.mubr.f32.mxu0 0.0
    %8887 = vmatmul.mubr.f32.gmra.mrb[0].mxu0 %v8818
    %v8888 = vpop.f32.mrb[0].mxu0
    %v8889 = vadd.f32 0.0, %v8888
    %v8890 = vpop.f32.mrb[0].mxu0
    %8891 = vdwg.mxu0
    %8892 = vrot.lane.b32.xlu0 %v7743, 32
    %v8893 = vpop.permute.xlu0 %8892
    %v8896 = vsel %vm519, %v8889, 0
    %8898 = vmatprep.subr.mxu0 0.0
    %8899 = vmatpush1.msra.mxu0 %v8893
    %8900 = vmatprep.subr.mxu0 0.0
    %8901 = vmatpush1.msra.mxu0 0.0
    %8902 = vmatprep.subr.mxu0 0.0
    %8903 = vmatpush1.msra.mxu0 0.0
    %8904 = vmatprep.subr.mxu0 0.0
    %8905 = vmatpush1.msra.mxu0 0.0
    %8906 = vmatprep.subr.mxu0 0.0
    %8907 = vmatpush1.msra.mxu0 0.0
    %8908 = vmatprep.subr.mxu0 0.0
    %8909 = vmatpush1.msra.mxu0 0.0
    %8910 = vmatprep.subr.mxu0 0.0
    %8911 = vmatpush1.msra.mxu0 0.0
    %8912 = vmatprep.subr.mxu0 0.0
    %8913 = vmatpush1.msra.mxu0 0.0
    %8914 = vmatprep.subr.mxu0 0.0
    %8915 = vmatpush1.msra.mxu0 0.0
    %8916 = vmatprep.subr.mxu0 0.0
    %8917 = vmatpush1.msra.mxu0 0.0
    %8918 = vmatprep.subr.mxu0 0.0
    %8919 = vmatpush1.msra.mxu0 0.0
    %8920 = vmatprep.subr.mxu0 0.0
    %8921 = vmatpush1.msra.mxu0 0.0
    %8922 = vmatprep.subr.mxu0 0.0
    %8923 = vmatpush1.msra.mxu0 0.0
    %8924 = vmatprep.subr.mxu0 0.0
    %8925 = vmatpush1.msra.mxu0 0.0
    %8926 = vmatprep.subr.mxu0 0.0
    %8927 = vmatpush1.msra.mxu0 0.0
    %8928 = vmatprep.subr.mxu0 0.0
    %8929 = vmatpush1.msra.mxu0 0.0
    %8930 = vmatprep.subr.mxu0 0.0
    %8931 = vmatpush1.msra.mxu0 0.0
    %8932 = vmatprep.subr.mxu0 0.0
    %8933 = vmatpush1.msra.mxu0 0.0
    %8934 = vmatprep.subr.mxu0 0.0
    %8935 = vmatpush1.msra.mxu0 0.0
    %8936 = vmatprep.subr.mxu0 0.0
    %8937 = vmatpush1.msra.mxu0 0.0
    %8938 = vmatprep.subr.mxu0 0.0
    %8939 = vmatpush1.msra.mxu0 0.0
    %8940 = vmatprep.subr.mxu0 0.0
    %8941 = vmatpush1.msra.mxu0 0.0
    %8942 = vmatprep.subr.mxu0 0.0
    %8943 = vmatpush1.msra.mxu0 0.0
    %8944 = vmatprep.subr.mxu0 0.0
    %8945 = vmatpush1.msra.mxu0 0.0
    %8946 = vmatprep.subr.mxu0 0.0
    %8947 = vmatpush1.msra.mxu0 0.0
    %8948 = vmatprep.subr.mxu0 0.0
    %8949 = vmatpush1.msra.mxu0 0.0
    %8950 = vmatprep.subr.mxu0 0.0
    %8951 = vmatpush1.msra.mxu0 0.0
    %8952 = vmatprep.subr.mxu0 0.0
    %8953 = vmatpush1.msra.mxu0 0.0
    %8954 = vmatprep.subr.mxu0 0.0
    %8955 = vmatpush1.msra.mxu0 0.0
    %8956 = vmatprep.subr.mxu0 0.0
    %8957 = vmatpush1.msra.mxu0 0.0
    %8958 = vmatprep.subr.mxu0 0.0
    %8959 = vmatpush1.msra.mxu0 0.0
    %8960 = vmatprep.subr.mxu0 0.0
    %8961 = vmatpush1.msra.mxu0 0.0
    %8962 = vmatprep.mubr.f32.mxu0 0.0
    %8963 = vmatmul.mubr.f32.gmra.mrb[0].mxu0 %v8896
    %v8964 = vpop.f32.mrb[0].mxu0
    %v8965 = vadd.f32 0.0, %v8964
    %v8966 = vpop.f32.mrb[0].mxu0
    %8967 = vdwg.mxu0
    %v8968 = vadd.f32 %v8725, %v8965
    %v8969 = vlaneseq
    %v8970 = vshrl.u32 %v8969, 7
    %v8971 = vsub.s32 3, %v8970
    %v8972 = vrot.slane %v7746, %v8971
    %v8973 = vadd.f32 %v8968, %v8972
    %v8974 = vadd.f32 %v7735, %v8973
    %v8975 = vsel %vm7517, %v8974, 0.0
    %8976 = vadd.xlane.f32.xlu0 %v8975
    %v8977 = vpop.xlane.xlu0 %8976
    %v8978 = vmul.f32 %v8977, %v2717
    %v8979 = vsub.f32 %v8974, %v8978
    %v8980 = vmul.f32 %v8979, %v8979
    %v8981 = vsel %vm7517, %v8980, 0.0
    %8982 = vadd.xlane.f32.xlu0 %v8981
    %v8983 = vpop.xlane.xlu0 %8982
    %v8984 = vmul.f32 %v8983, %v2717
    %v8985 = vadd.f32 %v8984, 1e-05
    %v8986 = vrsqrt.pop %v8985
    %v8987 = vmul.f32 %v8979, %v8986
    %v8988 = vlaneseq
    %v8989 = vshrl.u32 %v8988, 7
    %v8990 = vsub.s32 6, %v8989
    %v8991 = vrot.slane %v7746, %v8990
    %v8992 = vmul.f32 %v8987, %v8991
    %v8993 = vlaneseq
    %v8994 = vshrl.u32 %v8993, 7
    %v8995 = vsub.s32 7, %v8994
    %v8996 = vrot.slane %v7746, %v8995
    %v8997 = vadd.f32 %v8992, %v8996
    %v8998 = vlaneseq
    %v8999 = vshrl.u32 %v8998, 7
    %v9000 = vsub.s32 4, %v8999
    %v9001 = vrot.slane %v7746, %v9000
    %v9003 = vsel %vm135, %v8997, 0
    %9005 = vmatprep.subr.mxu0 0.0
    %9006 = vmatpush1.msra.mxu0 %v7738
    %9007 = vmatprep.subr.mxu0 0.0
    %9008 = vmatpush1.msra.mxu0 %v7740
    %9009 = vmatprep.subr.mxu0 0.0
    %9010 = vmatpush1.msra.mxu0 %v7742
    %9011 = vmatprep.subr.mxu0 0.0
    %9012 = vmatpush1.msra.mxu0 %v7744
    %9013 = vmatprep.subr.mxu0 0.0
    %9014 = vmatpush1.msra.mxu0 0.0
    %9015 = vmatprep.subr.mxu0 0.0
    %9016 = vmatpush1.msra.mxu0 0.0
    %9017 = vmatprep.subr.mxu0 0.0
    %9018 = vmatpush1.msra.mxu0 0.0
    %9019 = vmatprep.subr.mxu0 0.0
    %9020 = vmatpush1.msra.mxu0 0.0
    %9021 = vmatprep.subr.mxu0 0.0
    %9022 = vmatpush1.msra.mxu0 0.0
    %9023 = vmatprep.subr.mxu0 0.0
    %9024 = vmatpush1.msra.mxu0 0.0
    %9025 = vmatprep.subr.mxu0 0.0
    %9026 = vmatpush1.msra.mxu0 0.0
    %9027 = vmatprep.subr.mxu0 0.0
    %9028 = vmatpush1.msra.mxu0 0.0
    %9029 = vmatprep.subr.mxu0 0.0
    %9030 = vmatpush1.msra.mxu0 0.0
    %9031 = vmatprep.subr.mxu0 0.0
    %9032 = vmatpush1.msra.mxu0 0.0
    %9033 = vmatprep.subr.mxu0 0.0
    %9034 = vmatpush1.msra.mxu0 0.0
    %9035 = vmatprep.subr.mxu0 0.0
    %9036 = vmatpush1.msra.mxu0 0.0
    %9037 = vmatprep.subr.mxu0 0.0
    %9038 = vmatpush1.msra.mxu0 0.0
    %9039 = vmatprep.subr.mxu0 0.0
    %9040 = vmatpush1.msra.mxu0 0.0
    %9041 = vmatprep.subr.mxu0 0.0
    %9042 = vmatpush1.msra.mxu0 0.0
    %9043 = vmatprep.subr.mxu0 0.0
    %9044 = vmatpush1.msra.mxu0 0.0
    %9045 = vmatprep.subr.mxu0 0.0
    %9046 = vmatpush1.msra.mxu0 0.0
    %9047 = vmatprep.subr.mxu0 0.0
    %9048 = vmatpush1.msra.mxu0 0.0
    %9049 = vmatprep.subr.mxu0 0.0
    %9050 = vmatpush1.msra.mxu0 0.0
    %9051 = vmatprep.subr.mxu0 0.0
    %9052 = vmatpush1.msra.mxu0 0.0
    %9053 = vmatprep.subr.mxu0 0.0
    %9054 = vmatpush1.msra.mxu0 0.0
    %9055 = vmatprep.subr.mxu0 0.0
    %9056 = vmatpush1.msra.mxu0 0.0
    %9057 = vmatprep.subr.mxu0 0.0
    %9058 = vmatpush1.msra.mxu0 0.0
    %9059 = vmatprep.subr.mxu0 0.0
    %9060 = vmatpush1.msra.mxu0 0.0
    %9061 = vmatprep.subr.mxu0 0.0
    %9062 = vmatpush1.msra.mxu0 0.0
    %9063 = vmatprep.subr.mxu0 0.0
    %9064 = vmatpush1.msra.mxu0 0.0
    %9065 = vmatprep.subr.mxu0 0.0
    %9066 = vmatpush1.msra.mxu0 0.0
    %9067 = vmatprep.subr.mxu0 0.0
    %9068 = vmatpush1.msra.mxu0 0.0
    %9069 = vmatprep.mubr.f32.mxu0 0.0
    %9070 = vmatmul.mubr.f32.gmra.mrb[0].mxu0 %v9003
    %v9071 = vpop.f32.mrb[0].mxu0
    %v9072 = vadd.f32 %v9001, %v9071
    %v9073 = vpop.f32.mrb[0].mxu0
    %9074 = vdwg.mxu0
    %v9075 = vmax.f32 %v9072, 0.0
    %v9076 = vlaneseq
    %v9077 = vshrl.u32 %v9076, 7
    %v9078 = vsub.s32 5, %v9077
    %v9079 = vrot.slane %v7746, %v9078
    %9084 = vrot.lane.b32.xlu0 %v7738, 96
    %v9085 = vpop.permute.xlu0 %9084
    %9086 = vrot.lane.b32.xlu0 %v7740, 96
    %v9087 = vpop.permute.xlu0 %9086
    %9088 = vrot.lane.b32.xlu0 %v7742, 96
    %v9089 = vpop.permute.xlu0 %9088
    %9090 = vrot.lane.b32.xlu0 %v7744, 96
    %v9091 = vpop.permute.xlu0 %9090
    %v9097 = vsel %vm135, %v9075, 0
    %9099 = vmatprep.subr.mxu0 0.0
    %9100 = vmatpush1.msra.mxu0 %v9085
    %9101 = vmatprep.subr.mxu0 0.0
    %9102 = vmatpush1.msra.mxu0 %v9087
    %9103 = vmatprep.subr.mxu0 0.0
    %9104 = vmatpush1.msra.mxu0 %v9089
    %9105 = vmatprep.subr.mxu0 0.0
    %9106 = vmatpush1.msra.mxu0 %v9091
    %9107 = vmatprep.subr.mxu0 0.0
    %9108 = vmatpush1.msra.mxu0 0.0
    %9109 = vmatprep.subr.mxu0 0.0
    %9110 = vmatpush1.msra.mxu0 0.0
    %9111 = vmatprep.subr.mxu0 0.0
    %9112 = vmatpush1.msra.mxu0 0.0
    %9113 = vmatprep.subr.mxu0 0.0
    %9114 = vmatpush1.msra.mxu0 0.0
    %9115 = vmatprep.subr.mxu0 0.0
    %9116 = vmatpush1.msra.mxu0 0.0
    %9117 = vmatprep.subr.mxu0 0.0
    %9118 = vmatpush1.msra.mxu0 0.0
    %9119 = vmatprep.subr.mxu0 0.0
    %9120 = vmatpush1.msra.mxu0 0.0
    %9121 = vmatprep.subr.mxu0 0.0
    %9122 = vmatpush1.msra.mxu0 0.0
    %9123 = vmatprep.subr.mxu0 0.0
    %9124 = vmatpush1.msra.mxu0 0.0
    %9125 = vmatprep.subr.mxu0 0.0
    %9126 = vmatpush1.msra.mxu0 0.0
    %9127 = vmatprep.subr.mxu0 0.0
    %9128 = vmatpush1.msra.mxu0 0.0
    %9129 = vmatprep.subr.mxu0 0.0
    %9130 = vmatpush1.msra.mxu0 0.0
    %9131 = vmatprep.subr.mxu0 0.0
    %9132 = vmatpush1.msra.mxu0 0.0
    %9133 = vmatprep.subr.mxu0 0.0
    %9134 = vmatpush1.msra.mxu0 0.0
    %9135 = vmatprep.subr.mxu0 0.0
    %9136 = vmatpush1.msra.mxu0 0.0
    %9137 = vmatprep.subr.mxu0 0.0
    %9138 = vmatpush1.msra.mxu0 0.0
    %9139 = vmatprep.subr.mxu0 0.0
    %9140 = vmatpush1.msra.mxu0 0.0
    %9141 = vmatprep.subr.mxu0 0.0
    %9142 = vmatpush1.msra.mxu0 0.0
    %9143 = vmatprep.subr.mxu0 0.0
    %9144 = vmatpush1.msra.mxu0 0.0
    %9145 = vmatprep.subr.mxu0 0.0
    %9146 = vmatpush1.msra.mxu0 0.0
    %9147 = vmatprep.subr.mxu0 0.0
    %9148 = vmatpush1.msra.mxu0 0.0
    %9149 = vmatprep.subr.mxu0 0.0
    %9150 = vmatpush1.msra.mxu0 0.0
    %9151 = vmatprep.subr.mxu0 0.0
    %9152 = vmatpush1.msra.mxu0 0.0
    %9153 = vmatprep.subr.mxu0 0.0
    %9154 = vmatpush1.msra.mxu0 0.0
    %9155 = vmatprep.subr.mxu0 0.0
    %9156 = vmatpush1.msra.mxu0 0.0
    %9157 = vmatprep.subr.mxu0 0.0
    %9158 = vmatpush1.msra.mxu0 0.0
    %9159 = vmatprep.subr.mxu0 0.0
    %9160 = vmatpush1.msra.mxu0 0.0
    %9161 = vmatprep.subr.mxu0 0.0
    %9162 = vmatpush1.msra.mxu0 0.0
    %9163 = vmatprep.mubr.f32.mxu0 0.0
    %9164 = vmatmul.mubr.f32.gmra.mrb[0].mxu0 %v9097
    %v9165 = vpop.f32.mrb[0].mxu0
    %v9166 = vadd.f32 %v9079, %v9165
    %v9167 = vpop.f32.mrb[0].mxu0
    %9168 = vdwg.mxu0
    %v9169 = vadd.f32 %v8997, %v9166
    %v9170 = vsel %vm7517, %v9169, 0.0
    %9171 = vadd.xlane.f32.xlu0 %v9170
    %v9172 = vpop.xlane.xlu0 %9171
    %v9173 = vmul.f32 %v9172, %v2717
    %v9174 = vsub.f32 %v9169, %v9173
    %v9175 = vmul.f32 %v9174, %v9174
    %v9176 = vsel %vm7517, %v9175, 0.0
    %9177 = vadd.xlane.f32.xlu0 %v9176
    %v9178 = vpop.xlane.xlu0 %9177
    %v9179 = vmul.f32 %v9178, %v2717
    %v9180 = vadd.f32 %v9179, 1e-05
    %v9181 = vrsqrt.pop %v9180
    %v9182 = vmul.f32 %v9174, %v9181
    %v9183 = vlaneseq
    %v9184 = vshrl.u32 %v9183, 7
    %v9185 = vsub.s32 0, %v9184
    %v9186 = vrot.slane %v7747, %v9185
    %v9187 = vmul.f32 %v9182, %v9186
    %v9188 = vlaneseq
    %v9189 = vshrl.u32 %v9188, 7
    %v9190 = vsub.s32 1, %v9189
    %v9191 = vrot.slane %v7747, %v9190
    %v9192 = vadd.f32 %v9187, %v9191
    %v9193 = vsel %vm7517, %v9192, 0.0
    %9194 = vadd.xlane.f32.xlu0 %v9193
    %v9195 = vpop.xlane.xlu0 %9194
    %v9196 = vmul.f32 %v9195, %v2717
    %v9197 = vsub.f32 %v9192, %v9196
    %v9198 = vmul.f32 %v9197, %v9197
    %v9199 = vsel %vm7517, %v9198, 0.0
    %9200 = vadd.xlane.f32.xlu0 %v9199
    %v9201 = vpop.xlane.xlu0 %9200
    %v9202 = vmul.f32 %v9201, %v2717
    %v9203 = vadd.f32 %v9202, 1e-05
    %v9204 = vrsqrt.pop %v9203
    %v9205 = vmul.f32 %v9197, %v9204
    %v9206 = vlaneseq
    %v9207 = vshrl.u32 %v9206, 7
    %v9208 = vsub.s32 2, %v9207
    %v9209 = vrot.slane %v120, %v9208
    %v9210 = vmul.f32 %v9205, %v9209
    %v9211 = vlaneseq
    %v9212 = vshrl.u32 %v9211, 7
    %v9213 = vsub.s32 3, %v9212
    %v9214 = vrot.slane %v120, %v9213
    %v9215 = vadd.f32 %v9210, %v9214
    %v9216 = vld [vmem:[%s7] sm:$0xff]
    %v9217 = vld [vmem:[%s7 + $0x8] sm:$0xff]
    %v9218 = vld [vmem:[%s7 + $0x10] sm:$0xff]
    %v9219 = vld [vmem:[%s7 + $0x18] sm:$0xff]
    %v9220 = vld [vmem:[%s7 + $0x20] sm:$0xff]
    %v9221 = vld [vmem:[%s7 + $0x28] sm:$0xff]
    %v9222 = vld [vmem:[%s7 + $0x30] sm:$0xff]
    %v9223 = vld [vmem:[%s7 + $0x38] sm:$0xff]
    %v9224 = vld [vmem:[%s7 + $0x40] sm:$0xff]
    %v9225 = vld [vmem:[%s7 + $0x48] sm:$0xff]
    %v9226 = vld [vmem:[%s7 + $0x50] sm:$0xff]
    %v9227 = vld [vmem:[%s7 + $0x58] sm:$0xff]
    %v9228 = vld [vmem:[%s7 + $0x60] sm:$0xff]
    %v9229 = vld [vmem:[%s7 + $0x68] sm:$0xff]
    %v9230 = vld [vmem:[%s7 + $0x70] sm:$0xff]
    %v9231 = vld [vmem:[%s7 + $0x78] sm:$0xff]
    %v9232 = vld [vmem:[#allocation4] sm:$0xf]
    %v9233 = vlaneseq
    %v9234 = vshrl.u32 %v9233, 7
    %v9235 = vsub.s32 0, %v9234
    %v9236 = vrot.slane %v9232, %v9235
    %9237 = vmatprep.subr.mxu0 0.0
    %9238 = vmatpush1.msra.mxu0 %v9216
    %9239 = vmatprep.subr.mxu0 0.0
    %9240 = vmatpush1.msra.mxu0 %v9217
    %9241 = vmatprep.subr.mxu0 0.0
    %9242 = vmatpush1.msra.mxu0 %v9218
    %9243 = vmatprep.subr.mxu0 0.0
    %9244 = vmatpush1.msra.mxu0 %v9219
    %9245 = vmatprep.subr.mxu0 0.0
    %9246 = vmatpush1.msra.mxu0 0.0
    %9247 = vmatprep.subr.mxu0 0.0
    %9248 = vmatpush1.msra.mxu0 0.0
    %9249 = vmatprep.subr.mxu0 0.0
    %9250 = vmatpush1.msra.mxu0 0.0
    %9251 = vmatprep.subr.mxu0 0.0
    %9252 = vmatpush1.msra.mxu0 0.0
    %9253 = vmatprep.subr.mxu0 0.0
    %9254 = vmatpush1.msra.mxu0 0.0
    %9255 = vmatprep.subr.mxu0 0.0
    %9256 = vmatpush1.msra.mxu0 0.0
    %9257 = vmatprep.subr.mxu0 0.0
    %9258 = vmatpush1.msra.mxu0 0.0
    %9259 = vmatprep.subr.mxu0 0.0
    %9260 = vmatpush1.msra.mxu0 0.0
    %9261 = vmatprep.subr.mxu0 0.0
    %9262 = vmatpush1.msra.mxu0 0.0
    %9263 = vmatprep.subr.mxu0 0.0
    %9264 = vmatpush1.msra.mxu0 0.0
    %9265 = vmatprep.subr.mxu0 0.0
    %9266 = vmatpush1.msra.mxu0 0.0
    %9267 = vmatprep.subr.mxu0 0.0
    %9268 = vmatpush1.msra.mxu0 0.0
    %9269 = vmatprep.subr.mxu0 0.0
    %9270 = vmatpush1.msra.mxu0 0.0
    %9271 = vmatprep.subr.mxu0 0.0
    %9272 = vmatpush1.msra.mxu0 0.0
    %9273 = vmatprep.subr.mxu0 0.0
    %9274 = vmatpush1.msra.mxu0 0.0
    %9275 = vmatprep.subr.mxu0 0.0
    %9276 = vmatpush1.msra.mxu0 0.0
    %9277 = vmatprep.subr.mxu0 0.0
    %9278 = vmatpush1.msra.mxu0 0.0
    %9279 = vmatprep.subr.mxu0 0.0
    %9280 = vmatpush1.msra.mxu0 0.0
    %9281 = vmatprep.subr.mxu0 0.0
    %9282 = vmatpush1.msra.mxu0 0.0
    %9283 = vmatprep.subr.mxu0 0.0
    %9284 = vmatpush1.msra.mxu0 0.0
    %9285 = vmatprep.subr.mxu0 0.0
    %9286 = vmatpush1.msra.mxu0 0.0
    %9287 = vmatprep.subr.mxu0 0.0
    %9288 = vmatpush1.msra.mxu0 0.0
    %9289 = vmatprep.subr.mxu0 0.0
    %9290 = vmatpush1.msra.mxu0 0.0
    %9291 = vmatprep.subr.mxu0 0.0
    %9292 = vmatpush1.msra.mxu0 0.0
    %9293 = vmatprep.subr.mxu0 0.0
    %9294 = vmatpush1.msra.mxu0 0.0
    %9295 = vmatprep.subr.mxu0 0.0
    %9296 = vmatpush1.msra.mxu0 0.0
    %9297 = vmatprep.subr.mxu0 0.0
    %9298 = vmatpush1.msra.mxu0 0.0
    %9299 = vmatprep.subr.mxu0 0.0
    %9300 = vmatpush1.msra.mxu0 0.0
    %9301 = vmatprep.mubr.f32.mxu0 0.0
    %9302 = vmatmul.mubr.f32.gmra.mrb[0].mxu0 %v6292
    %v9303 = vpop.f32.mrb[0].mxu0
    %v9304 = vadd.f32 %v9236, %v9303
    %v9305 = vpop.f32.mrb[0].mxu0
    %9306 = vdwg.mxu0
    %v9307 = vmul.f32 %v9304, 0.5
    %v9308 = vmul.f32 %v9304, 0.044715
    %v9309 = vmul.f32 %v9308, %v9304
    %v9310 = vmul.f32 %v9309, %v9304
    %v9311 = vadd.f32 %v9304, %v9310
    %v9312 = vmul.f32 %v9311, 0.7978846
    %v9313 = vtanh.pop %v9312
    %v9314 = vadd.f32 %v9313, 1.0
    %v9315 = vmul.f32 %v9307, %v9314
    %v9316 = vlaneseq
    %v9317 = vshrl.u32 %v9316, 7
    %v9318 = vsub.s32 1, %v9317
    %v9319 = vrot.slane %v9232, %v9318
    %v9321 = vsel %vm135, %v9315, 0
    %9323 = vmatprep.subr.mxu0 0.0
    %9324 = vmatpush1.msra.mxu0 %v9220
    %9325 = vmatprep.subr.mxu0 0.0
    %9326 = vmatpush1.msra.mxu0 %v9221
    %9327 = vmatprep.subr.mxu0 0.0
    %9328 = vmatpush1.msra.mxu0 %v9222
    %9329 = vmatprep.subr.mxu0 0.0
    %9330 = vmatpush1.msra.mxu0 %v9223
    %9331 = vmatprep.subr.mxu0 0.0
    %9332 = vmatpush1.msra.mxu0 0.0
    %9333 = vmatprep.subr.mxu0 0.0
    %9334 = vmatpush1.msra.mxu0 0.0
    %9335 = vmatprep.subr.mxu0 0.0
    %9336 = vmatpush1.msra.mxu0 0.0
    %9337 = vmatprep.subr.mxu0 0.0
    %9338 = vmatpush1.msra.mxu0 0.0
    %9339 = vmatprep.subr.mxu0 0.0
    %9340 = vmatpush1.msra.mxu0 0.0
    %9341 = vmatprep.subr.mxu0 0.0
    %9342 = vmatpush1.msra.mxu0 0.0
    %9343 = vmatprep.subr.mxu0 0.0
    %9344 = vmatpush1.msra.mxu0 0.0
    %9345 = vmatprep.subr.mxu0 0.0
    %9346 = vmatpush1.msra.mxu0 0.0
    %9347 = vmatprep.subr.mxu0 0.0
    %9348 = vmatpush1.msra.mxu0 0.0
    %9349 = vmatprep.subr.mxu0 0.0
    %9350 = vmatpush1.msra.mxu0 0.0
    %9351 = vmatprep.subr.mxu0 0.0
    %9352 = vmatpush1.msra.mxu0 0.0
    %9353 = vmatprep.subr.mxu0 0.0
    %9354 = vmatpush1.msra.mxu0 0.0
    %9355 = vmatprep.subr.mxu0 0.0
    %9356 = vmatpush1.msra.mxu0 0.0
    %9357 = vmatprep.subr.mxu0 0.0
    %9358 = vmatpush1.msra.mxu0 0.0
    %9359 = vmatprep.subr.mxu0 0.0
    %9360 = vmatpush1.msra.mxu0 0.0
    %9361 = vmatprep.subr.mxu0 0.0
    %9362 = vmatpush1.msra.mxu0 0.0
    %9363 = vmatprep.subr.mxu0 0.0
    %9364 = vmatpush1.msra.mxu0 0.0
    %9365 = vmatprep.subr.mxu0 0.0
    %9366 = vmatpush1.msra.mxu0 0.0
    %9367 = vmatprep.subr.mxu0 0.0
    %9368 = vmatpush1.msra.mxu0 0.0
    %9369 = vmatprep.subr.mxu0 0.0
    %9370 = vmatpush1.msra.mxu0 0.0
    %9371 = vmatprep.subr.mxu0 0.0
    %9372 = vmatpush1.msra.mxu0 0.0
    %9373 = vmatprep.subr.mxu0 0.0
    %9374 = vmatpush1.msra.mxu0 0.0
    %9375 = vmatprep.subr.mxu0 0.0
    %9376 = vmatpush1.msra.mxu0 0.0
    %9377 = vmatprep.subr.mxu0 0.0
    %9378 = vmatpush1.msra.mxu0 0.0
    %9379 = vmatprep.subr.mxu0 0.0
    %9380 = vmatpush1.msra.mxu0 0.0
    %9381 = vmatprep.subr.mxu0 0.0
    %9382 = vmatpush1.msra.mxu0 0.0
    %9383 = vmatprep.subr.mxu0 0.0
    %9384 = vmatpush1.msra.mxu0 0.0
    %9385 = vmatprep.subr.mxu0 0.0
    %9386 = vmatpush1.msra.mxu0 0.0
    %9387 = vmatprep.mubr.f32.mxu0 0.0
    %9388 = vmatmul.mubr.f32.gmra.mrb[0].mxu0 %v9321
    %v9389 = vpop.f32.mrb[0].mxu0
    %v9390 = vadd.f32 %v9319, %v9389
    %v9391 = vpop.f32.mrb[0].mxu0
    %9392 = vdwg.mxu0
    %v9393 = vlaneseq
    %v9394 = vshrl.u32 %v9393, 7
    %v9395 = vsub.s32 2, %v9394
    %v9396 = vrot.slane %v9232, %v9395
    %v9398 = vsel %vm135, %v9390, 0
    %9400 = vmatprep.subr.mxu0 0.0
    %9401 = vmatpush1.msra.mxu0 %v9224
    %9402 = vmatprep.subr.mxu0 0.0
    %9403 = vmatpush1.msra.mxu0 %v9225
    %9404 = vmatprep.subr.mxu0 0.0
    %9405 = vmatpush1.msra.mxu0 %v9226
    %9406 = vmatprep.subr.mxu0 0.0
    %9407 = vmatpush1.msra.mxu0 %v9227
    %9408 = vmatprep.subr.mxu0 0.0
    %9409 = vmatpush1.msra.mxu0 0.0
    %9410 = vmatprep.subr.mxu0 0.0
    %9411 = vmatpush1.msra.mxu0 0.0
    %9412 = vmatprep.subr.mxu0 0.0
    %9413 = vmatpush1.msra.mxu0 0.0
    %9414 = vmatprep.subr.mxu0 0.0
    %9415 = vmatpush1.msra.mxu0 0.0
    %9416 = vmatprep.subr.mxu0 0.0
    %9417 = vmatpush1.msra.mxu0 0.0
    %9418 = vmatprep.subr.mxu0 0.0
    %9419 = vmatpush1.msra.mxu0 0.0
    %9420 = vmatprep.subr.mxu0 0.0
    %9421 = vmatpush1.msra.mxu0 0.0
    %9422 = vmatprep.subr.mxu0 0.0
    %9423 = vmatpush1.msra.mxu0 0.0
    %9424 = vmatprep.subr.mxu0 0.0
    %9425 = vmatpush1.msra.mxu0 0.0
    %9426 = vmatprep.subr.mxu0 0.0
    %9427 = vmatpush1.msra.mxu0 0.0
    %9428 = vmatprep.subr.mxu0 0.0
    %9429 = vmatpush1.msra.mxu0 0.0
    %9430 = vmatprep.subr.mxu0 0.0
    %9431 = vmatpush1.msra.mxu0 0.0
    %9432 = vmatprep.subr.mxu0 0.0
    %9433 = vmatpush1.msra.mxu0 0.0
    %9434 = vmatprep.subr.mxu0 0.0
    %9435 = vmatpush1.msra.mxu0 0.0
    %9436 = vmatprep.subr.mxu0 0.0
    %9437 = vmatpush1.msra.mxu0 0.0
    %9438 = vmatprep.subr.mxu0 0.0
    %9439 = vmatpush1.msra.mxu0 0.0
    %9440 = vmatprep.subr.mxu0 0.0
    %9441 = vmatpush1.msra.mxu0 0.0
    %9442 = vmatprep.subr.mxu0 0.0
    %9443 = vmatpush1.msra.mxu0 0.0
    %9444 = vmatprep.subr.mxu0 0.0
    %9445 = vmatpush1.msra.mxu0 0.0
    %9446 = vmatprep.subr.mxu0 0.0
    %9447 = vmatpush1.msra.mxu0 0.0
    %9448 = vmatprep.subr.mxu0 0.0
    %9449 = vmatpush1.msra.mxu0 0.0
    %9450 = vmatprep.subr.mxu0 0.0
    %9451 = vmatpush1.msra.mxu0 0.0
    %9452 = vmatprep.subr.mxu0 0.0
    %9453 = vmatpush1.msra.mxu0 0.0
    %9454 = vmatprep.subr.mxu0 0.0
    %9455 = vmatpush1.msra.mxu0 0.0
    %9456 = vmatprep.subr.mxu0 0.0
    %9457 = vmatpush1.msra.mxu0 0.0
    %9458 = vmatprep.subr.mxu0 0.0
    %9459 = vmatpush1.msra.mxu0 0.0
    %9460 = vmatprep.subr.mxu0 0.0
    %9461 = vmatpush1.msra.mxu0 0.0
    %9462 = vmatprep.subr.mxu0 0.0
    %9463 = vmatpush1.msra.mxu0 0.0
    %9464 = vmatprep.mubr.f32.mxu0 0.0
    %9465 = vmatmul.mubr.f32.gmra.mrb[0].mxu0 %v9398
    %v9466 = vpop.f32.mrb[0].mxu0
    %v9467 = vadd.f32 %v9396, %v9466
    %v9468 = vpop.f32.mrb[0].mxu0
    %9469 = vdwg.mxu0
    %v9470 = vmul.f32 %v9467, 0.5
    %v9471 = vmul.f32 %v9467, 0.044715
    %v9472 = vmul.f32 %v9471, %v9467
    %v9473 = vmul.f32 %v9472, %v9467
    %v9474 = vadd.f32 %v9467, %v9473
    %v9475 = vmul.f32 %v9474, 0.7978846
    %v9476 = vtanh.pop %v9475
    %v9477 = vadd.f32 %v9476, 1.0
    %v9478 = vmul.f32 %v9470, %v9477
    %v9479 = vlaneseq
    %v9480 = vshrl.u32 %v9479, 7
    %v9481 = vsub.s32 3, %v9480
    %v9482 = vrot.slane %v9232, %v9481
    %v9484 = vsel %vm135, %v9478, 0
    %9486 = vmatprep.subr.mxu0 0.0
    %9487 = vmatpush1.msra.mxu0 %v9228
    %9488 = vmatprep.subr.mxu0 0.0
    %9489 = vmatpush1.msra.mxu0 %v9229
    %9490 = vmatprep.subr.mxu0 0.0
    %9491 = vmatpush1.msra.mxu0 %v9230
    %9492 = vmatprep.subr.mxu0 0.0
    %9493 = vmatpush1.msra.mxu0 %v9231
    %9494 = vmatprep.subr.mxu0 0.0
    %9495 = vmatpush1.msra.mxu0 0.0
    %9496 = vmatprep.subr.mxu0 0.0
    %9497 = vmatpush1.msra.mxu0 0.0
    %9498 = vmatprep.subr.mxu0 0.0
    %9499 = vmatpush1.msra.mxu0 0.0
    %9500 = vmatprep.subr.mxu0 0.0
    %9501 = vmatpush1.msra.mxu0 0.0
    %9502 = vmatprep.subr.mxu0 0.0
    %9503 = vmatpush1.msra.mxu0 0.0
    %9504 = vmatprep.subr.mxu0 0.0
    %9505 = vmatpush1.msra.mxu0 0.0
    %9506 = vmatprep.subr.mxu0 0.0
    %9507 = vmatpush1.msra.mxu0 0.0
    %9508 = vmatprep.subr.mxu0 0.0
    %9509 = vmatpush1.msra.mxu0 0.0
    %9510 = vmatprep.subr.mxu0 0.0
    %9511 = vmatpush1.msra.mxu0 0.0
    %9512 = vmatprep.subr.mxu0 0.0
    %9513 = vmatpush1.msra.mxu0 0.0
    %9514 = vmatprep.subr.mxu0 0.0
    %9515 = vmatpush1.msra.mxu0 0.0
    %9516 = vmatprep.subr.mxu0 0.0
    %9517 = vmatpush1.msra.mxu0 0.0
    %9518 = vmatprep.subr.mxu0 0.0
    %9519 = vmatpush1.msra.mxu0 0.0
    %9520 = vmatprep.subr.mxu0 0.0
    %9521 = vmatpush1.msra.mxu0 0.0
    %9522 = vmatprep.subr.mxu0 0.0
    %9523 = vmatpush1.msra.mxu0 0.0
    %9524 = vmatprep.subr.mxu0 0.0
    %9525 = vmatpush1.msra.mxu0 0.0
    %9526 = vmatprep.subr.mxu0 0.0
    %9527 = vmatpush1.msra.mxu0 0.0
    %9528 = vmatprep.subr.mxu0 0.0
    %9529 = vmatpush1.msra.mxu0 0.0
    %9530 = vmatprep.subr.mxu0 0.0
    %9531 = vmatpush1.msra.mxu0 0.0
    %9532 = vmatprep.subr.mxu0 0.0
    %9533 = vmatpush1.msra.mxu0 0.0
    %9534 = vmatprep.subr.mxu0 0.0
    %9535 = vmatpush1.msra.mxu0 0.0
    %9536 = vmatprep.subr.mxu0 0.0
    %9537 = vmatpush1.msra.mxu0 0.0
    %9538 = vmatprep.subr.mxu0 0.0
    %9539 = vmatpush1.msra.mxu0 0.0
    %9540 = vmatprep.subr.mxu0 0.0
    %9541 = vmatpush1.msra.mxu0 0.0
    %9542 = vmatprep.subr.mxu0 0.0
    %9543 = vmatpush1.msra.mxu0 0.0
    %9544 = vmatprep.subr.mxu0 0.0
    %9545 = vmatpush1.msra.mxu0 0.0
    %9546 = vmatprep.subr.mxu0 0.0
    %9547 = vmatpush1.msra.mxu0 0.0
    %9548 = vmatprep.subr.mxu0 0.0
    %9549 = vmatpush1.msra.mxu0 0.0
    %9550 = vmatprep.mubr.f32.mxu0 0.0
    %9551 = vmatmul.mubr.f32.gmra.mrb[0].mxu0 %v9484
    %v9552 = vpop.f32.mrb[0].mxu0
    %v9553 = vadd.f32 %v9482, %v9552
    %v9554 = vpop.f32.mrb[0].mxu0
    %9555 = vdwg.mxu0
    %v9556 = vsel %vm7517, %v9553, 0.0
    %9557 = vadd.xlane.f32.xlu0 %v9556
    %v9558 = vpop.xlane.xlu0 %9557
    %v9559 = vmul.f32 %v9558, 0.0625
    %v9561 = vsel %vm135, 0.0625, 0
    %v9564 = vsel %vm135, %v9553, 0
    %9566 = vmatprep.subr.mxu0 0.0
    %9567 = vmatpush1.xpose.msra.mxu0 %v9564
    %9568 = vmatprep.subr.mxu0 0.0
    %9569 = vmatpush1.xpose.msra.mxu0 0.0
    %9570 = vmatprep.subr.mxu0 0.0
    %9571 = vmatpush1.xpose.msra.mxu0 0.0
    %9572 = vmatprep.subr.mxu0 0.0
    %9573 = vmatpush1.xpose.msra.mxu0 0.0
    %9574 = vmatprep.subr.mxu0 0.0
    %9575 = vmatpush1.xpose.msra.mxu0 0.0
    %9576 = vmatprep.subr.mxu0 0.0
    %9577 = vmatpush1.xpose.msra.mxu0 0.0
    %9578 = vmatprep.subr.mxu0 0.0
    %9579 = vmatpush1.xpose.msra.mxu0 0.0
    %9580 = vmatprep.subr.mxu0 0.0
    %9581 = vmatpush1.xpose.msra.mxu0 0.0
    %9582 = vmatprep.subr.mxu0 0.0
    %9583 = vmatpush1.xpose.msra.mxu0 0.0
    %9584 = vmatprep.subr.mxu0 0.0
    %9585 = vmatpush1.xpose.msra.mxu0 0.0
    %9586 = vmatprep.subr.mxu0 0.0
    %9587 = vmatpush1.xpose.msra.mxu0 0.0
    %9588 = vmatprep.subr.mxu0 0.0
    %9589 = vmatpush1.xpose.msra.mxu0 0.0
    %9590 = vmatprep.subr.mxu0 0.0
    %9591 = vmatpush1.xpose.msra.mxu0 0.0
    %9592 = vmatprep.subr.mxu0 0.0
    %9593 = vmatpush1.xpose.msra.mxu0 0.0
    %9594 = vmatprep.subr.mxu0 0.0
    %9595 = vmatpush1.xpose.msra.mxu0 0.0
    %9596 = vmatprep.subr.mxu0 0.0
    %9597 = vmatpush1.xpose.msra.mxu0 0.0
    %9598 = vmatprep.subr.mxu0 0.0
    %9599 = vmatpush1.xpose.msra.mxu0 0.0
    %9600 = vmatprep.subr.mxu0 0.0
    %9601 = vmatpush1.xpose.msra.mxu0 0.0
    %9602 = vmatprep.subr.mxu0 0.0
    %9603 = vmatpush1.xpose.msra.mxu0 0.0
    %9604 = vmatprep.subr.mxu0 0.0
    %9605 = vmatpush1.xpose.msra.mxu0 0.0
    %9606 = vmatprep.subr.mxu0 0.0
    %9607 = vmatpush1.xpose.msra.mxu0 0.0
    %9608 = vmatprep.subr.mxu0 0.0
    %9609 = vmatpush1.xpose.msra.mxu0 0.0
    %9610 = vmatprep.subr.mxu0 0.0
    %9611 = vmatpush1.xpose.msra.mxu0 0.0
    %9612 = vmatprep.subr.mxu0 0.0
    %9613 = vmatpush1.xpose.msra.mxu0 0.0
    %9614 = vmatprep.subr.mxu0 0.0
    %9615 = vmatpush1.xpose.msra.mxu0 0.0
    %9616 = vmatprep.subr.mxu0 0.0
    %9617 = vmatpush1.xpose.msra.mxu0 0.0
    %9618 = vmatprep.subr.mxu0 0.0
    %9619 = vmatpush1.xpose.msra.mxu0 0.0
    %9620 = vmatprep.subr.mxu0 0.0
    %9621 = vmatpush1.xpose.msra.mxu0 0.0
    %9622 = vmatprep.subr.mxu0 0.0
    %9623 = vmatpush1.xpose.msra.mxu0 0.0
    %9624 = vmatprep.subr.mxu0 0.0
    %9625 = vmatpush1.xpose.msra.mxu0 0.0
    %9626 = vmatprep.subr.mxu0 0.0
    %9627 = vmatpush1.xpose.msra.mxu0 0.0
    %9628 = vmatprep.subr.mxu0 0.0
    %9629 = vmatpush1.xpose.msra.mxu0 0.0
    %9630 = vmatprep.mubr.f32.mxu0 0.0
    %9631 = vmatmul.mubr.f32.gmra.mrb[0].mxu0 %v9561
    %v9632 = vpop.f32.mrb[0].mxu0
    %v9633 = vadd.f32 0.0, %v9632
    %v9634 = vpop.f32.mrb[0].mxu0
    %9635 = vdwg.mxu0
    %v9636 = vlaneseq
    %v9637 = vshrl.u32 %v9636, 7
    %v9638 = vlaneseq
    %v9639 = vand.u32 %v9638, 127
    %vm9640 = vcmp.eq.s32.totalorder %v9637, %v9639
    %v9641 = vsel %vm9640, 1.0, 0.0
    %v9643 = vsel %vm6629, %v9633, 0
    %v9646 = vsel %vm6633, %v9641, 0
    %9648 = vmatprep.subr.mxu0 0.0
    %9649 = vmatpush1.msra.mxu0 %v9646
    %9650 = vmatprep.subr.mxu0 0.0
    %9651 = vmatpush1.msra.mxu0 0.0
    %9652 = vmatprep.subr.mxu0 0.0
    %9653 = vmatpush1.msra.mxu0 0.0
    %9654 = vmatprep.subr.mxu0 0.0
    %9655 = vmatpush1.msra.mxu0 0.0
    %9656 = vmatprep.subr.mxu0 0.0
    %9657 = vmatpush1.msra.mxu0 0.0
    %9658 = vmatprep.subr.mxu0 0.0
    %9659 = vmatpush1.msra.mxu0 0.0
    %9660 = vmatprep.subr.mxu0 0.0
    %9661 = vmatpush1.msra.mxu0 0.0
    %9662 = vmatprep.subr.mxu0 0.0
    %9663 = vmatpush1.msra.mxu0 0.0
    %9664 = vmatprep.subr.mxu0 0.0
    %9665 = vmatpush1.msra.mxu0 0.0
    %9666 = vmatprep.subr.mxu0 0.0
    %9667 = vmatpush1.msra.mxu0 0.0
    %9668 = vmatprep.subr.mxu0 0.0
    %9669 = vmatpush1.msra.mxu0 0.0
    %9670 = vmatprep.subr.mxu0 0.0
    %9671 = vmatpush1.msra.mxu0 0.0
    %9672 = vmatprep.subr.mxu0 0.0
    %9673 = vmatpush1.msra.mxu0 0.0
    %9674 = vmatprep.subr.mxu0 0.0
    %9675 = vmatpush1.msra.mxu0 0.0
    %9676 = vmatprep.subr.mxu0 0.0
    %9677 = vmatpush1.msra.mxu0 0.0
    %9678 = vmatprep.subr.mxu0 0.0
    %9679 = vmatpush1.msra.mxu0 0.0
    %9680 = vmatprep.subr.mxu0 0.0
    %9681 = vmatpush1.msra.mxu0 0.0
    %9682 = vmatprep.subr.mxu0 0.0
    %9683 = vmatpush1.msra.mxu0 0.0
    %9684 = vmatprep.subr.mxu0 0.0
    %9685 = vmatpush1.msra.mxu0 0.0
    %9686 = vmatprep.subr.mxu0 0.0
    %9687 = vmatpush1.msra.mxu0 0.0
    %9688 = vmatprep.subr.mxu0 0.0
    %9689 = vmatpush1.msra.mxu0 0.0
    %9690 = vmatprep.subr.mxu0 0.0
    %9691 = vmatpush1.msra.mxu0 0.0
    %9692 = vmatprep.subr.mxu0 0.0
    %9693 = vmatpush1.msra.mxu0 0.0
    %9694 = vmatprep.subr.mxu0 0.0
    %9695 = vmatpush1.msra.mxu0 0.0
    %9696 = vmatprep.subr.mxu0 0.0
    %9697 = vmatpush1.msra.mxu0 0.0
    %9698 = vmatprep.subr.mxu0 0.0
    %9699 = vmatpush1.msra.mxu0 0.0
    %9700 = vmatprep.subr.mxu0 0.0
    %9701 = vmatpush1.msra.mxu0 0.0
    %9702 = vmatprep.subr.mxu0 0.0
    %9703 = vmatpush1.msra.mxu0 0.0
    %9704 = vmatprep.subr.mxu0 0.0
    %9705 = vmatpush1.msra.mxu0 0.0
    %9706 = vmatprep.subr.mxu0 0.0
    %9707 = vmatpush1.msra.mxu0 0.0
    %9708 = vmatprep.subr.mxu0 0.0
    %9709 = vmatpush1.msra.mxu0 0.0
    %9710 = vmatprep.subr.mxu0 0.0
    %9711 = vmatpush1.msra.mxu0 0.0
    %9712 = vmatprep.mubr.f32.mxu0 0.0
    %9713 = vmatmul.mubr.f32.gmra.mrb[0].mxu0 %v9643
    %v9714 = vpop.f32.mrb[0].mxu0
    %v9715 = vadd.f32 0.0, %v9714
    %v9716 = vpop.f32.mrb[0].mxu0
    %9717 = vdwg.mxu0
    %v9718 = vlaneseq
    %v9719 = vshrl.u32 %v9718, 7
    %v9720 = vsub.s32 0, %v9719
    %v9721 = vrot.slane %v9715, %v9720
    %v9722 = vsub.f32 %v9559, %v9721
    %v9723 = vld [vmem:[#allocation6] sm:$0xff]
    %v9724 = vld [vmem:[#allocation6 + $0x8] sm:$0xff]
    %v9725 = vld [vmem:[#allocation6 + $0x10] sm:$0xff]
    %v9726 = vld [vmem:[#allocation6 + $0x18] sm:$0xff]
    %v9727 = vld [vmem:[#allocation6 + $0x20] sm:$0xff]
    %v9728 = vld [vmem:[#allocation6 + $0x28] sm:$0xff]
    %v9729 = vld [vmem:[#allocation6 + $0x30] sm:$0xff]
    %v9730 = vld [vmem:[#allocation6 + $0x38] sm:$0xff]
    %v9731 = vld [vmem:[#allocation6 + $0x40] sm:$0xff]
    %v9732 = vld [vmem:[#allocation6 + $0x48] sm:$0xff]
    %v9733 = vld [vmem:[#allocation6 + $0x50] sm:$0xff]
    %v9734 = vld [vmem:[#allocation6 + $0x58] sm:$0xff]
    %v9735 = vld [vmem:[#allocation7] sm:$0x7]
    %v9736 = vlaneseq
    %v9737 = vshrl.u32 %v9736, 7
    %v9738 = vsub.s32 0, %v9737
    %v9739 = vrot.slane %v9735, %v9738
    %v9741 = vsel %vm135, %v9215, 0
    %9743 = vmatprep.subr.mxu0 0.0
    %9744 = vmatpush1.msra.mxu0 %v9723
    %9745 = vmatprep.subr.mxu0 0.0
    %9746 = vmatpush1.msra.mxu0 %v9724
    %9747 = vmatprep.subr.mxu0 0.0
    %9748 = vmatpush1.msra.mxu0 %v9725
    %9749 = vmatprep.subr.mxu0 0.0
    %9750 = vmatpush1.msra.mxu0 %v9726
    %9751 = vmatprep.subr.mxu0 0.0
    %9752 = vmatpush1.msra.mxu0 0.0
    %9753 = vmatprep.subr.mxu0 0.0
    %9754 = vmatpush1.msra.mxu0 0.0
    %9755 = vmatprep.subr.mxu0 0.0
    %9756 = vmatpush1.msra.mxu0 0.0
    %9757 = vmatprep.subr.mxu0 0.0
    %9758 = vmatpush1.msra.mxu0 0.0
    %9759 = vmatprep.subr.mxu0 0.0
    %9760 = vmatpush1.msra.mxu0 0.0
    %9761 = vmatprep.subr.mxu0 0.0
    %9762 = vmatpush1.msra.mxu0 0.0
    %9763 = vmatprep.subr.mxu0 0.0
    %9764 = vmatpush1.msra.mxu0 0.0
    %9765 = vmatprep.subr.mxu0 0.0
    %9766 = vmatpush1.msra.mxu0 0.0
    %9767 = vmatprep.subr.mxu0 0.0
    %9768 = vmatpush1.msra.mxu0 0.0
    %9769 = vmatprep.subr.mxu0 0.0
    %9770 = vmatpush1.msra.mxu0 0.0
    %9771 = vmatprep.subr.mxu0 0.0
    %9772 = vmatpush1.msra.mxu0 0.0
    %9773 = vmatprep.subr.mxu0 0.0
    %9774 = vmatpush1.msra.mxu0 0.0
    %9775 = vmatprep.subr.mxu0 0.0
    %9776 = vmatpush1.msra.mxu0 0.0
    %9777 = vmatprep.subr.mxu0 0.0
    %9778 = vmatpush1.msra.mxu0 0.0
    %9779 = vmatprep.subr.mxu0 0.0
    %9780 = vmatpush1.msra.mxu0 0.0
    %9781 = vmatprep.subr.mxu0 0.0
    %9782 = vmatpush1.msra.mxu0 0.0
    %9783 = vmatprep.subr.mxu0 0.0
    %9784 = vmatpush1.msra.mxu0 0.0
    %9785 = vmatprep.subr.mxu0 0.0
    %9786 = vmatpush1.msra.mxu0 0.0
    %9787 = vmatprep.subr.mxu0 0.0
    %9788 = vmatpush1.msra.mxu0 0.0
    %9789 = vmatprep.subr.mxu0 0.0
    %9790 = vmatpush1.msra.mxu0 0.0
    %9791 = vmatprep.subr.mxu0 0.0
    %9792 = vmatpush1.msra.mxu0 0.0
    %9793 = vmatprep.subr.mxu0 0.0
    %9794 = vmatpush1.msra.mxu0 0.0
    %9795 = vmatprep.subr.mxu0 0.0
    %9796 = vmatpush1.msra.mxu0 0.0
    %9797 = vmatprep.subr.mxu0 0.0
    %9798 = vmatpush1.msra.mxu0 0.0
    %9799 = vmatprep.subr.mxu0 0.0
    %9800 = vmatpush1.msra.mxu0 0.0
    %9801 = vmatprep.subr.mxu0 0.0
    %9802 = vmatpush1.msra.mxu0 0.0
    %9803 = vmatprep.subr.mxu0 0.0
    %9804 = vmatpush1.msra.mxu0 0.0
    %9805 = vmatprep.subr.mxu0 0.0
    %9806 = vmatpush1.msra.mxu0 0.0
    %9807 = vmatprep.mubr.f32.mxu0 0.0
    %9808 = vmatmul.mubr.f32.gmra.mrb[0].mxu0 %v9741
    %v9809 = vpop.f32.mrb[0].mxu0
    %v9810 = vadd.f32 %v9739, %v9809
    %v9811 = vpop.f32.mrb[0].mxu0
    %9812 = vdwg.mxu0
    %v9813 = vmul.f32 %v9810, 0.5
    %v9814 = vmul.f32 %v9810, 0.044715
    %v9815 = vmul.f32 %v9814, %v9810
    %v9816 = vmul.f32 %v9815, %v9810
    %v9817 = vadd.f32 %v9810, %v9816
    %v9818 = vmul.f32 %v9817, 0.7978846
    %v9819 = vtanh.pop %v9818
    %v9820 = vadd.f32 %v9819, 1.0
    %v9821 = vmul.f32 %v9813, %v9820
    %v9822 = vlaneseq
    %v9823 = vshrl.u32 %v9822, 7
    %v9824 = vsub.s32 1, %v9823
    %v9825 = vrot.slane %v9735, %v9824
    %v9827 = vsel %vm135, %v9821, 0
    %9829 = vmatprep.subr.mxu0 0.0
    %9830 = vmatpush1.msra.mxu0 %v9727
    %9831 = vmatprep.subr.mxu0 0.0
    %9832 = vmatpush1.msra.mxu0 %v9728
    %9833 = vmatprep.subr.mxu0 0.0
    %9834 = vmatpush1.msra.mxu0 %v9729
    %9835 = vmatprep.subr.mxu0 0.0
    %9836 = vmatpush1.msra.mxu0 %v9730
    %9837 = vmatprep.subr.mxu0 0.0
    %9838 = vmatpush1.msra.mxu0 0.0
    %9839 = vmatprep.subr.mxu0 0.0
    %9840 = vmatpush1.msra.mxu0 0.0
    %9841 = vmatprep.subr.mxu0 0.0
    %9842 = vmatpush1.msra.mxu0 0.0
    %9843 = vmatprep.subr.mxu0 0.0
    %9844 = vmatpush1.msra.mxu0 0.0
    %9845 = vmatprep.subr.mxu0 0.0
    %9846 = vmatpush1.msra.mxu0 0.0
    %9847 = vmatprep.subr.mxu0 0.0
    %9848 = vmatpush1.msra.mxu0 0.0
    %9849 = vmatprep.subr.mxu0 0.0
    %9850 = vmatpush1.msra.mxu0 0.0
    %9851 = vmatprep.subr.mxu0 0.0
    %9852 = vmatpush1.msra.mxu0 0.0
    %9853 = vmatprep.subr.mxu0 0.0
    %9854 = vmatpush1.msra.mxu0 0.0
    %9855 = vmatprep.subr.mxu0 0.0
    %9856 = vmatpush1.msra.mxu0 0.0
    %9857 = vmatprep.subr.mxu0 0.0
    %9858 = vmatpush1.msra.mxu0 0.0
    %9859 = vmatprep.subr.mxu0 0.0
    %9860 = vmatpush1.msra.mxu0 0.0
    %9861 = vmatprep.subr.mxu0 0.0
    %9862 = vmatpush1.msra.mxu0 0.0
    %9863 = vmatprep.subr.mxu0 0.0
    %9864 = vmatpush1.msra.mxu0 0.0
    %9865 = vmatprep.subr.mxu0 0.0
    %9866 = vmatpush1.msra.mxu0 0.0
    %9867 = vmatprep.subr.mxu0 0.0
    %9868 = vmatpush1.msra.mxu0 0.0
    %9869 = vmatprep.subr.mxu0 0.0
    %9870 = vmatpush1.msra.mxu0 0.0
    %9871 = vmatprep.subr.mxu0 0.0
    %9872 = vmatpush1.msra.mxu0 0.0
    %9873 = vmatprep.subr.mxu0 0.0
    %9874 = vmatpush1.msra.mxu0 0.0
    %9875 = vmatprep.subr.mxu0 0.0
    %9876 = vmatpush1.msra.mxu0 0.0
    %9877 = vmatprep.subr.mxu0 0.0
    %9878 = vmatpush1.msra.mxu0 0.0
    %9879 = vmatprep.subr.mxu0 0.0
    %9880 = vmatpush1.msra.mxu0 0.0
    %9881 = vmatprep.subr.mxu0 0.0
    %9882 = vmatpush1.msra.mxu0 0.0
    %9883 = vmatprep.subr.mxu0 0.0
    %9884 = vmatpush1.msra.mxu0 0.0
    %9885 = vmatprep.subr.mxu0 0.0
    %9886 = vmatpush1.msra.mxu0 0.0
    %9887 = vmatprep.subr.mxu0 0.0
    %9888 = vmatpush1.msra.mxu0 0.0
    %9889 = vmatprep.subr.mxu0 0.0
    %9890 = vmatpush1.msra.mxu0 0.0
    %9891 = vmatprep.subr.mxu0 0.0
    %9892 = vmatpush1.msra.mxu0 0.0
    %9893 = vmatprep.mubr.f32.mxu0 0.0
    %9894 = vmatmul.mubr.f32.gmra.mrb[0].mxu0 %v9827
    %v9895 = vpop.f32.mrb[0].mxu0
    %v9896 = vadd.f32 %v9825, %v9895
    %v9897 = vpop.f32.mrb[0].mxu0
    %9898 = vdwg.mxu0
    %v9899 = vlaneseq
    %v9900 = vshrl.u32 %v9899, 7
    %v9901 = vsub.s32 2, %v9900
    %v9902 = vrot.slane %v9735, %v9901
    %v9904 = vsel %vm135, %v9896, 0
    %9906 = vmatprep.subr.mxu0 0.0
    %9907 = vmatpush1.msra.mxu0 %v9731
    %9908 = vmatprep.subr.mxu0 0.0
    %9909 = vmatpush1.msra.mxu0 %v9732
    %9910 = vmatprep.subr.mxu0 0.0
    %9911 = vmatpush1.msra.mxu0 %v9733
    %9912 = vmatprep.subr.mxu0 0.0
    %9913 = vmatpush1.msra.mxu0 %v9734
    %9914 = vmatprep.subr.mxu0 0.0
    %9915 = vmatpush1.msra.mxu0 0.0
    %9916 = vmatprep.subr.mxu0 0.0
    %9917 = vmatpush1.msra.mxu0 0.0
    %9918 = vmatprep.subr.mxu0 0.0
    %9919 = vmatpush1.msra.mxu0 0.0
    %9920 = vmatprep.subr.mxu0 0.0
    %9921 = vmatpush1.msra.mxu0 0.0
    %9922 = vmatprep.subr.mxu0 0.0
    %9923 = vmatpush1.msra.mxu0 0.0
    %9924 = vmatprep.subr.mxu0 0.0
    %9925 = vmatpush1.msra.mxu0 0.0
    %9926 = vmatprep.subr.mxu0 0.0
    %9927 = vmatpush1.msra.mxu0 0.0
    %9928 = vmatprep.subr.mxu0 0.0
    %9929 = vmatpush1.msra.mxu0 0.0
    %9930 = vmatprep.subr.mxu0 0.0
    %9931 = vmatpush1.msra.mxu0 0.0
    %9932 = vmatprep.subr.mxu0 0.0
    %9933 = vmatpush1.msra.mxu0 0.0
    %9934 = vmatprep.subr.mxu0 0.0
    %9935 = vmatpush1.msra.mxu0 0.0
    %9936 = vmatprep.subr.mxu0 0.0
    %9937 = vmatpush1.msra.mxu0 0.0
    %9938 = vmatprep.subr.mxu0 0.0
    %9939 = vmatpush1.msra.mxu0 0.0
    %9940 = vmatprep.subr.mxu0 0.0
    %9941 = vmatpush1.msra.mxu0 0.0
    %9942 = vmatprep.subr.mxu0 0.0
    %9943 = vmatpush1.msra.mxu0 0.0
    %9944 = vmatprep.subr.mxu0 0.0
    %9945 = vmatpush1.msra.mxu0 0.0
    %9946 = vmatprep.subr.mxu0 0.0
    %9947 = vmatpush1.msra.mxu0 0.0
    %9948 = vmatprep.subr.mxu0 0.0
    %9949 = vmatpush1.msra.mxu0 0.0
    %9950 = vmatprep.subr.mxu0 0.0
    %9951 = vmatpush1.msra.mxu0 0.0
    %9952 = vmatprep.subr.mxu0 0.0
    %9953 = vmatpush1.msra.mxu0 0.0
    %9954 = vmatprep.subr.mxu0 0.0
    %9955 = vmatpush1.msra.mxu0 0.0
    %9956 = vmatprep.subr.mxu0 0.0
    %9957 = vmatpush1.msra.mxu0 0.0
    %9958 = vmatprep.subr.mxu0 0.0
    %9959 = vmatpush1.msra.mxu0 0.0
    %9960 = vmatprep.subr.mxu0 0.0
    %9961 = vmatpush1.msra.mxu0 0.0
    %9962 = vmatprep.subr.mxu0 0.0
    %9963 = vmatpush1.msra.mxu0 0.0
    %9964 = vmatprep.subr.mxu0 0.0
    %9965 = vmatpush1.msra.mxu0 0.0
    %9966 = vmatprep.subr.mxu0 0.0
    %9967 = vmatpush1.msra.mxu0 0.0
    %9968 = vmatprep.subr.mxu0 0.0
    %9969 = vmatpush1.msra.mxu0 0.0
    %9970 = vmatprep.mubr.f32.mxu0 0.0
    %9971 = vmatmul.mubr.f32.gmra.mrb[0].mxu0 %v9904
    %v9972 = vpop.f32.mrb[0].mxu0
    %v9973 = vadd.f32 %v9902, %v9972
    %v9974 = vpop.f32.mrb[0].mxu0
    %9975 = vdwg.mxu0
    %v9976 = vmul.f32 %v9973, 0.5
    %v9977 = vmul.f32 %v9973, 0.044715
    %v9978 = vmul.f32 %v9977, %v9973
    %v9979 = vmul.f32 %v9978, %v9973
    %v9980 = vadd.f32 %v9973, %v9979
    %v9981 = vmul.f32 %v9980, 0.7978846
    %v9982 = vtanh.pop %v9981
    %v9983 = vadd.f32 %v9982, 1.0
    %v9984 = vmul.f32 %v9976, %v9983
    %v9985 = vld [vmem:[%s11] sm:$0xff]
    %v9986 = vld [vmem:[%s11 + $0x8] sm:$0xff]
    %v9987 = vld [vmem:[%s11 + $0x10] sm:$0xff]
    %v9988 = vld [vmem:[%s11 + $0x18] sm:$0xff]
    %v9989 = vld [vmem:[#allocation9] sm:$0x1]
    %v9991 = vlaneseq
    %v9992 = vshrl.u32 %v9991, 7
    %v9993 = vsub.s32 0, %v9992
    %v9994 = vrot.slane %v9989, %v9993
    %v9997 = vsel %vm135, %v9984, 0
    %9999 = vmatprep.subr.mxu0 0.0
    %10000 = vmatpush1.msra.mxu0 %v9985
    %10001 = vmatprep.subr.mxu0 0.0
    %10002 = vmatpush1.msra.mxu0 %v9986
    %10003 = vmatprep.subr.mxu0 0.0
    %10004 = vmatpush1.msra.mxu0 %v9987
    %10005 = vmatprep.subr.mxu0 0.0
    %10006 = vmatpush1.msra.mxu0 %v9988
    %10007 = vmatprep.subr.mxu0 0.0
    %10008 = vmatpush1.msra.mxu0 0.0
    %10009 = vmatprep.subr.mxu0 0.0
    %10010 = vmatpush1.msra.mxu0 0.0
    %10011 = vmatprep.subr.mxu0 0.0
    %10012 = vmatpush1.msra.mxu0 0.0
    %10013 = vmatprep.subr.mxu0 0.0
    %10014 = vmatpush1.msra.mxu0 0.0
    %10015 = vmatprep.subr.mxu0 0.0
    %10016 = vmatpush1.msra.mxu0 0.0
    %10017 = vmatprep.subr.mxu0 0.0
    %10018 = vmatpush1.msra.mxu0 0.0
    %10019 = vmatprep.subr.mxu0 0.0
    %10020 = vmatpush1.msra.mxu0 0.0
    %10021 = vmatprep.subr.mxu0 0.0
    %10022 = vmatpush1.msra.mxu0 0.0
    %10023 = vmatprep.subr.mxu0 0.0
    %10024 = vmatpush1.msra.mxu0 0.0
    %10025 = vmatprep.subr.mxu0 0.0
    %10026 = vmatpush1.msra.mxu0 0.0
    %10027 = vmatprep.subr.mxu0 0.0
    %10028 = vmatpush1.msra.mxu0 0.0
    %10029 = vmatprep.subr.mxu0 0.0
    %10030 = vmatpush1.msra.mxu0 0.0
    %10031 = vmatprep.subr.mxu0 0.0
    %10032 = vmatpush1.msra.mxu0 0.0
    %10033 = vmatprep.subr.mxu0 0.0
    %10034 = vmatpush1.msra.mxu0 0.0
    %10035 = vmatprep.subr.mxu0 0.0
    %10036 = vmatpush1.msra.mxu0 0.0
    %10037 = vmatprep.subr.mxu0 0.0
    %10038 = vmatpush1.msra.mxu0 0.0
    %10039 = vmatprep.subr.mxu0 0.0
    %10040 = vmatpush1.msra.mxu0 0.0
    %10041 = vmatprep.subr.mxu0 0.0
    %10042 = vmatpush1.msra.mxu0 0.0
    %10043 = vmatprep.subr.mxu0 0.0
    %10044 = vmatpush1.msra.mxu0 0.0
    %10045 = vmatprep.subr.mxu0 0.0
    %10046 = vmatpush1.msra.mxu0 0.0
    %10047 = vmatprep.subr.mxu0 0.0
    %10048 = vmatpush1.msra.mxu0 0.0
    %10049 = vmatprep.subr.mxu0 0.0
    %10050 = vmatpush1.msra.mxu0 0.0
    %10051 = vmatprep.subr.mxu0 0.0
    %10052 = vmatpush1.msra.mxu0 0.0
    %10053 = vmatprep.subr.mxu0 0.0
    %10054 = vmatpush1.msra.mxu0 0.0
    %10055 = vmatprep.subr.mxu0 0.0
    %10056 = vmatpush1.msra.mxu0 0.0
    %10057 = vmatprep.subr.mxu0 0.0
    %10058 = vmatpush1.msra.mxu0 0.0
    %10059 = vmatprep.subr.mxu0 0.0
    %10060 = vmatpush1.msra.mxu0 0.0
    %10061 = vmatprep.subr.mxu0 0.0
    %10062 = vmatpush1.msra.mxu0 0.0
    %10063 = vmatprep.mubr.f32.mxu0 0.0
    %10064 = vmatmul.mubr.f32.gmra.mrb[0].mxu0 %v9997
    %v10065 = vpop.f32.mrb[0].mxu0
    %v10066 = vadd.f32 %v9994, %v10065
    %v10067 = vpop.f32.mrb[0].mxu0
    %10068 = vdwg.mxu0
    %v10070 = vrot.slane %v10066, 4
    %v10072 = vsel %vm6633, %v9722, %v10070
    %10073 = vst [vmem:[%s13] sm:$0xff] %v10072
    // Predicated region
    $region74: #{rank_adapter_v2_forward.1} parent=1 // pred_check
      _
    $region75: #{rank_adapter_v2_forward.1} parent=1 // pred_check_branch
      %10075 = sbr.rel (0) target = $region77
    $region76: #{rank_adapter_v2_forward.1} parent=1 // pred_region
      _
    $region77: #{rank_adapter_v2_forward.1} parent=1 // pred_fallthru
      _
    // Predicated region
    $region78: #{rank_adapter_v2_forward.1} parent=1 // pred_check
      _
    $region79: #{rank_adapter_v2_forward.1} parent=1 // pred_check_branch
      %10077 = sbr.rel (0) target = $region81
    $region80: #{rank_adapter_v2_forward.1} parent=1 // pred_region
      _
    $region81: #{rank_adapter_v2_forward.1} parent=1 // pred_fallthru
      _
    %10078 = vsyncpa [#allocation3], 1
    %10079 = vsyncpa [#allocation5], 1
    %10080 = vsyncpa [#allocation8], 1

</llo_original>
